<compile_context>
chip_gen: v6e
topology: v6e:2x2x1
jax: 0.10.0
libtpu: 0.0.40
codegen_flags: <defaults>
</compile_context>

<pallas_src>
import functools

import jax
import jax.numpy as jnp
from jax.experimental import pallas as pl
from jax.experimental.pallas import tpu as pltpu

LANE = 128
SUBLANE = 8
_LN_EPS = 1e-5

# Single-buffer constant-index (weight/bias/LN) blocks; set to [None] to fall
# back to the default double-buffered pipeline if Buffered(1) is unsupported.
_CONST_WEIGHT_BUFFERING = [pl.Buffered(1)]


def _round_up(v, m):
    return ((v + m - 1) // m) * m


@functools.lru_cache(maxsize=None)
def _vmem_limit():
    """Generation-aware VMEM budget: ~75% of physical, capped at 96 MiB."""
    cap = 128 * 1024 * 1024
    try:
        cap = int(pltpu.get_tpu_info().vmem_capacity_bytes)
    except Exception:
        pass
    return min((cap * 3) // 4, 96 * 1024 * 1024)


def _const_spec(shape):
    """BlockSpec for an array whose block index never changes (weights etc.)."""
    ndim = len(shape)
    idx = lambda g: (0,) * ndim
    mode = _CONST_WEIGHT_BUFFERING[0]
    if mode is None:
        return pl.BlockSpec(shape, idx)
    return pl.BlockSpec(shape, idx, pipeline_mode=mode)


def _pick_row_tile(n_rows, max_tile=512):
    """One tile if it fits; otherwise roughly-equal tiles that are multiples of 8."""
    n8 = _round_up(n_rows, SUBLANE)
    if n8 <= max_tile:
        return n8
    n_tiles = -(-n8 // max_tile)
    return _round_up(-(-n8 // n_tiles), SUBLANE)


def _pick_seq_batch(batch, seq_pad, target_rows=256):
    """How many sequences to process per grid step (must divide batch)."""
    bt = max(1, min(batch, max(1, target_rows // seq_pad)))
    while batch % bt:
        bt -= 1
    return bt


# ----------------------------------------------------------------------------
# Fused MLP-chain kernel (used for the input projection and the output MLP)
# ----------------------------------------------------------------------------

def _mlp_chain_kernel(x_ref, *rest, num_layers):
    """h = x; for each layer: h = h @ W + b (ReLU between layers, not after last)."""
    o_ref = rest[-1]
    h = x_ref[...].astype(jnp.float32)
    for i in range(num_layers):
        w_ref, b_ref = rest[2 * i], rest[2 * i + 1]
        h = jnp.dot(h.astype(jnp.bfloat16), w_ref[...],
                    preferred_element_type=jnp.float32) + b_ref[...]
        if i < num_layers - 1:
            h = jnp.maximum(h, 0.0)
    o_ref[...] = h.astype(o_ref.dtype)


def mlp_chain(x, layers_wb, out_dtype=jnp.float32):
    """x: [N, Din_pad]; layers_wb: list of (W[Din,Dout] bf16, b[1,Dout] f32)."""
    n, d_in = x.shape
    d_out = layers_wb[-1][0].shape[1]
    row_tile = _pick_row_tile(n)
    args = [x]
    in_specs = [pl.BlockSpec((row_tile, d_in), lambda i: (i, 0))]
    for w, b in layers_wb:
        args += [w, b]
        in_specs += [_const_spec(w.shape), _const_spec(b.shape)]
    return pl.pallas_call(
        functools.partial(_mlp_chain_kernel, num_layers=len(layers_wb)),
        out_shape=jax.ShapeDtypeStruct((n, d_out), out_dtype),
        grid=(pl.cdiv(n, row_tile),),
        in_specs=in_specs,
        out_specs=pl.BlockSpec((row_tile, d_out), lambda i: (i, 0)),
        compiler_params=pltpu.CompilerParams(
            dimension_semantics=("parallel",),
            vmem_limit_bytes=_vmem_limit()),
    )(*args)


# ----------------------------------------------------------------------------
# Fused transformer layer kernel (MHA + LN1 + FFN + LN2); Bt sequences / step
# ----------------------------------------------------------------------------

def _masked_layernorm(x, gamma, beta, col_mask, inv_d, eps):
    """LayerNorm over the real columns of a lane-padded [R, Dp] tensor.
    Padded lanes of x are exactly zero by construction, so the mean needs no
    mask; the mask is only applied to (x - mean) for the variance.  Padded
    gamma/beta are zero, so padded output lanes stay exactly zero."""
    mean = jnp.sum(x, axis=-1, keepdims=True) * inv_d
    diff = (x - mean) * col_mask
    var = jnp.sum(diff * diff, axis=-1, keepdims=True) * inv_d
    return ((x - mean) * jax.lax.rsqrt(var + eps)) * gamma + beta


def _transformer_layer_kernel(
        h_ref, mask_ref,
        wqkv_ref, bqkv_ref, wo_ref, bo_ref,
        ln1g_ref, ln1b_ref,
        w1_ref, b1_ref, w2_ref, b2_ref,
        ln2g_ref, ln2b_ref,
        o_ref,
        *, num_heads, seq, bt, dh_real, d_real, eps):
    h = h_ref[...].astype(jnp.float32)                 # [Bt*Sp, Dp], padded lanes == 0
    rows, Dp = h.shape
    dhp = Dp // num_heads                              # padded (lane-aligned) head dim

    col_ids = jax.lax.broadcasted_iota(jnp.int32, (1, Dp), 1)
    col_mask = (col_ids < d_real).astype(jnp.float32)  # [1, Dp]
    inv_d = 1.0 / d_real

    # Fused QKV projection: one MXU pass, lane-dense 3*Dp output.
    hb = h.astype(jnp.bfloat16)
    qkv = jnp.dot(hb, wqkv_ref[...],
                  preferred_element_type=jnp.float32) + bqkv_ref[...]
    q = qkv[:, 0 * Dp:1 * Dp]
    k = qkv[:, 1 * Dp:2 * Dp]
    v = qkv[:, 2 * Dp:3 * Dp]

    scale = 1.0 / (dh_real ** 0.5)
    mask_all = mask_ref[...]                           # [Bt, 8, Sp]; 0 or -1e9 per key

    # Attention scores / softmax / P@V per sequence (each has its own key mask).
    attn_rows = []
    for b in range(bt):                                # static unroll, Bt is small
        rsl = slice(b * seq, (b + 1) * seq)
        qb = q[rsl].astype(jnp.bfloat16)               # [Sp, Dp]
        ktb = k[rsl].astype(jnp.bfloat16).T            # [Dp, Sp]  (ONE transpose / seq)
        vb = v[rsl].astype(jnp.bfloat16)               # [Sp, Dp]
        bias = mask_all[b, 0:1, :]                     # [1, Sp]
        heads = []
        for hi in range(num_heads):                    # static unroll, H is small
            csl = slice(hi * dhp, (hi + 1) * dhp)
            sc = jnp.dot(qb[:, csl], ktb[csl, :],
                         preferred_element_type=jnp.float32) * scale + bias
            sc = sc - jnp.max(sc, axis=-1, keepdims=True)
            p = jnp.exp(sc)
            p = p * pl.reciprocal(jnp.sum(p, axis=-1, keepdims=True), approx=True)
            heads.append(jnp.dot(p.astype(jnp.bfloat16), vb[:, csl],
                                 preferred_element_type=jnp.float32))  # [Sp, dhp]
        attn_rows.append(jnp.concatenate(heads, axis=-1))               # [Sp, Dp]
    attn = attn_rows[0] if bt == 1 else jnp.concatenate(attn_rows, axis=0)

    # Single full-depth (K = Dp) output projection for all heads & sequences.
    attn = jnp.dot(attn.astype(jnp.bfloat16), wo_ref[...],
                   preferred_element_type=jnp.float32) + bo_ref[...]

    h1 = _masked_layernorm(h + attn, ln1g_ref[...], ln1b_ref[...],
                           col_mask, inv_d, eps)

    ff = jnp.dot(h1.astype(jnp.bfloat16), w1_ref[...],
                 preferred_element_type=jnp.float32) + b1_ref[...]
    ff = jnp.maximum(ff, 0.0)
    ff = jnp.dot(ff.astype(jnp.bfloat16), w2_ref[...],
                 preferred_element_type=jnp.float32) + b2_ref[...]

    h2 = _masked_layernorm(h1 + ff, ln2g_ref[...], ln2b_ref[...],
                           col_mask, inv_d, eps)
    o_ref[...] = h2.astype(o_ref.dtype)


def transformer_layer(h, mask_b, layer, *, batch, seq, bt, num_heads, dh_real,
                      d_real, eps=_LN_EPS):
    """h: [batch*seq, Dp] (bf16); mask_b: [batch, 8, seq] additive key mask (f32)."""
    n, dp = h.shape
    rows = bt * seq
    wqkv, bqkv = layer["wqkv"]
    wo, bo = layer["wo"]
    w1, b1 = layer["ffn1"]
    w2, b2 = layer["ffn2"]

    kernel = functools.partial(_transformer_layer_kernel, num_heads=num_heads,
                               seq=seq, bt=bt, dh_real=dh_real, d_real=d_real,
                               eps=eps)
    return pl.pallas_call(
        kernel,
        out_shape=jax.ShapeDtypeStruct((n, dp), jnp.bfloat16),
        grid=(batch // bt,),
        in_specs=[
            pl.BlockSpec((rows, dp), lambda g: (g, 0)),
            pl.BlockSpec((bt, 8, seq), lambda g: (g, 0, 0)),
            _const_spec(wqkv.shape), _const_spec(bqkv.shape),
            _const_spec(wo.shape), _const_spec(bo.shape),
            _const_spec(layer["ln1_g"].shape), _const_spec(layer["ln1_b"].shape),
            _const_spec(w1.shape), _const_spec(b1.shape),
            _const_spec(w2.shape), _const_spec(b2.shape),
            _const_spec(layer["ln2_g"].shape), _const_spec(layer["ln2_b"].shape),
        ],
        out_specs=pl.BlockSpec((rows, dp), lambda g: (g, 0)),
        compiler_params=pltpu.CompilerParams(
            dimension_semantics=("parallel",),
            vmem_limit_bytes=_vmem_limit()),
    )(h, mask_b, wqkv, bqkv, wo, bo,
      layer["ln1_g"], layer["ln1_b"], w1, b1, w2, b2,
      layer["ln2_g"], layer["ln2_b"])


# ----------------------------------------------------------------------------
# Parameter init (real dims) + zero-padding to lane-dense kernel layout
# ----------------------------------------------------------------------------

def _dense_init(key, d_in, d_out):
    k1, k2 = jax.random.split(key)
    s = 1.0 / jnp.sqrt(jnp.float32(d_in))
    w = jax.random.uniform(k1, (d_in, d_out), jnp.float32, -s, s)
    b = jax.random.uniform(k2, (d_out,), jnp.float32, -s, s)
    return w, b


def _pad_wb(w, b, rows_pad, cols_pad, row_idx=None, col_idx=None):
    """Scatter real (W, b) into zero-padded arrays; W stored bf16, b f32 [1, cols_pad]."""
    d_in, d_out = w.shape
    ri = jnp.arange(d_in) if row_idx is None else row_idx
    ci = jnp.arange(d_out) if col_idx is None else col_idx
    wp = jnp.zeros((rows_pad, cols_pad), jnp.float32).at[ri[:, None], ci[None, :]].set(w)
    bp = jnp.zeros((1, cols_pad), jnp.float32).at[0, ci].set(b)
    return wp.astype(jnp.bfloat16), bp


def init_params(key, input_dim, output_dim, hidden_dim, num_layers,
                mlp_hidden_layers_dims, num_heads):
    D = hidden_dim
    dh = D // num_heads
    ffn = 2 * D
    Fp = _round_up(input_dim, LANE)
    Dp = _round_up(D, LANE)
    dhp = Dp // num_heads                     # padded per-head width (lane aligned)
    FFp = _round_up(ffn, LANE)
    out2 = 2 * output_dim
    OUTp = _round_up(out2, LANE)

    # Real column j of Wq/Wk/Wv -> padded column head*dhp + (j % dh).
    head_cols = (jnp.arange(D) // dh) * dhp + (jnp.arange(D) % dh)

    keys = jax.random.split(key, 2 + num_layers)
    w, b = _dense_init(keys[0], input_dim, D)
    params = {
        "meta": dict(D=D, Dp=Dp, dh=dh, H=num_heads, Fp=Fp,
                     input_dim=input_dim, out_dim=output_dim),
        "in_proj": _pad_wb(w, b, Fp, Dp),
        "layers": [],
    }
    for l in range(num_layers):
        lk = jax.random.split(keys[1 + l], 6)
        wq, bq = _dense_init(lk[0], D, D)
        wk, bk = _dense_init(lk[1], D, D)
        wv, bv = _dense_init(lk[2], D, D)
        wo, bo = _dense_init(lk[3], D, D)
        w1, b1 = _dense_init(lk[4], D, ffn)
        w2, b2 = _dense_init(lk[5], ffn, D)
        wq_p, bq_p = _pad_wb(wq, bq, Dp, Dp, col_idx=head_cols)
        wk_p, bk_p = _pad_wb(wk, bk, Dp, Dp, col_idx=head_cols)
        wv_p, bv_p = _pad_wb(wv, bv, Dp, Dp, col_idx=head_cols)
        # Packed QKV weight: one [Dp, 3*Dp] matmul per layer instead of three.
        wqkv = jnp.concatenate([wq_p, wk_p, wv_p], axis=1)
        bqkv = jnp.concatenate([bq_p, bk_p, bv_p], axis=1)
        params["layers"].append({
            "wqkv": (wqkv, bqkv),
            "wo": _pad_wb(wo, bo, Dp, Dp, row_idx=head_cols),
            "ln1_g": jnp.zeros((1, Dp), jnp.float32).at[0, :D].set(1.0),
            "ln1_b": jnp.zeros((1, Dp), jnp.float32),
            "ffn1": _pad_wb(w1, b1, Dp, FFp),
            "ffn2": _pad_wb(w2, b2, FFp, Dp),
            "ln2_g": jnp.zeros((1, Dp), jnp.float32).at[0, :D].set(1.0),
            "ln2_b": jnp.zeros((1, Dp), jnp.float32),
        })

    dims = [D] + list(mlp_hidden_layers_dims) + [out2]
    pdims = [Dp] + [_round_up(d, LANE) for d in mlp_hidden_layers_dims] + [OUTp]
    ok = jax.random.split(keys[-1], len(dims) - 1)
    params["out_mlp"] = []
    for i in range(len(dims) - 1):
        w, b = _dense_init(ok[i], dims[i], dims[i + 1])
        params["out_mlp"].append(_pad_wb(w, b, pdims[i], pdims[i + 1]))
    return params


# ----------------------------------------------------------------------------
# Forward pass
# ----------------------------------------------------------------------------

def flat_transformer_mean_log_scale_forward(params, x, adj_list, edge_batch_idx,
                                            masked_elements):
    """Returns (out_mean, out_log_scale), each [B, S, output_dim]."""
    del adj_list, edge_batch_idx                       # unused in the reference forward
    meta = params["meta"]
    B, S, F = x.shape
    Sp = _round_up(S, SUBLANE)
    Fp = meta["Fp"]
    out_dim = meta["out_dim"]

    # Zero-pad features to 128 lanes and sequence to a multiple of 8 sublanes.
    xp = jnp.zeros((B, Sp, Fp), jnp.float32).at[:, :S, :F].set(x.astype(jnp.float32))
    x2 = xp.reshape(B * Sp, Fp)

    # masked_elements: True = padding token -> excluded as attention key.
    mpad = jnp.ones((B, Sp), dtype=bool).at[:, :S].set(masked_elements)
    mask_bias = jnp.where(mpad, jnp.float32(-1e9), jnp.float32(0.0))
    mask_b = jnp.tile(mask_bias[:, None, :], (1, 8, 1))   # [B, 8, Sp] (sublane-safe)

    bt = _pick_seq_batch(B, Sp)                           # sequences per grid step

    # Residual stream carried between layer kernels as bf16 (HBM traffic /2);
    # all LN / softmax / bias math is f32 inside the kernels.
    h = mlp_chain(x2, [params["in_proj"]], out_dtype=jnp.bfloat16)   # [B*Sp, Dp]
    for layer in params["layers"]:
        h = transformer_layer(h, mask_b, layer, batch=B, seq=Sp, bt=bt,
                              num_heads=meta["H"], dh_real=meta["dh"],
                              d_real=meta["D"])
    out = mlp_chain(h, params["out_mlp"], out_dtype=jnp.float32)     # [B*Sp, OUTp]

    out = out.reshape(B, Sp, -1)[:, :S, :2 * out_dim]
    out_mean = out[..., :out_dim]                         # torch.chunk(out, 2, dim=-1)[0]
    out_log_scale = out[..., out_dim:]                    # torch.chunk(out, 2, dim=-1)[1]
    return out_mean, out_log_scale


# ----------------------------------------------------------------------------
# Demo
# ----------------------------------------------------------------------------

if __name__ == "__main__":
    B, S = 2, 8
    input_dim, output_dim, hidden_dim = 16, 8, 32
    num_transformer_layers = 2
    mlp_hidden_layers_dims = (64,)
    num_heads = 4

    root = jax.random.PRNGKey(0)
    kp, kx = jax.random.split(root)
    params = init_params(kp, input_dim, output_dim, hidden_dim,
                         num_transformer_layers, mlp_hidden_layers_dims, num_heads)

    x = jax.random.normal(kx, (B, S, input_dim), dtype=jnp.float32)
    masked_elements = jnp.array(
        [[False] * S,
         [False] * (S - 2) + [True] * 2], dtype=bool)     # pad last 2 tokens of batch 1
    adj_list = jnp.zeros((1, 2), dtype=jnp.int32)         # unused by forward
    edge_batch_idx = jnp.zeros((1,), dtype=jnp.int32)     # unused by forward

    def run():
        fwd = jax.jit(functools.partial(flat_transformer_mean_log_scale_forward,
                                        params))
        out = fwd(x, adj_list, edge_batch_idx, masked_elements)
        jax.block_until_ready(out)
        return out

    try:
        out_mean, out_log_scale = run()
    except Exception:
        # Fall back to default (double-buffered) weight pipelining if this
        # JAX/Mosaic version does not accept pl.Buffered(1).
        _CONST_WEIGHT_BUFFERING[0] = None
        out_mean, out_log_scale = run()

    assert out_mean.shape == (B, S, output_dim)
    assert out_log_scale.shape == (B, S, output_dim)
    assert bool(jnp.all(jnp.isfinite(out_mean)))
    assert bool(jnp.all(jnp.isfinite(out_log_scale)))
    print("KERNEL_OK")
</pallas_src>

<mosaic_0001>
module attributes {stable_mosaic.version = 11 : i64} {
  func.func @_mlp_chain_kernel(%arg0: i32, %arg1: memref<16x128xf32, #tpu.memory_space<vmem>>, %arg2: memref<128x128xbf16, #tpu.memory_space<vmem>>, %arg3: memref<1x128xf32, #tpu.memory_space<vmem>>, %arg4: memref<16x128xbf16, #tpu.memory_space<vmem>>) attributes {dimension_semantics = [#tpu.dimension_semantics<parallel>], iteration_bounds = array<i64: 1>, scalar_prefetch = 0 : i64, scratch_operands = 0 : i64, tpu.core_type = #tpu.core_type<tc>, window_params = [{transform_indices = @transform_0, window_bounds = array<i64: 16, 128>}, {pipeline_mode = #tpu.pipeline_mode<synchronous>, transform_indices = @transform_1, window_bounds = array<i64: 128, 128>}, {pipeline_mode = #tpu.pipeline_mode<synchronous>, transform_indices = @transform_2, window_bounds = array<i64: 1, 128>}, {transform_indices = @transform_3, window_bounds = array<i64: 16, 128>}]} {
    %c0 = arith.constant 0 : index
    %c0_0 = arith.constant 0 : index
    %0 = vector.load %arg1[%c0, %c0_0] : memref<16x128xf32, #tpu.memory_space<vmem>>, vector<16x128xf32>
    %1 = arith.truncf %0 : vector<16x128xf32> to vector<16x128xbf16>
    %c0_1 = arith.constant 0 : index
    %c0_2 = arith.constant 0 : index
    %2 = vector.load %arg2[%c0_1, %c0_2] : memref<128x128xbf16, #tpu.memory_space<vmem>>, vector<128x128xbf16>
    %cst = arith.constant dense<0.000000e+00> : vector<16x128xf32>
    %3 = tpu.matmul %1, %2, %cst {dimension_numbers = #tpu.dot_dimension_numbers<[1], [0], [0], [1], [0, 0, 1, 1], [], []>} : vector<16x128xbf16>, vector<128x128xbf16>, vector<16x128xf32> -> vector<16x128xf32>
    %c0_3 = arith.constant 0 : index
    %c0_4 = arith.constant 0 : index
    %4 = vector.load %arg3[%c0_3, %c0_4] : memref<1x128xf32, #tpu.memory_space<vmem>>, vector<1x128xf32>
    %5 = vector.broadcast %4 : vector<1x128xf32> to vector<16x128xf32>
    %6 = arith.addf %3, %5 : vector<16x128xf32>
    %7 = arith.truncf %6 : vector<16x128xf32> to vector<16x128xbf16>
    %c0_5 = arith.constant 0 : index
    %c0_6 = arith.constant 0 : index
    %8 = vector.load %arg4[%c0_5, %c0_6] : memref<16x128xbf16, #tpu.memory_space<vmem>>, vector<16x128xbf16>
    tpu.vector_store %arg4[%c0_5, %c0_6], %7 {strides = array<i32>} : memref<16x128xbf16, #tpu.memory_space<vmem>>, vector<16x128xbf16>,
    return
  }
  func.func @transform_0(%arg0: i32) -> (i32, i32) {
    %c0_i32 = arith.constant 0 : i32
    %c0_i32_0 = arith.constant 0 : i32
    return %arg0, %c0_i32 : i32, i32
  }
  func.func @transform_1(%arg0: i32) -> (i32, i32) {
    %c0_i32 = arith.constant 0 : i32
    %c0_i32_0 = arith.constant 0 : i32
    %c0_i32_1 = arith.constant 0 : i32
    return %c0_i32, %c0_i32_0 : i32, i32
  }
  func.func @transform_2(%arg0: i32) -> (i32, i32) {
    %c0_i32 = arith.constant 0 : i32
    %c0_i32_0 = arith.constant 0 : i32
    %c0_i32_1 = arith.constant 0 : i32
    return %c0_i32, %c0_i32_0 : i32, i32
  }
  func.func @transform_3(%arg0: i32) -> (i32, i32) {
    %c0_i32 = arith.constant 0 : i32
    %c0_i32_0 = arith.constant 0 : i32
    return %arg0, %c0_i32 : i32, i32
  }
}

module attributes {stable_mosaic.version = 11 : i64} {
  func.func @_mlp_chain_kernel(%arg0: i32, %arg1: memref<16x128xbf16, #tpu.memory_space<vmem>>, %arg2: memref<128x128xbf16, #tpu.memory_space<vmem>>, %arg3: memref<1x128xf32, #tpu.memory_space<vmem>>, %arg4: memref<128x128xbf16, #tpu.memory_space<vmem>>, %arg5: memref<1x128xf32, #tpu.memory_space<vmem>>, %arg6: memref<16x128xf32, #tpu.memory_space<vmem>>) attributes {dimension_semantics = [#tpu.dimension_semantics<parallel>], iteration_bounds = array<i64: 1>, scalar_prefetch = 0 : i64, scratch_operands = 0 : i64, tpu.core_type = #tpu.core_type<tc>, window_params = [{transform_indices = @transform_0, window_bounds = array<i64: 16, 128>}, {pipeline_mode = #tpu.pipeline_mode<synchronous>, transform_indices = @transform_1, window_bounds = array<i64: 128, 128>}, {pipeline_mode = #tpu.pipeline_mode<synchronous>, transform_indices = @transform_2, window_bounds = array<i64: 1, 128>}, {pipeline_mode = #tpu.pipeline_mode<synchronous>, transform_indices = @transform_3, window_bounds = array<i64: 128, 128>}, {pipeline_mode = #tpu.pipeline_mode<synchronous>, transform_indices = @transform_4, window_bounds = array<i64: 1, 128>}, {transform_indices = @transform_5, window_bounds = array<i64: 16, 128>}]} {
    %c0 = arith.constant 0 : index
    %c0_0 = arith.constant 0 : index
    %0 = vector.load %arg1[%c0, %c0_0] : memref<16x128xbf16, #tpu.memory_space<vmem>>, vector<16x128xbf16>
    %1 = arith.extf %0 : vector<16x128xbf16> to vector<16x128xf32>
    %2 = arith.truncf %1 : vector<16x128xf32> to vector<16x128xbf16>
    %c0_1 = arith.constant 0 : index
    %c0_2 = arith.constant 0 : index
    %3 = vector.load %arg2[%c0_1, %c0_2] : memref<128x128xbf16, #tpu.memory_space<vmem>>, vector<128x128xbf16>
    %cst = arith.constant dense<0.000000e+00> : vector<16x128xf32>
    %4 = tpu.matmul %2, %3, %cst {dimension_numbers = #tpu.dot_dimension_numbers<[1], [0], [0], [1], [0, 0, 1, 1], [], []>} : vector<16x128xbf16>, vector<128x128xbf16>, vector<16x128xf32> -> vector<16x128xf32>
    %c0_3 = arith.constant 0 : index
    %c0_4 = arith.constant 0 : index
    %5 = vector.load %arg3[%c0_3, %c0_4] : memref<1x128xf32, #tpu.memory_space<vmem>>, vector<1x128xf32>
    %6 = vector.broadcast %5 : vector<1x128xf32> to vector<16x128xf32>
    %7 = arith.addf %4, %6 : vector<16x128xf32>
    %cst_5 = arith.constant 0.000000e+00 : f32
    %8 = vector.broadcast %cst_5 : f32 to vector<16x128xf32>
    %9 = arith.maximumf %7, %8 : vector<16x128xf32>
    %10 = arith.truncf %9 : vector<16x128xf32> to vector<16x128xbf16>
    %c0_6 = arith.constant 0 : index
    %c0_7 = arith.constant 0 : index
    %11 = vector.load %arg4[%c0_6, %c0_7] : memref<128x128xbf16, #tpu.memory_space<vmem>>, vector<128x128xbf16>
    %cst_8 = arith.constant dense<0.000000e+00> : vector<16x128xf32>
    %12 = tpu.matmul %10, %11, %cst_8 {dimension_numbers = #tpu.dot_dimension_numbers<[1], [0], [0], [1], [0, 0, 1, 1], [], []>} : vector<16x128xbf16>, vector<128x128xbf16>, vector<16x128xf32> -> vector<16x128xf32>
    %c0_9 = arith.constant 0 : index
    %c0_10 = arith.constant 0 : index
    %13 = vector.load %arg5[%c0_9, %c0_10] : memref<1x128xf32, #tpu.memory_space<vmem>>, vector<1x128xf32>
    %14 = vector.broadcast %13 : vector<1x128xf32> to vector<16x128xf32>
    %15 = arith.addf %12, %14 : vector<16x128xf32>
    %c0_11 = arith.constant 0 : index
    %c0_12 = arith.constant 0 : index
    %16 = vector.load %arg6[%c0_11, %c0_12] : memref<16x128xf32, #tpu.memory_space<vmem>>, vector<16x128xf32>
    tpu.vector_store %arg6[%c0_11, %c0_12], %15 {strides = array<i32>} : memref<16x128xf32, #tpu.memory_space<vmem>>, vector<16x128xf32>,
    return
  }
  func.func @transform_0(%arg0: i32) -> (i32, i32) {
    %c0_i32 = arith.constant 0 : i32
    %c0_i32_0 = arith.constant 0 : i32
    return %arg0, %c0_i32 : i32, i32
  }
  func.func @transform_1(%arg0: i32) -> (i32, i32) {
    %c0_i32 = arith.constant 0 : i32
    %c0_i32_0 = arith.constant 0 : i32
    %c0_i32_1 = arith.constant 0 : i32
    return %c0_i32, %c0_i32_0 : i32, i32
  }
  func.func @transform_2(%arg0: i32) -> (i32, i32) {
    %c0_i32 = arith.constant 0 : i32
    %c0_i32_0 = arith.constant 0 : i32
    %c0_i32_1 = arith.constant 0 : i32
    return %c0_i32, %c0_i32_0 : i32, i32
  }
  func.func @transform_3(%arg0: i32) -> (i32, i32) {
    %c0_i32 = arith.constant 0 : i32
    %c0_i32_0 = arith.constant 0 : i32
    %c0_i32_1 = arith.constant 0 : i32
    return %c0_i32, %c0_i32_0 : i32, i32
  }
  func.func @transform_4(%arg0: i32) -> (i32, i32) {
    %c0_i32 = arith.constant 0 : i32
    %c0_i32_0 = arith.constant 0 : i32
    %c0_i32_1 = arith.constant 0 : i32
    return %c0_i32, %c0_i32_0 : i32, i32
  }
  func.func @transform_5(%arg0: i32) -> (i32, i32) {
    %c0_i32 = arith.constant 0 : i32
    %c0_i32_0 = arith.constant 0 : i32
    return %arg0, %c0_i32 : i32, i32
  }
}

module attributes {stable_mosaic.version = 11 : i64} {
  func.func @_transformer_layer_kernel(%arg0: i32, %arg1: memref<16x128xbf16, #tpu.memory_space<vmem>>, %arg2: memref<2x8x8xf32, #tpu.memory_space<vmem>>, %arg3: memref<128x384xbf16, #tpu.memory_space<vmem>>, %arg4: memref<1x384xf32, #tpu.memory_space<vmem>>, %arg5: memref<128x128xbf16, #tpu.memory_space<vmem>>, %arg6: memref<1x128xf32, #tpu.memory_space<vmem>>, %arg7: memref<1x128xf32, #tpu.memory_space<vmem>>, %arg8: memref<1x128xf32, #tpu.memory_space<vmem>>, %arg9: memref<128x128xbf16, #tpu.memory_space<vmem>>, %arg10: memref<1x128xf32, #tpu.memory_space<vmem>>, %arg11: memref<128x128xbf16, #tpu.memory_space<vmem>>, %arg12: memref<1x128xf32, #tpu.memory_space<vmem>>, %arg13: memref<1x128xf32, #tpu.memory_space<vmem>>, %arg14: memref<1x128xf32, #tpu.memory_space<vmem>>, %arg15: memref<16x128xbf16, #tpu.memory_space<vmem>>) attributes {dimension_semantics = [#tpu.dimension_semantics<parallel>], iteration_bounds = array<i64: 1>, scalar_prefetch = 0 : i64, scratch_operands = 0 : i64, tpu.core_type = #tpu.core_type<tc>, window_params = [{transform_indices = @transform_0, window_bounds = array<i64: 16, 128>}, {transform_indices = @transform_1, window_bounds = array<i64: 2, 8, 8>}, {pipeline_mode = #tpu.pipeline_mode<synchronous>, transform_indices = @transform_2, window_bounds = array<i64: 128, 384>}, {pipeline_mode = #tpu.pipeline_mode<synchronous>, transform_indices = @transform_3, window_bounds = array<i64: 1, 384>}, {pipeline_mode = #tpu.pipeline_mode<synchronous>, transform_indices = @transform_4, window_bounds = array<i64: 128, 128>}, {pipeline_mode = #tpu.pipeline_mode<synchronous>, transform_indices = @transform_5, window_bounds = array<i64: 1, 128>}, {pipeline_mode = #tpu.pipeline_mode<synchronous>, transform_indices = @transform_6, window_bounds = array<i64: 1, 128>}, {pipeline_mode = #tpu.pipeline_mode<synchronous>, transform_indices = @transform_7, window_bounds = array<i64: 1, 128>}, {pipeline_mode = #tpu.pipeline_mode<synchronous>, transform_indices = @transform_8, window_bounds = array<i64: 128, 128>}, {pipeline_mode = #tpu.pipeline_mode<synchronous>, transform_indices = @transform_9, window_bounds = array<i64: 1, 128>}, {pipeline_mode = #tpu.pipeline_mode<synchronous>, transform_indices = @transform_10, window_bounds = array<i64: 128, 128>}, {pipeline_mode = #tpu.pipeline_mode<synchronous>, transform_indices = @transform_11, window_bounds = array<i64: 1, 128>}, {pipeline_mode = #tpu.pipeline_mode<synchronous>, transform_indices = @transform_12, window_bounds = array<i64: 1, 128>}, {pipeline_mode = #tpu.pipeline_mode<synchronous>, transform_indices = @transform_13, window_bounds = array<i64: 1, 128>}, {transform_indices = @transform_14, window_bounds = array<i64: 16, 128>}]} {
    %c0 = arith.constant 0 : index
    %c0_0 = arith.constant 0 : index
    %0 = vector.load %arg1[%c0, %c0_0] : memref<16x128xbf16, #tpu.memory_space<vmem>>, vector<16x128xbf16>
    %1 = arith.extf %0 : vector<16x128xbf16> to vector<16x128xf32>
    %2 = tpu.iota {dimensions = array<i32: 1>} : vector<1x128xi32>
    %c32_i32 = arith.constant 32 : i32
    %3 = vector.broadcast %c32_i32 : i32 to vector<1x128xi32>
    %4 = arith.cmpi slt, %2, %3 : vector<1x128xi32>
    %5 = arith.extui %4 : vector<1x128xi1> to vector<1x128xi32>
    %6 = arith.sitofp %5 : vector<1x128xi32> to vector<1x128xf32>
    %7 = arith.truncf %1 : vector<16x128xf32> to vector<16x128xbf16>
    %c0_1 = arith.constant 0 : index
    %c0_2 = arith.constant 0 : index
    %8 = vector.load %arg3[%c0_1, %c0_2] : memref<128x384xbf16, #tpu.memory_space<vmem>>, vector<128x384xbf16>
    %cst = arith.constant dense<0.000000e+00> : vector<16x384xf32>
    %9 = tpu.matmul %7, %8, %cst {dimension_numbers = #tpu.dot_dimension_numbers<[1], [0], [0], [1], [0, 0, 1, 1], [], []>} : vector<16x128xbf16>, vector<128x384xbf16>, vector<16x384xf32> -> vector<16x384xf32>
    %c0_3 = arith.constant 0 : index
    %c0_4 = arith.constant 0 : index
    %10 = vector.load %arg4[%c0_3, %c0_4] : memref<1x384xf32, #tpu.memory_space<vmem>>, vector<1x384xf32>
    %11 = vector.broadcast %10 : vector<1x384xf32> to vector<16x384xf32>
    %12 = arith.addf %9, %11 : vector<16x384xf32>
    %13 = vector.extract_strided_slice %12 {offsets = [0, 0], sizes = [16, 128], strides = [1, 1]} : vector<16x384xf32> to vector<16x128xf32>
    %14 = vector.extract_strided_slice %12 {offsets = [0, 128], sizes = [16, 128], strides = [1, 1]} : vector<16x384xf32> to vector<16x128xf32>
    %15 = vector.extract_strided_slice %12 {offsets = [0, 256], sizes = [16, 128], strides = [1, 1]} : vector<16x384xf32> to vector<16x128xf32>
    %c0_5 = arith.constant 0 : index
    %c0_6 = arith.constant 0 : index
    %c0_7 = arith.constant 0 : index
    %16 = vector.load %arg2[%c0_5, %c0_6, %c0_7] : memref<2x8x8xf32, #tpu.memory_space<vmem>>, vector<2x8x8xf32>
    %17 = vector.extract_strided_slice %13 {offsets = [0, 0], sizes = [8, 128], strides = [1, 1]} : vector<16x128xf32> to vector<8x128xf32>
    %18 = arith.truncf %17 : vector<8x128xf32> to vector<8x128xbf16>
    %19 = vector.extract_strided_slice %14 {offsets = [0, 0], sizes = [8, 128], strides = [1, 1]} : vector<16x128xf32> to vector<8x128xf32>
    %20 = arith.truncf %19 : vector<8x128xf32> to vector<8x128xbf16>
    %21 = tpu.transpose %20, [1, 0] : vector<8x128xbf16> -> vector<128x8xbf16>
    %22 = vector.extract_strided_slice %15 {offsets = [0, 0], sizes = [8, 128], strides = [1, 1]} : vector<16x128xf32> to vector<8x128xf32>
    %23 = arith.truncf %22 : vector<8x128xf32> to vector<8x128xbf16>
    %24 = vector.extract_strided_slice %16 {offsets = [0, 0, 0], sizes = [1, 1, 8], strides = [1, 1, 1]} : vector<2x8x8xf32> to vector<1x1x8xf32>
    %25 = vector.shape_cast %24 : vector<1x1x8xf32> to vector<1x8xf32>
    %26 = vector.extract_strided_slice %18 {offsets = [0, 0], sizes = [8, 32], strides = [1, 1]} : vector<8x128xbf16> to vector<8x32xbf16>
    %27 = vector.extract_strided_slice %21 {offsets = [0, 0], sizes = [32, 8], strides = [1, 1]} : vector<128x8xbf16> to vector<32x8xbf16>
    %cst_8 = arith.constant dense<0.000000e+00> : vector<8x8xf32>
    %28 = tpu.matmul %26, %27, %cst_8 {dimension_numbers = #tpu.dot_dimension_numbers<[1], [0], [0], [1], [0, 0, 1, 1], [], []>} : vector<8x32xbf16>, vector<32x8xbf16>, vector<8x8xf32> -> vector<8x8xf32>
    %cst_9 = arith.constant 0.353553385 : f32
    %29 = vector.broadcast %cst_9 : f32 to vector<8x8xf32>
    %30 = arith.mulf %28, %29 : vector<8x8xf32>
    %31 = vector.broadcast %25 : vector<1x8xf32> to vector<8x8xf32>
    %32 = arith.addf %30, %31 : vector<8x8xf32>
    %cst_10 = arith.constant dense<0xFF800000> : vector<8xf32>
    %33 = vector.multi_reduction <maximumf>, %32, %cst_10 [1] : vector<8x8xf32> to vector<8xf32>
    %34 = vector.shape_cast %33 : vector<8xf32> to vector<8x1xf32>
    %35 = vector.broadcast %34 : vector<8x1xf32> to vector<8x8xf32>
    %36 = arith.subf %32, %35 : vector<8x8xf32>
    %37 = math.exp %36 : vector<8x8xf32>
    %cst_11 = arith.constant dense<0.000000e+00> : vector<8xf32>
    %38 = vector.multi_reduction <add>, %37, %cst_11 [1] : vector<8x8xf32> to vector<8xf32>
    %39 = vector.shape_cast %38 : vector<8xf32> to vector<8x1xf32>
    %40 = tpu.reciprocal %39 {approx = true} : vector<8x1xf32> -> vector<8x1xf32>
    %41 = vector.broadcast %40 : vector<8x1xf32> to vector<8x8xf32>
    %42 = arith.mulf %37, %41 : vector<8x8xf32>
    %43 = arith.truncf %42 : vector<8x8xf32> to vector<8x8xbf16>
    %44 = vector.extract_strided_slice %23 {offsets = [0, 0], sizes = [8, 32], strides = [1, 1]} : vector<8x128xbf16> to vector<8x32xbf16>
    %cst_12 = arith.constant dense<0.000000e+00> : vector<8x32xf32>
    %45 = tpu.matmul %43, %44, %cst_12 {dimension_numbers = #tpu.dot_dimension_numbers<[1], [0], [0], [1], [0, 0, 1, 1], [], []>} : vector<8x8xbf16>, vector<8x32xbf16>, vector<8x32xf32> -> vector<8x32xf32>
    %46 = vector.extract_strided_slice %18 {offsets = [0, 32], sizes = [8, 32], strides = [1, 1]} : vector<8x128xbf16> to vector<8x32xbf16>
    %47 = vector.extract_strided_slice %21 {offsets = [32, 0], sizes = [32, 8], strides = [1, 1]} : vector<128x8xbf16> to vector<32x8xbf16>
    %cst_13 = arith.constant dense<0.000000e+00> : vector<8x8xf32>
    %48 = tpu.matmul %46, %47, %cst_13 {dimension_numbers = #tpu.dot_dimension_numbers<[1], [0], [0], [1], [0, 0, 1, 1], [], []>} : vector<8x32xbf16>, vector<32x8xbf16>, vector<8x8xf32> -> vector<8x8xf32>
    %cst_14 = arith.constant 0.353553385 : f32
    %49 = vector.broadcast %cst_14 : f32 to vector<8x8xf32>
    %50 = arith.mulf %48, %49 : vector<8x8xf32>
    %51 = vector.broadcast %25 : vector<1x8xf32> to vector<8x8xf32>
    %52 = arith.addf %50, %51 : vector<8x8xf32>
    %cst_15 = arith.constant dense<0xFF800000> : vector<8xf32>
    %53 = vector.multi_reduction <maximumf>, %52, %cst_15 [1] : vector<8x8xf32> to vector<8xf32>
    %54 = vector.shape_cast %53 : vector<8xf32> to vector<8x1xf32>
    %55 = vector.broadcast %54 : vector<8x1xf32> to vector<8x8xf32>
    %56 = arith.subf %52, %55 : vector<8x8xf32>
    %57 = math.exp %56 : vector<8x8xf32>
    %cst_16 = arith.constant dense<0.000000e+00> : vector<8xf32>
    %58 = vector.multi_reduction <add>, %57, %cst_16 [1] : vector<8x8xf32> to vector<8xf32>
    %59 = vector.shape_cast %58 : vector<8xf32> to vector<8x1xf32>
    %60 = tpu.reciprocal %59 {approx = true} : vector<8x1xf32> -> vector<8x1xf32>
    %61 = vector.broadcast %60 : vector<8x1xf32> to vector<8x8xf32>
    %62 = arith.mulf %57, %61 : vector<8x8xf32>
    %63 = arith.truncf %62 : vector<8x8xf32> to vector<8x8xbf16>
    %64 = vector.extract_strided_slice %23 {offsets = [0, 32], sizes = [8, 32], strides = [1, 1]} : vector<8x128xbf16> to vector<8x32xbf16>
    %cst_17 = arith.constant dense<0.000000e+00> : vector<8x32xf32>
    %65 = tpu.matmul %63, %64, %cst_17 {dimension_numbers = #tpu.dot_dimension_numbers<[1], [0], [0], [1], [0, 0, 1, 1], [], []>} : vector<8x8xbf16>, vector<8x32xbf16>, vector<8x32xf32> -> vector<8x32xf32>
    %66 = vector.extract_strided_slice %18 {offsets = [0, 64], sizes = [8, 32], strides = [1, 1]} : vector<8x128xbf16> to vector<8x32xbf16>
    %67 = vector.extract_strided_slice %21 {offsets = [64, 0], sizes = [32, 8], strides = [1, 1]} : vector<128x8xbf16> to vector<32x8xbf16>
    %cst_18 = arith.constant dense<0.000000e+00> : vector<8x8xf32>
    %68 = tpu.matmul %66, %67, %cst_18 {dimension_numbers = #tpu.dot_dimension_numbers<[1], [0], [0], [1], [0, 0, 1, 1], [], []>} : vector<8x32xbf16>, vector<32x8xbf16>, vector<8x8xf32> -> vector<8x8xf32>
    %cst_19 = arith.constant 0.353553385 : f32
    %69 = vector.broadcast %cst_19 : f32 to vector<8x8xf32>
    %70 = arith.mulf %68, %69 : vector<8x8xf32>
    %71 = vector.broadcast %25 : vector<1x8xf32> to vector<8x8xf32>
    %72 = arith.addf %70, %71 : vector<8x8xf32>
    %cst_20 = arith.constant dense<0xFF800000> : vector<8xf32>
    %73 = vector.multi_reduction <maximumf>, %72, %cst_20 [1] : vector<8x8xf32> to vector<8xf32>
    %74 = vector.shape_cast %73 : vector<8xf32> to vector<8x1xf32>
    %75 = vector.broadcast %74 : vector<8x1xf32> to vector<8x8xf32>
    %76 = arith.subf %72, %75 : vector<8x8xf32>
    %77 = math.exp %76 : vector<8x8xf32>
    %cst_21 = arith.constant dense<0.000000e+00> : vector<8xf32>
    %78 = vector.multi_reduction <add>, %77, %cst_21 [1] : vector<8x8xf32> to vector<8xf32>
    %79 = vector.shape_cast %78 : vector<8xf32> to vector<8x1xf32>
    %80 = tpu.reciprocal %79 {approx = true} : vector<8x1xf32> -> vector<8x1xf32>
    %81 = vector.broadcast %80 : vector<8x1xf32> to vector<8x8xf32>
    %82 = arith.mulf %77, %81 : vector<8x8xf32>
    %83 = arith.truncf %82 : vector<8x8xf32> to vector<8x8xbf16>
    %84 = vector.extract_strided_slice %23 {offsets = [0, 64], sizes = [8, 32], strides = [1, 1]} : vector<8x128xbf16> to vector<8x32xbf16>
    %cst_22 = arith.constant dense<0.000000e+00> : vector<8x32xf32>
    %85 = tpu.matmul %83, %84, %cst_22 {dimension_numbers = #tpu.dot_dimension_numbers<[1], [0], [0], [1], [0, 0, 1, 1], [], []>} : vector<8x8xbf16>, vector<8x32xbf16>, vector<8x32xf32> -> vector<8x32xf32>
    %86 = vector.extract_strided_slice %18 {offsets = [0, 96], sizes = [8, 32], strides = [1, 1]} : vector<8x128xbf16> to vector<8x32xbf16>
    %87 = vector.extract_strided_slice %21 {offsets = [96, 0], sizes = [32, 8], strides = [1, 1]} : vector<128x8xbf16> to vector<32x8xbf16>
    %cst_23 = arith.constant dense<0.000000e+00> : vector<8x8xf32>
    %88 = tpu.matmul %86, %87, %cst_23 {dimension_numbers = #tpu.dot_dimension_numbers<[1], [0], [0], [1], [0, 0, 1, 1], [], []>} : vector<8x32xbf16>, vector<32x8xbf16>, vector<8x8xf32> -> vector<8x8xf32>
    %cst_24 = arith.constant 0.353553385 : f32
    %89 = vector.broadcast %cst_24 : f32 to vector<8x8xf32>
    %90 = arith.mulf %88, %89 : vector<8x8xf32>
    %91 = vector.broadcast %25 : vector<1x8xf32> to vector<8x8xf32>
    %92 = arith.addf %90, %91 : vector<8x8xf32>
    %cst_25 = arith.constant dense<0xFF800000> : vector<8xf32>
    %93 = vector.multi_reduction <maximumf>, %92, %cst_25 [1] : vector<8x8xf32> to vector<8xf32>
    %94 = vector.shape_cast %93 : vector<8xf32> to vector<8x1xf32>
    %95 = vector.broadcast %94 : vector<8x1xf32> to vector<8x8xf32>
    %96 = arith.subf %92, %95 : vector<8x8xf32>
    %97 = math.exp %96 : vector<8x8xf32>
    %cst_26 = arith.constant dense<0.000000e+00> : vector<8xf32>
    %98 = vector.multi_reduction <add>, %97, %cst_26 [1] : vector<8x8xf32> to vector<8xf32>
    %99 = vector.shape_cast %98 : vector<8xf32> to vector<8x1xf32>
    %100 = tpu.reciprocal %99 {approx = true} : vector<8x1xf32> -> vector<8x1xf32>
    %101 = vector.broadcast %100 : vector<8x1xf32> to vector<8x8xf32>
    %102 = arith.mulf %97, %101 : vector<8x8xf32>
    %103 = arith.truncf %102 : vector<8x8xf32> to vector<8x8xbf16>
    %104 = vector.extract_strided_slice %23 {offsets = [0, 96], sizes = [8, 32], strides = [1, 1]} : vector<8x128xbf16> to vector<8x32xbf16>
    %cst_27 = arith.constant dense<0.000000e+00> : vector<8x32xf32>
    %105 = tpu.matmul %103, %104, %cst_27 {dimension_numbers = #tpu.dot_dimension_numbers<[1], [0], [0], [1], [0, 0, 1, 1], [], []>} : vector<8x8xbf16>, vector<8x32xbf16>, vector<8x32xf32> -> vector<8x32xf32>
    %106 = tpu.concatenate %45, %65, %85, %105 in 1 : vector<8x32xf32>, vector<8x32xf32>, vector<8x32xf32>, vector<8x32xf32> -> vector<8x128xf32>
    %107 = vector.extract_strided_slice %13 {offsets = [8, 0], sizes = [8, 128], strides = [1, 1]} : vector<16x128xf32> to vector<8x128xf32>
    %108 = arith.truncf %107 : vector<8x128xf32> to vector<8x128xbf16>
    %109 = vector.extract_strided_slice %14 {offsets = [8, 0], sizes = [8, 128], strides = [1, 1]} : vector<16x128xf32> to vector<8x128xf32>
    %110 = arith.truncf %109 : vector<8x128xf32> to vector<8x128xbf16>
    %111 = tpu.transpose %110, [1, 0] : vector<8x128xbf16> -> vector<128x8xbf16>
    %112 = vector.extract_strided_slice %15 {offsets = [8, 0], sizes = [8, 128], strides = [1, 1]} : vector<16x128xf32> to vector<8x128xf32>
    %113 = arith.truncf %112 : vector<8x128xf32> to vector<8x128xbf16>
    %114 = vector.extract_strided_slice %16 {offsets = [1, 0, 0], sizes = [1, 1, 8], strides = [1, 1, 1]} : vector<2x8x8xf32> to vector<1x1x8xf32>
    %115 = vector.shape_cast %114 : vector<1x1x8xf32> to vector<1x8xf32>
    %116 = vector.extract_strided_slice %108 {offsets = [0, 0], sizes = [8, 32], strides = [1, 1]} : vector<8x128xbf16> to vector<8x32xbf16>
    %117 = vector.extract_strided_slice %111 {offsets = [0, 0], sizes = [32, 8], strides = [1, 1]} : vector<128x8xbf16> to vector<32x8xbf16>
    %cst_28 = arith.constant dense<0.000000e+00> : vector<8x8xf32>
    %118 = tpu.matmul %116, %117, %cst_28 {dimension_numbers = #tpu.dot_dimension_numbers<[1], [0], [0], [1], [0, 0, 1, 1], [], []>} : vector<8x32xbf16>, vector<32x8xbf16>, vector<8x8xf32> -> vector<8x8xf32>
    %cst_29 = arith.constant 0.353553385 : f32
    %119 = vector.broadcast %cst_29 : f32 to vector<8x8xf32>
    %120 = arith.mulf %118, %119 : vector<8x8xf32>
    %121 = vector.broadcast %115 : vector<1x8xf32> to vector<8x8xf32>
    %122 = arith.addf %120, %121 : vector<8x8xf32>
    %cst_30 = arith.constant dense<0xFF800000> : vector<8xf32>
    %123 = vector.multi_reduction <maximumf>, %122, %cst_30 [1] : vector<8x8xf32> to vector<8xf32>
    %124 = vector.shape_cast %123 : vector<8xf32> to vector<8x1xf32>
    %125 = vector.broadcast %124 : vector<8x1xf32> to vector<8x8xf32>
    %126 = arith.subf %122, %125 : vector<8x8xf32>
    %127 = math.exp %126 : vector<8x8xf32>
    %cst_31 = arith.constant dense<0.000000e+00> : vector<8xf32>
    %128 = vector.multi_reduction <add>, %127, %cst_31 [1] : vector<8x8xf32> to vector<8xf32>
    %129 = vector.shape_cast %128 : vector<8xf32> to vector<8x1xf32>
    %130 = tpu.reciprocal %129 {approx = true} : vector<8x1xf32> -> vector<8x1xf32>
    %131 = vector.broadcast %130 : vector<8x1xf32> to vector<8x8xf32>
    %132 = arith.mulf %127, %131 : vector<8x8xf32>
    %133 = arith.truncf %132 : vector<8x8xf32> to vector<8x8xbf16>
    %134 = vector.extract_strided_slice %113 {offsets = [0, 0], sizes = [8, 32], strides = [1, 1]} : vector<8x128xbf16> to vector<8x32xbf16>
    %cst_32 = arith.constant dense<0.000000e+00> : vector<8x32xf32>
    %135 = tpu.matmul %133, %134, %cst_32 {dimension_numbers = #tpu.dot_dimension_numbers<[1], [0], [0], [1], [0, 0, 1, 1], [], []>} : vector<8x8xbf16>, vector<8x32xbf16>, vector<8x32xf32> -> vector<8x32xf32>
    %136 = vector.extract_strided_slice %108 {offsets = [0, 32], sizes = [8, 32], strides = [1, 1]} : vector<8x128xbf16> to vector<8x32xbf16>
    %137 = vector.extract_strided_slice %111 {offsets = [32, 0], sizes = [32, 8], strides = [1, 1]} : vector<128x8xbf16> to vector<32x8xbf16>
    %cst_33 = arith.constant dense<0.000000e+00> : vector<8x8xf32>
    %138 = tpu.matmul %136, %137, %cst_33 {dimension_numbers = #tpu.dot_dimension_numbers<[1], [0], [0], [1], [0, 0, 1, 1], [], []>} : vector<8x32xbf16>, vector<32x8xbf16>, vector<8x8xf32> -> vector<8x8xf32>
    %cst_34 = arith.constant 0.353553385 : f32
    %139 = vector.broadcast %cst_34 : f32 to vector<8x8xf32>
    %140 = arith.mulf %138, %139 : vector<8x8xf32>
    %141 = vector.broadcast %115 : vector<1x8xf32> to vector<8x8xf32>
    %142 = arith.addf %140, %141 : vector<8x8xf32>
    %cst_35 = arith.constant dense<0xFF800000> : vector<8xf32>
    %143 = vector.multi_reduction <maximumf>, %142, %cst_35 [1] : vector<8x8xf32> to vector<8xf32>
    %144 = vector.shape_cast %143 : vector<8xf32> to vector<8x1xf32>
    %145 = vector.broadcast %144 : vector<8x1xf32> to vector<8x8xf32>
    %146 = arith.subf %142, %145 : vector<8x8xf32>
    %147 = math.exp %146 : vector<8x8xf32>
    %cst_36 = arith.constant dense<0.000000e+00> : vector<8xf32>
    %148 = vector.multi_reduction <add>, %147, %cst_36 [1] : vector<8x8xf32> to vector<8xf32>
    %149 = vector.shape_cast %148 : vector<8xf32> to vector<8x1xf32>
    %150 = tpu.reciprocal %149 {approx = true} : vector<8x1xf32> -> vector<8x1xf32>
    %151 = vector.broadcast %150 : vector<8x1xf32> to vector<8x8xf32>
    %152 = arith.mulf %147, %151 : vector<8x8xf32>
    %153 = arith.truncf %152 : vector<8x8xf32> to vector<8x8xbf16>
    %154 = vector.extract_strided_slice %113 {offsets = [0, 32], sizes = [8, 32], strides = [1, 1]} : vector<8x128xbf16> to vector<8x32xbf16>
    %cst_37 = arith.constant dense<0.000000e+00> : vector<8x32xf32>
    %155 = tpu.matmul %153, %154, %cst_37 {dimension_numbers = #tpu.dot_dimension_numbers<[1], [0], [0], [1], [0, 0, 1, 1], [], []>} : vector<8x8xbf16>, vector<8x32xbf16>, vector<8x32xf32> -> vector<8x32xf32>
    %156 = vector.extract_strided_slice %108 {offsets = [0, 64], sizes = [8, 32], strides = [1, 1]} : vector<8x128xbf16> to vector<8x32xbf16>
    %157 = vector.extract_strided_slice %111 {offsets = [64, 0], sizes = [32, 8], strides = [1, 1]} : vector<128x8xbf16> to vector<32x8xbf16>
    %cst_38 = arith.constant dense<0.000000e+00> : vector<8x8xf32>
    %158 = tpu.matmul %156, %157, %cst_38 {dimension_numbers = #tpu.dot_dimension_numbers<[1], [0], [0], [1], [0, 0, 1, 1], [], []>} : vector<8x32xbf16>, vector<32x8xbf16>, vector<8x8xf32> -> vector<8x8xf32>
    %cst_39 = arith.constant 0.353553385 : f32
    %159 = vector.broadcast %cst_39 : f32 to vector<8x8xf32>
    %160 = arith.mulf %158, %159 : vector<8x8xf32>
    %161 = vector.broadcast %115 : vector<1x8xf32> to vector<8x8xf32>
    %162 = arith.addf %160, %161 : vector<8x8xf32>
    %cst_40 = arith.constant dense<0xFF800000> : vector<8xf32>
    %163 = vector.multi_reduction <maximumf>, %162, %cst_40 [1] : vector<8x8xf32> to vector<8xf32>
    %164 = vector.shape_cast %163 : vector<8xf32> to vector<8x1xf32>
    %165 = vector.broadcast %164 : vector<8x1xf32> to vector<8x8xf32>
    %166 = arith.subf %162, %165 : vector<8x8xf32>
    %167 = math.exp %166 : vector<8x8xf32>
    %cst_41 = arith.constant dense<0.000000e+00> : vector<8xf32>
    %168 = vector.multi_reduction <add>, %167, %cst_41 [1] : vector<8x8xf32> to vector<8xf32>
    %169 = vector.shape_cast %168 : vector<8xf32> to vector<8x1xf32>
    %170 = tpu.reciprocal %169 {approx = true} : vector<8x1xf32> -> vector<8x1xf32>
    %171 = vector.broadcast %170 : vector<8x1xf32> to vector<8x8xf32>
    %172 = arith.mulf %167, %171 : vector<8x8xf32>
    %173 = arith.truncf %172 : vector<8x8xf32> to vector<8x8xbf16>
    %174 = vector.extract_strided_slice %113 {offsets = [0, 64], sizes = [8, 32], strides = [1, 1]} : vector<8x128xbf16> to vector<8x32xbf16>
    %cst_42 = arith.constant dense<0.000000e+00> : vector<8x32xf32>
    %175 = tpu.matmul %173, %174, %cst_42 {dimension_numbers = #tpu.dot_dimension_numbers<[1], [0], [0], [1], [0, 0, 1, 1], [], []>} : vector<8x8xbf16>, vector<8x32xbf16>, vector<8x32xf32> -> vector<8x32xf32>
    %176 = vector.extract_strided_slice %108 {offsets = [0, 96], sizes = [8, 32], strides = [1, 1]} : vector<8x128xbf16> to vector<8x32xbf16>
    %177 = vector.extract_strided_slice %111 {offsets = [96, 0], sizes = [32, 8], strides = [1, 1]} : vector<128x8xbf16> to vector<32x8xbf16>
    %cst_43 = arith.constant dense<0.000000e+00> : vector<8x8xf32>
    %178 = tpu.matmul %176, %177, %cst_43 {dimension_numbers = #tpu.dot_dimension_numbers<[1], [0], [0], [1], [0, 0, 1, 1], [], []>} : vector<8x32xbf16>, vector<32x8xbf16>, vector<8x8xf32> -> vector<8x8xf32>
    %cst_44 = arith.constant 0.353553385 : f32
    %179 = vector.broadcast %cst_44 : f32 to vector<8x8xf32>
    %180 = arith.mulf %178, %179 : vector<8x8xf32>
    %181 = vector.broadcast %115 : vector<1x8xf32> to vector<8x8xf32>
    %182 = arith.addf %180, %181 : vector<8x8xf32>
    %cst_45 = arith.constant dense<0xFF800000> : vector<8xf32>
    %183 = vector.multi_reduction <maximumf>, %182, %cst_45 [1] : vector<8x8xf32> to vector<8xf32>
    %184 = vector.shape_cast %183 : vector<8xf32> to vector<8x1xf32>
    %185 = vector.broadcast %184 : vector<8x1xf32> to vector<8x8xf32>
    %186 = arith.subf %182, %185 : vector<8x8xf32>
    %187 = math.exp %186 : vector<8x8xf32>
    %cst_46 = arith.constant dense<0.000000e+00> : vector<8xf32>
    %188 = vector.multi_reduction <add>, %187, %cst_46 [1] : vector<8x8xf32> to vector<8xf32>
    %189 = vector.shape_cast %188 : vector<8xf32> to vector<8x1xf32>
    %190 = tpu.reciprocal %189 {approx = true} : vector<8x1xf32> -> vector<8x1xf32>
    %191 = vector.broadcast %190 : vector<8x1xf32> to vector<8x8xf32>
    %192 = arith.mulf %187, %191 : vector<8x8xf32>
    %193 = arith.truncf %192 : vector<8x8xf32> to vector<8x8xbf16>
    %194 = vector.extract_strided_slice %113 {offsets = [0, 96], sizes = [8, 32], strides = [1, 1]} : vector<8x128xbf16> to vector<8x32xbf16>
    %cst_47 = arith.constant dense<0.000000e+00> : vector<8x32xf32>
    %195 = tpu.matmul %193, %194, %cst_47 {dimension_numbers = #tpu.dot_dimension_numbers<[1], [0], [0], [1], [0, 0, 1, 1], [], []>} : vector<8x8xbf16>, vector<8x32xbf16>, vector<8x32xf32> -> vector<8x32xf32>
    %196 = tpu.concatenate %135, %155, %175, %195 in 1 : vector<8x32xf32>, vector<8x32xf32>, vector<8x32xf32>, vector<8x32xf32> -> vector<8x128xf32>
    %197 = tpu.concatenate %106, %196 in 0 : vector<8x128xf32>, vector<8x128xf32> -> vector<16x128xf32>
    %198 = arith.truncf %197 : vector<16x128xf32> to vector<16x128xbf16>
    %c0_48 = arith.constant 0 : index
    %c0_49 = arith.constant 0 : index
    %199 = vector.load %arg5[%c0_48, %c0_49] : memref<128x128xbf16, #tpu.memory_space<vmem>>, vector<128x128xbf16>
    %cst_50 = arith.constant dense<0.000000e+00> : vector<16x128xf32>
    %200 = tpu.matmul %198, %199, %cst_50 {dimension_numbers = #tpu.dot_dimension_numbers<[1], [0], [0], [1], [0, 0, 1, 1], [], []>} : vector<16x128xbf16>, vector<128x128xbf16>, vector<16x128xf32> -> vector<16x128xf32>
    %c0_51 = arith.constant 0 : index
    %c0_52 = arith.constant 0 : index
    %201 = vector.load %arg6[%c0_51, %c0_52] : memref<1x128xf32, #tpu.memory_space<vmem>>, vector<1x128xf32>
    %202 = vector.broadcast %201 : vector<1x128xf32> to vector<16x128xf32>
    %203 = arith.addf %200, %202 : vector<16x128xf32>
    %204 = arith.addf %1, %203 : vector<16x128xf32>
    %c0_53 = arith.constant 0 : index
    %c0_54 = arith.constant 0 : index
    %205 = vector.load %arg7[%c0_53, %c0_54] : memref<1x128xf32, #tpu.memory_space<vmem>>, vector<1x128xf32>
    %c0_55 = arith.constant 0 : index
    %c0_56 = arith.constant 0 : index
    %206 = vector.load %arg8[%c0_55, %c0_56] : memref<1x128xf32, #tpu.memory_space<vmem>>, vector<1x128xf32>
    %cst_57 = arith.constant dense<0.000000e+00> : vector<16xf32>
    %207 = vector.multi_reduction <add>, %204, %cst_57 [1] : vector<16x128xf32> to vector<16xf32>
    %208 = vector.shape_cast %207 : vector<16xf32> to vector<16x1xf32>
    %cst_58 = arith.constant 3.125000e-02 : f32
    %209 = vector.broadcast %cst_58 : f32 to vector<16x1xf32>
    %210 = arith.mulf %208, %209 : vector<16x1xf32>
    %211 = vector.broadcast %210 : vector<16x1xf32> to vector<16x128xf32>
    %212 = arith.subf %204, %211 : vector<16x128xf32>
    %213 = vector.broadcast %6 : vector<1x128xf32> to vector<16x128xf32>
    %214 = arith.mulf %212, %213 : vector<16x128xf32>
    %215 = arith.mulf %214, %214 : vector<16x128xf32>
    %cst_59 = arith.constant dense<0.000000e+00> : vector<16xf32>
    %216 = vector.multi_reduction <add>, %215, %cst_59 [1] : vector<16x128xf32> to vector<16xf32>
    %217 = vector.shape_cast %216 : vector<16xf32> to vector<16x1xf32>
    %cst_60 = arith.constant 3.125000e-02 : f32
    %218 = vector.broadcast %cst_60 : f32 to vector<16x1xf32>
    %219 = arith.mulf %217, %218 : vector<16x1xf32>
    %220 = vector.broadcast %210 : vector<16x1xf32> to vector<16x128xf32>
    %221 = arith.subf %204, %220 : vector<16x128xf32>
    %cst_61 = arith.constant 9.99999974E-6 : f32
    %222 = vector.broadcast %cst_61 : f32 to vector<16x1xf32>
    %223 = arith.addf %219, %222 : vector<16x1xf32>
    %224 = math.rsqrt %223 : vector<16x1xf32>
    %225 = vector.broadcast %224 : vector<16x1xf32> to vector<16x128xf32>
    %226 = arith.mulf %221, %225 : vector<16x128xf32>
    %227 = vector.broadcast %205 : vector<1x128xf32> to vector<16x128xf32>
    %228 = arith.mulf %226, %227 : vector<16x128xf32>
    %229 = vector.broadcast %206 : vector<1x128xf32> to vector<16x128xf32>
    %230 = arith.addf %228, %229 : vector<16x128xf32>
    %231 = arith.truncf %230 : vector<16x128xf32> to vector<16x128xbf16>
    %c0_62 = arith.constant 0 : index
    %c0_63 = arith.constant 0 : index
    %232 = vector.load %arg9[%c0_62, %c0_63] : memref<128x128xbf16, #tpu.memory_space<vmem>>, vector<128x128xbf16>
    %cst_64 = arith.constant dense<0.000000e+00> : vector<16x128xf32>
    %233 = tpu.matmul %231, %232, %cst_64 {dimension_numbers = #tpu.dot_dimension_numbers<[1], [0], [0], [1], [0, 0, 1, 1], [], []>} : vector<16x128xbf16>, vector<128x128xbf16>, vector<16x128xf32> -> vector<16x128xf32>
    %c0_65 = arith.constant 0 : index
    %c0_66 = arith.constant 0 : index
    %234 = vector.load %arg10[%c0_65, %c0_66] : memref<1x128xf32, #tpu.memory_space<vmem>>, vector<1x128xf32>
    %235 = vector.broadcast %234 : vector<1x128xf32> to vector<16x128xf32>
    %236 = arith.addf %233, %235 : vector<16x128xf32>
    %cst_67 = arith.constant 0.000000e+00 : f32
    %237 = vector.broadcast %cst_67 : f32 to vector<16x128xf32>
    %238 = arith.maximumf %236, %237 : vector<16x128xf32>
    %239 = arith.truncf %238 : vector<16x128xf32> to vector<16x128xbf16>
    %c0_68 = arith.constant 0 : index
    %c0_69 = arith.constant 0 : index
    %240 = vector.load %arg11[%c0_68, %c0_69] : memref<128x128xbf16, #tpu.memory_space<vmem>>, vector<128x128xbf16>
    %cst_70 = arith.constant dense<0.000000e+00> : vector<16x128xf32>
    %241 = tpu.matmul %239, %240, %cst_70 {dimension_numbers = #tpu.dot_dimension_numbers<[1], [0], [0], [1], [0, 0, 1, 1], [], []>} : vector<16x128xbf16>, vector<128x128xbf16>, vector<16x128xf32> -> vector<16x128xf32>
    %c0_71 = arith.constant 0 : index
    %c0_72 = arith.constant 0 : index
    %242 = vector.load %arg12[%c0_71, %c0_72] : memref<1x128xf32, #tpu.memory_space<vmem>>, vector<1x128xf32>
    %243 = vector.broadcast %242 : vector<1x128xf32> to vector<16x128xf32>
    %244 = arith.addf %241, %243 : vector<16x128xf32>
    %245 = arith.addf %230, %244 : vector<16x128xf32>
    %c0_73 = arith.constant 0 : index
    %c0_74 = arith.constant 0 : index
    %246 = vector.load %arg13[%c0_73, %c0_74] : memref<1x128xf32, #tpu.memory_space<vmem>>, vector<1x128xf32>
    %c0_75 = arith.constant 0 : index
    %c0_76 = arith.constant 0 : index
    %247 = vector.load %arg14[%c0_75, %c0_76] : memref<1x128xf32, #tpu.memory_space<vmem>>, vector<1x128xf32>
    %cst_77 = arith.constant dense<0.000000e+00> : vector<16xf32>
    %248 = vector.multi_reduction <add>, %245, %cst_77 [1] : vector<16x128xf32> to vector<16xf32>
    %249 = vector.shape_cast %248 : vector<16xf32> to vector<16x1xf32>
    %cst_78 = arith.constant 3.125000e-02 : f32
    %250 = vector.broadcast %cst_78 : f32 to vector<16x1xf32>
    %251 = arith.mulf %249, %250 : vector<16x1xf32>
    %252 = vector.broadcast %251 : vector<16x1xf32> to vector<16x128xf32>
    %253 = arith.subf %245, %252 : vector<16x128xf32>
    %254 = vector.broadcast %6 : vector<1x128xf32> to vector<16x128xf32>
    %255 = arith.mulf %253, %254 : vector<16x128xf32>
    %256 = arith.mulf %255, %255 : vector<16x128xf32>
    %cst_79 = arith.constant dense<0.000000e+00> : vector<16xf32>
    %257 = vector.multi_reduction <add>, %256, %cst_79 [1] : vector<16x128xf32> to vector<16xf32>
    %258 = vector.shape_cast %257 : vector<16xf32> to vector<16x1xf32>
    %cst_80 = arith.constant 3.125000e-02 : f32
    %259 = vector.broadcast %cst_80 : f32 to vector<16x1xf32>
    %260 = arith.mulf %258, %259 : vector<16x1xf32>
    %261 = vector.broadcast %251 : vector<16x1xf32> to vector<16x128xf32>
    %262 = arith.subf %245, %261 : vector<16x128xf32>
    %cst_81 = arith.constant 9.99999974E-6 : f32
    %263 = vector.broadcast %cst_81 : f32 to vector<16x1xf32>
    %264 = arith.addf %260, %263 : vector<16x1xf32>
    %265 = math.rsqrt %264 : vector<16x1xf32>
    %266 = vector.broadcast %265 : vector<16x1xf32> to vector<16x128xf32>
    %267 = arith.mulf %262, %266 : vector<16x128xf32>
    %268 = vector.broadcast %246 : vector<1x128xf32> to vector<16x128xf32>
    %269 = arith.mulf %267, %268 : vector<16x128xf32>
    %270 = vector.broadcast %247 : vector<1x128xf32> to vector<16x128xf32>
    %271 = arith.addf %269, %270 : vector<16x128xf32>
    %272 = arith.truncf %271 : vector<16x128xf32> to vector<16x128xbf16>
    %c0_82 = arith.constant 0 : index
    %c0_83 = arith.constant 0 : index
    %273 = vector.load %arg15[%c0_82, %c0_83] : memref<16x128xbf16, #tpu.memory_space<vmem>>, vector<16x128xbf16>
    tpu.vector_store %arg15[%c0_82, %c0_83], %272 {strides = array<i32>} : memref<16x128xbf16, #tpu.memory_space<vmem>>, vector<16x128xbf16>,
    return
  }
  func.func @transform_0(%arg0: i32) -> (i32, i32) {
    %c0_i32 = arith.constant 0 : i32
    %c0_i32_0 = arith.constant 0 : i32
    return %arg0, %c0_i32 : i32, i32
  }
  func.func @transform_1(%arg0: i32) -> (i32, i32, i32) {
    %c0_i32 = arith.constant 0 : i32
    %c0_i32_0 = arith.constant 0 : i32
    %c0_i32_1 = arith.constant 0 : i32
    return %arg0, %c0_i32, %c0_i32_0 : i32, i32, i32
  }
  func.func @transform_2(%arg0: i32) -> (i32, i32) {
    %c0_i32 = arith.constant 0 : i32
    %c0_i32_0 = arith.constant 0 : i32
    %c0_i32_1 = arith.constant 0 : i32
    return %c0_i32, %c0_i32_0 : i32, i32
  }
  func.func @transform_3(%arg0: i32) -> (i32, i32) {
    %c0_i32 = arith.constant 0 : i32
    %c0_i32_0 = arith.constant 0 : i32
    %c0_i32_1 = arith.constant 0 : i32
    return %c0_i32, %c0_i32_0 : i32, i32
  }
  func.func @transform_4(%arg0: i32) -> (i32, i32) {
    %c0_i32 = arith.constant 0 : i32
    %c0_i32_0 = arith.constant 0 : i32
    %c0_i32_1 = arith.constant 0 : i32
    return %c0_i32, %c0_i32_0 : i32, i32
  }
  func.func @transform_5(%arg0: i32) -> (i32, i32) {
    %c0_i32 = arith.constant 0 : i32
    %c0_i32_0 = arith.constant 0 : i32
    %c0_i32_1 = arith.constant 0 : i32
    return %c0_i32, %c0_i32_0 : i32, i32
  }
  func.func @transform_6(%arg0: i32) -> (i32, i32) {
    %c0_i32 = arith.constant 0 : i32
    %c0_i32_0 = arith.constant 0 : i32
    %c0_i32_1 = arith.constant 0 : i32
    return %c0_i32, %c0_i32_0 : i32, i32
  }
  func.func @transform_7(%arg0: i32) -> (i32, i32) {
    %c0_i32 = arith.constant 0 : i32
    %c0_i32_0 = arith.constant 0 : i32
    %c0_i32_1 = arith.constant 0 : i32
    return %c0_i32, %c0_i32_0 : i32, i32
  }
  func.func @transform_8(%arg0: i32) -> (i32, i32) {
    %c0_i32 = arith.constant 0 : i32
    %c0_i32_0 = arith.constant 0 : i32
    %c0_i32_1 = arith.constant 0 : i32
    return %c0_i32, %c0_i32_0 : i32, i32
  }
  func.func @transform_9(%arg0: i32) -> (i32, i32) {
    %c0_i32 = arith.constant 0 : i32
    %c0_i32_0 = arith.constant 0 : i32
    %c0_i32_1 = arith.constant 0 : i32
    return %c0_i32, %c0_i32_0 : i32, i32
  }
  func.func @transform_10(%arg0: i32) -> (i32, i32) {
    %c0_i32 = arith.constant 0 : i32
    %c0_i32_0 = arith.constant 0 : i32
    %c0_i32_1 = arith.constant 0 : i32
    return %c0_i32, %c0_i32_0 : i32, i32
  }
  func.func @transform_11(%arg0: i32) -> (i32, i32) {
    %c0_i32 = arith.constant 0 : i32
    %c0_i32_0 = arith.constant 0 : i32
    %c0_i32_1 = arith.constant 0 : i32
    return %c0_i32, %c0_i32_0 : i32, i32
  }
  func.func @transform_12(%arg0: i32) -> (i32, i32) {
    %c0_i32 = arith.constant 0 : i32
    %c0_i32_0 = arith.constant 0 : i32
    %c0_i32_1 = arith.constant 0 : i32
    return %c0_i32, %c0_i32_0 : i32, i32
  }
  func.func @transform_13(%arg0: i32) -> (i32, i32) {
    %c0_i32 = arith.constant 0 : i32
    %c0_i32_0 = arith.constant 0 : i32
    %c0_i32_1 = arith.constant 0 : i32
    return %c0_i32, %c0_i32_0 : i32, i32
  }
  func.func @transform_14(%arg0: i32) -> (i32, i32) {
    %c0_i32 = arith.constant 0 : i32
    %c0_i32_0 = arith.constant 0 : i32
    return %arg0, %c0_i32 : i32, i32
  }
}

module attributes {stable_mosaic.version = 11 : i64} {
  func.func @_transformer_layer_kernel(%arg0: i32, %arg1: memref<16x128xbf16, #tpu.memory_space<vmem>>, %arg2: memref<2x8x8xf32, #tpu.memory_space<vmem>>, %arg3: memref<128x384xbf16, #tpu.memory_space<vmem>>, %arg4: memref<1x384xf32, #tpu.memory_space<vmem>>, %arg5: memref<128x128xbf16, #tpu.memory_space<vmem>>, %arg6: memref<1x128xf32, #tpu.memory_space<vmem>>, %arg7: memref<1x128xf32, #tpu.memory_space<vmem>>, %arg8: memref<1x128xf32, #tpu.memory_space<vmem>>, %arg9: memref<128x128xbf16, #tpu.memory_space<vmem>>, %arg10: memref<1x128xf32, #tpu.memory_space<vmem>>, %arg11: memref<128x128xbf16, #tpu.memory_space<vmem>>, %arg12: memref<1x128xf32, #tpu.memory_space<vmem>>, %arg13: memref<1x128xf32, #tpu.memory_space<vmem>>, %arg14: memref<1x128xf32, #tpu.memory_space<vmem>>, %arg15: memref<16x128xbf16, #tpu.memory_space<vmem>>) attributes {dimension_semantics = [#tpu.dimension_semantics<parallel>], iteration_bounds = array<i64: 1>, scalar_prefetch = 0 : i64, scratch_operands = 0 : i64, tpu.core_type = #tpu.core_type<tc>, window_params = [{transform_indices = @transform_0, window_bounds = array<i64: 16, 128>}, {transform_indices = @transform_1, window_bounds = array<i64: 2, 8, 8>}, {pipeline_mode = #tpu.pipeline_mode<synchronous>, transform_indices = @transform_2, window_bounds = array<i64: 128, 384>}, {pipeline_mode = #tpu.pipeline_mode<synchronous>, transform_indices = @transform_3, window_bounds = array<i64: 1, 384>}, {pipeline_mode = #tpu.pipeline_mode<synchronous>, transform_indices = @transform_4, window_bounds = array<i64: 128, 128>}, {pipeline_mode = #tpu.pipeline_mode<synchronous>, transform_indices = @transform_5, window_bounds = array<i64: 1, 128>}, {pipeline_mode = #tpu.pipeline_mode<synchronous>, transform_indices = @transform_6, window_bounds = array<i64: 1, 128>}, {pipeline_mode = #tpu.pipeline_mode<synchronous>, transform_indices = @transform_7, window_bounds = array<i64: 1, 128>}, {pipeline_mode = #tpu.pipeline_mode<synchronous>, transform_indices = @transform_8, window_bounds = array<i64: 128, 128>}, {pipeline_mode = #tpu.pipeline_mode<synchronous>, transform_indices = @transform_9, window_bounds = array<i64: 1, 128>}, {pipeline_mode = #tpu.pipeline_mode<synchronous>, transform_indices = @transform_10, window_bounds = array<i64: 128, 128>}, {pipeline_mode = #tpu.pipeline_mode<synchronous>, transform_indices = @transform_11, window_bounds = array<i64: 1, 128>}, {pipeline_mode = #tpu.pipeline_mode<synchronous>, transform_indices = @transform_12, window_bounds = array<i64: 1, 128>}, {pipeline_mode = #tpu.pipeline_mode<synchronous>, transform_indices = @transform_13, window_bounds = array<i64: 1, 128>}, {transform_indices = @transform_14, window_bounds = array<i64: 16, 128>}]} {
    %c0 = arith.constant 0 : index
    %c0_0 = arith.constant 0 : index
    %0 = vector.load %arg1[%c0, %c0_0] : memref<16x128xbf16, #tpu.memory_space<vmem>>, vector<16x128xbf16>
    %1 = arith.extf %0 : vector<16x128xbf16> to vector<16x128xf32>
    %2 = tpu.iota {dimensions = array<i32: 1>} : vector<1x128xi32>
    %c32_i32 = arith.constant 32 : i32
    %3 = vector.broadcast %c32_i32 : i32 to vector<1x128xi32>
    %4 = arith.cmpi slt, %2, %3 : vector<1x128xi32>
    %5 = arith.extui %4 : vector<1x128xi1> to vector<1x128xi32>
    %6 = arith.sitofp %5 : vector<1x128xi32> to vector<1x128xf32>
    %7 = arith.truncf %1 : vector<16x128xf32> to vector<16x128xbf16>
    %c0_1 = arith.constant 0 : index
    %c0_2 = arith.constant 0 : index
    %8 = vector.load %arg3[%c0_1, %c0_2] : memref<128x384xbf16, #tpu.memory_space<vmem>>, vector<128x384xbf16>
    %cst = arith.constant dense<0.000000e+00> : vector<16x384xf32>
    %9 = tpu.matmul %7, %8, %cst {dimension_numbers = #tpu.dot_dimension_numbers<[1], [0], [0], [1], [0, 0, 1, 1], [], []>} : vector<16x128xbf16>, vector<128x384xbf16>, vector<16x384xf32> -> vector<16x384xf32>
    %c0_3 = arith.constant 0 : index
    %c0_4 = arith.constant 0 : index
    %10 = vector.load %arg4[%c0_3, %c0_4] : memref<1x384xf32, #tpu.memory_space<vmem>>, vector<1x384xf32>
    %11 = vector.broadcast %10 : vector<1x384xf32> to vector<16x384xf32>
    %12 = arith.addf %9, %11 : vector<16x384xf32>
    %13 = vector.extract_strided_slice %12 {offsets = [0, 0], sizes = [16, 128], strides = [1, 1]} : vector<16x384xf32> to vector<16x128xf32>
    %14 = vector.extract_strided_slice %12 {offsets = [0, 128], sizes = [16, 128], strides = [1, 1]} : vector<16x384xf32> to vector<16x128xf32>
    %15 = vector.extract_strided_slice %12 {offsets = [0, 256], sizes = [16, 128], strides = [1, 1]} : vector<16x384xf32> to vector<16x128xf32>
    %c0_5 = arith.constant 0 : index
    %c0_6 = arith.constant 0 : index
    %c0_7 = arith.constant 0 : index
    %16 = vector.load %arg2[%c0_5, %c0_6, %c0_7] : memref<2x8x8xf32, #tpu.memory_space<vmem>>, vector<2x8x8xf32>
    %17 = vector.extract_strided_slice %13 {offsets = [0, 0], sizes = [8, 128], strides = [1, 1]} : vector<16x128xf32> to vector<8x128xf32>
    %18 = arith.truncf %17 : vector<8x128xf32> to vector<8x128xbf16>
    %19 = vector.extract_strided_slice %14 {offsets = [0, 0], sizes = [8, 128], strides = [1, 1]} : vector<16x128xf32> to vector<8x128xf32>
    %20 = arith.truncf %19 : vector<8x128xf32> to vector<8x128xbf16>
    %21 = tpu.transpose %20, [1, 0] : vector<8x128xbf16> -> vector<128x8xbf16>
    %22 = vector.extract_strided_slice %15 {offsets = [0, 0], sizes = [8, 128], strides = [1, 1]} : vector<16x128xf32> to vector<8x128xf32>
    %23 = arith.truncf %22 : vector<8x128xf32> to vector<8x128xbf16>
    %24 = vector.extract_strided_slice %16 {offsets = [0, 0, 0], sizes = [1, 1, 8], strides = [1, 1, 1]} : vector<2x8x8xf32> to vector<1x1x8xf32>
    %25 = vector.shape_cast %24 : vector<1x1x8xf32> to vector<1x8xf32>
    %26 = vector.extract_strided_slice %18 {offsets = [0, 0], sizes = [8, 32], strides = [1, 1]} : vector<8x128xbf16> to vector<8x32xbf16>
    %27 = vector.extract_strided_slice %21 {offsets = [0, 0], sizes = [32, 8], strides = [1, 1]} : vector<128x8xbf16> to vector<32x8xbf16>
    %cst_8 = arith.constant dense<0.000000e+00> : vector<8x8xf32>
    %28 = tpu.matmul %26, %27, %cst_8 {dimension_numbers = #tpu.dot_dimension_numbers<[1], [0], [0], [1], [0, 0, 1, 1], [], []>} : vector<8x32xbf16>, vector<32x8xbf16>, vector<8x8xf32> -> vector<8x8xf32>
    %cst_9 = arith.constant 0.353553385 : f32
    %29 = vector.broadcast %cst_9 : f32 to vector<8x8xf32>
    %30 = arith.mulf %28, %29 : vector<8x8xf32>
    %31 = vector.broadcast %25 : vector<1x8xf32> to vector<8x8xf32>
    %32 = arith.addf %30, %31 : vector<8x8xf32>
    %cst_10 = arith.constant dense<0xFF800000> : vector<8xf32>
    %33 = vector.multi_reduction <maximumf>, %32, %cst_10 [1] : vector<8x8xf32> to vector<8xf32>
    %34 = vector.shape_cast %33 : vector<8xf32> to vector<8x1xf32>
    %35 = vector.broadcast %34 : vector<8x1xf32> to vector<8x8xf32>
    %36 = arith.subf %32, %35 : vector<8x8xf32>
    %37 = math.exp %36 : vector<8x8xf32>
    %cst_11 = arith.constant dense<0.000000e+00> : vector<8xf32>
    %38 = vector.multi_reduction <add>, %37, %cst_11 [1] : vector<8x8xf32> to vector<8xf32>
    %39 = vector.shape_cast %38 : vector<8xf32> to vector<8x1xf32>
    %40 = tpu.reciprocal %39 {approx = true} : vector<8x1xf32> -> vector<8x1xf32>
    %41 = vector.broadcast %40 : vector<8x1xf32> to vector<8x8xf32>
    %42 = arith.mulf %37, %41 : vector<8x8xf32>
    %43 = arith.truncf %42 : vector<8x8xf32> to vector<8x8xbf16>
    %44 = vector.extract_strided_slice %23 {offsets = [0, 0], sizes = [8, 32], strides = [1, 1]} : vector<8x128xbf16> to vector<8x32xbf16>
    %cst_12 = arith.constant dense<0.000000e+00> : vector<8x32xf32>
    %45 = tpu.matmul %43, %44, %cst_12 {dimension_numbers = #tpu.dot_dimension_numbers<[1], [0], [0], [1], [0, 0, 1, 1], [], []>} : vector<8x8xbf16>, vector<8x32xbf16>, vector<8x32xf32> -> vector<8x32xf32>
    %46 = vector.extract_strided_slice %18 {offsets = [0, 32], sizes = [8, 32], strides = [1, 1]} : vector<8x128xbf16> to vector<8x32xbf16>
    %47 = vector.extract_strided_slice %21 {offsets = [32, 0], sizes = [32, 8], strides = [1, 1]} : vector<128x8xbf16> to vector<32x8xbf16>
    %cst_13 = arith.constant dense<0.000000e+00> : vector<8x8xf32>
    %48 = tpu.matmul %46, %47, %cst_13 {dimension_numbers = #tpu.dot_dimension_numbers<[1], [0], [0], [1], [0, 0, 1, 1], [], []>} : vector<8x32xbf16>, vector<32x8xbf16>, vector<8x8xf32> -> vector<8x8xf32>
    %cst_14 = arith.constant 0.353553385 : f32
    %49 = vector.broadcast %cst_14 : f32 to vector<8x8xf32>
    %50 = arith.mulf %48, %49 : vector<8x8xf32>
    %51 = vector.broadcast %25 : vector<1x8xf32> to vector<8x8xf32>
    %52 = arith.addf %50, %51 : vector<8x8xf32>
    %cst_15 = arith.constant dense<0xFF800000> : vector<8xf32>
    %53 = vector.multi_reduction <maximumf>, %52, %cst_15 [1] : vector<8x8xf32> to vector<8xf32>
    %54 = vector.shape_cast %53 : vector<8xf32> to vector<8x1xf32>
    %55 = vector.broadcast %54 : vector<8x1xf32> to vector<8x8xf32>
    %56 = arith.subf %52, %55 : vector<8x8xf32>
    %57 = math.exp %56 : vector<8x8xf32>
    %cst_16 = arith.constant dense<0.000000e+00> : vector<8xf32>
    %58 = vector.multi_reduction <add>, %57, %cst_16 [1] : vector<8x8xf32> to vector<8xf32>
    %59 = vector.shape_cast %58 : vector<8xf32> to vector<8x1xf32>
    %60 = tpu.reciprocal %59 {approx = true} : vector<8x1xf32> -> vector<8x1xf32>
    %61 = vector.broadcast %60 : vector<8x1xf32> to vector<8x8xf32>
    %62 = arith.mulf %57, %61 : vector<8x8xf32>
    %63 = arith.truncf %62 : vector<8x8xf32> to vector<8x8xbf16>
    %64 = vector.extract_strided_slice %23 {offsets = [0, 32], sizes = [8, 32], strides = [1, 1]} : vector<8x128xbf16> to vector<8x32xbf16>
    %cst_17 = arith.constant dense<0.000000e+00> : vector<8x32xf32>
    %65 = tpu.matmul %63, %64, %cst_17 {dimension_numbers = #tpu.dot_dimension_numbers<[1], [0], [0], [1], [0, 0, 1, 1], [], []>} : vector<8x8xbf16>, vector<8x32xbf16>, vector<8x32xf32> -> vector<8x32xf32>
    %66 = vector.extract_strided_slice %18 {offsets = [0, 64], sizes = [8, 32], strides = [1, 1]} : vector<8x128xbf16> to vector<8x32xbf16>
    %67 = vector.extract_strided_slice %21 {offsets = [64, 0], sizes = [32, 8], strides = [1, 1]} : vector<128x8xbf16> to vector<32x8xbf16>
    %cst_18 = arith.constant dense<0.000000e+00> : vector<8x8xf32>
    %68 = tpu.matmul %66, %67, %cst_18 {dimension_numbers = #tpu.dot_dimension_numbers<[1], [0], [0], [1], [0, 0, 1, 1], [], []>} : vector<8x32xbf16>, vector<32x8xbf16>, vector<8x8xf32> -> vector<8x8xf32>
    %cst_19 = arith.constant 0.353553385 : f32
    %69 = vector.broadcast %cst_19 : f32 to vector<8x8xf32>
    %70 = arith.mulf %68, %69 : vector<8x8xf32>
    %71 = vector.broadcast %25 : vector<1x8xf32> to vector<8x8xf32>
    %72 = arith.addf %70, %71 : vector<8x8xf32>
    %cst_20 = arith.constant dense<0xFF800000> : vector<8xf32>
    %73 = vector.multi_reduction <maximumf>, %72, %cst_20 [1] : vector<8x8xf32> to vector<8xf32>
    %74 = vector.shape_cast %73 : vector<8xf32> to vector<8x1xf32>
    %75 = vector.broadcast %74 : vector<8x1xf32> to vector<8x8xf32>
    %76 = arith.subf %72, %75 : vector<8x8xf32>
    %77 = math.exp %76 : vector<8x8xf32>
    %cst_21 = arith.constant dense<0.000000e+00> : vector<8xf32>
    %78 = vector.multi_reduction <add>, %77, %cst_21 [1] : vector<8x8xf32> to vector<8xf32>
    %79 = vector.shape_cast %78 : vector<8xf32> to vector<8x1xf32>
    %80 = tpu.reciprocal %79 {approx = true} : vector<8x1xf32> -> vector<8x1xf32>
    %81 = vector.broadcast %80 : vector<8x1xf32> to vector<8x8xf32>
    %82 = arith.mulf %77, %81 : vector<8x8xf32>
    %83 = arith.truncf %82 : vector<8x8xf32> to vector<8x8xbf16>
    %84 = vector.extract_strided_slice %23 {offsets = [0, 64], sizes = [8, 32], strides = [1, 1]} : vector<8x128xbf16> to vector<8x32xbf16>
    %cst_22 = arith.constant dense<0.000000e+00> : vector<8x32xf32>
    %85 = tpu.matmul %83, %84, %cst_22 {dimension_numbers = #tpu.dot_dimension_numbers<[1], [0], [0], [1], [0, 0, 1, 1], [], []>} : vector<8x8xbf16>, vector<8x32xbf16>, vector<8x32xf32> -> vector<8x32xf32>
    %86 = vector.extract_strided_slice %18 {offsets = [0, 96], sizes = [8, 32], strides = [1, 1]} : vector<8x128xbf16> to vector<8x32xbf16>
    %87 = vector.extract_strided_slice %21 {offsets = [96, 0], sizes = [32, 8], strides = [1, 1]} : vector<128x8xbf16> to vector<32x8xbf16>
    %cst_23 = arith.constant dense<0.000000e+00> : vector<8x8xf32>
    %88 = tpu.matmul %86, %87, %cst_23 {dimension_numbers = #tpu.dot_dimension_numbers<[1], [0], [0], [1], [0, 0, 1, 1], [], []>} : vector<8x32xbf16>, vector<32x8xbf16>, vector<8x8xf32> -> vector<8x8xf32>
    %cst_24 = arith.constant 0.353553385 : f32
    %89 = vector.broadcast %cst_24 : f32 to vector<8x8xf32>
    %90 = arith.mulf %88, %89 : vector<8x8xf32>
    %91 = vector.broadcast %25 : vector<1x8xf32> to vector<8x8xf32>
    %92 = arith.addf %90, %91 : vector<8x8xf32>
    %cst_25 = arith.constant dense<0xFF800000> : vector<8xf32>
    %93 = vector.multi_reduction <maximumf>, %92, %cst_25 [1] : vector<8x8xf32> to vector<8xf32>
    %94 = vector.shape_cast %93 : vector<8xf32> to vector<8x1xf32>
    %95 = vector.broadcast %94 : vector<8x1xf32> to vector<8x8xf32>
    %96 = arith.subf %92, %95 : vector<8x8xf32>
    %97 = math.exp %96 : vector<8x8xf32>
    %cst_26 = arith.constant dense<0.000000e+00> : vector<8xf32>
    %98 = vector.multi_reduction <add>, %97, %cst_26 [1] : vector<8x8xf32> to vector<8xf32>
    %99 = vector.shape_cast %98 : vector<8xf32> to vector<8x1xf32>
    %100 = tpu.reciprocal %99 {approx = true} : vector<8x1xf32> -> vector<8x1xf32>
    %101 = vector.broadcast %100 : vector<8x1xf32> to vector<8x8xf32>
    %102 = arith.mulf %97, %101 : vector<8x8xf32>
    %103 = arith.truncf %102 : vector<8x8xf32> to vector<8x8xbf16>
    %104 = vector.extract_strided_slice %23 {offsets = [0, 96], sizes = [8, 32], strides = [1, 1]} : vector<8x128xbf16> to vector<8x32xbf16>
    %cst_27 = arith.constant dense<0.000000e+00> : vector<8x32xf32>
    %105 = tpu.matmul %103, %104, %cst_27 {dimension_numbers = #tpu.dot_dimension_numbers<[1], [0], [0], [1], [0, 0, 1, 1], [], []>} : vector<8x8xbf16>, vector<8x32xbf16>, vector<8x32xf32> -> vector<8x32xf32>
    %106 = tpu.concatenate %45, %65, %85, %105 in 1 : vector<8x32xf32>, vector<8x32xf32>, vector<8x32xf32>, vector<8x32xf32> -> vector<8x128xf32>
    %107 = vector.extract_strided_slice %13 {offsets = [8, 0], sizes = [8, 128], strides = [1, 1]} : vector<16x128xf32> to vector<8x128xf32>
    %108 = arith.truncf %107 : vector<8x128xf32> to vector<8x128xbf16>
    %109 = vector.extract_strided_slice %14 {offsets = [8, 0], sizes = [8, 128], strides = [1, 1]} : vector<16x128xf32> to vector<8x128xf32>
    %110 = arith.truncf %109 : vector<8x128xf32> to vector<8x128xbf16>
    %111 = tpu.transpose %110, [1, 0] : vector<8x128xbf16> -> vector<128x8xbf16>
    %112 = vector.extract_strided_slice %15 {offsets = [8, 0], sizes = [8, 128], strides = [1, 1]} : vector<16x128xf32> to vector<8x128xf32>
    %113 = arith.truncf %112 : vector<8x128xf32> to vector<8x128xbf16>
    %114 = vector.extract_strided_slice %16 {offsets = [1, 0, 0], sizes = [1, 1, 8], strides = [1, 1, 1]} : vector<2x8x8xf32> to vector<1x1x8xf32>
    %115 = vector.shape_cast %114 : vector<1x1x8xf32> to vector<1x8xf32>
    %116 = vector.extract_strided_slice %108 {offsets = [0, 0], sizes = [8, 32], strides = [1, 1]} : vector<8x128xbf16> to vector<8x32xbf16>
    %117 = vector.extract_strided_slice %111 {offsets = [0, 0], sizes = [32, 8], strides = [1, 1]} : vector<128x8xbf16> to vector<32x8xbf16>
    %cst_28 = arith.constant dense<0.000000e+00> : vector<8x8xf32>
    %118 = tpu.matmul %116, %117, %cst_28 {dimension_numbers = #tpu.dot_dimension_numbers<[1], [0], [0], [1], [0, 0, 1, 1], [], []>} : vector<8x32xbf16>, vector<32x8xbf16>, vector<8x8xf32> -> vector<8x8xf32>
    %cst_29 = arith.constant 0.353553385 : f32
    %119 = vector.broadcast %cst_29 : f32 to vector<8x8xf32>
    %120 = arith.mulf %118, %119 : vector<8x8xf32>
    %121 = vector.broadcast %115 : vector<1x8xf32> to vector<8x8xf32>
    %122 = arith.addf %120, %121 : vector<8x8xf32>
    %cst_30 = arith.constant dense<0xFF800000> : vector<8xf32>
    %123 = vector.multi_reduction <maximumf>, %122, %cst_30 [1] : vector<8x8xf32> to vector<8xf32>
    %124 = vector.shape_cast %123 : vector<8xf32> to vector<8x1xf32>
    %125 = vector.broadcast %124 : vector<8x1xf32> to vector<8x8xf32>
    %126 = arith.subf %122, %125 : vector<8x8xf32>
    %127 = math.exp %126 : vector<8x8xf32>
    %cst_31 = arith.constant dense<0.000000e+00> : vector<8xf32>
    %128 = vector.multi_reduction <add>, %127, %cst_31 [1] : vector<8x8xf32> to vector<8xf32>
    %129 = vector.shape_cast %128 : vector<8xf32> to vector<8x1xf32>
    %130 = tpu.reciprocal %129 {approx = true} : vector<8x1xf32> -> vector<8x1xf32>
    %131 = vector.broadcast %130 : vector<8x1xf32> to vector<8x8xf32>
    %132 = arith.mulf %127, %131 : vector<8x8xf32>
    %133 = arith.truncf %132 : vector<8x8xf32> to vector<8x8xbf16>
    %134 = vector.extract_strided_slice %113 {offsets = [0, 0], sizes = [8, 32], strides = [1, 1]} : vector<8x128xbf16> to vector<8x32xbf16>
    %cst_32 = arith.constant dense<0.000000e+00> : vector<8x32xf32>
    %135 = tpu.matmul %133, %134, %cst_32 {dimension_numbers = #tpu.dot_dimension_numbers<[1], [0], [0], [1], [0, 0, 1, 1], [], []>} : vector<8x8xbf16>, vector<8x32xbf16>, vector<8x32xf32> -> vector<8x32xf32>
    %136 = vector.extract_strided_slice %108 {offsets = [0, 32], sizes = [8, 32], strides = [1, 1]} : vector<8x128xbf16> to vector<8x32xbf16>
    %137 = vector.extract_strided_slice %111 {offsets = [32, 0], sizes = [32, 8], strides = [1, 1]} : vector<128x8xbf16> to vector<32x8xbf16>
    %cst_33 = arith.constant dense<0.000000e+00> : vector<8x8xf32>
    %138 = tpu.matmul %136, %137, %cst_33 {dimension_numbers = #tpu.dot_dimension_numbers<[1], [0], [0], [1], [0, 0, 1, 1], [], []>} : vector<8x32xbf16>, vector<32x8xbf16>, vector<8x8xf32> -> vector<8x8xf32>
    %cst_34 = arith.constant 0.353553385 : f32
    %139 = vector.broadcast %cst_34 : f32 to vector<8x8xf32>
    %140 = arith.mulf %138, %139 : vector<8x8xf32>
    %141 = vector.broadcast %115 : vector<1x8xf32> to vector<8x8xf32>
    %142 = arith.addf %140, %141 : vector<8x8xf32>
    %cst_35 = arith.constant dense<0xFF800000> : vector<8xf32>
    %143 = vector.multi_reduction <maximumf>, %142, %cst_35 [1] : vector<8x8xf32> to vector<8xf32>
    %144 = vector.shape_cast %143 : vector<8xf32> to vector<8x1xf32>
    %145 = vector.broadcast %144 : vector<8x1xf32> to vector<8x8xf32>
    %146 = arith.subf %142, %145 : vector<8x8xf32>
    %147 = math.exp %146 : vector<8x8xf32>
    %cst_36 = arith.constant dense<0.000000e+00> : vector<8xf32>
    %148 = vector.multi_reduction <add>, %147, %cst_36 [1] : vector<8x8xf32> to vector<8xf32>
    %149 = vector.shape_cast %148 : vector<8xf32> to vector<8x1xf32>
    %150 = tpu.reciprocal %149 {approx = true} : vector<8x1xf32> -> vector<8x1xf32>
    %151 = vector.broadcast %150 : vector<8x1xf32> to vector<8x8xf32>
    %152 = arith.mulf %147, %151 : vector<8x8xf32>
    %153 = arith.truncf %152 : vector<8x8xf32> to vector<8x8xbf16>
    %154 = vector.extract_strided_slice %113 {offsets = [0, 32], sizes = [8, 32], strides = [1, 1]} : vector<8x128xbf16> to vector<8x32xbf16>
    %cst_37 = arith.constant dense<0.000000e+00> : vector<8x32xf32>
    %155 = tpu.matmul %153, %154, %cst_37 {dimension_numbers = #tpu.dot_dimension_numbers<[1], [0], [0], [1], [0, 0, 1, 1], [], []>} : vector<8x8xbf16>, vector<8x32xbf16>, vector<8x32xf32> -> vector<8x32xf32>
    %156 = vector.extract_strided_slice %108 {offsets = [0, 64], sizes = [8, 32], strides = [1, 1]} : vector<8x128xbf16> to vector<8x32xbf16>
    %157 = vector.extract_strided_slice %111 {offsets = [64, 0], sizes = [32, 8], strides = [1, 1]} : vector<128x8xbf16> to vector<32x8xbf16>
    %cst_38 = arith.constant dense<0.000000e+00> : vector<8x8xf32>
    %158 = tpu.matmul %156, %157, %cst_38 {dimension_numbers = #tpu.dot_dimension_numbers<[1], [0], [0], [1], [0, 0, 1, 1], [], []>} : vector<8x32xbf16>, vector<32x8xbf16>, vector<8x8xf32> -> vector<8x8xf32>
    %cst_39 = arith.constant 0.353553385 : f32
    %159 = vector.broadcast %cst_39 : f32 to vector<8x8xf32>
    %160 = arith.mulf %158, %159 : vector<8x8xf32>
    %161 = vector.broadcast %115 : vector<1x8xf32> to vector<8x8xf32>
    %162 = arith.addf %160, %161 : vector<8x8xf32>
    %cst_40 = arith.constant dense<0xFF800000> : vector<8xf32>
    %163 = vector.multi_reduction <maximumf>, %162, %cst_40 [1] : vector<8x8xf32> to vector<8xf32>
    %164 = vector.shape_cast %163 : vector<8xf32> to vector<8x1xf32>
    %165 = vector.broadcast %164 : vector<8x1xf32> to vector<8x8xf32>
    %166 = arith.subf %162, %165 : vector<8x8xf32>
    %167 = math.exp %166 : vector<8x8xf32>
    %cst_41 = arith.constant dense<0.000000e+00> : vector<8xf32>
    %168 = vector.multi_reduction <add>, %167, %cst_41 [1] : vector<8x8xf32> to vector<8xf32>
    %169 = vector.shape_cast %168 : vector<8xf32> to vector<8x1xf32>
    %170 = tpu.reciprocal %169 {approx = true} : vector<8x1xf32> -> vector<8x1xf32>
    %171 = vector.broadcast %170 : vector<8x1xf32> to vector<8x8xf32>
    %172 = arith.mulf %167, %171 : vector<8x8xf32>
    %173 = arith.truncf %172 : vector<8x8xf32> to vector<8x8xbf16>
    %174 = vector.extract_strided_slice %113 {offsets = [0, 64], sizes = [8, 32], strides = [1, 1]} : vector<8x128xbf16> to vector<8x32xbf16>
    %cst_42 = arith.constant dense<0.000000e+00> : vector<8x32xf32>
    %175 = tpu.matmul %173, %174, %cst_42 {dimension_numbers = #tpu.dot_dimension_numbers<[1], [0], [0], [1], [0, 0, 1, 1], [], []>} : vector<8x8xbf16>, vector<8x32xbf16>, vector<8x32xf32> -> vector<8x32xf32>
    %176 = vector.extract_strided_slice %108 {offsets = [0, 96], sizes = [8, 32], strides = [1, 1]} : vector<8x128xbf16> to vector<8x32xbf16>
    %177 = vector.extract_strided_slice %111 {offsets = [96, 0], sizes = [32, 8], strides = [1, 1]} : vector<128x8xbf16> to vector<32x8xbf16>
    %cst_43 = arith.constant dense<0.000000e+00> : vector<8x8xf32>
    %178 = tpu.matmul %176, %177, %cst_43 {dimension_numbers = #tpu.dot_dimension_numbers<[1], [0], [0], [1], [0, 0, 1, 1], [], []>} : vector<8x32xbf16>, vector<32x8xbf16>, vector<8x8xf32> -> vector<8x8xf32>
    %cst_44 = arith.constant 0.353553385 : f32
    %179 = vector.broadcast %cst_44 : f32 to vector<8x8xf32>
    %180 = arith.mulf %178, %179 : vector<8x8xf32>
    %181 = vector.broadcast %115 : vector<1x8xf32> to vector<8x8xf32>
    %182 = arith.addf %180, %181 : vector<8x8xf32>
    %cst_45 = arith.constant dense<0xFF800000> : vector<8xf32>
    %183 = vector.multi_reduction <maximumf>, %182, %cst_45 [1] : vector<8x8xf32> to vector<8xf32>
    %184 = vector.shape_cast %183 : vector<8xf32> to vector<8x1xf32>
    %185 = vector.broadcast %184 : vector<8x1xf32> to vector<8x8xf32>
    %186 = arith.subf %182, %185 : vector<8x8xf32>
    %187 = math.exp %186 : vector<8x8xf32>
    %cst_46 = arith.constant dense<0.000000e+00> : vector<8xf32>
    %188 = vector.multi_reduction <add>, %187, %cst_46 [1] : vector<8x8xf32> to vector<8xf32>
    %189 = vector.shape_cast %188 : vector<8xf32> to vector<8x1xf32>
    %190 = tpu.reciprocal %189 {approx = true} : vector<8x1xf32> -> vector<8x1xf32>
    %191 = vector.broadcast %190 : vector<8x1xf32> to vector<8x8xf32>
    %192 = arith.mulf %187, %191 : vector<8x8xf32>
    %193 = arith.truncf %192 : vector<8x8xf32> to vector<8x8xbf16>
    %194 = vector.extract_strided_slice %113 {offsets = [0, 96], sizes = [8, 32], strides = [1, 1]} : vector<8x128xbf16> to vector<8x32xbf16>
    %cst_47 = arith.constant dense<0.000000e+00> : vector<8x32xf32>
    %195 = tpu.matmul %193, %194, %cst_47 {dimension_numbers = #tpu.dot_dimension_numbers<[1], [0], [0], [1], [0, 0, 1, 1], [], []>} : vector<8x8xbf16>, vector<8x32xbf16>, vector<8x32xf32> -> vector<8x32xf32>
    %196 = tpu.concatenate %135, %155, %175, %195 in 1 : vector<8x32xf32>, vector<8x32xf32>, vector<8x32xf32>, vector<8x32xf32> -> vector<8x128xf32>
    %197 = tpu.concatenate %106, %196 in 0 : vector<8x128xf32>, vector<8x128xf32> -> vector<16x128xf32>
    %198 = arith.truncf %197 : vector<16x128xf32> to vector<16x128xbf16>
    %c0_48 = arith.constant 0 : index
    %c0_49 = arith.constant 0 : index
    %199 = vector.load %arg5[%c0_48, %c0_49] : memref<128x128xbf16, #tpu.memory_space<vmem>>, vector<128x128xbf16>
    %cst_50 = arith.constant dense<0.000000e+00> : vector<16x128xf32>
    %200 = tpu.matmul %198, %199, %cst_50 {dimension_numbers = #tpu.dot_dimension_numbers<[1], [0], [0], [1], [0, 0, 1, 1], [], []>} : vector<16x128xbf16>, vector<128x128xbf16>, vector<16x128xf32> -> vector<16x128xf32>
    %c0_51 = arith.constant 0 : index
    %c0_52 = arith.constant 0 : index
    %201 = vector.load %arg6[%c0_51, %c0_52] : memref<1x128xf32, #tpu.memory_space<vmem>>, vector<1x128xf32>
    %202 = vector.broadcast %201 : vector<1x128xf32> to vector<16x128xf32>
    %203 = arith.addf %200, %202 : vector<16x128xf32>
    %204 = arith.addf %1, %203 : vector<16x128xf32>
    %c0_53 = arith.constant 0 : index
    %c0_54 = arith.constant 0 : index
    %205 = vector.load %arg7[%c0_53, %c0_54] : memref<1x128xf32, #tpu.memory_space<vmem>>, vector<1x128xf32>
    %c0_55 = arith.constant 0 : index
    %c0_56 = arith.constant 0 : index
    %206 = vector.load %arg8[%c0_55, %c0_56] : memref<1x128xf32, #tpu.memory_space<vmem>>, vector<1x128xf32>
    %cst_57 = arith.constant dense<0.000000e+00> : vector<16xf32>
    %207 = vector.multi_reduction <add>, %204, %cst_57 [1] : vector<16x128xf32> to vector<16xf32>
    %208 = vector.shape_cast %207 : vector<16xf32> to vector<16x1xf32>
    %cst_58 = arith.constant 3.125000e-02 : f32
    %209 = vector.broadcast %cst_58 : f32 to vector<16x1xf32>
    %210 = arith.mulf %208, %209 : vector<16x1xf32>
    %211 = vector.broadcast %210 : vector<16x1xf32> to vector<16x128xf32>
    %212 = arith.subf %204, %211 : vector<16x128xf32>
    %213 = vector.broadcast %6 : vector<1x128xf32> to vector<16x128xf32>
    %214 = arith.mulf %212, %213 : vector<16x128xf32>
    %215 = arith.mulf %214, %214 : vector<16x128xf32>
    %cst_59 = arith.constant dense<0.000000e+00> : vector<16xf32>
    %216 = vector.multi_reduction <add>, %215, %cst_59 [1] : vector<16x128xf32> to vector<16xf32>
    %217 = vector.shape_cast %216 : vector<16xf32> to vector<16x1xf32>
    %cst_60 = arith.constant 3.125000e-02 : f32
    %218 = vector.broadcast %cst_60 : f32 to vector<16x1xf32>
    %219 = arith.mulf %217, %218 : vector<16x1xf32>
    %220 = vector.broadcast %210 : vector<16x1xf32> to vector<16x128xf32>
    %221 = arith.subf %204, %220 : vector<16x128xf32>
    %cst_61 = arith.constant 9.99999974E-6 : f32
    %222 = vector.broadcast %cst_61 : f32 to vector<16x1xf32>
    %223 = arith.addf %219, %222 : vector<16x1xf32>
    %224 = math.rsqrt %223 : vector<16x1xf32>
    %225 = vector.broadcast %224 : vector<16x1xf32> to vector<16x128xf32>
    %226 = arith.mulf %221, %225 : vector<16x128xf32>
    %227 = vector.broadcast %205 : vector<1x128xf32> to vector<16x128xf32>
    %228 = arith.mulf %226, %227 : vector<16x128xf32>
    %229 = vector.broadcast %206 : vector<1x128xf32> to vector<16x128xf32>
    %230 = arith.addf %228, %229 : vector<16x128xf32>
    %231 = arith.truncf %230 : vector<16x128xf32> to vector<16x128xbf16>
    %c0_62 = arith.constant 0 : index
    %c0_63 = arith.constant 0 : index
    %232 = vector.load %arg9[%c0_62, %c0_63] : memref<128x128xbf16, #tpu.memory_space<vmem>>, vector<128x128xbf16>
    %cst_64 = arith.constant dense<0.000000e+00> : vector<16x128xf32>
    %233 = tpu.matmul %231, %232, %cst_64 {dimension_numbers = #tpu.dot_dimension_numbers<[1], [0], [0], [1], [0, 0, 1, 1], [], []>} : vector<16x128xbf16>, vector<128x128xbf16>, vector<16x128xf32> -> vector<16x128xf32>
    %c0_65 = arith.constant 0 : index
    %c0_66 = arith.constant 0 : index
    %234 = vector.load %arg10[%c0_65, %c0_66] : memref<1x128xf32, #tpu.memory_space<vmem>>, vector<1x128xf32>
    %235 = vector.broadcast %234 : vector<1x128xf32> to vector<16x128xf32>
    %236 = arith.addf %233, %235 : vector<16x128xf32>
    %cst_67 = arith.constant 0.000000e+00 : f32
    %237 = vector.broadcast %cst_67 : f32 to vector<16x128xf32>
    %238 = arith.maximumf %236, %237 : vector<16x128xf32>
    %239 = arith.truncf %238 : vector<16x128xf32> to vector<16x128xbf16>
    %c0_68 = arith.constant 0 : index
    %c0_69 = arith.constant 0 : index
    %240 = vector.load %arg11[%c0_68, %c0_69] : memref<128x128xbf16, #tpu.memory_space<vmem>>, vector<128x128xbf16>
    %cst_70 = arith.constant dense<0.000000e+00> : vector<16x128xf32>
    %241 = tpu.matmul %239, %240, %cst_70 {dimension_numbers = #tpu.dot_dimension_numbers<[1], [0], [0], [1], [0, 0, 1, 1], [], []>} : vector<16x128xbf16>, vector<128x128xbf16>, vector<16x128xf32> -> vector<16x128xf32>
    %c0_71 = arith.constant 0 : index
    %c0_72 = arith.constant 0 : index
    %242 = vector.load %arg12[%c0_71, %c0_72] : memref<1x128xf32, #tpu.memory_space<vmem>>, vector<1x128xf32>
    %243 = vector.broadcast %242 : vector<1x128xf32> to vector<16x128xf32>
    %244 = arith.addf %241, %243 : vector<16x128xf32>
    %245 = arith.addf %230, %244 : vector<16x128xf32>
    %c0_73 = arith.constant 0 : index
    %c0_74 = arith.constant 0 : index
    %246 = vector.load %arg13[%c0_73, %c0_74] : memref<1x128xf32, #tpu.memory_space<vmem>>, vector<1x128xf32>
    %c0_75 = arith.constant 0 : index
    %c0_76 = arith.constant 0 : index
    %247 = vector.load %arg14[%c0_75, %c0_76] : memref<1x128xf32, #tpu.memory_space<vmem>>, vector<1x128xf32>
    %cst_77 = arith.constant dense<0.000000e+00> : vector<16xf32>
    %248 = vector.multi_reduction <add>, %245, %cst_77 [1] : vector<16x128xf32> to vector<16xf32>
    %249 = vector.shape_cast %248 : vector<16xf32> to vector<16x1xf32>
    %cst_78 = arith.constant 3.125000e-02 : f32
    %250 = vector.broadcast %cst_78 : f32 to vector<16x1xf32>
    %251 = arith.mulf %249, %250 : vector<16x1xf32>
    %252 = vector.broadcast %251 : vector<16x1xf32> to vector<16x128xf32>
    %253 = arith.subf %245, %252 : vector<16x128xf32>
    %254 = vector.broadcast %6 : vector<1x128xf32> to vector<16x128xf32>
    %255 = arith.mulf %253, %254 : vector<16x128xf32>
    %256 = arith.mulf %255, %255 : vector<16x128xf32>
    %cst_79 = arith.constant dense<0.000000e+00> : vector<16xf32>
    %257 = vector.multi_reduction <add>, %256, %cst_79 [1] : vector<16x128xf32> to vector<16xf32>
    %258 = vector.shape_cast %257 : vector<16xf32> to vector<16x1xf32>
    %cst_80 = arith.constant 3.125000e-02 : f32
    %259 = vector.broadcast %cst_80 : f32 to vector<16x1xf32>
    %260 = arith.mulf %258, %259 : vector<16x1xf32>
    %261 = vector.broadcast %251 : vector<16x1xf32> to vector<16x128xf32>
    %262 = arith.subf %245, %261 : vector<16x128xf32>
    %cst_81 = arith.constant 9.99999974E-6 : f32
    %263 = vector.broadcast %cst_81 : f32 to vector<16x1xf32>
    %264 = arith.addf %260, %263 : vector<16x1xf32>
    %265 = math.rsqrt %264 : vector<16x1xf32>
    %266 = vector.broadcast %265 : vector<16x1xf32> to vector<16x128xf32>
    %267 = arith.mulf %262, %266 : vector<16x128xf32>
    %268 = vector.broadcast %246 : vector<1x128xf32> to vector<16x128xf32>
    %269 = arith.mulf %267, %268 : vector<16x128xf32>
    %270 = vector.broadcast %247 : vector<1x128xf32> to vector<16x128xf32>
    %271 = arith.addf %269, %270 : vector<16x128xf32>
    %272 = arith.truncf %271 : vector<16x128xf32> to vector<16x128xbf16>
    %c0_82 = arith.constant 0 : index
    %c0_83 = arith.constant 0 : index
    %273 = vector.load %arg15[%c0_82, %c0_83] : memref<16x128xbf16, #tpu.memory_space<vmem>>, vector<16x128xbf16>
    tpu.vector_store %arg15[%c0_82, %c0_83], %272 {strides = array<i32>} : memref<16x128xbf16, #tpu.memory_space<vmem>>, vector<16x128xbf16>,
    return
  }
  func.func @transform_0(%arg0: i32) -> (i32, i32) {
    %c0_i32 = arith.constant 0 : i32
    %c0_i32_0 = arith.constant 0 : i32
    return %arg0, %c0_i32 : i32, i32
  }
  func.func @transform_1(%arg0: i32) -> (i32, i32, i32) {
    %c0_i32 = arith.constant 0 : i32
    %c0_i32_0 = arith.constant 0 : i32
    %c0_i32_1 = arith.constant 0 : i32
    return %arg0, %c0_i32, %c0_i32_0 : i32, i32, i32
  }
  func.func @transform_2(%arg0: i32) -> (i32, i32) {
    %c0_i32 = arith.constant 0 : i32
    %c0_i32_0 = arith.constant 0 : i32
    %c0_i32_1 = arith.constant 0 : i32
    return %c0_i32, %c0_i32_0 : i32, i32
  }
  func.func @transform_3(%arg0: i32) -> (i32, i32) {
    %c0_i32 = arith.constant 0 : i32
    %c0_i32_0 = arith.constant 0 : i32
    %c0_i32_1 = arith.constant 0 : i32
    return %c0_i32, %c0_i32_0 : i32, i32
  }
  func.func @transform_4(%arg0: i32) -> (i32, i32) {
    %c0_i32 = arith.constant 0 : i32
    %c0_i32_0 = arith.constant 0 : i32
    %c0_i32_1 = arith.constant 0 : i32
    return %c0_i32, %c0_i32_0 : i32, i32
  }
  func.func @transform_5(%arg0: i32) -> (i32, i32) {
    %c0_i32 = arith.constant 0 : i32
    %c0_i32_0 = arith.constant 0 : i32
    %c0_i32_1 = arith.constant 0 : i32
    return %c0_i32, %c0_i32_0 : i32, i32
  }
  func.func @transform_6(%arg0: i32) -> (i32, i32) {
    %c0_i32 = arith.constant 0 : i32
    %c0_i32_0 = arith.constant 0 : i32
    %c0_i32_1 = arith.constant 0 : i32
    return %c0_i32, %c0_i32_0 : i32, i32
  }
  func.func @transform_7(%arg0: i32) -> (i32, i32) {
    %c0_i32 = arith.constant 0 : i32
    %c0_i32_0 = arith.constant 0 : i32
    %c0_i32_1 = arith.constant 0 : i32
    return %c0_i32, %c0_i32_0 : i32, i32
  }
  func.func @transform_8(%arg0: i32) -> (i32, i32) {
    %c0_i32 = arith.constant 0 : i32
    %c0_i32_0 = arith.constant 0 : i32
    %c0_i32_1 = arith.constant 0 : i32
    return %c0_i32, %c0_i32_0 : i32, i32
  }
  func.func @transform_9(%arg0: i32) -> (i32, i32) {
    %c0_i32 = arith.constant 0 : i32
    %c0_i32_0 = arith.constant 0 : i32
    %c0_i32_1 = arith.constant 0 : i32
    return %c0_i32, %c0_i32_0 : i32, i32
  }
  func.func @transform_10(%arg0: i32) -> (i32, i32) {
    %c0_i32 = arith.constant 0 : i32
    %c0_i32_0 = arith.constant 0 : i32
    %c0_i32_1 = arith.constant 0 : i32
    return %c0_i32, %c0_i32_0 : i32, i32
  }
  func.func @transform_11(%arg0: i32) -> (i32, i32) {
    %c0_i32 = arith.constant 0 : i32
    %c0_i32_0 = arith.constant 0 : i32
    %c0_i32_1 = arith.constant 0 : i32
    return %c0_i32, %c0_i32_0 : i32, i32
  }
  func.func @transform_12(%arg0: i32) -> (i32, i32) {
    %c0_i32 = arith.constant 0 : i32
    %c0_i32_0 = arith.constant 0 : i32
    %c0_i32_1 = arith.constant 0 : i32
    return %c0_i32, %c0_i32_0 : i32, i32
  }
  func.func @transform_13(%arg0: i32) -> (i32, i32) {
    %c0_i32 = arith.constant 0 : i32
    %c0_i32_0 = arith.constant 0 : i32
    %c0_i32_1 = arith.constant 0 : i32
    return %c0_i32, %c0_i32_0 : i32, i32
  }
  func.func @transform_14(%arg0: i32) -> (i32, i32) {
    %c0_i32 = arith.constant 0 : i32
    %c0_i32_0 = arith.constant 0 : i32
    return %arg0, %c0_i32 : i32, i32
  }
}

module attributes {stable_mosaic.version = 11 : i64} {
  func.func @_mlp_chain_kernel(%arg0: i32, %arg1: memref<16x128xf32, #tpu.memory_space<vmem>>, %arg2: memref<128x128xbf16, #tpu.memory_space<vmem>>, %arg3: memref<1x128xf32, #tpu.memory_space<vmem>>, %arg4: memref<16x128xbf16, #tpu.memory_space<vmem>>) attributes {dimension_semantics = [#tpu.dimension_semantics<parallel>], iteration_bounds = array<i64: 1>, scalar_prefetch = 0 : i64, scratch_operands = 0 : i64, tpu.core_type = #tpu.core_type<tc>, window_params = [{transform_indices = @transform_0, window_bounds = array<i64: 16, 128>}, {pipeline_mode = #tpu.pipeline_mode<synchronous>, transform_indices = @transform_1, window_bounds = array<i64: 128, 128>}, {pipeline_mode = #tpu.pipeline_mode<synchronous>, transform_indices = @transform_2, window_bounds = array<i64: 1, 128>}, {transform_indices = @transform_3, window_bounds = array<i64: 16, 128>}]} {
    %c0 = arith.constant 0 : index
    %c0_0 = arith.constant 0 : index
    %0 = vector.load %arg1[%c0, %c0_0] : memref<16x128xf32, #tpu.memory_space<vmem>>, vector<16x128xf32>
    %1 = arith.truncf %0 : vector<16x128xf32> to vector<16x128xbf16>
    %c0_1 = arith.constant 0 : index
    %c0_2 = arith.constant 0 : index
    %2 = vector.load %arg2[%c0_1, %c0_2] : memref<128x128xbf16, #tpu.memory_space<vmem>>, vector<128x128xbf16>
    %cst = arith.constant dense<0.000000e+00> : vector<16x128xf32>
    %3 = tpu.matmul %1, %2, %cst {dimension_numbers = #tpu.dot_dimension_numbers<[1], [0], [0], [1], [0, 0, 1, 1], [], []>} : vector<16x128xbf16>, vector<128x128xbf16>, vector<16x128xf32> -> vector<16x128xf32>
    %c0_3 = arith.constant 0 : index
    %c0_4 = arith.constant 0 : index
    %4 = vector.load %arg3[%c0_3, %c0_4] : memref<1x128xf32, #tpu.memory_space<vmem>>, vector<1x128xf32>
    %5 = vector.broadcast %4 : vector<1x128xf32> to vector<16x128xf32>
    %6 = arith.addf %3, %5 : vector<16x128xf32>
    %7 = arith.truncf %6 : vector<16x128xf32> to vector<16x128xbf16>
    %c0_5 = arith.constant 0 : index
    %c0_6 = arith.constant 0 : index
    %8 = vector.load %arg4[%c0_5, %c0_6] : memref<16x128xbf16, #tpu.memory_space<vmem>>, vector<16x128xbf16>
    tpu.vector_store %arg4[%c0_5, %c0_6], %7 {strides = array<i32>} : memref<16x128xbf16, #tpu.memory_space<vmem>>, vector<16x128xbf16>,
    return
  }
  func.func @transform_0(%arg0: i32) -> (i32, i32) {
    %c0_i32 = arith.constant 0 : i32
    %c0_i32_0 = arith.constant 0 : i32
    return %arg0, %c0_i32 : i32, i32
  }
  func.func @transform_1(%arg0: i32) -> (i32, i32) {
    %c0_i32 = arith.constant 0 : i32
    %c0_i32_0 = arith.constant 0 : i32
    %c0_i32_1 = arith.constant 0 : i32
    return %c0_i32, %c0_i32_0 : i32, i32
  }
  func.func @transform_2(%arg0: i32) -> (i32, i32) {
    %c0_i32 = arith.constant 0 : i32
    %c0_i32_0 = arith.constant 0 : i32
    %c0_i32_1 = arith.constant 0 : i32
    return %c0_i32, %c0_i32_0 : i32, i32
  }
  func.func @transform_3(%arg0: i32) -> (i32, i32) {
    %c0_i32 = arith.constant 0 : i32
    %c0_i32_0 = arith.constant 0 : i32
    return %arg0, %c0_i32 : i32, i32
  }
}

module attributes {stable_mosaic.version = 11 : i64} {
  func.func @_transformer_layer_kernel(%arg0: i32, %arg1: memref<16x128xbf16, #tpu.memory_space<vmem>>, %arg2: memref<2x8x8xf32, #tpu.memory_space<vmem>>, %arg3: memref<128x384xbf16, #tpu.memory_space<vmem>>, %arg4: memref<1x384xf32, #tpu.memory_space<vmem>>, %arg5: memref<128x128xbf16, #tpu.memory_space<vmem>>, %arg6: memref<1x128xf32, #tpu.memory_space<vmem>>, %arg7: memref<1x128xf32, #tpu.memory_space<vmem>>, %arg8: memref<1x128xf32, #tpu.memory_space<vmem>>, %arg9: memref<128x128xbf16, #tpu.memory_space<vmem>>, %arg10: memref<1x128xf32, #tpu.memory_space<vmem>>, %arg11: memref<128x128xbf16, #tpu.memory_space<vmem>>, %arg12: memref<1x128xf32, #tpu.memory_space<vmem>>, %arg13: memref<1x128xf32, #tpu.memory_space<vmem>>, %arg14: memref<1x128xf32, #tpu.memory_space<vmem>>, %arg15: memref<16x128xbf16, #tpu.memory_space<vmem>>) attributes {dimension_semantics = [#tpu.dimension_semantics<parallel>], iteration_bounds = array<i64: 1>, scalar_prefetch = 0 : i64, scratch_operands = 0 : i64, tpu.core_type = #tpu.core_type<tc>, window_params = [{transform_indices = @transform_0, window_bounds = array<i64: 16, 128>}, {transform_indices = @transform_1, window_bounds = array<i64: 2, 8, 8>}, {pipeline_mode = #tpu.pipeline_mode<synchronous>, transform_indices = @transform_2, window_bounds = array<i64: 128, 384>}, {pipeline_mode = #tpu.pipeline_mode<synchronous>, transform_indices = @transform_3, window_bounds = array<i64: 1, 384>}, {pipeline_mode = #tpu.pipeline_mode<synchronous>, transform_indices = @transform_4, window_bounds = array<i64: 128, 128>}, {pipeline_mode = #tpu.pipeline_mode<synchronous>, transform_indices = @transform_5, window_bounds = array<i64: 1, 128>}, {pipeline_mode = #tpu.pipeline_mode<synchronous>, transform_indices = @transform_6, window_bounds = array<i64: 1, 128>}, {pipeline_mode = #tpu.pipeline_mode<synchronous>, transform_indices = @transform_7, window_bounds = array<i64: 1, 128>}, {pipeline_mode = #tpu.pipeline_mode<synchronous>, transform_indices = @transform_8, window_bounds = array<i64: 128, 128>}, {pipeline_mode = #tpu.pipeline_mode<synchronous>, transform_indices = @transform_9, window_bounds = array<i64: 1, 128>}, {pipeline_mode = #tpu.pipeline_mode<synchronous>, transform_indices = @transform_10, window_bounds = array<i64: 128, 128>}, {pipeline_mode = #tpu.pipeline_mode<synchronous>, transform_indices = @transform_11, window_bounds = array<i64: 1, 128>}, {pipeline_mode = #tpu.pipeline_mode<synchronous>, transform_indices = @transform_12, window_bounds = array<i64: 1, 128>}, {pipeline_mode = #tpu.pipeline_mode<synchronous>, transform_indices = @transform_13, window_bounds = array<i64: 1, 128>}, {transform_indices = @transform_14, window_bounds = array<i64: 16, 128>}]} {
    %c0 = arith.constant 0 : index
    %c0_0 = arith.constant 0 : index
    %0 = vector.load %arg1[%c0, %c0_0] : memref<16x128xbf16, #tpu.memory_space<vmem>>, vector<16x128xbf16>
    %1 = arith.extf %0 : vector<16x128xbf16> to vector<16x128xf32>
    %2 = tpu.iota {dimensions = array<i32: 1>} : vector<1x128xi32>
    %c32_i32 = arith.constant 32 : i32
    %3 = vector.broadcast %c32_i32 : i32 to vector<1x128xi32>
    %4 = arith.cmpi slt, %2, %3 : vector<1x128xi32>
    %5 = arith.extui %4 : vector<1x128xi1> to vector<1x128xi32>
    %6 = arith.sitofp %5 : vector<1x128xi32> to vector<1x128xf32>
    %7 = arith.truncf %1 : vector<16x128xf32> to vector<16x128xbf16>
    %c0_1 = arith.constant 0 : index
    %c0_2 = arith.constant 0 : index
    %8 = vector.load %arg3[%c0_1, %c0_2] : memref<128x384xbf16, #tpu.memory_space<vmem>>, vector<128x384xbf16>
    %cst = arith.constant dense<0.000000e+00> : vector<16x384xf32>
    %9 = tpu.matmul %7, %8, %cst {dimension_numbers = #tpu.dot_dimension_numbers<[1], [0], [0], [1], [0, 0, 1, 1], [], []>} : vector<16x128xbf16>, vector<128x384xbf16>, vector<16x384xf32> -> vector<16x384xf32>
    %c0_3 = arith.constant 0 : index
    %c0_4 = arith.constant 0 : index
    %10 = vector.load %arg4[%c0_3, %c0_4] : memref<1x384xf32, #tpu.memory_space<vmem>>, vector<1x384xf32>
    %11 = vector.broadcast %10 : vector<1x384xf32> to vector<16x384xf32>
    %12 = arith.addf %9, %11 : vector<16x384xf32>
    %13 = vector.extract_strided_slice %12 {offsets = [0, 0], sizes = [16, 128], strides = [1, 1]} : vector<16x384xf32> to vector<16x128xf32>
    %14 = vector.extract_strided_slice %12 {offsets = [0, 128], sizes = [16, 128], strides = [1, 1]} : vector<16x384xf32> to vector<16x128xf32>
    %15 = vector.extract_strided_slice %12 {offsets = [0, 256], sizes = [16, 128], strides = [1, 1]} : vector<16x384xf32> to vector<16x128xf32>
    %c0_5 = arith.constant 0 : index
    %c0_6 = arith.constant 0 : index
    %c0_7 = arith.constant 0 : index
    %16 = vector.load %arg2[%c0_5, %c0_6, %c0_7] : memref<2x8x8xf32, #tpu.memory_space<vmem>>, vector<2x8x8xf32>
    %17 = vector.extract_strided_slice %13 {offsets = [0, 0], sizes = [8, 128], strides = [1, 1]} : vector<16x128xf32> to vector<8x128xf32>
    %18 = arith.truncf %17 : vector<8x128xf32> to vector<8x128xbf16>
    %19 = vector.extract_strided_slice %14 {offsets = [0, 0], sizes = [8, 128], strides = [1, 1]} : vector<16x128xf32> to vector<8x128xf32>
    %20 = arith.truncf %19 : vector<8x128xf32> to vector<8x128xbf16>
    %21 = tpu.transpose %20, [1, 0] : vector<8x128xbf16> -> vector<128x8xbf16>
    %22 = vector.extract_strided_slice %15 {offsets = [0, 0], sizes = [8, 128], strides = [1, 1]} : vector<16x128xf32> to vector<8x128xf32>
    %23 = arith.truncf %22 : vector<8x128xf32> to vector<8x128xbf16>
    %24 = vector.extract_strided_slice %16 {offsets = [0, 0, 0], sizes = [1, 1, 8], strides = [1, 1, 1]} : vector<2x8x8xf32> to vector<1x1x8xf32>
    %25 = vector.shape_cast %24 : vector<1x1x8xf32> to vector<1x8xf32>
    %26 = vector.extract_strided_slice %18 {offsets = [0, 0], sizes = [8, 32], strides = [1, 1]} : vector<8x128xbf16> to vector<8x32xbf16>
    %27 = vector.extract_strided_slice %21 {offsets = [0, 0], sizes = [32, 8], strides = [1, 1]} : vector<128x8xbf16> to vector<32x8xbf16>
    %cst_8 = arith.constant dense<0.000000e+00> : vector<8x8xf32>
    %28 = tpu.matmul %26, %27, %cst_8 {dimension_numbers = #tpu.dot_dimension_numbers<[1], [0], [0], [1], [0, 0, 1, 1], [], []>} : vector<8x32xbf16>, vector<32x8xbf16>, vector<8x8xf32> -> vector<8x8xf32>
    %cst_9 = arith.constant 0.353553385 : f32
    %29 = vector.broadcast %cst_9 : f32 to vector<8x8xf32>
    %30 = arith.mulf %28, %29 : vector<8x8xf32>
    %31 = vector.broadcast %25 : vector<1x8xf32> to vector<8x8xf32>
    %32 = arith.addf %30, %31 : vector<8x8xf32>
    %cst_10 = arith.constant dense<0xFF800000> : vector<8xf32>
    %33 = vector.multi_reduction <maximumf>, %32, %cst_10 [1] : vector<8x8xf32> to vector<8xf32>
    %34 = vector.shape_cast %33 : vector<8xf32> to vector<8x1xf32>
    %35 = vector.broadcast %34 : vector<8x1xf32> to vector<8x8xf32>
    %36 = arith.subf %32, %35 : vector<8x8xf32>
    %37 = math.exp %36 : vector<8x8xf32>
    %cst_11 = arith.constant dense<0.000000e+00> : vector<8xf32>
    %38 = vector.multi_reduction <add>, %37, %cst_11 [1] : vector<8x8xf32> to vector<8xf32>
    %39 = vector.shape_cast %38 : vector<8xf32> to vector<8x1xf32>
    %40 = tpu.reciprocal %39 {approx = true} : vector<8x1xf32> -> vector<8x1xf32>
    %41 = vector.broadcast %40 : vector<8x1xf32> to vector<8x8xf32>
    %42 = arith.mulf %37, %41 : vector<8x8xf32>
    %43 = arith.truncf %42 : vector<8x8xf32> to vector<8x8xbf16>
    %44 = vector.extract_strided_slice %23 {offsets = [0, 0], sizes = [8, 32], strides = [1, 1]} : vector<8x128xbf16> to vector<8x32xbf16>
    %cst_12 = arith.constant dense<0.000000e+00> : vector<8x32xf32>
    %45 = tpu.matmul %43, %44, %cst_12 {dimension_numbers = #tpu.dot_dimension_numbers<[1], [0], [0], [1], [0, 0, 1, 1], [], []>} : vector<8x8xbf16>, vector<8x32xbf16>, vector<8x32xf32> -> vector<8x32xf32>
    %46 = vector.extract_strided_slice %18 {offsets = [0, 32], sizes = [8, 32], strides = [1, 1]} : vector<8x128xbf16> to vector<8x32xbf16>
    %47 = vector.extract_strided_slice %21 {offsets = [32, 0], sizes = [32, 8], strides = [1, 1]} : vector<128x8xbf16> to vector<32x8xbf16>
    %cst_13 = arith.constant dense<0.000000e+00> : vector<8x8xf32>
    %48 = tpu.matmul %46, %47, %cst_13 {dimension_numbers = #tpu.dot_dimension_numbers<[1], [0], [0], [1], [0, 0, 1, 1], [], []>} : vector<8x32xbf16>, vector<32x8xbf16>, vector<8x8xf32> -> vector<8x8xf32>
    %cst_14 = arith.constant 0.353553385 : f32
    %49 = vector.broadcast %cst_14 : f32 to vector<8x8xf32>
    %50 = arith.mulf %48, %49 : vector<8x8xf32>
    %51 = vector.broadcast %25 : vector<1x8xf32> to vector<8x8xf32>
    %52 = arith.addf %50, %51 : vector<8x8xf32>
    %cst_15 = arith.constant dense<0xFF800000> : vector<8xf32>
    %53 = vector.multi_reduction <maximumf>, %52, %cst_15 [1] : vector<8x8xf32> to vector<8xf32>
    %54 = vector.shape_cast %53 : vector<8xf32> to vector<8x1xf32>
    %55 = vector.broadcast %54 : vector<8x1xf32> to vector<8x8xf32>
    %56 = arith.subf %52, %55 : vector<8x8xf32>
    %57 = math.exp %56 : vector<8x8xf32>
    %cst_16 = arith.constant dense<0.000000e+00> : vector<8xf32>
    %58 = vector.multi_reduction <add>, %57, %cst_16 [1] : vector<8x8xf32> to vector<8xf32>
    %59 = vector.shape_cast %58 : vector<8xf32> to vector<8x1xf32>
    %60 = tpu.reciprocal %59 {approx = true} : vector<8x1xf32> -> vector<8x1xf32>
    %61 = vector.broadcast %60 : vector<8x1xf32> to vector<8x8xf32>
    %62 = arith.mulf %57, %61 : vector<8x8xf32>
    %63 = arith.truncf %62 : vector<8x8xf32> to vector<8x8xbf16>
    %64 = vector.extract_strided_slice %23 {offsets = [0, 32], sizes = [8, 32], strides = [1, 1]} : vector<8x128xbf16> to vector<8x32xbf16>
    %cst_17 = arith.constant dense<0.000000e+00> : vector<8x32xf32>
    %65 = tpu.matmul %63, %64, %cst_17 {dimension_numbers = #tpu.dot_dimension_numbers<[1], [0], [0], [1], [0, 0, 1, 1], [], []>} : vector<8x8xbf16>, vector<8x32xbf16>, vector<8x32xf32> -> vector<8x32xf32>
    %66 = vector.extract_strided_slice %18 {offsets = [0, 64], sizes = [8, 32], strides = [1, 1]} : vector<8x128xbf16> to vector<8x32xbf16>
    %67 = vector.extract_strided_slice %21 {offsets = [64, 0], sizes = [32, 8], strides = [1, 1]} : vector<128x8xbf16> to vector<32x8xbf16>
    %cst_18 = arith.constant dense<0.000000e+00> : vector<8x8xf32>
    %68 = tpu.matmul %66, %67, %cst_18 {dimension_numbers = #tpu.dot_dimension_numbers<[1], [0], [0], [1], [0, 0, 1, 1], [], []>} : vector<8x32xbf16>, vector<32x8xbf16>, vector<8x8xf32> -> vector<8x8xf32>
    %cst_19 = arith.constant 0.353553385 : f32
    %69 = vector.broadcast %cst_19 : f32 to vector<8x8xf32>
    %70 = arith.mulf %68, %69 : vector<8x8xf32>
    %71 = vector.broadcast %25 : vector<1x8xf32> to vector<8x8xf32>
    %72 = arith.addf %70, %71 : vector<8x8xf32>
    %cst_20 = arith.constant dense<0xFF800000> : vector<8xf32>
    %73 = vector.multi_reduction <maximumf>, %72, %cst_20 [1] : vector<8x8xf32> to vector<8xf32>
    %74 = vector.shape_cast %73 : vector<8xf32> to vector<8x1xf32>
    %75 = vector.broadcast %74 : vector<8x1xf32> to vector<8x8xf32>
    %76 = arith.subf %72, %75 : vector<8x8xf32>
    %77 = math.exp %76 : vector<8x8xf32>
    %cst_21 = arith.constant dense<0.000000e+00> : vector<8xf32>
    %78 = vector.multi_reduction <add>, %77, %cst_21 [1] : vector<8x8xf32> to vector<8xf32>
    %79 = vector.shape_cast %78 : vector<8xf32> to vector<8x1xf32>
    %80 = tpu.reciprocal %79 {approx = true} : vector<8x1xf32> -> vector<8x1xf32>
    %81 = vector.broadcast %80 : vector<8x1xf32> to vector<8x8xf32>
    %82 = arith.mulf %77, %81 : vector<8x8xf32>
    %83 = arith.truncf %82 : vector<8x8xf32> to vector<8x8xbf16>
    %84 = vector.extract_strided_slice %23 {offsets = [0, 64], sizes = [8, 32], strides = [1, 1]} : vector<8x128xbf16> to vector<8x32xbf16>
    %cst_22 = arith.constant dense<0.000000e+00> : vector<8x32xf32>
    %85 = tpu.matmul %83, %84, %cst_22 {dimension_numbers = #tpu.dot_dimension_numbers<[1], [0], [0], [1], [0, 0, 1, 1], [], []>} : vector<8x8xbf16>, vector<8x32xbf16>, vector<8x32xf32> -> vector<8x32xf32>
    %86 = vector.extract_strided_slice %18 {offsets = [0, 96], sizes = [8, 32], strides = [1, 1]} : vector<8x128xbf16> to vector<8x32xbf16>
    %87 = vector.extract_strided_slice %21 {offsets = [96, 0], sizes = [32, 8], strides = [1, 1]} : vector<128x8xbf16> to vector<32x8xbf16>
    %cst_23 = arith.constant dense<0.000000e+00> : vector<8x8xf32>
    %88 = tpu.matmul %86, %87, %cst_23 {dimension_numbers = #tpu.dot_dimension_numbers<[1], [0], [0], [1], [0, 0, 1, 1], [], []>} : vector<8x32xbf16>, vector<32x8xbf16>, vector<8x8xf32> -> vector<8x8xf32>
    %cst_24 = arith.constant 0.353553385 : f32
    %89 = vector.broadcast %cst_24 : f32 to vector<8x8xf32>
    %90 = arith.mulf %88, %89 : vector<8x8xf32>
    %91 = vector.broadcast %25 : vector<1x8xf32> to vector<8x8xf32>
    %92 = arith.addf %90, %91 : vector<8x8xf32>
    %cst_25 = arith.constant dense<0xFF800000> : vector<8xf32>
    %93 = vector.multi_reduction <maximumf>, %92, %cst_25 [1] : vector<8x8xf32> to vector<8xf32>
    %94 = vector.shape_cast %93 : vector<8xf32> to vector<8x1xf32>
    %95 = vector.broadcast %94 : vector<8x1xf32> to vector<8x8xf32>
    %96 = arith.subf %92, %95 : vector<8x8xf32>
    %97 = math.exp %96 : vector<8x8xf32>
    %cst_26 = arith.constant dense<0.000000e+00> : vector<8xf32>
    %98 = vector.multi_reduction <add>, %97, %cst_26 [1] : vector<8x8xf32> to vector<8xf32>
    %99 = vector.shape_cast %98 : vector<8xf32> to vector<8x1xf32>
    %100 = tpu.reciprocal %99 {approx = true} : vector<8x1xf32> -> vector<8x1xf32>
    %101 = vector.broadcast %100 : vector<8x1xf32> to vector<8x8xf32>
    %102 = arith.mulf %97, %101 : vector<8x8xf32>
    %103 = arith.truncf %102 : vector<8x8xf32> to vector<8x8xbf16>
    %104 = vector.extract_strided_slice %23 {offsets = [0, 96], sizes = [8, 32], strides = [1, 1]} : vector<8x128xbf16> to vector<8x32xbf16>
    %cst_27 = arith.constant dense<0.000000e+00> : vector<8x32xf32>
    %105 = tpu.matmul %103, %104, %cst_27 {dimension_numbers = #tpu.dot_dimension_numbers<[1], [0], [0], [1], [0, 0, 1, 1], [], []>} : vector<8x8xbf16>, vector<8x32xbf16>, vector<8x32xf32> -> vector<8x32xf32>
    %106 = tpu.concatenate %45, %65, %85, %105 in 1 : vector<8x32xf32>, vector<8x32xf32>, vector<8x32xf32>, vector<8x32xf32> -> vector<8x128xf32>
    %107 = vector.extract_strided_slice %13 {offsets = [8, 0], sizes = [8, 128], strides = [1, 1]} : vector<16x128xf32> to vector<8x128xf32>
    %108 = arith.truncf %107 : vector<8x128xf32> to vector<8x128xbf16>
    %109 = vector.extract_strided_slice %14 {offsets = [8, 0], sizes = [8, 128], strides = [1, 1]} : vector<16x128xf32> to vector<8x128xf32>
    %110 = arith.truncf %109 : vector<8x128xf32> to vector<8x128xbf16>
    %111 = tpu.transpose %110, [1, 0] : vector<8x128xbf16> -> vector<128x8xbf16>
    %112 = vector.extract_strided_slice %15 {offsets = [8, 0], sizes = [8, 128], strides = [1, 1]} : vector<16x128xf32> to vector<8x128xf32>
    %113 = arith.truncf %112 : vector<8x128xf32> to vector<8x128xbf16>
    %114 = vector.extract_strided_slice %16 {offsets = [1, 0, 0], sizes = [1, 1, 8], strides = [1, 1, 1]} : vector<2x8x8xf32> to vector<1x1x8xf32>
    %115 = vector.shape_cast %114 : vector<1x1x8xf32> to vector<1x8xf32>
    %116 = vector.extract_strided_slice %108 {offsets = [0, 0], sizes = [8, 32], strides = [1, 1]} : vector<8x128xbf16> to vector<8x32xbf16>
    %117 = vector.extract_strided_slice %111 {offsets = [0, 0], sizes = [32, 8], strides = [1, 1]} : vector<128x8xbf16> to vector<32x8xbf16>
    %cst_28 = arith.constant dense<0.000000e+00> : vector<8x8xf32>
    %118 = tpu.matmul %116, %117, %cst_28 {dimension_numbers = #tpu.dot_dimension_numbers<[1], [0], [0], [1], [0, 0, 1, 1], [], []>} : vector<8x32xbf16>, vector<32x8xbf16>, vector<8x8xf32> -> vector<8x8xf32>
    %cst_29 = arith.constant 0.353553385 : f32
    %119 = vector.broadcast %cst_29 : f32 to vector<8x8xf32>
    %120 = arith.mulf %118, %119 : vector<8x8xf32>
    %121 = vector.broadcast %115 : vector<1x8xf32> to vector<8x8xf32>
    %122 = arith.addf %120, %121 : vector<8x8xf32>
    %cst_30 = arith.constant dense<0xFF800000> : vector<8xf32>
    %123 = vector.multi_reduction <maximumf>, %122, %cst_30 [1] : vector<8x8xf32> to vector<8xf32>
    %124 = vector.shape_cast %123 : vector<8xf32> to vector<8x1xf32>
    %125 = vector.broadcast %124 : vector<8x1xf32> to vector<8x8xf32>
    %126 = arith.subf %122, %125 : vector<8x8xf32>
    %127 = math.exp %126 : vector<8x8xf32>
    %cst_31 = arith.constant dense<0.000000e+00> : vector<8xf32>
    %128 = vector.multi_reduction <add>, %127, %cst_31 [1] : vector<8x8xf32> to vector<8xf32>
    %129 = vector.shape_cast %128 : vector<8xf32> to vector<8x1xf32>
    %130 = tpu.reciprocal %129 {approx = true} : vector<8x1xf32> -> vector<8x1xf32>
    %131 = vector.broadcast %130 : vector<8x1xf32> to vector<8x8xf32>
    %132 = arith.mulf %127, %131 : vector<8x8xf32>
    %133 = arith.truncf %132 : vector<8x8xf32> to vector<8x8xbf16>
    %134 = vector.extract_strided_slice %113 {offsets = [0, 0], sizes = [8, 32], strides = [1, 1]} : vector<8x128xbf16> to vector<8x32xbf16>
    %cst_32 = arith.constant dense<0.000000e+00> : vector<8x32xf32>
    %135 = tpu.matmul %133, %134, %cst_32 {dimension_numbers = #tpu.dot_dimension_numbers<[1], [0], [0], [1], [0, 0, 1, 1], [], []>} : vector<8x8xbf16>, vector<8x32xbf16>, vector<8x32xf32> -> vector<8x32xf32>
    %136 = vector.extract_strided_slice %108 {offsets = [0, 32], sizes = [8, 32], strides = [1, 1]} : vector<8x128xbf16> to vector<8x32xbf16>
    %137 = vector.extract_strided_slice %111 {offsets = [32, 0], sizes = [32, 8], strides = [1, 1]} : vector<128x8xbf16> to vector<32x8xbf16>
    %cst_33 = arith.constant dense<0.000000e+00> : vector<8x8xf32>
    %138 = tpu.matmul %136, %137, %cst_33 {dimension_numbers = #tpu.dot_dimension_numbers<[1], [0], [0], [1], [0, 0, 1, 1], [], []>} : vector<8x32xbf16>, vector<32x8xbf16>, vector<8x8xf32> -> vector<8x8xf32>
    %cst_34 = arith.constant 0.353553385 : f32
    %139 = vector.broadcast %cst_34 : f32 to vector<8x8xf32>
    %140 = arith.mulf %138, %139 : vector<8x8xf32>
    %141 = vector.broadcast %115 : vector<1x8xf32> to vector<8x8xf32>
    %142 = arith.addf %140, %141 : vector<8x8xf32>
    %cst_35 = arith.constant dense<0xFF800000> : vector<8xf32>
    %143 = vector.multi_reduction <maximumf>, %142, %cst_35 [1] : vector<8x8xf32> to vector<8xf32>
    %144 = vector.shape_cast %143 : vector<8xf32> to vector<8x1xf32>
    %145 = vector.broadcast %144 : vector<8x1xf32> to vector<8x8xf32>
    %146 = arith.subf %142, %145 : vector<8x8xf32>
    %147 = math.exp %146 : vector<8x8xf32>
    %cst_36 = arith.constant dense<0.000000e+00> : vector<8xf32>
    %148 = vector.multi_reduction <add>, %147, %cst_36 [1] : vector<8x8xf32> to vector<8xf32>
    %149 = vector.shape_cast %148 : vector<8xf32> to vector<8x1xf32>
    %150 = tpu.reciprocal %149 {approx = true} : vector<8x1xf32> -> vector<8x1xf32>
    %151 = vector.broadcast %150 : vector<8x1xf32> to vector<8x8xf32>
    %152 = arith.mulf %147, %151 : vector<8x8xf32>
    %153 = arith.truncf %152 : vector<8x8xf32> to vector<8x8xbf16>
    %154 = vector.extract_strided_slice %113 {offsets = [0, 32], sizes = [8, 32], strides = [1, 1]} : vector<8x128xbf16> to vector<8x32xbf16>
    %cst_37 = arith.constant dense<0.000000e+00> : vector<8x32xf32>
    %155 = tpu.matmul %153, %154, %cst_37 {dimension_numbers = #tpu.dot_dimension_numbers<[1], [0], [0], [1], [0, 0, 1, 1], [], []>} : vector<8x8xbf16>, vector<8x32xbf16>, vector<8x32xf32> -> vector<8x32xf32>
    %156 = vector.extract_strided_slice %108 {offsets = [0, 64], sizes = [8, 32], strides = [1, 1]} : vector<8x128xbf16> to vector<8x32xbf16>
    %157 = vector.extract_strided_slice %111 {offsets = [64, 0], sizes = [32, 8], strides = [1, 1]} : vector<128x8xbf16> to vector<32x8xbf16>
    %cst_38 = arith.constant dense<0.000000e+00> : vector<8x8xf32>
    %158 = tpu.matmul %156, %157, %cst_38 {dimension_numbers = #tpu.dot_dimension_numbers<[1], [0], [0], [1], [0, 0, 1, 1], [], []>} : vector<8x32xbf16>, vector<32x8xbf16>, vector<8x8xf32> -> vector<8x8xf32>
    %cst_39 = arith.constant 0.353553385 : f32
    %159 = vector.broadcast %cst_39 : f32 to vector<8x8xf32>
    %160 = arith.mulf %158, %159 : vector<8x8xf32>
    %161 = vector.broadcast %115 : vector<1x8xf32> to vector<8x8xf32>
    %162 = arith.addf %160, %161 : vector<8x8xf32>
    %cst_40 = arith.constant dense<0xFF800000> : vector<8xf32>
    %163 = vector.multi_reduction <maximumf>, %162, %cst_40 [1] : vector<8x8xf32> to vector<8xf32>
    %164 = vector.shape_cast %163 : vector<8xf32> to vector<8x1xf32>
    %165 = vector.broadcast %164 : vector<8x1xf32> to vector<8x8xf32>
    %166 = arith.subf %162, %165 : vector<8x8xf32>
    %167 = math.exp %166 : vector<8x8xf32>
    %cst_41 = arith.constant dense<0.000000e+00> : vector<8xf32>
    %168 = vector.multi_reduction <add>, %167, %cst_41 [1] : vector<8x8xf32> to vector<8xf32>
    %169 = vector.shape_cast %168 : vector<8xf32> to vector<8x1xf32>
    %170 = tpu.reciprocal %169 {approx = true} : vector<8x1xf32> -> vector<8x1xf32>
    %171 = vector.broadcast %170 : vector<8x1xf32> to vector<8x8xf32>
    %172 = arith.mulf %167, %171 : vector<8x8xf32>
    %173 = arith.truncf %172 : vector<8x8xf32> to vector<8x8xbf16>
    %174 = vector.extract_strided_slice %113 {offsets = [0, 64], sizes = [8, 32], strides = [1, 1]} : vector<8x128xbf16> to vector<8x32xbf16>
    %cst_42 = arith.constant dense<0.000000e+00> : vector<8x32xf32>
    %175 = tpu.matmul %173, %174, %cst_42 {dimension_numbers = #tpu.dot_dimension_numbers<[1], [0], [0], [1], [0, 0, 1, 1], [], []>} : vector<8x8xbf16>, vector<8x32xbf16>, vector<8x32xf32> -> vector<8x32xf32>
    %176 = vector.extract_strided_slice %108 {offsets = [0, 96], sizes = [8, 32], strides = [1, 1]} : vector<8x128xbf16> to vector<8x32xbf16>
    %177 = vector.extract_strided_slice %111 {offsets = [96, 0], sizes = [32, 8], strides = [1, 1]} : vector<128x8xbf16> to vector<32x8xbf16>
    %cst_43 = arith.constant dense<0.000000e+00> : vector<8x8xf32>
    %178 = tpu.matmul %176, %177, %cst_43 {dimension_numbers = #tpu.dot_dimension_numbers<[1], [0], [0], [1], [0, 0, 1, 1], [], []>} : vector<8x32xbf16>, vector<32x8xbf16>, vector<8x8xf32> -> vector<8x8xf32>
    %cst_44 = arith.constant 0.353553385 : f32
    %179 = vector.broadcast %cst_44 : f32 to vector<8x8xf32>
    %180 = arith.mulf %178, %179 : vector<8x8xf32>
    %181 = vector.broadcast %115 : vector<1x8xf32> to vector<8x8xf32>
    %182 = arith.addf %180, %181 : vector<8x8xf32>
    %cst_45 = arith.constant dense<0xFF800000> : vector<8xf32>
    %183 = vector.multi_reduction <maximumf>, %182, %cst_45 [1] : vector<8x8xf32> to vector<8xf32>
    %184 = vector.shape_cast %183 : vector<8xf32> to vector<8x1xf32>
    %185 = vector.broadcast %184 : vector<8x1xf32> to vector<8x8xf32>
    %186 = arith.subf %182, %185 : vector<8x8xf32>
    %187 = math.exp %186 : vector<8x8xf32>
    %cst_46 = arith.constant dense<0.000000e+00> : vector<8xf32>
    %188 = vector.multi_reduction <add>, %187, %cst_46 [1] : vector<8x8xf32> to vector<8xf32>
    %189 = vector.shape_cast %188 : vector<8xf32> to vector<8x1xf32>
    %190 = tpu.reciprocal %189 {approx = true} : vector<8x1xf32> -> vector<8x1xf32>
    %191 = vector.broadcast %190 : vector<8x1xf32> to vector<8x8xf32>
    %192 = arith.mulf %187, %191 : vector<8x8xf32>
    %193 = arith.truncf %192 : vector<8x8xf32> to vector<8x8xbf16>
    %194 = vector.extract_strided_slice %113 {offsets = [0, 96], sizes = [8, 32], strides = [1, 1]} : vector<8x128xbf16> to vector<8x32xbf16>
    %cst_47 = arith.constant dense<0.000000e+00> : vector<8x32xf32>
    %195 = tpu.matmul %193, %194, %cst_47 {dimension_numbers = #tpu.dot_dimension_numbers<[1], [0], [0], [1], [0, 0, 1, 1], [], []>} : vector<8x8xbf16>, vector<8x32xbf16>, vector<8x32xf32> -> vector<8x32xf32>
    %196 = tpu.concatenate %135, %155, %175, %195 in 1 : vector<8x32xf32>, vector<8x32xf32>, vector<8x32xf32>, vector<8x32xf32> -> vector<8x128xf32>
    %197 = tpu.concatenate %106, %196 in 0 : vector<8x128xf32>, vector<8x128xf32> -> vector<16x128xf32>
    %198 = arith.truncf %197 : vector<16x128xf32> to vector<16x128xbf16>
    %c0_48 = arith.constant 0 : index
    %c0_49 = arith.constant 0 : index
    %199 = vector.load %arg5[%c0_48, %c0_49] : memref<128x128xbf16, #tpu.memory_space<vmem>>, vector<128x128xbf16>
    %cst_50 = arith.constant dense<0.000000e+00> : vector<16x128xf32>
    %200 = tpu.matmul %198, %199, %cst_50 {dimension_numbers = #tpu.dot_dimension_numbers<[1], [0], [0], [1], [0, 0, 1, 1], [], []>} : vector<16x128xbf16>, vector<128x128xbf16>, vector<16x128xf32> -> vector<16x128xf32>
    %c0_51 = arith.constant 0 : index
    %c0_52 = arith.constant 0 : index
    %201 = vector.load %arg6[%c0_51, %c0_52] : memref<1x128xf32, #tpu.memory_space<vmem>>, vector<1x128xf32>
    %202 = vector.broadcast %201 : vector<1x128xf32> to vector<16x128xf32>
    %203 = arith.addf %200, %202 : vector<16x128xf32>
    %204 = arith.addf %1, %203 : vector<16x128xf32>
    %c0_53 = arith.constant 0 : index
    %c0_54 = arith.constant 0 : index
    %205 = vector.load %arg7[%c0_53, %c0_54] : memref<1x128xf32, #tpu.memory_space<vmem>>, vector<1x128xf32>
    %c0_55 = arith.constant 0 : index
    %c0_56 = arith.constant 0 : index
    %206 = vector.load %arg8[%c0_55, %c0_56] : memref<1x128xf32, #tpu.memory_space<vmem>>, vector<1x128xf32>
    %cst_57 = arith.constant dense<0.000000e+00> : vector<16xf32>
    %207 = vector.multi_reduction <add>, %204, %cst_57 [1] : vector<16x128xf32> to vector<16xf32>
    %208 = vector.shape_cast %207 : vector<16xf32> to vector<16x1xf32>
    %cst_58 = arith.constant 3.125000e-02 : f32
    %209 = vector.broadcast %cst_58 : f32 to vector<16x1xf32>
    %210 = arith.mulf %208, %209 : vector<16x1xf32>
    %211 = vector.broadcast %210 : vector<16x1xf32> to vector<16x128xf32>
    %212 = arith.subf %204, %211 : vector<16x128xf32>
    %213 = vector.broadcast %6 : vector<1x128xf32> to vector<16x128xf32>
    %214 = arith.mulf %212, %213 : vector<16x128xf32>
    %215 = arith.mulf %214, %214 : vector<16x128xf32>
    %cst_59 = arith.constant dense<0.000000e+00> : vector<16xf32>
    %216 = vector.multi_reduction <add>, %215, %cst_59 [1] : vector<16x128xf32> to vector<16xf32>
    %217 = vector.shape_cast %216 : vector<16xf32> to vector<16x1xf32>
    %cst_60 = arith.constant 3.125000e-02 : f32
    %218 = vector.broadcast %cst_60 : f32 to vector<16x1xf32>
    %219 = arith.mulf %217, %218 : vector<16x1xf32>
    %220 = vector.broadcast %210 : vector<16x1xf32> to vector<16x128xf32>
    %221 = arith.subf %204, %220 : vector<16x128xf32>
    %cst_61 = arith.constant 9.99999974E-6 : f32
    %222 = vector.broadcast %cst_61 : f32 to vector<16x1xf32>
    %223 = arith.addf %219, %222 : vector<16x1xf32>
    %224 = math.rsqrt %223 : vector<16x1xf32>
    %225 = vector.broadcast %224 : vector<16x1xf32> to vector<16x128xf32>
    %226 = arith.mulf %221, %225 : vector<16x128xf32>
    %227 = vector.broadcast %205 : vector<1x128xf32> to vector<16x128xf32>
    %228 = arith.mulf %226, %227 : vector<16x128xf32>
    %229 = vector.broadcast %206 : vector<1x128xf32> to vector<16x128xf32>
    %230 = arith.addf %228, %229 : vector<16x128xf32>
    %231 = arith.truncf %230 : vector<16x128xf32> to vector<16x128xbf16>
    %c0_62 = arith.constant 0 : index
    %c0_63 = arith.constant 0 : index
    %232 = vector.load %arg9[%c0_62, %c0_63] : memref<128x128xbf16, #tpu.memory_space<vmem>>, vector<128x128xbf16>
    %cst_64 = arith.constant dense<0.000000e+00> : vector<16x128xf32>
    %233 = tpu.matmul %231, %232, %cst_64 {dimension_numbers = #tpu.dot_dimension_numbers<[1], [0], [0], [1], [0, 0, 1, 1], [], []>} : vector<16x128xbf16>, vector<128x128xbf16>, vector<16x128xf32> -> vector<16x128xf32>
    %c0_65 = arith.constant 0 : index
    %c0_66 = arith.constant 0 : index
    %234 = vector.load %arg10[%c0_65, %c0_66] : memref<1x128xf32, #tpu.memory_space<vmem>>, vector<1x128xf32>
    %235 = vector.broadcast %234 : vector<1x128xf32> to vector<16x128xf32>
    %236 = arith.addf %233, %235 : vector<16x128xf32>
    %cst_67 = arith.constant 0.000000e+00 : f32
    %237 = vector.broadcast %cst_67 : f32 to vector<16x128xf32>
    %238 = arith.maximumf %236, %237 : vector<16x128xf32>
    %239 = arith.truncf %238 : vector<16x128xf32> to vector<16x128xbf16>
    %c0_68 = arith.constant 0 : index
    %c0_69 = arith.constant 0 : index
    %240 = vector.load %arg11[%c0_68, %c0_69] : memref<128x128xbf16, #tpu.memory_space<vmem>>, vector<128x128xbf16>
    %cst_70 = arith.constant dense<0.000000e+00> : vector<16x128xf32>
    %241 = tpu.matmul %239, %240, %cst_70 {dimension_numbers = #tpu.dot_dimension_numbers<[1], [0], [0], [1], [0, 0, 1, 1], [], []>} : vector<16x128xbf16>, vector<128x128xbf16>, vector<16x128xf32> -> vector<16x128xf32>
    %c0_71 = arith.constant 0 : index
    %c0_72 = arith.constant 0 : index
    %242 = vector.load %arg12[%c0_71, %c0_72] : memref<1x128xf32, #tpu.memory_space<vmem>>, vector<1x128xf32>
    %243 = vector.broadcast %242 : vector<1x128xf32> to vector<16x128xf32>
    %244 = arith.addf %241, %243 : vector<16x128xf32>
    %245 = arith.addf %230, %244 : vector<16x128xf32>
    %c0_73 = arith.constant 0 : index
    %c0_74 = arith.constant 0 : index
    %246 = vector.load %arg13[%c0_73, %c0_74] : memref<1x128xf32, #tpu.memory_space<vmem>>, vector<1x128xf32>
    %c0_75 = arith.constant 0 : index
    %c0_76 = arith.constant 0 : index
    %247 = vector.load %arg14[%c0_75, %c0_76] : memref<1x128xf32, #tpu.memory_space<vmem>>, vector<1x128xf32>
    %cst_77 = arith.constant dense<0.000000e+00> : vector<16xf32>
    %248 = vector.multi_reduction <add>, %245, %cst_77 [1] : vector<16x128xf32> to vector<16xf32>
    %249 = vector.shape_cast %248 : vector<16xf32> to vector<16x1xf32>
    %cst_78 = arith.constant 3.125000e-02 : f32
    %250 = vector.broadcast %cst_78 : f32 to vector<16x1xf32>
    %251 = arith.mulf %249, %250 : vector<16x1xf32>
    %252 = vector.broadcast %251 : vector<16x1xf32> to vector<16x128xf32>
    %253 = arith.subf %245, %252 : vector<16x128xf32>
    %254 = vector.broadcast %6 : vector<1x128xf32> to vector<16x128xf32>
    %255 = arith.mulf %253, %254 : vector<16x128xf32>
    %256 = arith.mulf %255, %255 : vector<16x128xf32>
    %cst_79 = arith.constant dense<0.000000e+00> : vector<16xf32>
    %257 = vector.multi_reduction <add>, %256, %cst_79 [1] : vector<16x128xf32> to vector<16xf32>
    %258 = vector.shape_cast %257 : vector<16xf32> to vector<16x1xf32>
    %cst_80 = arith.constant 3.125000e-02 : f32
    %259 = vector.broadcast %cst_80 : f32 to vector<16x1xf32>
    %260 = arith.mulf %258, %259 : vector<16x1xf32>
    %261 = vector.broadcast %251 : vector<16x1xf32> to vector<16x128xf32>
    %262 = arith.subf %245, %261 : vector<16x128xf32>
    %cst_81 = arith.constant 9.99999974E-6 : f32
    %263 = vector.broadcast %cst_81 : f32 to vector<16x1xf32>
    %264 = arith.addf %260, %263 : vector<16x1xf32>
    %265 = math.rsqrt %264 : vector<16x1xf32>
    %266 = vector.broadcast %265 : vector<16x1xf32> to vector<16x128xf32>
    %267 = arith.mulf %262, %266 : vector<16x128xf32>
    %268 = vector.broadcast %246 : vector<1x128xf32> to vector<16x128xf32>
    %269 = arith.mulf %267, %268 : vector<16x128xf32>
    %270 = vector.broadcast %247 : vector<1x128xf32> to vector<16x128xf32>
    %271 = arith.addf %269, %270 : vector<16x128xf32>
    %272 = arith.truncf %271 : vector<16x128xf32> to vector<16x128xbf16>
    %c0_82 = arith.constant 0 : index
    %c0_83 = arith.constant 0 : index
    %273 = vector.load %arg15[%c0_82, %c0_83] : memref<16x128xbf16, #tpu.memory_space<vmem>>, vector<16x128xbf16>
    tpu.vector_store %arg15[%c0_82, %c0_83], %272 {strides = array<i32>} : memref<16x128xbf16, #tpu.memory_space<vmem>>, vector<16x128xbf16>,
    return
  }
  func.func @transform_0(%arg0: i32) -> (i32, i32) {
    %c0_i32 = arith.constant 0 : i32
    %c0_i32_0 = arith.constant 0 : i32
    return %arg0, %c0_i32 : i32, i32
  }
  func.func @transform_1(%arg0: i32) -> (i32, i32, i32) {
    %c0_i32 = arith.constant 0 : i32
    %c0_i32_0 = arith.constant 0 : i32
    %c0_i32_1 = arith.constant 0 : i32
    return %arg0, %c0_i32, %c0_i32_0 : i32, i32, i32
  }
  func.func @transform_2(%arg0: i32) -> (i32, i32) {
    %c0_i32 = arith.constant 0 : i32
    %c0_i32_0 = arith.constant 0 : i32
    %c0_i32_1 = arith.constant 0 : i32
    return %c0_i32, %c0_i32_0 : i32, i32
  }
  func.func @transform_3(%arg0: i32) -> (i32, i32) {
    %c0_i32 = arith.constant 0 : i32
    %c0_i32_0 = arith.constant 0 : i32
    %c0_i32_1 = arith.constant 0 : i32
    return %c0_i32, %c0_i32_0 : i32, i32
  }
  func.func @transform_4(%arg0: i32) -> (i32, i32) {
    %c0_i32 = arith.constant 0 : i32
    %c0_i32_0 = arith.constant 0 : i32
    %c0_i32_1 = arith.constant 0 : i32
    return %c0_i32, %c0_i32_0 : i32, i32
  }
  func.func @transform_5(%arg0: i32) -> (i32, i32) {
    %c0_i32 = arith.constant 0 : i32
    %c0_i32_0 = arith.constant 0 : i32
    %c0_i32_1 = arith.constant 0 : i32
    return %c0_i32, %c0_i32_0 : i32, i32
  }
  func.func @transform_6(%arg0: i32) -> (i32, i32) {
    %c0_i32 = arith.constant 0 : i32
    %c0_i32_0 = arith.constant 0 : i32
    %c0_i32_1 = arith.constant 0 : i32
    return %c0_i32, %c0_i32_0 : i32, i32
  }
  func.func @transform_7(%arg0: i32) -> (i32, i32) {
    %c0_i32 = arith.constant 0 : i32
    %c0_i32_0 = arith.constant 0 : i32
    %c0_i32_1 = arith.constant 0 : i32
    return %c0_i32, %c0_i32_0 : i32, i32
  }
  func.func @transform_8(%arg0: i32) -> (i32, i32) {
    %c0_i32 = arith.constant 0 : i32
    %c0_i32_0 = arith.constant 0 : i32
    %c0_i32_1 = arith.constant 0 : i32
    return %c0_i32, %c0_i32_0 : i32, i32
  }
  func.func @transform_9(%arg0: i32) -> (i32, i32) {
    %c0_i32 = arith.constant 0 : i32
    %c0_i32_0 = arith.constant 0 : i32
    %c0_i32_1 = arith.constant 0 : i32
    return %c0_i32, %c0_i32_0 : i32, i32
  }
  func.func @transform_10(%arg0: i32) -> (i32, i32) {
    %c0_i32 = arith.constant 0 : i32
    %c0_i32_0 = arith.constant 0 : i32
    %c0_i32_1 = arith.constant 0 : i32
    return %c0_i32, %c0_i32_0 : i32, i32
  }
  func.func @transform_11(%arg0: i32) -> (i32, i32) {
    %c0_i32 = arith.constant 0 : i32
    %c0_i32_0 = arith.constant 0 : i32
    %c0_i32_1 = arith.constant 0 : i32
    return %c0_i32, %c0_i32_0 : i32, i32
  }
  func.func @transform_12(%arg0: i32) -> (i32, i32) {
    %c0_i32 = arith.constant 0 : i32
    %c0_i32_0 = arith.constant 0 : i32
    %c0_i32_1 = arith.constant 0 : i32
    return %c0_i32, %c0_i32_0 : i32, i32
  }
  func.func @transform_13(%arg0: i32) -> (i32, i32) {
    %c0_i32 = arith.constant 0 : i32
    %c0_i32_0 = arith.constant 0 : i32
    %c0_i32_1 = arith.constant 0 : i32
    return %c0_i32, %c0_i32_0 : i32, i32
  }
  func.func @transform_14(%arg0: i32) -> (i32, i32) {
    %c0_i32 = arith.constant 0 : i32
    %c0_i32_0 = arith.constant 0 : i32
    return %arg0, %c0_i32 : i32, i32
  }
}

module attributes {stable_mosaic.version = 11 : i64} {
  func.func @_transformer_layer_kernel(%arg0: i32, %arg1: memref<16x128xbf16, #tpu.memory_space<vmem>>, %arg2: memref<2x8x8xf32, #tpu.memory_space<vmem>>, %arg3: memref<128x384xbf16, #tpu.memory_space<vmem>>, %arg4: memref<1x384xf32, #tpu.memory_space<vmem>>, %arg5: memref<128x128xbf16, #tpu.memory_space<vmem>>, %arg6: memref<1x128xf32, #tpu.memory_space<vmem>>, %arg7: memref<1x128xf32, #tpu.memory_space<vmem>>, %arg8: memref<1x128xf32, #tpu.memory_space<vmem>>, %arg9: memref<128x128xbf16, #tpu.memory_space<vmem>>, %arg10: memref<1x128xf32, #tpu.memory_space<vmem>>, %arg11: memref<128x128xbf16, #tpu.memory_space<vmem>>, %arg12: memref<1x128xf32, #tpu.memory_space<vmem>>, %arg13: memref<1x128xf32, #tpu.memory_space<vmem>>, %arg14: memref<1x128xf32, #tpu.memory_space<vmem>>, %arg15: memref<16x128xbf16, #tpu.memory_space<vmem>>) attributes {dimension_semantics = [#tpu.dimension_semantics<parallel>], iteration_bounds = array<i64: 1>, scalar_prefetch = 0 : i64, scratch_operands = 0 : i64, tpu.core_type = #tpu.core_type<tc>, window_params = [{transform_indices = @transform_0, window_bounds = array<i64: 16, 128>}, {transform_indices = @transform_1, window_bounds = array<i64: 2, 8, 8>}, {pipeline_mode = #tpu.pipeline_mode<synchronous>, transform_indices = @transform_2, window_bounds = array<i64: 128, 384>}, {pipeline_mode = #tpu.pipeline_mode<synchronous>, transform_indices = @transform_3, window_bounds = array<i64: 1, 384>}, {pipeline_mode = #tpu.pipeline_mode<synchronous>, transform_indices = @transform_4, window_bounds = array<i64: 128, 128>}, {pipeline_mode = #tpu.pipeline_mode<synchronous>, transform_indices = @transform_5, window_bounds = array<i64: 1, 128>}, {pipeline_mode = #tpu.pipeline_mode<synchronous>, transform_indices = @transform_6, window_bounds = array<i64: 1, 128>}, {pipeline_mode = #tpu.pipeline_mode<synchronous>, transform_indices = @transform_7, window_bounds = array<i64: 1, 128>}, {pipeline_mode = #tpu.pipeline_mode<synchronous>, transform_indices = @transform_8, window_bounds = array<i64: 128, 128>}, {pipeline_mode = #tpu.pipeline_mode<synchronous>, transform_indices = @transform_9, window_bounds = array<i64: 1, 128>}, {pipeline_mode = #tpu.pipeline_mode<synchronous>, transform_indices = @transform_10, window_bounds = array<i64: 128, 128>}, {pipeline_mode = #tpu.pipeline_mode<synchronous>, transform_indices = @transform_11, window_bounds = array<i64: 1, 128>}, {pipeline_mode = #tpu.pipeline_mode<synchronous>, transform_indices = @transform_12, window_bounds = array<i64: 1, 128>}, {pipeline_mode = #tpu.pipeline_mode<synchronous>, transform_indices = @transform_13, window_bounds = array<i64: 1, 128>}, {transform_indices = @transform_14, window_bounds = array<i64: 16, 128>}]} {
    %c0 = arith.constant 0 : index
    %c0_0 = arith.constant 0 : index
    %0 = vector.load %arg1[%c0, %c0_0] : memref<16x128xbf16, #tpu.memory_space<vmem>>, vector<16x128xbf16>
    %1 = arith.extf %0 : vector<16x128xbf16> to vector<16x128xf32>
    %2 = tpu.iota {dimensions = array<i32: 1>} : vector<1x128xi32>
    %c32_i32 = arith.constant 32 : i32
    %3 = vector.broadcast %c32_i32 : i32 to vector<1x128xi32>
    %4 = arith.cmpi slt, %2, %3 : vector<1x128xi32>
    %5 = arith.extui %4 : vector<1x128xi1> to vector<1x128xi32>
    %6 = arith.sitofp %5 : vector<1x128xi32> to vector<1x128xf32>
    %7 = arith.truncf %1 : vector<16x128xf32> to vector<16x128xbf16>
    %c0_1 = arith.constant 0 : index
    %c0_2 = arith.constant 0 : index
    %8 = vector.load %arg3[%c0_1, %c0_2] : memref<128x384xbf16, #tpu.memory_space<vmem>>, vector<128x384xbf16>
    %cst = arith.constant dense<0.000000e+00> : vector<16x384xf32>
    %9 = tpu.matmul %7, %8, %cst {dimension_numbers = #tpu.dot_dimension_numbers<[1], [0], [0], [1], [0, 0, 1, 1], [], []>} : vector<16x128xbf16>, vector<128x384xbf16>, vector<16x384xf32> -> vector<16x384xf32>
    %c0_3 = arith.constant 0 : index
    %c0_4 = arith.constant 0 : index
    %10 = vector.load %arg4[%c0_3, %c0_4] : memref<1x384xf32, #tpu.memory_space<vmem>>, vector<1x384xf32>
    %11 = vector.broadcast %10 : vector<1x384xf32> to vector<16x384xf32>
    %12 = arith.addf %9, %11 : vector<16x384xf32>
    %13 = vector.extract_strided_slice %12 {offsets = [0, 0], sizes = [16, 128], strides = [1, 1]} : vector<16x384xf32> to vector<16x128xf32>
    %14 = vector.extract_strided_slice %12 {offsets = [0, 128], sizes = [16, 128], strides = [1, 1]} : vector<16x384xf32> to vector<16x128xf32>
    %15 = vector.extract_strided_slice %12 {offsets = [0, 256], sizes = [16, 128], strides = [1, 1]} : vector<16x384xf32> to vector<16x128xf32>
    %c0_5 = arith.constant 0 : index
    %c0_6 = arith.constant 0 : index
    %c0_7 = arith.constant 0 : index
    %16 = vector.load %arg2[%c0_5, %c0_6, %c0_7] : memref<2x8x8xf32, #tpu.memory_space<vmem>>, vector<2x8x8xf32>
    %17 = vector.extract_strided_slice %13 {offsets = [0, 0], sizes = [8, 128], strides = [1, 1]} : vector<16x128xf32> to vector<8x128xf32>
    %18 = arith.truncf %17 : vector<8x128xf32> to vector<8x128xbf16>
    %19 = vector.extract_strided_slice %14 {offsets = [0, 0], sizes = [8, 128], strides = [1, 1]} : vector<16x128xf32> to vector<8x128xf32>
    %20 = arith.truncf %19 : vector<8x128xf32> to vector<8x128xbf16>
    %21 = tpu.transpose %20, [1, 0] : vector<8x128xbf16> -> vector<128x8xbf16>
    %22 = vector.extract_strided_slice %15 {offsets = [0, 0], sizes = [8, 128], strides = [1, 1]} : vector<16x128xf32> to vector<8x128xf32>
    %23 = arith.truncf %22 : vector<8x128xf32> to vector<8x128xbf16>
    %24 = vector.extract_strided_slice %16 {offsets = [0, 0, 0], sizes = [1, 1, 8], strides = [1, 1, 1]} : vector<2x8x8xf32> to vector<1x1x8xf32>
    %25 = vector.shape_cast %24 : vector<1x1x8xf32> to vector<1x8xf32>
    %26 = vector.extract_strided_slice %18 {offsets = [0, 0], sizes = [8, 32], strides = [1, 1]} : vector<8x128xbf16> to vector<8x32xbf16>
    %27 = vector.extract_strided_slice %21 {offsets = [0, 0], sizes = [32, 8], strides = [1, 1]} : vector<128x8xbf16> to vector<32x8xbf16>
    %cst_8 = arith.constant dense<0.000000e+00> : vector<8x8xf32>
    %28 = tpu.matmul %26, %27, %cst_8 {dimension_numbers = #tpu.dot_dimension_numbers<[1], [0], [0], [1], [0, 0, 1, 1], [], []>} : vector<8x32xbf16>, vector<32x8xbf16>, vector<8x8xf32> -> vector<8x8xf32>
    %cst_9 = arith.constant 0.353553385 : f32
    %29 = vector.broadcast %cst_9 : f32 to vector<8x8xf32>
    %30 = arith.mulf %28, %29 : vector<8x8xf32>
    %31 = vector.broadcast %25 : vector<1x8xf32> to vector<8x8xf32>
    %32 = arith.addf %30, %31 : vector<8x8xf32>
    %cst_10 = arith.constant dense<0xFF800000> : vector<8xf32>
    %33 = vector.multi_reduction <maximumf>, %32, %cst_10 [1] : vector<8x8xf32> to vector<8xf32>
    %34 = vector.shape_cast %33 : vector<8xf32> to vector<8x1xf32>
    %35 = vector.broadcast %34 : vector<8x1xf32> to vector<8x8xf32>
    %36 = arith.subf %32, %35 : vector<8x8xf32>
    %37 = math.exp %36 : vector<8x8xf32>
    %cst_11 = arith.constant dense<0.000000e+00> : vector<8xf32>
    %38 = vector.multi_reduction <add>, %37, %cst_11 [1] : vector<8x8xf32> to vector<8xf32>
    %39 = vector.shape_cast %38 : vector<8xf32> to vector<8x1xf32>
    %40 = tpu.reciprocal %39 {approx = true} : vector<8x1xf32> -> vector<8x1xf32>
    %41 = vector.broadcast %40 : vector<8x1xf32> to vector<8x8xf32>
    %42 = arith.mulf %37, %41 : vector<8x8xf32>
    %43 = arith.truncf %42 : vector<8x8xf32> to vector<8x8xbf16>
    %44 = vector.extract_strided_slice %23 {offsets = [0, 0], sizes = [8, 32], strides = [1, 1]} : vector<8x128xbf16> to vector<8x32xbf16>
    %cst_12 = arith.constant dense<0.000000e+00> : vector<8x32xf32>
    %45 = tpu.matmul %43, %44, %cst_12 {dimension_numbers = #tpu.dot_dimension_numbers<[1], [0], [0], [1], [0, 0, 1, 1], [], []>} : vector<8x8xbf16>, vector<8x32xbf16>, vector<8x32xf32> -> vector<8x32xf32>
    %46 = vector.extract_strided_slice %18 {offsets = [0, 32], sizes = [8, 32], strides = [1, 1]} : vector<8x128xbf16> to vector<8x32xbf16>
    %47 = vector.extract_strided_slice %21 {offsets = [32, 0], sizes = [32, 8], strides = [1, 1]} : vector<128x8xbf16> to vector<32x8xbf16>
    %cst_13 = arith.constant dense<0.000000e+00> : vector<8x8xf32>
    %48 = tpu.matmul %46, %47, %cst_13 {dimension_numbers = #tpu.dot_dimension_numbers<[1], [0], [0], [1], [0, 0, 1, 1], [], []>} : vector<8x32xbf16>, vector<32x8xbf16>, vector<8x8xf32> -> vector<8x8xf32>
    %cst_14 = arith.constant 0.353553385 : f32
    %49 = vector.broadcast %cst_14 : f32 to vector<8x8xf32>
    %50 = arith.mulf %48, %49 : vector<8x8xf32>
    %51 = vector.broadcast %25 : vector<1x8xf32> to vector<8x8xf32>
    %52 = arith.addf %50, %51 : vector<8x8xf32>
    %cst_15 = arith.constant dense<0xFF800000> : vector<8xf32>
    %53 = vector.multi_reduction <maximumf>, %52, %cst_15 [1] : vector<8x8xf32> to vector<8xf32>
    %54 = vector.shape_cast %53 : vector<8xf32> to vector<8x1xf32>
    %55 = vector.broadcast %54 : vector<8x1xf32> to vector<8x8xf32>
    %56 = arith.subf %52, %55 : vector<8x8xf32>
    %57 = math.exp %56 : vector<8x8xf32>
    %cst_16 = arith.constant dense<0.000000e+00> : vector<8xf32>
    %58 = vector.multi_reduction <add>, %57, %cst_16 [1] : vector<8x8xf32> to vector<8xf32>
    %59 = vector.shape_cast %58 : vector<8xf32> to vector<8x1xf32>
    %60 = tpu.reciprocal %59 {approx = true} : vector<8x1xf32> -> vector<8x1xf32>
    %61 = vector.broadcast %60 : vector<8x1xf32> to vector<8x8xf32>
    %62 = arith.mulf %57, %61 : vector<8x8xf32>
    %63 = arith.truncf %62 : vector<8x8xf32> to vector<8x8xbf16>
    %64 = vector.extract_strided_slice %23 {offsets = [0, 32], sizes = [8, 32], strides = [1, 1]} : vector<8x128xbf16> to vector<8x32xbf16>
    %cst_17 = arith.constant dense<0.000000e+00> : vector<8x32xf32>
    %65 = tpu.matmul %63, %64, %cst_17 {dimension_numbers = #tpu.dot_dimension_numbers<[1], [0], [0], [1], [0, 0, 1, 1], [], []>} : vector<8x8xbf16>, vector<8x32xbf16>, vector<8x32xf32> -> vector<8x32xf32>
    %66 = vector.extract_strided_slice %18 {offsets = [0, 64], sizes = [8, 32], strides = [1, 1]} : vector<8x128xbf16> to vector<8x32xbf16>
    %67 = vector.extract_strided_slice %21 {offsets = [64, 0], sizes = [32, 8], strides = [1, 1]} : vector<128x8xbf16> to vector<32x8xbf16>
    %cst_18 = arith.constant dense<0.000000e+00> : vector<8x8xf32>
    %68 = tpu.matmul %66, %67, %cst_18 {dimension_numbers = #tpu.dot_dimension_numbers<[1], [0], [0], [1], [0, 0, 1, 1], [], []>} : vector<8x32xbf16>, vector<32x8xbf16>, vector<8x8xf32> -> vector<8x8xf32>
    %cst_19 = arith.constant 0.353553385 : f32
    %69 = vector.broadcast %cst_19 : f32 to vector<8x8xf32>
    %70 = arith.mulf %68, %69 : vector<8x8xf32>
    %71 = vector.broadcast %25 : vector<1x8xf32> to vector<8x8xf32>
    %72 = arith.addf %70, %71 : vector<8x8xf32>
    %cst_20 = arith.constant dense<0xFF800000> : vector<8xf32>
    %73 = vector.multi_reduction <maximumf>, %72, %cst_20 [1] : vector<8x8xf32> to vector<8xf32>
    %74 = vector.shape_cast %73 : vector<8xf32> to vector<8x1xf32>
    %75 = vector.broadcast %74 : vector<8x1xf32> to vector<8x8xf32>
    %76 = arith.subf %72, %75 : vector<8x8xf32>
    %77 = math.exp %76 : vector<8x8xf32>
    %cst_21 = arith.constant dense<0.000000e+00> : vector<8xf32>
    %78 = vector.multi_reduction <add>, %77, %cst_21 [1] : vector<8x8xf32> to vector<8xf32>
    %79 = vector.shape_cast %78 : vector<8xf32> to vector<8x1xf32>
    %80 = tpu.reciprocal %79 {approx = true} : vector<8x1xf32> -> vector<8x1xf32>
    %81 = vector.broadcast %80 : vector<8x1xf32> to vector<8x8xf32>
    %82 = arith.mulf %77, %81 : vector<8x8xf32>
    %83 = arith.truncf %82 : vector<8x8xf32> to vector<8x8xbf16>
    %84 = vector.extract_strided_slice %23 {offsets = [0, 64], sizes = [8, 32], strides = [1, 1]} : vector<8x128xbf16> to vector<8x32xbf16>
    %cst_22 = arith.constant dense<0.000000e+00> : vector<8x32xf32>
    %85 = tpu.matmul %83, %84, %cst_22 {dimension_numbers = #tpu.dot_dimension_numbers<[1], [0], [0], [1], [0, 0, 1, 1], [], []>} : vector<8x8xbf16>, vector<8x32xbf16>, vector<8x32xf32> -> vector<8x32xf32>
    %86 = vector.extract_strided_slice %18 {offsets = [0, 96], sizes = [8, 32], strides = [1, 1]} : vector<8x128xbf16> to vector<8x32xbf16>
    %87 = vector.extract_strided_slice %21 {offsets = [96, 0], sizes = [32, 8], strides = [1, 1]} : vector<128x8xbf16> to vector<32x8xbf16>
    %cst_23 = arith.constant dense<0.000000e+00> : vector<8x8xf32>
    %88 = tpu.matmul %86, %87, %cst_23 {dimension_numbers = #tpu.dot_dimension_numbers<[1], [0], [0], [1], [0, 0, 1, 1], [], []>} : vector<8x32xbf16>, vector<32x8xbf16>, vector<8x8xf32> -> vector<8x8xf32>
    %cst_24 = arith.constant 0.353553385 : f32
    %89 = vector.broadcast %cst_24 : f32 to vector<8x8xf32>
    %90 = arith.mulf %88, %89 : vector<8x8xf32>
    %91 = vector.broadcast %25 : vector<1x8xf32> to vector<8x8xf32>
    %92 = arith.addf %90, %91 : vector<8x8xf32>
    %cst_25 = arith.constant dense<0xFF800000> : vector<8xf32>
    %93 = vector.multi_reduction <maximumf>, %92, %cst_25 [1] : vector<8x8xf32> to vector<8xf32>
    %94 = vector.shape_cast %93 : vector<8xf32> to vector<8x1xf32>
    %95 = vector.broadcast %94 : vector<8x1xf32> to vector<8x8xf32>
    %96 = arith.subf %92, %95 : vector<8x8xf32>
    %97 = math.exp %96 : vector<8x8xf32>
    %cst_26 = arith.constant dense<0.000000e+00> : vector<8xf32>
    %98 = vector.multi_reduction <add>, %97, %cst_26 [1] : vector<8x8xf32> to vector<8xf32>
    %99 = vector.shape_cast %98 : vector<8xf32> to vector<8x1xf32>
    %100 = tpu.reciprocal %99 {approx = true} : vector<8x1xf32> -> vector<8x1xf32>
    %101 = vector.broadcast %100 : vector<8x1xf32> to vector<8x8xf32>
    %102 = arith.mulf %97, %101 : vector<8x8xf32>
    %103 = arith.truncf %102 : vector<8x8xf32> to vector<8x8xbf16>
    %104 = vector.extract_strided_slice %23 {offsets = [0, 96], sizes = [8, 32], strides = [1, 1]} : vector<8x128xbf16> to vector<8x32xbf16>
    %cst_27 = arith.constant dense<0.000000e+00> : vector<8x32xf32>
    %105 = tpu.matmul %103, %104, %cst_27 {dimension_numbers = #tpu.dot_dimension_numbers<[1], [0], [0], [1], [0, 0, 1, 1], [], []>} : vector<8x8xbf16>, vector<8x32xbf16>, vector<8x32xf32> -> vector<8x32xf32>
    %106 = tpu.concatenate %45, %65, %85, %105 in 1 : vector<8x32xf32>, vector<8x32xf32>, vector<8x32xf32>, vector<8x32xf32> -> vector<8x128xf32>
    %107 = vector.extract_strided_slice %13 {offsets = [8, 0], sizes = [8, 128], strides = [1, 1]} : vector<16x128xf32> to vector<8x128xf32>
    %108 = arith.truncf %107 : vector<8x128xf32> to vector<8x128xbf16>
    %109 = vector.extract_strided_slice %14 {offsets = [8, 0], sizes = [8, 128], strides = [1, 1]} : vector<16x128xf32> to vector<8x128xf32>
    %110 = arith.truncf %109 : vector<8x128xf32> to vector<8x128xbf16>
    %111 = tpu.transpose %110, [1, 0] : vector<8x128xbf16> -> vector<128x8xbf16>
    %112 = vector.extract_strided_slice %15 {offsets = [8, 0], sizes = [8, 128], strides = [1, 1]} : vector<16x128xf32> to vector<8x128xf32>
    %113 = arith.truncf %112 : vector<8x128xf32> to vector<8x128xbf16>
    %114 = vector.extract_strided_slice %16 {offsets = [1, 0, 0], sizes = [1, 1, 8], strides = [1, 1, 1]} : vector<2x8x8xf32> to vector<1x1x8xf32>
    %115 = vector.shape_cast %114 : vector<1x1x8xf32> to vector<1x8xf32>
    %116 = vector.extract_strided_slice %108 {offsets = [0, 0], sizes = [8, 32], strides = [1, 1]} : vector<8x128xbf16> to vector<8x32xbf16>
    %117 = vector.extract_strided_slice %111 {offsets = [0, 0], sizes = [32, 8], strides = [1, 1]} : vector<128x8xbf16> to vector<32x8xbf16>
    %cst_28 = arith.constant dense<0.000000e+00> : vector<8x8xf32>
    %118 = tpu.matmul %116, %117, %cst_28 {dimension_numbers = #tpu.dot_dimension_numbers<[1], [0], [0], [1], [0, 0, 1, 1], [], []>} : vector<8x32xbf16>, vector<32x8xbf16>, vector<8x8xf32> -> vector<8x8xf32>
    %cst_29 = arith.constant 0.353553385 : f32
    %119 = vector.broadcast %cst_29 : f32 to vector<8x8xf32>
    %120 = arith.mulf %118, %119 : vector<8x8xf32>
    %121 = vector.broadcast %115 : vector<1x8xf32> to vector<8x8xf32>
    %122 = arith.addf %120, %121 : vector<8x8xf32>
    %cst_30 = arith.constant dense<0xFF800000> : vector<8xf32>
    %123 = vector.multi_reduction <maximumf>, %122, %cst_30 [1] : vector<8x8xf32> to vector<8xf32>
    %124 = vector.shape_cast %123 : vector<8xf32> to vector<8x1xf32>
    %125 = vector.broadcast %124 : vector<8x1xf32> to vector<8x8xf32>
    %126 = arith.subf %122, %125 : vector<8x8xf32>
    %127 = math.exp %126 : vector<8x8xf32>
    %cst_31 = arith.constant dense<0.000000e+00> : vector<8xf32>
    %128 = vector.multi_reduction <add>, %127, %cst_31 [1] : vector<8x8xf32> to vector<8xf32>
    %129 = vector.shape_cast %128 : vector<8xf32> to vector<8x1xf32>
    %130 = tpu.reciprocal %129 {approx = true} : vector<8x1xf32> -> vector<8x1xf32>
    %131 = vector.broadcast %130 : vector<8x1xf32> to vector<8x8xf32>
    %132 = arith.mulf %127, %131 : vector<8x8xf32>
    %133 = arith.truncf %132 : vector<8x8xf32> to vector<8x8xbf16>
    %134 = vector.extract_strided_slice %113 {offsets = [0, 0], sizes = [8, 32], strides = [1, 1]} : vector<8x128xbf16> to vector<8x32xbf16>
    %cst_32 = arith.constant dense<0.000000e+00> : vector<8x32xf32>
    %135 = tpu.matmul %133, %134, %cst_32 {dimension_numbers = #tpu.dot_dimension_numbers<[1], [0], [0], [1], [0, 0, 1, 1], [], []>} : vector<8x8xbf16>, vector<8x32xbf16>, vector<8x32xf32> -> vector<8x32xf32>
    %136 = vector.extract_strided_slice %108 {offsets = [0, 32], sizes = [8, 32], strides = [1, 1]} : vector<8x128xbf16> to vector<8x32xbf16>
    %137 = vector.extract_strided_slice %111 {offsets = [32, 0], sizes = [32, 8], strides = [1, 1]} : vector<128x8xbf16> to vector<32x8xbf16>
    %cst_33 = arith.constant dense<0.000000e+00> : vector<8x8xf32>
    %138 = tpu.matmul %136, %137, %cst_33 {dimension_numbers = #tpu.dot_dimension_numbers<[1], [0], [0], [1], [0, 0, 1, 1], [], []>} : vector<8x32xbf16>, vector<32x8xbf16>, vector<8x8xf32> -> vector<8x8xf32>
    %cst_34 = arith.constant 0.353553385 : f32
    %139 = vector.broadcast %cst_34 : f32 to vector<8x8xf32>
    %140 = arith.mulf %138, %139 : vector<8x8xf32>
    %141 = vector.broadcast %115 : vector<1x8xf32> to vector<8x8xf32>
    %142 = arith.addf %140, %141 : vector<8x8xf32>
    %cst_35 = arith.constant dense<0xFF800000> : vector<8xf32>
    %143 = vector.multi_reduction <maximumf>, %142, %cst_35 [1] : vector<8x8xf32> to vector<8xf32>
    %144 = vector.shape_cast %143 : vector<8xf32> to vector<8x1xf32>
    %145 = vector.broadcast %144 : vector<8x1xf32> to vector<8x8xf32>
    %146 = arith.subf %142, %145 : vector<8x8xf32>
    %147 = math.exp %146 : vector<8x8xf32>
    %cst_36 = arith.constant dense<0.000000e+00> : vector<8xf32>
    %148 = vector.multi_reduction <add>, %147, %cst_36 [1] : vector<8x8xf32> to vector<8xf32>
    %149 = vector.shape_cast %148 : vector<8xf32> to vector<8x1xf32>
    %150 = tpu.reciprocal %149 {approx = true} : vector<8x1xf32> -> vector<8x1xf32>
    %151 = vector.broadcast %150 : vector<8x1xf32> to vector<8x8xf32>
    %152 = arith.mulf %147, %151 : vector<8x8xf32>
    %153 = arith.truncf %152 : vector<8x8xf32> to vector<8x8xbf16>
    %154 = vector.extract_strided_slice %113 {offsets = [0, 32], sizes = [8, 32], strides = [1, 1]} : vector<8x128xbf16> to vector<8x32xbf16>
    %cst_37 = arith.constant dense<0.000000e+00> : vector<8x32xf32>
    %155 = tpu.matmul %153, %154, %cst_37 {dimension_numbers = #tpu.dot_dimension_numbers<[1], [0], [0], [1], [0, 0, 1, 1], [], []>} : vector<8x8xbf16>, vector<8x32xbf16>, vector<8x32xf32> -> vector<8x32xf32>
    %156 = vector.extract_strided_slice %108 {offsets = [0, 64], sizes = [8, 32], strides = [1, 1]} : vector<8x128xbf16> to vector<8x32xbf16>
    %157 = vector.extract_strided_slice %111 {offsets = [64, 0], sizes = [32, 8], strides = [1, 1]} : vector<128x8xbf16> to vector<32x8xbf16>
    %cst_38 = arith.constant dense<0.000000e+00> : vector<8x8xf32>
    %158 = tpu.matmul %156, %157, %cst_38 {dimension_numbers = #tpu.dot_dimension_numbers<[1], [0], [0], [1], [0, 0, 1, 1], [], []>} : vector<8x32xbf16>, vector<32x8xbf16>, vector<8x8xf32> -> vector<8x8xf32>
    %cst_39 = arith.constant 0.353553385 : f32
    %159 = vector.broadcast %cst_39 : f32 to vector<8x8xf32>
    %160 = arith.mulf %158, %159 : vector<8x8xf32>
    %161 = vector.broadcast %115 : vector<1x8xf32> to vector<8x8xf32>
    %162 = arith.addf %160, %161 : vector<8x8xf32>
    %cst_40 = arith.constant dense<0xFF800000> : vector<8xf32>
    %163 = vector.multi_reduction <maximumf>, %162, %cst_40 [1] : vector<8x8xf32> to vector<8xf32>
    %164 = vector.shape_cast %163 : vector<8xf32> to vector<8x1xf32>
    %165 = vector.broadcast %164 : vector<8x1xf32> to vector<8x8xf32>
    %166 = arith.subf %162, %165 : vector<8x8xf32>
    %167 = math.exp %166 : vector<8x8xf32>
    %cst_41 = arith.constant dense<0.000000e+00> : vector<8xf32>
    %168 = vector.multi_reduction <add>, %167, %cst_41 [1] : vector<8x8xf32> to vector<8xf32>
    %169 = vector.shape_cast %168 : vector<8xf32> to vector<8x1xf32>
    %170 = tpu.reciprocal %169 {approx = true} : vector<8x1xf32> -> vector<8x1xf32>
    %171 = vector.broadcast %170 : vector<8x1xf32> to vector<8x8xf32>
    %172 = arith.mulf %167, %171 : vector<8x8xf32>
    %173 = arith.truncf %172 : vector<8x8xf32> to vector<8x8xbf16>
    %174 = vector.extract_strided_slice %113 {offsets = [0, 64], sizes = [8, 32], strides = [1, 1]} : vector<8x128xbf16> to vector<8x32xbf16>
    %cst_42 = arith.constant dense<0.000000e+00> : vector<8x32xf32>
    %175 = tpu.matmul %173, %174, %cst_42 {dimension_numbers = #tpu.dot_dimension_numbers<[1], [0], [0], [1], [0, 0, 1, 1], [], []>} : vector<8x8xbf16>, vector<8x32xbf16>, vector<8x32xf32> -> vector<8x32xf32>
    %176 = vector.extract_strided_slice %108 {offsets = [0, 96], sizes = [8, 32], strides = [1, 1]} : vector<8x128xbf16> to vector<8x32xbf16>
    %177 = vector.extract_strided_slice %111 {offsets = [96, 0], sizes = [32, 8], strides = [1, 1]} : vector<128x8xbf16> to vector<32x8xbf16>
    %cst_43 = arith.constant dense<0.000000e+00> : vector<8x8xf32>
    %178 = tpu.matmul %176, %177, %cst_43 {dimension_numbers = #tpu.dot_dimension_numbers<[1], [0], [0], [1], [0, 0, 1, 1], [], []>} : vector<8x32xbf16>, vector<32x8xbf16>, vector<8x8xf32> -> vector<8x8xf32>
    %cst_44 = arith.constant 0.353553385 : f32
    %179 = vector.broadcast %cst_44 : f32 to vector<8x8xf32>
    %180 = arith.mulf %178, %179 : vector<8x8xf32>
    %181 = vector.broadcast %115 : vector<1x8xf32> to vector<8x8xf32>
    %182 = arith.addf %180, %181 : vector<8x8xf32>
    %cst_45 = arith.constant dense<0xFF800000> : vector<8xf32>
    %183 = vector.multi_reduction <maximumf>, %182, %cst_45 [1] : vector<8x8xf32> to vector<8xf32>
    %184 = vector.shape_cast %183 : vector<8xf32> to vector<8x1xf32>
    %185 = vector.broadcast %184 : vector<8x1xf32> to vector<8x8xf32>
    %186 = arith.subf %182, %185 : vector<8x8xf32>
    %187 = math.exp %186 : vector<8x8xf32>
    %cst_46 = arith.constant dense<0.000000e+00> : vector<8xf32>
    %188 = vector.multi_reduction <add>, %187, %cst_46 [1] : vector<8x8xf32> to vector<8xf32>
    %189 = vector.shape_cast %188 : vector<8xf32> to vector<8x1xf32>
    %190 = tpu.reciprocal %189 {approx = true} : vector<8x1xf32> -> vector<8x1xf32>
    %191 = vector.broadcast %190 : vector<8x1xf32> to vector<8x8xf32>
    %192 = arith.mulf %187, %191 : vector<8x8xf32>
    %193 = arith.truncf %192 : vector<8x8xf32> to vector<8x8xbf16>
    %194 = vector.extract_strided_slice %113 {offsets = [0, 96], sizes = [8, 32], strides = [1, 1]} : vector<8x128xbf16> to vector<8x32xbf16>
    %cst_47 = arith.constant dense<0.000000e+00> : vector<8x32xf32>
    %195 = tpu.matmul %193, %194, %cst_47 {dimension_numbers = #tpu.dot_dimension_numbers<[1], [0], [0], [1], [0, 0, 1, 1], [], []>} : vector<8x8xbf16>, vector<8x32xbf16>, vector<8x32xf32> -> vector<8x32xf32>
    %196 = tpu.concatenate %135, %155, %175, %195 in 1 : vector<8x32xf32>, vector<8x32xf32>, vector<8x32xf32>, vector<8x32xf32> -> vector<8x128xf32>
    %197 = tpu.concatenate %106, %196 in 0 : vector<8x128xf32>, vector<8x128xf32> -> vector<16x128xf32>
    %198 = arith.truncf %197 : vector<16x128xf32> to vector<16x128xbf16>
    %c0_48 = arith.constant 0 : index
    %c0_49 = arith.constant 0 : index
    %199 = vector.load %arg5[%c0_48, %c0_49] : memref<128x128xbf16, #tpu.memory_space<vmem>>, vector<128x128xbf16>
    %cst_50 = arith.constant dense<0.000000e+00> : vector<16x128xf32>
    %200 = tpu.matmul %198, %199, %cst_50 {dimension_numbers = #tpu.dot_dimension_numbers<[1], [0], [0], [1], [0, 0, 1, 1], [], []>} : vector<16x128xbf16>, vector<128x128xbf16>, vector<16x128xf32> -> vector<16x128xf32>
    %c0_51 = arith.constant 0 : index
    %c0_52 = arith.constant 0 : index
    %201 = vector.load %arg6[%c0_51, %c0_52] : memref<1x128xf32, #tpu.memory_space<vmem>>, vector<1x128xf32>
    %202 = vector.broadcast %201 : vector<1x128xf32> to vector<16x128xf32>
    %203 = arith.addf %200, %202 : vector<16x128xf32>
    %204 = arith.addf %1, %203 : vector<16x128xf32>
    %c0_53 = arith.constant 0 : index
    %c0_54 = arith.constant 0 : index
    %205 = vector.load %arg7[%c0_53, %c0_54] : memref<1x128xf32, #tpu.memory_space<vmem>>, vector<1x128xf32>
    %c0_55 = arith.constant 0 : index
    %c0_56 = arith.constant 0 : index
    %206 = vector.load %arg8[%c0_55, %c0_56] : memref<1x128xf32, #tpu.memory_space<vmem>>, vector<1x128xf32>
    %cst_57 = arith.constant dense<0.000000e+00> : vector<16xf32>
    %207 = vector.multi_reduction <add>, %204, %cst_57 [1] : vector<16x128xf32> to vector<16xf32>
    %208 = vector.shape_cast %207 : vector<16xf32> to vector<16x1xf32>
    %cst_58 = arith.constant 3.125000e-02 : f32
    %209 = vector.broadcast %cst_58 : f32 to vector<16x1xf32>
    %210 = arith.mulf %208, %209 : vector<16x1xf32>
    %211 = vector.broadcast %210 : vector<16x1xf32> to vector<16x128xf32>
    %212 = arith.subf %204, %211 : vector<16x128xf32>
    %213 = vector.broadcast %6 : vector<1x128xf32> to vector<16x128xf32>
    %214 = arith.mulf %212, %213 : vector<16x128xf32>
    %215 = arith.mulf %214, %214 : vector<16x128xf32>
    %cst_59 = arith.constant dense<0.000000e+00> : vector<16xf32>
    %216 = vector.multi_reduction <add>, %215, %cst_59 [1] : vector<16x128xf32> to vector<16xf32>
    %217 = vector.shape_cast %216 : vector<16xf32> to vector<16x1xf32>
    %cst_60 = arith.constant 3.125000e-02 : f32
    %218 = vector.broadcast %cst_60 : f32 to vector<16x1xf32>
    %219 = arith.mulf %217, %218 : vector<16x1xf32>
    %220 = vector.broadcast %210 : vector<16x1xf32> to vector<16x128xf32>
    %221 = arith.subf %204, %220 : vector<16x128xf32>
    %cst_61 = arith.constant 9.99999974E-6 : f32
    %222 = vector.broadcast %cst_61 : f32 to vector<16x1xf32>
    %223 = arith.addf %219, %222 : vector<16x1xf32>
    %224 = math.rsqrt %223 : vector<16x1xf32>
    %225 = vector.broadcast %224 : vector<16x1xf32> to vector<16x128xf32>
    %226 = arith.mulf %221, %225 : vector<16x128xf32>
    %227 = vector.broadcast %205 : vector<1x128xf32> to vector<16x128xf32>
    %228 = arith.mulf %226, %227 : vector<16x128xf32>
    %229 = vector.broadcast %206 : vector<1x128xf32> to vector<16x128xf32>
    %230 = arith.addf %228, %229 : vector<16x128xf32>
    %231 = arith.truncf %230 : vector<16x128xf32> to vector<16x128xbf16>
    %c0_62 = arith.constant 0 : index
    %c0_63 = arith.constant 0 : index
    %232 = vector.load %arg9[%c0_62, %c0_63] : memref<128x128xbf16, #tpu.memory_space<vmem>>, vector<128x128xbf16>
    %cst_64 = arith.constant dense<0.000000e+00> : vector<16x128xf32>
    %233 = tpu.matmul %231, %232, %cst_64 {dimension_numbers = #tpu.dot_dimension_numbers<[1], [0], [0], [1], [0, 0, 1, 1], [], []>} : vector<16x128xbf16>, vector<128x128xbf16>, vector<16x128xf32> -> vector<16x128xf32>
    %c0_65 = arith.constant 0 : index
    %c0_66 = arith.constant 0 : index
    %234 = vector.load %arg10[%c0_65, %c0_66] : memref<1x128xf32, #tpu.memory_space<vmem>>, vector<1x128xf32>
    %235 = vector.broadcast %234 : vector<1x128xf32> to vector<16x128xf32>
    %236 = arith.addf %233, %235 : vector<16x128xf32>
    %cst_67 = arith.constant 0.000000e+00 : f32
    %237 = vector.broadcast %cst_67 : f32 to vector<16x128xf32>
    %238 = arith.maximumf %236, %237 : vector<16x128xf32>
    %239 = arith.truncf %238 : vector<16x128xf32> to vector<16x128xbf16>
    %c0_68 = arith.constant 0 : index
    %c0_69 = arith.constant 0 : index
    %240 = vector.load %arg11[%c0_68, %c0_69] : memref<128x128xbf16, #tpu.memory_space<vmem>>, vector<128x128xbf16>
    %cst_70 = arith.constant dense<0.000000e+00> : vector<16x128xf32>
    %241 = tpu.matmul %239, %240, %cst_70 {dimension_numbers = #tpu.dot_dimension_numbers<[1], [0], [0], [1], [0, 0, 1, 1], [], []>} : vector<16x128xbf16>, vector<128x128xbf16>, vector<16x128xf32> -> vector<16x128xf32>
    %c0_71 = arith.constant 0 : index
    %c0_72 = arith.constant 0 : index
    %242 = vector.load %arg12[%c0_71, %c0_72] : memref<1x128xf32, #tpu.memory_space<vmem>>, vector<1x128xf32>
    %243 = vector.broadcast %242 : vector<1x128xf32> to vector<16x128xf32>
    %244 = arith.addf %241, %243 : vector<16x128xf32>
    %245 = arith.addf %230, %244 : vector<16x128xf32>
    %c0_73 = arith.constant 0 : index
    %c0_74 = arith.constant 0 : index
    %246 = vector.load %arg13[%c0_73, %c0_74] : memref<1x128xf32, #tpu.memory_space<vmem>>, vector<1x128xf32>
    %c0_75 = arith.constant 0 : index
    %c0_76 = arith.constant 0 : index
    %247 = vector.load %arg14[%c0_75, %c0_76] : memref<1x128xf32, #tpu.memory_space<vmem>>, vector<1x128xf32>
    %cst_77 = arith.constant dense<0.000000e+00> : vector<16xf32>
    %248 = vector.multi_reduction <add>, %245, %cst_77 [1] : vector<16x128xf32> to vector<16xf32>
    %249 = vector.shape_cast %248 : vector<16xf32> to vector<16x1xf32>
    %cst_78 = arith.constant 3.125000e-02 : f32
    %250 = vector.broadcast %cst_78 : f32 to vector<16x1xf32>
    %251 = arith.mulf %249, %250 : vector<16x1xf32>
    %252 = vector.broadcast %251 : vector<16x1xf32> to vector<16x128xf32>
    %253 = arith.subf %245, %252 : vector<16x128xf32>
    %254 = vector.broadcast %6 : vector<1x128xf32> to vector<16x128xf32>
    %255 = arith.mulf %253, %254 : vector<16x128xf32>
    %256 = arith.mulf %255, %255 : vector<16x128xf32>
    %cst_79 = arith.constant dense<0.000000e+00> : vector<16xf32>
    %257 = vector.multi_reduction <add>, %256, %cst_79 [1] : vector<16x128xf32> to vector<16xf32>
    %258 = vector.shape_cast %257 : vector<16xf32> to vector<16x1xf32>
    %cst_80 = arith.constant 3.125000e-02 : f32
    %259 = vector.broadcast %cst_80 : f32 to vector<16x1xf32>
    %260 = arith.mulf %258, %259 : vector<16x1xf32>
    %261 = vector.broadcast %251 : vector<16x1xf32> to vector<16x128xf32>
    %262 = arith.subf %245, %261 : vector<16x128xf32>
    %cst_81 = arith.constant 9.99999974E-6 : f32
    %263 = vector.broadcast %cst_81 : f32 to vector<16x1xf32>
    %264 = arith.addf %260, %263 : vector<16x1xf32>
    %265 = math.rsqrt %264 : vector<16x1xf32>
    %266 = vector.broadcast %265 : vector<16x1xf32> to vector<16x128xf32>
    %267 = arith.mulf %262, %266 : vector<16x128xf32>
    %268 = vector.broadcast %246 : vector<1x128xf32> to vector<16x128xf32>
    %269 = arith.mulf %267, %268 : vector<16x128xf32>
    %270 = vector.broadcast %247 : vector<1x128xf32> to vector<16x128xf32>
    %271 = arith.addf %269, %270 : vector<16x128xf32>
    %272 = arith.truncf %271 : vector<16x128xf32> to vector<16x128xbf16>
    %c0_82 = arith.constant 0 : index
    %c0_83 = arith.constant 0 : index
    %273 = vector.load %arg15[%c0_82, %c0_83] : memref<16x128xbf16, #tpu.memory_space<vmem>>, vector<16x128xbf16>
    tpu.vector_store %arg15[%c0_82, %c0_83], %272 {strides = array<i32>} : memref<16x128xbf16, #tpu.memory_space<vmem>>, vector<16x128xbf16>,
    return
  }
  func.func @transform_0(%arg0: i32) -> (i32, i32) {
    %c0_i32 = arith.constant 0 : i32
    %c0_i32_0 = arith.constant 0 : i32
    return %arg0, %c0_i32 : i32, i32
  }
  func.func @transform_1(%arg0: i32) -> (i32, i32, i32) {
    %c0_i32 = arith.constant 0 : i32
    %c0_i32_0 = arith.constant 0 : i32
    %c0_i32_1 = arith.constant 0 : i32
    return %arg0, %c0_i32, %c0_i32_0 : i32, i32, i32
  }
  func.func @transform_2(%arg0: i32) -> (i32, i32) {
    %c0_i32 = arith.constant 0 : i32
    %c0_i32_0 = arith.constant 0 : i32
    %c0_i32_1 = arith.constant 0 : i32
    return %c0_i32, %c0_i32_0 : i32, i32
  }
  func.func @transform_3(%arg0: i32) -> (i32, i32) {
    %c0_i32 = arith.constant 0 : i32
    %c0_i32_0 = arith.constant 0 : i32
    %c0_i32_1 = arith.constant 0 : i32
    return %c0_i32, %c0_i32_0 : i32, i32
  }
  func.func @transform_4(%arg0: i32) -> (i32, i32) {
    %c0_i32 = arith.constant 0 : i32
    %c0_i32_0 = arith.constant 0 : i32
    %c0_i32_1 = arith.constant 0 : i32
    return %c0_i32, %c0_i32_0 : i32, i32
  }
  func.func @transform_5(%arg0: i32) -> (i32, i32) {
    %c0_i32 = arith.constant 0 : i32
    %c0_i32_0 = arith.constant 0 : i32
    %c0_i32_1 = arith.constant 0 : i32
    return %c0_i32, %c0_i32_0 : i32, i32
  }
  func.func @transform_6(%arg0: i32) -> (i32, i32) {
    %c0_i32 = arith.constant 0 : i32
    %c0_i32_0 = arith.constant 0 : i32
    %c0_i32_1 = arith.constant 0 : i32
    return %c0_i32, %c0_i32_0 : i32, i32
  }
  func.func @transform_7(%arg0: i32) -> (i32, i32) {
    %c0_i32 = arith.constant 0 : i32
    %c0_i32_0 = arith.constant 0 : i32
    %c0_i32_1 = arith.constant 0 : i32
    return %c0_i32, %c0_i32_0 : i32, i32
  }
  func.func @transform_8(%arg0: i32) -> (i32, i32) {
    %c0_i32 = arith.constant 0 : i32
    %c0_i32_0 = arith.constant 0 : i32
    %c0_i32_1 = arith.constant 0 : i32
    return %c0_i32, %c0_i32_0 : i32, i32
  }
  func.func @transform_9(%arg0: i32) -> (i32, i32) {
    %c0_i32 = arith.constant 0 : i32
    %c0_i32_0 = arith.constant 0 : i32
    %c0_i32_1 = arith.constant 0 : i32
    return %c0_i32, %c0_i32_0 : i32, i32
  }
  func.func @transform_10(%arg0: i32) -> (i32, i32) {
    %c0_i32 = arith.constant 0 : i32
    %c0_i32_0 = arith.constant 0 : i32
    %c0_i32_1 = arith.constant 0 : i32
    return %c0_i32, %c0_i32_0 : i32, i32
  }
  func.func @transform_11(%arg0: i32) -> (i32, i32) {
    %c0_i32 = arith.constant 0 : i32
    %c0_i32_0 = arith.constant 0 : i32
    %c0_i32_1 = arith.constant 0 : i32
    return %c0_i32, %c0_i32_0 : i32, i32
  }
  func.func @transform_12(%arg0: i32) -> (i32, i32) {
    %c0_i32 = arith.constant 0 : i32
    %c0_i32_0 = arith.constant 0 : i32
    %c0_i32_1 = arith.constant 0 : i32
    return %c0_i32, %c0_i32_0 : i32, i32
  }
  func.func @transform_13(%arg0: i32) -> (i32, i32) {
    %c0_i32 = arith.constant 0 : i32
    %c0_i32_0 = arith.constant 0 : i32
    %c0_i32_1 = arith.constant 0 : i32
    return %c0_i32, %c0_i32_0 : i32, i32
  }
  func.func @transform_14(%arg0: i32) -> (i32, i32) {
    %c0_i32 = arith.constant 0 : i32
    %c0_i32_0 = arith.constant 0 : i32
    return %arg0, %c0_i32 : i32, i32
  }
}

module attributes {stable_mosaic.version = 11 : i64} {
  func.func @_mlp_chain_kernel(%arg0: i32, %arg1: memref<16x128xbf16, #tpu.memory_space<vmem>>, %arg2: memref<128x128xbf16, #tpu.memory_space<vmem>>, %arg3: memref<1x128xf32, #tpu.memory_space<vmem>>, %arg4: memref<128x128xbf16, #tpu.memory_space<vmem>>, %arg5: memref<1x128xf32, #tpu.memory_space<vmem>>, %arg6: memref<16x128xf32, #tpu.memory_space<vmem>>) attributes {dimension_semantics = [#tpu.dimension_semantics<parallel>], iteration_bounds = array<i64: 1>, scalar_prefetch = 0 : i64, scratch_operands = 0 : i64, tpu.core_type = #tpu.core_type<tc>, window_params = [{transform_indices = @transform_0, window_bounds = array<i64: 16, 128>}, {pipeline_mode = #tpu.pipeline_mode<synchronous>, transform_indices = @transform_1, window_bounds = array<i64: 128, 128>}, {pipeline_mode = #tpu.pipeline_mode<synchronous>, transform_indices = @transform_2, window_bounds = array<i64: 1, 128>}, {pipeline_mode = #tpu.pipeline_mode<synchronous>, transform_indices = @transform_3, window_bounds = array<i64: 128, 128>}, {pipeline_mode = #tpu.pipeline_mode<synchronous>, transform_indices = @transform_4, window_bounds = array<i64: 1, 128>}, {transform_indices = @transform_5, window_bounds = array<i64: 16, 128>}]} {
    %c0 = arith.constant 0 : index
    %c0_0 = arith.constant 0 : index
    %0 = vector.load %arg1[%c0, %c0_0] : memref<16x128xbf16, #tpu.memory_space<vmem>>, vector<16x128xbf16>
    %1 = arith.extf %0 : vector<16x128xbf16> to vector<16x128xf32>
    %2 = arith.truncf %1 : vector<16x128xf32> to vector<16x128xbf16>
    %c0_1 = arith.constant 0 : index
    %c0_2 = arith.constant 0 : index
    %3 = vector.load %arg2[%c0_1, %c0_2] : memref<128x128xbf16, #tpu.memory_space<vmem>>, vector<128x128xbf16>
    %cst = arith.constant dense<0.000000e+00> : vector<16x128xf32>
    %4 = tpu.matmul %2, %3, %cst {dimension_numbers = #tpu.dot_dimension_numbers<[1], [0], [0], [1], [0, 0, 1, 1], [], []>} : vector<16x128xbf16>, vector<128x128xbf16>, vector<16x128xf32> -> vector<16x128xf32>
    %c0_3 = arith.constant 0 : index
    %c0_4 = arith.constant 0 : index
    %5 = vector.load %arg3[%c0_3, %c0_4] : memref<1x128xf32, #tpu.memory_space<vmem>>, vector<1x128xf32>
    %6 = vector.broadcast %5 : vector<1x128xf32> to vector<16x128xf32>
    %7 = arith.addf %4, %6 : vector<16x128xf32>
    %cst_5 = arith.constant 0.000000e+00 : f32
    %8 = vector.broadcast %cst_5 : f32 to vector<16x128xf32>
    %9 = arith.maximumf %7, %8 : vector<16x128xf32>
    %10 = arith.truncf %9 : vector<16x128xf32> to vector<16x128xbf16>
    %c0_6 = arith.constant 0 : index
    %c0_7 = arith.constant 0 : index
    %11 = vector.load %arg4[%c0_6, %c0_7] : memref<128x128xbf16, #tpu.memory_space<vmem>>, vector<128x128xbf16>
    %cst_8 = arith.constant dense<0.000000e+00> : vector<16x128xf32>
    %12 = tpu.matmul %10, %11, %cst_8 {dimension_numbers = #tpu.dot_dimension_numbers<[1], [0], [0], [1], [0, 0, 1, 1], [], []>} : vector<16x128xbf16>, vector<128x128xbf16>, vector<16x128xf32> -> vector<16x128xf32>
    %c0_9 = arith.constant 0 : index
    %c0_10 = arith.constant 0 : index
    %13 = vector.load %arg5[%c0_9, %c0_10] : memref<1x128xf32, #tpu.memory_space<vmem>>, vector<1x128xf32>
    %14 = vector.broadcast %13 : vector<1x128xf32> to vector<16x128xf32>
    %15 = arith.addf %12, %14 : vector<16x128xf32>
    %c0_11 = arith.constant 0 : index
    %c0_12 = arith.constant 0 : index
    %16 = vector.load %arg6[%c0_11, %c0_12] : memref<16x128xf32, #tpu.memory_space<vmem>>, vector<16x128xf32>
    tpu.vector_store %arg6[%c0_11, %c0_12], %15 {strides = array<i32>} : memref<16x128xf32, #tpu.memory_space<vmem>>, vector<16x128xf32>,
    return
  }
  func.func @transform_0(%arg0: i32) -> (i32, i32) {
    %c0_i32 = arith.constant 0 : i32
    %c0_i32_0 = arith.constant 0 : i32
    return %arg0, %c0_i32 : i32, i32
  }
  func.func @transform_1(%arg0: i32) -> (i32, i32) {
    %c0_i32 = arith.constant 0 : i32
    %c0_i32_0 = arith.constant 0 : i32
    %c0_i32_1 = arith.constant 0 : i32
    return %c0_i32, %c0_i32_0 : i32, i32
  }
  func.func @transform_2(%arg0: i32) -> (i32, i32) {
    %c0_i32 = arith.constant 0 : i32
    %c0_i32_0 = arith.constant 0 : i32
    %c0_i32_1 = arith.constant 0 : i32
    return %c0_i32, %c0_i32_0 : i32, i32
  }
  func.func @transform_3(%arg0: i32) -> (i32, i32) {
    %c0_i32 = arith.constant 0 : i32
    %c0_i32_0 = arith.constant 0 : i32
    %c0_i32_1 = arith.constant 0 : i32
    return %c0_i32, %c0_i32_0 : i32, i32
  }
  func.func @transform_4(%arg0: i32) -> (i32, i32) {
    %c0_i32 = arith.constant 0 : i32
    %c0_i32_0 = arith.constant 0 : i32
    %c0_i32_1 = arith.constant 0 : i32
    return %c0_i32, %c0_i32_0 : i32, i32
  }
  func.func @transform_5(%arg0: i32) -> (i32, i32) {
    %c0_i32 = arith.constant 0 : i32
    %c0_i32_0 = arith.constant 0 : i32
    return %arg0, %c0_i32 : i32, i32
  }
}

</mosaic_0001>

<llo_original>
// kernel: flat_transformer_mean_log_scale_forward.7
$region0: #{flat_transformer_mean_log_scale_forward.7}
  #allocation0 [shape = 'u32[]', space=smem, size = 0x4, offset = 0x4, fixed_abs, tag = 'smem constant byte address 0x4 - core index']
  #allocation1 [shape = 'u32[144,128]{1,0:T(1,128)}', space=vmem, size = 0x12000, scoped, tag = 'internal scratch']
  %s0 = inlined_call_operand.vmem [shape: bf16[16,128], index: 0, kind: input, shape index: {}]
  %s1 = inlined_call_operand.vmem [shape: bf16[128,128], index: 1, kind: input, shape index: {}]
  %s2 = inlined_call_operand.vmem [shape: f32[1,128], index: 2, kind: input, shape index: {}]
  %s3 = inlined_call_operand.vmem [shape: bf16[128,128], index: 3, kind: input, shape index: {}]
  %s4 = inlined_call_operand.vmem [shape: f32[1,128], index: 4, kind: input, shape index: {}]
  %s5 = inlined_call_operand.vmem [shape: f32[16,128], index: 5, kind: output, shape index: {}]
  %s6 = sld [smem:[#allocation0]]
  $region30: #{flat_transformer_mean_log_scale_forward.7} parent=0
    _
  %s8 = ssub.s32 1, %s6
  %s9 = scalar_select 0, %s8, %s6
  // Predicated region
  $region2: #{flat_transformer_mean_log_scale_forward.7} parent=0 // pred_check
    _
  $region3: #{flat_transformer_mean_log_scale_forward.7} parent=0 // pred_check_branch
    %11 = sbr.rel (0) target = $region5
  $region4: #{flat_transformer_mean_log_scale_forward.7} parent=0 // pred_region
    _
  $region5: #{flat_transformer_mean_log_scale_forward.7} parent=0 // pred_fallthru
    _
  // Predicated region
  $region6: #{flat_transformer_mean_log_scale_forward.7} parent=0 // pred_check
    _
  $region7: #{flat_transformer_mean_log_scale_forward.7} parent=0 // pred_check_branch
    %13 = sbr.rel (0) target = $region9
  $region8: #{flat_transformer_mean_log_scale_forward.7} parent=0 // pred_region
    _
  $region9: #{flat_transformer_mean_log_scale_forward.7} parent=0 // pred_fallthru
    _
  // Predicated region
  $region10: #{flat_transformer_mean_log_scale_forward.7} parent=0 // pred_check
    _
  $region11: #{flat_transformer_mean_log_scale_forward.7} parent=0 // pred_check_branch
    %15 = sbr.rel (0) target = $region13
  $region12: #{flat_transformer_mean_log_scale_forward.7} parent=0 // pred_region
    _
  $region13: #{flat_transformer_mean_log_scale_forward.7} parent=0 // pred_fallthru
    _
  // Predicated region
  $region14: #{flat_transformer_mean_log_scale_forward.7} parent=0 // pred_check
    _
  $region15: #{flat_transformer_mean_log_scale_forward.7} parent=0 // pred_check_branch
    %17 = sbr.rel (0) target = $region17
  $region16: #{flat_transformer_mean_log_scale_forward.7} parent=0 // pred_region
    _
  $region17: #{flat_transformer_mean_log_scale_forward.7} parent=0 // pred_fallthru
    _
  // Predicated region
  $region18: #{flat_transformer_mean_log_scale_forward.7} parent=0 // pred_check
    _
  $region19: #{flat_transformer_mean_log_scale_forward.7} parent=0 // pred_check_branch
    %19 = sbr.rel (0) target = $region21
  $region20: #{flat_transformer_mean_log_scale_forward.7} parent=0 // pred_region
    _
  $region21: #{flat_transformer_mean_log_scale_forward.7} parent=0 // pred_fallthru
    _
  %v21 = vld [vmem:[%s0] sm:$0xf]
  %v22 = vld [vmem:[%s0 + $0x4] sm:$0xf]
  %v23 = vld [vmem:[%s1] sm:$0xf]
  %v24 = vld [vmem:[%s1 + $0x4] sm:$0xf]
  %v25 = vld [vmem:[%s1 + $0x8] sm:$0xf]
  %v26 = vld [vmem:[%s1 + $0xc] sm:$0xf]
  %v27 = vld [vmem:[%s1 + $0x10] sm:$0xf]
  %v28 = vld [vmem:[%s1 + $0x14] sm:$0xf]
  %v29 = vld [vmem:[%s1 + $0x18] sm:$0xf]
  %v30 = vld [vmem:[%s1 + $0x1c] sm:$0xf]
  %v31 = vld [vmem:[%s1 + $0x20] sm:$0xf]
  %v32 = vld [vmem:[%s1 + $0x24] sm:$0xf]
  %v33 = vld [vmem:[%s1 + $0x28] sm:$0xf]
  %v34 = vld [vmem:[%s1 + $0x2c] sm:$0xf]
  %v35 = vld [vmem:[%s1 + $0x30] sm:$0xf]
  %v36 = vld [vmem:[%s1 + $0x34] sm:$0xf]
  %v37 = vld [vmem:[%s1 + $0x38] sm:$0xf]
  %v38 = vld [vmem:[%s1 + $0x3c] sm:$0xf]
  %v39 = vld [vmem:[%s2] sm:$0x1]
  %v41 = vlaneseq
  %v42 = vshrl.u32 %v41, 7
  %v43 = vsub.s32 0, %v42
  %v44 = vrot.slane %v39, %v43
  %v48 = vunpack.c.l.b16 %v21
  %v49 = vunpack.c.l.b16 %v22
  %v50 = vpack.c.b16 %v49, %v48
  %v68 = vunpack.c.l.b16 %v23
  %v69 = vunpack.c.l.b16 %v24
  %v70 = vunpack.c.l.b16 %v25
  %v71 = vunpack.c.l.b16 %v26
  %v72 = vunpack.c.l.b16 %v27
  %v73 = vunpack.c.l.b16 %v28
  %v74 = vunpack.c.l.b16 %v29
  %v75 = vunpack.c.l.b16 %v30
  %v76 = vunpack.c.l.b16 %v31
  %v77 = vunpack.c.l.b16 %v32
  %v78 = vunpack.c.l.b16 %v33
  %v79 = vunpack.c.l.b16 %v34
  %v80 = vunpack.c.l.b16 %v35
  %v81 = vunpack.c.l.b16 %v36
  %v82 = vunpack.c.l.b16 %v37
  %v83 = vunpack.c.l.b16 %v38
  %v84 = vpack.c.b16 %v69, %v68
  %v85 = vpack.c.b16 %v71, %v70
  %v86 = vpack.c.b16 %v73, %v72
  %v87 = vpack.c.b16 %v75, %v74
  %v88 = vpack.c.b16 %v77, %v76
  %v89 = vpack.c.b16 %v79, %v78
  %v90 = vpack.c.b16 %v81, %v80
  %v91 = vpack.c.b16 %v83, %v82
  %100 = vmatprep.subr.bf16.mxu0 0
  %101 = vmatpush1.bf16.msra.mxu0 %v91
  %102 = vmatprep.subr.bf16.mxu0 0
  %103 = vmatpush1.bf16.msra.mxu0 %v90
  %104 = vmatprep.subr.bf16.mxu0 0
  %105 = vmatpush1.bf16.msra.mxu0 %v89
  %106 = vmatprep.subr.bf16.mxu0 0
  %107 = vmatpush1.bf16.msra.mxu0 %v88
  %108 = vmatprep.subr.bf16.mxu0 0
  %109 = vmatpush1.bf16.msra.mxu0 %v87
  %110 = vmatprep.subr.bf16.mxu0 0
  %111 = vmatpush1.bf16.msra.mxu0 %v86
  %112 = vmatprep.subr.bf16.mxu0 0
  %113 = vmatpush1.bf16.msra.mxu0 %v85
  %114 = vmatprep.subr.bf16.mxu0 0
  %115 = vmatpush1.bf16.msra.mxu0 %v84
  %116 = vmatprep.subr.bf16.mxu0 0
  %117 = vmatpush2.bf16.msra.mxu0 0
  %118 = vmatprep.subr.bf16.mxu0 0
  %119 = vmatpush2.bf16.msra.mxu0 0
  %120 = vmatprep.subr.bf16.mxu0 0
  %121 = vmatpush2.bf16.msra.mxu0 0
  %122 = vmatprep.subr.bf16.mxu0 0
  %123 = vmatpush2.bf16.msra.mxu0 0
  %124 = vmatprep.subr.bf16.mxu0 0
  %125 = vmatpush2.bf16.msra.mxu0 0
  %126 = vmatprep.subr.bf16.mxu0 0
  %127 = vmatpush2.bf16.msra.mxu0 0
  %128 = vmatprep.subr.bf16.mxu0 0
  %129 = vmatpush2.bf16.msra.mxu0 0
  %130 = vmatprep.subr.bf16.mxu0 0
  %131 = vmatpush2.bf16.msra.mxu0 0
  %132 = vmatprep.mubr.bf16.mxu0 0
  %133 = vmatmul.mubr.bf16.gmra.mxu0 %v50
  %v134 = vpop.f32.mrf.mxu0
  %v135 = vadd.f32 %v44, %v134
  %v136 = vpop.f32.mrf.mxu0
  %v137 = vpop.f32.mrf.mxu0
  %v138 = vadd.f32 %v44, %v137
  %v139 = vpop.f32.mrf.mxu0
  %140 = vdwg.mxu0
  %v141 = vmax.f32 %v135, 0.0
  %v142 = vmax.f32 %v138, 0.0
  %v143 = vpack.c.bf16 %v142, %v141
  %v144 = vld [vmem:[%s3] sm:$0xf]
  %v145 = vld [vmem:[%s3 + $0x4] sm:$0xf]
  %v146 = vld [vmem:[%s3 + $0x8] sm:$0xf]
  %v147 = vld [vmem:[%s3 + $0xc] sm:$0xf]
  %v148 = vld [vmem:[%s3 + $0x10] sm:$0xf]
  %v149 = vld [vmem:[%s3 + $0x14] sm:$0xf]
  %v150 = vld [vmem:[%s3 + $0x18] sm:$0xf]
  %v151 = vld [vmem:[%s3 + $0x1c] sm:$0xf]
  %v152 = vld [vmem:[%s3 + $0x20] sm:$0xf]
  %v153 = vld [vmem:[%s3 + $0x24] sm:$0xf]
  %v154 = vld [vmem:[%s3 + $0x28] sm:$0xf]
  %v155 = vld [vmem:[%s3 + $0x2c] sm:$0xf]
  %v156 = vld [vmem:[%s3 + $0x30] sm:$0xf]
  %v157 = vld [vmem:[%s3 + $0x34] sm:$0xf]
  %v158 = vld [vmem:[%s3 + $0x38] sm:$0xf]
  %v159 = vld [vmem:[%s3 + $0x3c] sm:$0xf]
  %v160 = vld [vmem:[%s4] sm:$0x1]
  %v162 = vlaneseq
  %v163 = vshrl.u32 %v162, 7
  %v164 = vsub.s32 0, %v163
  %v165 = vrot.slane %v160, %v164
  %v183 = vunpack.c.l.b16 %v144
  %v184 = vunpack.c.l.b16 %v145
  %v185 = vunpack.c.l.b16 %v146
  %v186 = vunpack.c.l.b16 %v147
  %v187 = vunpack.c.l.b16 %v148
  %v188 = vunpack.c.l.b16 %v149
  %v189 = vunpack.c.l.b16 %v150
  %v190 = vunpack.c.l.b16 %v151
  %v191 = vunpack.c.l.b16 %v152
  %v192 = vunpack.c.l.b16 %v153
  %v193 = vunpack.c.l.b16 %v154
  %v194 = vunpack.c.l.b16 %v155
  %v195 = vunpack.c.l.b16 %v156
  %v196 = vunpack.c.l.b16 %v157
  %v197 = vunpack.c.l.b16 %v158
  %v198 = vunpack.c.l.b16 %v159
  %v199 = vpack.c.b16 %v184, %v183
  %v200 = vpack.c.b16 %v186, %v185
  %v201 = vpack.c.b16 %v188, %v187
  %v202 = vpack.c.b16 %v190, %v189
  %v203 = vpack.c.b16 %v192, %v191
  %v204 = vpack.c.b16 %v194, %v193
  %v205 = vpack.c.b16 %v196, %v195
  %v206 = vpack.c.b16 %v198, %v197
  %215 = vmatprep.subr.bf16.mxu0 0
  %216 = vmatpush1.bf16.msra.mxu0 %v206
  %217 = vmatprep.subr.bf16.mxu0 0
  %218 = vmatpush1.bf16.msra.mxu0 %v205
  %219 = vmatprep.subr.bf16.mxu0 0
  %220 = vmatpush1.bf16.msra.mxu0 %v204
  %221 = vmatprep.subr.bf16.mxu0 0
  %222 = vmatpush1.bf16.msra.mxu0 %v203
  %223 = vmatprep.subr.bf16.mxu0 0
  %224 = vmatpush1.bf16.msra.mxu0 %v202
  %225 = vmatprep.subr.bf16.mxu0 0
  %226 = vmatpush1.bf16.msra.mxu0 %v201
  %227 = vmatprep.subr.bf16.mxu0 0
  %228 = vmatpush1.bf16.msra.mxu0 %v200
  %229 = vmatprep.subr.bf16.mxu0 0
  %230 = vmatpush1.bf16.msra.mxu0 %v199
  %231 = vmatprep.subr.bf16.mxu0 0
  %232 = vmatpush2.bf16.msra.mxu0 0
  %233 = vmatprep.subr.bf16.mxu0 0
  %234 = vmatpush2.bf16.msra.mxu0 0
  %235 = vmatprep.subr.bf16.mxu0 0
  %236 = vmatpush2.bf16.msra.mxu0 0
  %237 = vmatprep.subr.bf16.mxu0 0
  %238 = vmatpush2.bf16.msra.mxu0 0
  %239 = vmatprep.subr.bf16.mxu0 0
  %240 = vmatpush2.bf16.msra.mxu0 0
  %241 = vmatprep.subr.bf16.mxu0 0
  %242 = vmatpush2.bf16.msra.mxu0 0
  %243 = vmatprep.subr.bf16.mxu0 0
  %244 = vmatpush2.bf16.msra.mxu0 0
  %245 = vmatprep.subr.bf16.mxu0 0
  %246 = vmatpush2.bf16.msra.mxu0 0
  %247 = vmatprep.mubr.bf16.mxu0 0
  %248 = vmatmul.mubr.bf16.gmra.mxu0 %v143
  %v249 = vpop.f32.mrf.mxu0
  %v250 = vadd.f32 %v165, %v249
  %v251 = vpop.f32.mrf.mxu0
  %v252 = vpop.f32.mrf.mxu0
  %v253 = vadd.f32 %v165, %v252
  %v254 = vpop.f32.mrf.mxu0
  %255 = vdwg.mxu0
  %256 = vst [vmem:[%s5] sm:$0xff] %v250
  %257 = vst [vmem:[%s5 + $0x8] sm:$0xff] %v253
  // Predicated region
  $region22: #{flat_transformer_mean_log_scale_forward.7} parent=0 // pred_check
    _
  $region23: #{flat_transformer_mean_log_scale_forward.7} parent=0 // pred_check_branch
    %259 = sbr.rel (0) target = $region25
  $region24: #{flat_transformer_mean_log_scale_forward.7} parent=0 // pred_region
    _
  $region25: #{flat_transformer_mean_log_scale_forward.7} parent=0 // pred_fallthru
    _
  // Predicated region
  $region26: #{flat_transformer_mean_log_scale_forward.7} parent=0 // pred_check
    _
  $region27: #{flat_transformer_mean_log_scale_forward.7} parent=0 // pred_check_branch
    %261 = sbr.rel (0) target = $region29
  $region28: #{flat_transformer_mean_log_scale_forward.7} parent=0 // pred_region
    _
  $region29: #{flat_transformer_mean_log_scale_forward.7} parent=0 // pred_fallthru
    _

// kernel: flat_transformer_mean_log_scale_forward.4
$region0: #{flat_transformer_mean_log_scale_forward.4}
  #allocation0 [shape = 'u32[]', space=smem, size = 0x4, offset = 0x4, fixed_abs, tag = 'smem constant byte address 0x4 - core index']
  #allocation1 [shape = 'u32[144,128]{1,0:T(1,128)}', space=vmem, size = 0x12000, scoped, tag = 'internal scratch']
  %s0 = inlined_call_operand.vmem [shape: f32[16,128], index: 0, kind: input, shape index: {}]
  %s1 = inlined_call_operand.hbm [shape: bf16[128,128], index: 1, kind: input, shape index: {}]
  %s2 = inlined_call_operand.vmem [shape: f32[1,128], index: 2, kind: input, shape index: {}]
  %s3 = inlined_call_operand.vmem [shape: bf16[16,128], index: 3, kind: output, shape index: {}]
  %s4 = sld [smem:[#allocation0]]
  $region26: #{flat_transformer_mean_log_scale_forward.4} parent=0
    _
  %s6 = ssub.s32 1, %s4
  %s7 = scalar_select 0, %s6, %s4
  $region1: #{flat_transformer_mean_log_scale_forward.4} parent=0
    #allocation2 [shape = 'u8[32768]{0}', space=vmem, size = 0x8000, scoped, tag = 'input window, operand 1, single buffered']
    #allocation3 [shape = 's32[1]{0}', space=sflag, size = 0x4, scoped, tag = 'scoped memory for flat_transformer_mean_log_scale_forward.4']
    %8 = vsyncpa [#allocation3], 0
    // Predicated region
    $region2: #{flat_transformer_mean_log_scale_forward.4} parent=1 // pred_check
      _
    $region3: #{flat_transformer_mean_log_scale_forward.4} parent=1 // pred_check_branch
      %10 = sbr.rel (0) target = $region5
    $region4: #{flat_transformer_mean_log_scale_forward.4} parent=1 // pred_region
      _
    $region5: #{flat_transformer_mean_log_scale_forward.4} parent=1 // pred_fallthru
      _
    // Predicated region
    $region6: #{flat_transformer_mean_log_scale_forward.4} parent=1 // pred_check
      _
    $region7: #{flat_transformer_mean_log_scale_forward.4} parent=1 // pred_check_branch
      %12 = sbr.rel (0) target = $region9
    $region8: #{flat_transformer_mean_log_scale_forward.4} parent=1 // pred_region
      %s14 = ssub.s32 1024, 1024
      %15 = vsyncadd [#allocation3], %s14
      %s16 = sshll.u32 [#allocation2], 4
      %s17 = int_to_ptr.vmem [resolvable:$true] %s16
      %22 = dma.hbm_to_vmem [thread:$0]  %s1, 1024, %s17, [#allocation3], 64, 64, 4
    $region9: #{flat_transformer_mean_log_scale_forward.4} parent=1 // pred_fallthru
      _
    // Predicated region
    $region10: #{flat_transformer_mean_log_scale_forward.4} parent=1 // pred_check
      _
    $region11: #{flat_transformer_mean_log_scale_forward.4} parent=1 // pred_check_branch
      %24 = sbr.rel (0) target = $region13
    $region12: #{flat_transformer_mean_log_scale_forward.4} parent=1 // pred_region
      _
    $region13: #{flat_transformer_mean_log_scale_forward.4} parent=1 // pred_fallthru
      _
    // Predicated region
    $region14: #{flat_transformer_mean_log_scale_forward.4} parent=1 // pred_check
      _
    $region15: #{flat_transformer_mean_log_scale_forward.4} parent=1 // pred_check_branch
      %26 = sbr.rel (0) target = $region17
    $region16: #{flat_transformer_mean_log_scale_forward.4} parent=1 // pred_region
      %27 = dma.done [#allocation3], 1024
    $region17: #{flat_transformer_mean_log_scale_forward.4} parent=1 // pred_fallthru
      _
    %v29 = vld [vmem:[%s0] sm:$0xff]
    %v30 = vld [vmem:[%s0 + $0x8] sm:$0xff]
    %v31 = vpack.c.bf16 %v30, %v29
    %v32 = vld [vmem:[#allocation2] sm:$0xf]
    %v33 = vld [vmem:[#allocation2 + $0x4] sm:$0xf]
    %v34 = vld [vmem:[#allocation2 + $0x8] sm:$0xf]
    %v35 = vld [vmem:[#allocation2 + $0xc] sm:$0xf]
    %v36 = vld [vmem:[#allocation2 + $0x10] sm:$0xf]
    %v37 = vld [vmem:[#allocation2 + $0x14] sm:$0xf]
    %v38 = vld [vmem:[#allocation2 + $0x18] sm:$0xf]
    %v39 = vld [vmem:[#allocation2 + $0x1c] sm:$0xf]
    %v40 = vld [vmem:[#allocation2 + $0x20] sm:$0xf]
    %v41 = vld [vmem:[#allocation2 + $0x24] sm:$0xf]
    %v42 = vld [vmem:[#allocation2 + $0x28] sm:$0xf]
    %v43 = vld [vmem:[#allocation2 + $0x2c] sm:$0xf]
    %v44 = vld [vmem:[#allocation2 + $0x30] sm:$0xf]
    %v45 = vld [vmem:[#allocation2 + $0x34] sm:$0xf]
    %v46 = vld [vmem:[#allocation2 + $0x38] sm:$0xf]
    %v47 = vld [vmem:[#allocation2 + $0x3c] sm:$0xf]
    %v48 = vld [vmem:[%s2] sm:$0x1]
    %v50 = vlaneseq
    %v51 = vshrl.u32 %v50, 7
    %v52 = vsub.s32 0, %v51
    %v53 = vrot.slane %v48, %v52
    %v71 = vunpack.c.l.b16 %v32
    %v72 = vunpack.c.l.b16 %v33
    %v73 = vunpack.c.l.b16 %v34
    %v74 = vunpack.c.l.b16 %v35
    %v75 = vunpack.c.l.b16 %v36
    %v76 = vunpack.c.l.b16 %v37
    %v77 = vunpack.c.l.b16 %v38
    %v78 = vunpack.c.l.b16 %v39
    %v79 = vunpack.c.l.b16 %v40
    %v80 = vunpack.c.l.b16 %v41
    %v81 = vunpack.c.l.b16 %v42
    %v82 = vunpack.c.l.b16 %v43
    %v83 = vunpack.c.l.b16 %v44
    %v84 = vunpack.c.l.b16 %v45
    %v85 = vunpack.c.l.b16 %v46
    %v86 = vunpack.c.l.b16 %v47
    %v87 = vpack.c.b16 %v72, %v71
    %v88 = vpack.c.b16 %v74, %v73
    %v89 = vpack.c.b16 %v76, %v75
    %v90 = vpack.c.b16 %v78, %v77
    %v91 = vpack.c.b16 %v80, %v79
    %v92 = vpack.c.b16 %v82, %v81
    %v93 = vpack.c.b16 %v84, %v83
    %v94 = vpack.c.b16 %v86, %v85
    %103 = vmatprep.subr.bf16.mxu0 0
    %104 = vmatpush1.bf16.msra.mxu0 %v94
    %105 = vmatprep.subr.bf16.mxu0 0
    %106 = vmatpush1.bf16.msra.mxu0 %v93
    %107 = vmatprep.subr.bf16.mxu0 0
    %108 = vmatpush1.bf16.msra.mxu0 %v92
    %109 = vmatprep.subr.bf16.mxu0 0
    %110 = vmatpush1.bf16.msra.mxu0 %v91
    %111 = vmatprep.subr.bf16.mxu0 0
    %112 = vmatpush1.bf16.msra.mxu0 %v90
    %113 = vmatprep.subr.bf16.mxu0 0
    %114 = vmatpush1.bf16.msra.mxu0 %v89
    %115 = vmatprep.subr.bf16.mxu0 0
    %116 = vmatpush1.bf16.msra.mxu0 %v88
    %117 = vmatprep.subr.bf16.mxu0 0
    %118 = vmatpush1.bf16.msra.mxu0 %v87
    %119 = vmatprep.subr.bf16.mxu0 0
    %120 = vmatpush2.bf16.msra.mxu0 0
    %121 = vmatprep.subr.bf16.mxu0 0
    %122 = vmatpush2.bf16.msra.mxu0 0
    %123 = vmatprep.subr.bf16.mxu0 0
    %124 = vmatpush2.bf16.msra.mxu0 0
    %125 = vmatprep.subr.bf16.mxu0 0
    %126 = vmatpush2.bf16.msra.mxu0 0
    %127 = vmatprep.subr.bf16.mxu0 0
    %128 = vmatpush2.bf16.msra.mxu0 0
    %129 = vmatprep.subr.bf16.mxu0 0
    %130 = vmatpush2.bf16.msra.mxu0 0
    %131 = vmatprep.subr.bf16.mxu0 0
    %132 = vmatpush2.bf16.msra.mxu0 0
    %133 = vmatprep.subr.bf16.mxu0 0
    %134 = vmatpush2.bf16.msra.mxu0 0
    %135 = vmatprep.mubr.bf16.mxu0 0
    %136 = vmatmul.mubr.bf16.gmra.mxu0 %v31
    %v137 = vpop.f32.mrf.mxu0
    %v138 = vadd.f32 %v53, %v137
    %v139 = vpop.f32.mrf.mxu0
    %v140 = vpop.f32.mrf.mxu0
    %v141 = vadd.f32 %v53, %v140
    %v142 = vpop.f32.mrf.mxu0
    %143 = vdwg.mxu0
    %v144 = vpack.c.bf16 %v141, %v138
    %v146 = vunpack.c.l.b16 %v144
    %v147 = vunpack.c.h.b16 %v144
    %v148 = vpack.c.b16 %v146, %v146
    %v149 = vpack.c.b16 %v147, %v147
    %152 = vst [vmem:[%s3] sm:$0xf] %v148
    %153 = vst [vmem:[%s3 + $0x4] sm:$0xf] %v149
    // Predicated region
    $region18: #{flat_transformer_mean_log_scale_forward.4} parent=1 // pred_check
      _
    $region19: #{flat_transformer_mean_log_scale_forward.4} parent=1 // pred_check_branch
      %155 = sbr.rel (0) target = $region21
    $region20: #{flat_transformer_mean_log_scale_forward.4} parent=1 // pred_region
      _
    $region21: #{flat_transformer_mean_log_scale_forward.4} parent=1 // pred_fallthru
      _
    // Predicated region
    $region22: #{flat_transformer_mean_log_scale_forward.4} parent=1 // pred_check
      _
    $region23: #{flat_transformer_mean_log_scale_forward.4} parent=1 // pred_check_branch
      %157 = sbr.rel (0) target = $region25
    $region24: #{flat_transformer_mean_log_scale_forward.4} parent=1 // pred_region
      _
    $region25: #{flat_transformer_mean_log_scale_forward.4} parent=1 // pred_fallthru
      _
    %158 = vsyncpa [#allocation3], 1

// kernel: flat_transformer_mean_log_scale_forward.5
$region0: #{flat_transformer_mean_log_scale_forward.5}
  #allocation0 [shape = 'u32[]', space=smem, size = 0x4, offset = 0x4, fixed_abs, tag = 'smem constant byte address 0x4 - core index']
  #allocation1 [shape = 'u32[144,128]{1,0:T(1,128)}', space=vmem, size = 0x12000, scoped, tag = 'internal scratch']
  %s0 = inlined_call_operand.vmem [shape: bf16[16,128], index: 0, kind: input, shape index: {}]
  %s1 = inlined_call_operand.vmem [shape: f32[2,8,8], index: 1, kind: input, shape index: {}]
  %s2 = inlined_call_operand.hbm [shape: bf16[128,384], index: 2, kind: input, shape index: {}]
  %s3 = inlined_call_operand.vmem [shape: f32[1,384], index: 3, kind: input, shape index: {}]
  %s4 = inlined_call_operand.hbm [shape: bf16[128,128], index: 4, kind: input, shape index: {}]
  %s5 = inlined_call_operand.vmem [shape: f32[1,128], index: 5, kind: input, shape index: {}]
  %s6 = inlined_call_operand.vmem [shape: f32[1,128], index: 6, kind: input, shape index: {}, may-alias: {6,12}]
  %s7 = inlined_call_operand.vmem [shape: f32[1,128], index: 7, kind: input, shape index: {}, may-alias: {7,13}]
  %s8 = inlined_call_operand.vmem [shape: bf16[128,128], index: 8, kind: input, shape index: {}]
  %s9 = inlined_call_operand.vmem [shape: f32[1,128], index: 9, kind: input, shape index: {}]
  %s10 = inlined_call_operand.vmem [shape: bf16[128,128], index: 10, kind: input, shape index: {}]
  %s11 = inlined_call_operand.vmem [shape: f32[1,128], index: 11, kind: input, shape index: {}]
  %s12 = inlined_call_operand.vmem [shape: f32[1,128], index: 12, kind: input, shape index: {}, may-alias: {6,12}]
  %s13 = inlined_call_operand.vmem [shape: f32[1,128], index: 13, kind: input, shape index: {}, may-alias: {7,13}]
  %s14 = inlined_call_operand.vmem [shape: bf16[16,128], index: 14, kind: output, shape index: {}]
  %s15 = sld [smem:[#allocation0]]
  $region74: #{flat_transformer_mean_log_scale_forward.5} parent=0
    _
  %s17 = ssub.s32 1, %s15
  %s18 = scalar_select 0, %s17, %s15
  $region1: #{flat_transformer_mean_log_scale_forward.5} parent=0
    #allocation2 [shape = 'u8[98304]{0}', space=vmem, size = 0x18000, scoped, tag = 'input window, operand 2, single buffered']
    #allocation3 [shape = 's32[1]{0}', space=sflag, size = 0x4, scoped, tag = 'scoped memory for flat_transformer_mean_log_scale_forward.5']
    #allocation4 [shape = 'u8[32768]{0}', space=vmem, size = 0x8000, scoped, tag = 'input window, operand 4, single buffered']
    #allocation5 [shape = 's32[1]{0}', space=sflag, size = 0x4, scoped, tag = 'scoped memory for flat_transformer_mean_log_scale_forward.5']
    %19 = vsyncpa [#allocation3], 0
    %20 = vsyncpa [#allocation5], 0
    // Predicated region
    $region2: #{flat_transformer_mean_log_scale_forward.5} parent=1 // pred_check
      _
    $region3: #{flat_transformer_mean_log_scale_forward.5} parent=1 // pred_check_branch
      %22 = sbr.rel (0) target = $region5
    $region4: #{flat_transformer_mean_log_scale_forward.5} parent=1 // pred_region
      _
    $region5: #{flat_transformer_mean_log_scale_forward.5} parent=1 // pred_fallthru
      _
    // Predicated region
    $region6: #{flat_transformer_mean_log_scale_forward.5} parent=1 // pred_check
      _
    $region7: #{flat_transformer_mean_log_scale_forward.5} parent=1 // pred_check_branch
      %24 = sbr.rel (0) target = $region9
    $region8: #{flat_transformer_mean_log_scale_forward.5} parent=1 // pred_region
      _
    $region9: #{flat_transformer_mean_log_scale_forward.5} parent=1 // pred_fallthru
      _
    // Predicated region
    $region10: #{flat_transformer_mean_log_scale_forward.5} parent=1 // pred_check
      _
    $region11: #{flat_transformer_mean_log_scale_forward.5} parent=1 // pred_check_branch
      %26 = sbr.rel (0) target = $region13
    $region12: #{flat_transformer_mean_log_scale_forward.5} parent=1 // pred_region
      %s28 = ssub.s32 3072, 3072
      %29 = vsyncadd [#allocation3], %s28
      %s30 = sshll.u32 [#allocation2], 4
      %s31 = int_to_ptr.vmem [resolvable:$true] %s30
      %36 = dma.hbm_to_vmem [thread:$0]  %s2, 3072, %s31, [#allocation3], 192, 192, 12
    $region13: #{flat_transformer_mean_log_scale_forward.5} parent=1 // pred_fallthru
      _
    // Predicated region
    $region14: #{flat_transformer_mean_log_scale_forward.5} parent=1 // pred_check
      _
    $region15: #{flat_transformer_mean_log_scale_forward.5} parent=1 // pred_check_branch
      %38 = sbr.rel (0) target = $region17
    $region16: #{flat_transformer_mean_log_scale_forward.5} parent=1 // pred_region
      _
    $region17: #{flat_transformer_mean_log_scale_forward.5} parent=1 // pred_fallthru
      _
    // Predicated region
    $region18: #{flat_transformer_mean_log_scale_forward.5} parent=1 // pred_check
      _
    $region19: #{flat_transformer_mean_log_scale_forward.5} parent=1 // pred_check_branch
      %40 = sbr.rel (0) target = $region21
    $region20: #{flat_transformer_mean_log_scale_forward.5} parent=1 // pred_region
      %s42 = ssub.s32 1024, 1024
      %43 = vsyncadd [#allocation5], %s42
      %s44 = sshll.u32 [#allocation4], 4
      %s45 = int_to_ptr.vmem [resolvable:$true] %s44
      %50 = dma.hbm_to_vmem [thread:$0]  %s4, 1024, %s45, [#allocation5], 64, 64, 4
    $region21: #{flat_transformer_mean_log_scale_forward.5} parent=1 // pred_fallthru
      _
    // Predicated region
    $region22: #{flat_transformer_mean_log_scale_forward.5} parent=1 // pred_check
      _
    $region23: #{flat_transformer_mean_log_scale_forward.5} parent=1 // pred_check_branch
      %52 = sbr.rel (0) target = $region25
    $region24: #{flat_transformer_mean_log_scale_forward.5} parent=1 // pred_region
      _
    $region25: #{flat_transformer_mean_log_scale_forward.5} parent=1 // pred_fallthru
      _
    // Predicated region
    $region26: #{flat_transformer_mean_log_scale_forward.5} parent=1 // pred_check
      _
    $region27: #{flat_transformer_mean_log_scale_forward.5} parent=1 // pred_check_branch
      %54 = sbr.rel (0) target = $region29
    $region28: #{flat_transformer_mean_log_scale_forward.5} parent=1 // pred_region
      _
    $region29: #{flat_transformer_mean_log_scale_forward.5} parent=1 // pred_fallthru
      _
    // Predicated region
    $region30: #{flat_transformer_mean_log_scale_forward.5} parent=1 // pred_check
      _
    $region31: #{flat_transformer_mean_log_scale_forward.5} parent=1 // pred_check_branch
      %56 = sbr.rel (0) target = $region33
    $region32: #{flat_transformer_mean_log_scale_forward.5} parent=1 // pred_region
      _
    $region33: #{flat_transformer_mean_log_scale_forward.5} parent=1 // pred_fallthru
      _
    // Predicated region
    $region34: #{flat_transformer_mean_log_scale_forward.5} parent=1 // pred_check
      _
    $region35: #{flat_transformer_mean_log_scale_forward.5} parent=1 // pred_check_branch
      %58 = sbr.rel (0) target = $region37
    $region36: #{flat_transformer_mean_log_scale_forward.5} parent=1 // pred_region
      _
    $region37: #{flat_transformer_mean_log_scale_forward.5} parent=1 // pred_fallthru
      _
    // Predicated region
    $region38: #{flat_transformer_mean_log_scale_forward.5} parent=1 // pred_check
      _
    $region39: #{flat_transformer_mean_log_scale_forward.5} parent=1 // pred_check_branch
      %60 = sbr.rel (0) target = $region41
    $region40: #{flat_transformer_mean_log_scale_forward.5} parent=1 // pred_region
      _
    $region41: #{flat_transformer_mean_log_scale_forward.5} parent=1 // pred_fallthru
      _
    // Predicated region
    $region42: #{flat_transformer_mean_log_scale_forward.5} parent=1 // pred_check
      _
    $region43: #{flat_transformer_mean_log_scale_forward.5} parent=1 // pred_check_branch
      %62 = sbr.rel (0) target = $region45
    $region44: #{flat_transformer_mean_log_scale_forward.5} parent=1 // pred_region
      _
    $region45: #{flat_transformer_mean_log_scale_forward.5} parent=1 // pred_fallthru
      _
    // Predicated region
    $region46: #{flat_transformer_mean_log_scale_forward.5} parent=1 // pred_check
      _
    $region47: #{flat_transformer_mean_log_scale_forward.5} parent=1 // pred_check_branch
      %64 = sbr.rel (0) target = $region49
    $region48: #{flat_transformer_mean_log_scale_forward.5} parent=1 // pred_region
      _
    $region49: #{flat_transformer_mean_log_scale_forward.5} parent=1 // pred_fallthru
      _
    // Predicated region
    $region50: #{flat_transformer_mean_log_scale_forward.5} parent=1 // pred_check
      _
    $region51: #{flat_transformer_mean_log_scale_forward.5} parent=1 // pred_check_branch
      %66 = sbr.rel (0) target = $region53
    $region52: #{flat_transformer_mean_log_scale_forward.5} parent=1 // pred_region
      _
    $region53: #{flat_transformer_mean_log_scale_forward.5} parent=1 // pred_fallthru
      _
    // Predicated region
    $region54: #{flat_transformer_mean_log_scale_forward.5} parent=1 // pred_check
      _
    $region55: #{flat_transformer_mean_log_scale_forward.5} parent=1 // pred_check_branch
      %68 = sbr.rel (0) target = $region57
    $region56: #{flat_transformer_mean_log_scale_forward.5} parent=1 // pred_region
      _
    $region57: #{flat_transformer_mean_log_scale_forward.5} parent=1 // pred_fallthru
      _
    // Predicated region
    $region58: #{flat_transformer_mean_log_scale_forward.5} parent=1 // pred_check
      _
    $region59: #{flat_transformer_mean_log_scale_forward.5} parent=1 // pred_check_branch
      %70 = sbr.rel (0) target = $region61
    $region60: #{flat_transformer_mean_log_scale_forward.5} parent=1 // pred_region
      %71 = dma.done [#allocation3], 3072
    $region61: #{flat_transformer_mean_log_scale_forward.5} parent=1 // pred_fallthru
      _
    // Predicated region
    $region62: #{flat_transformer_mean_log_scale_forward.5} parent=1 // pred_check
      _
    $region63: #{flat_transformer_mean_log_scale_forward.5} parent=1 // pred_check_branch
      %73 = sbr.rel (0) target = $region65
    $region64: #{flat_transformer_mean_log_scale_forward.5} parent=1 // pred_region
      %74 = dma.done [#allocation5], 1024
    $region65: #{flat_transformer_mean_log_scale_forward.5} parent=1 // pred_fallthru
      _
    %v76 = vld [vmem:[%s0] sm:$0xf]
    %v77 = vld [vmem:[%s0 + $0x4] sm:$0xf]
    %v78 = vunpack.c.l.bf16 %v76
    %v79 = vunpack.c.l.bf16 %v77
    %v80 = vlaneseq
    %v81 = vand.u32 %v80, 127
    %vm82 = vcmp.lt.s32.totalorder %v81, 32
    %v83 = vsel %vm82, 1, 0
    %v84 = vcvt.s32.f32 %v83
    %v85 = vld [vmem:[#allocation2] sm:$0xff]
    %v86 = vld [vmem:[#allocation2 + $0x8] sm:$0xf]
    %v87 = vld [vmem:[#allocation2 + $0xc] sm:$0xff]
    %v88 = vld [vmem:[#allocation2 + $0x14] sm:$0xf]
    %v89 = vld [vmem:[#allocation2 + $0x18] sm:$0xff]
    %v90 = vld [vmem:[#allocation2 + $0x20] sm:$0xf]
    %v91 = vld [vmem:[#allocation2 + $0x24] sm:$0xff]
    %v92 = vld [vmem:[#allocation2 + $0x2c] sm:$0xf]
    %v93 = vld [vmem:[#allocation2 + $0x30] sm:$0xff]
    %v94 = vld [vmem:[#allocation2 + $0x38] sm:$0xf]
    %v95 = vld [vmem:[#allocation2 + $0x3c] sm:$0xff]
    %v96 = vld [vmem:[#allocation2 + $0x44] sm:$0xf]
    %v97 = vld [vmem:[#allocation2 + $0x48] sm:$0xff]
    %v98 = vld [vmem:[#allocation2 + $0x50] sm:$0xf]
    %v99 = vld [vmem:[#allocation2 + $0x54] sm:$0xff]
    %v100 = vld [vmem:[#allocation2 + $0x5c] sm:$0xf]
    %v101 = vld [vmem:[#allocation2 + $0x60] sm:$0xff]
    %v102 = vld [vmem:[#allocation2 + $0x68] sm:$0xf]
    %v103 = vld [vmem:[#allocation2 + $0x6c] sm:$0xff]
    %v104 = vld [vmem:[#allocation2 + $0x74] sm:$0xf]
    %v105 = vld [vmem:[#allocation2 + $0x78] sm:$0xff]
    %v106 = vld [vmem:[#allocation2 + $0x80] sm:$0xf]
    %v107 = vld [vmem:[#allocation2 + $0x84] sm:$0xff]
    %v108 = vld [vmem:[#allocation2 + $0x8c] sm:$0xf]
    %v109 = vld [vmem:[#allocation2 + $0x90] sm:$0xff]
    %v110 = vld [vmem:[#allocation2 + $0x98] sm:$0xf]
    %v111 = vld [vmem:[#allocation2 + $0x9c] sm:$0xff]
    %v112 = vld [vmem:[#allocation2 + $0xa4] sm:$0xf]
    %v113 = vld [vmem:[#allocation2 + $0xa8] sm:$0xff]
    %v114 = vld [vmem:[#allocation2 + $0xb0] sm:$0xf]
    %v115 = vld [vmem:[#allocation2 + $0xb4] sm:$0xff]
    %v116 = vld [vmem:[#allocation2 + $0xbc] sm:$0xf]
    %v117 = vld [vmem:[%s3] sm:$0x7]
    %v119 = vlaneseq
    %v120 = vshrl.u32 %v119, 7
    %v121 = vsub.s32 0, %v120
    %v122 = vrot.slane %v117, %v121
    %v123 = vlaneseq
    %v124 = vshrl.u32 %v123, 7
    %v125 = vsub.s32 1, %v124
    %v126 = vrot.slane %v117, %v125
    %v127 = vlaneseq
    %v128 = vshrl.u32 %v127, 7
    %v129 = vsub.s32 2, %v128
    %v130 = vrot.slane %v117, %v129
    %v136 = vunpack.c.l.b16 %v76
    %v137 = vunpack.c.l.b16 %v77
    %v138 = vpack.c.b16 %v137, %v136
    %v172 = vunpack.c.l.b16 %v85
    %v173 = vunpack.c.h.b16 %v85
    %v174 = vunpack.c.l.b16 %v86
    %v175 = vunpack.c.l.b16 %v87
    %v176 = vunpack.c.h.b16 %v87
    %v177 = vunpack.c.l.b16 %v88
    %v178 = vunpack.c.l.b16 %v89
    %v179 = vunpack.c.h.b16 %v89
    %v180 = vunpack.c.l.b16 %v90
    %v181 = vunpack.c.l.b16 %v91
    %v182 = vunpack.c.h.b16 %v91
    %v183 = vunpack.c.l.b16 %v92
    %v184 = vunpack.c.l.b16 %v93
    %v185 = vunpack.c.h.b16 %v93
    %v186 = vunpack.c.l.b16 %v94
    %v187 = vunpack.c.l.b16 %v95
    %v188 = vunpack.c.h.b16 %v95
    %v189 = vunpack.c.l.b16 %v96
    %v190 = vunpack.c.l.b16 %v97
    %v191 = vunpack.c.h.b16 %v97
    %v192 = vunpack.c.l.b16 %v98
    %v193 = vunpack.c.l.b16 %v99
    %v194 = vunpack.c.h.b16 %v99
    %v195 = vunpack.c.l.b16 %v100
    %v196 = vunpack.c.l.b16 %v101
    %v197 = vunpack.c.h.b16 %v101
    %v198 = vunpack.c.l.b16 %v102
    %v199 = vunpack.c.l.b16 %v103
    %v200 = vunpack.c.h.b16 %v103
    %v201 = vunpack.c.l.b16 %v104
    %v202 = vunpack.c.l.b16 %v105
    %v203 = vunpack.c.h.b16 %v105
    %v204 = vunpack.c.l.b16 %v106
    %v205 = vunpack.c.l.b16 %v107
    %v206 = vunpack.c.h.b16 %v107
    %v207 = vunpack.c.l.b16 %v108
    %v208 = vunpack.c.l.b16 %v109
    %v209 = vunpack.c.h.b16 %v109
    %v210 = vunpack.c.l.b16 %v110
    %v211 = vunpack.c.l.b16 %v111
    %v212 = vunpack.c.h.b16 %v111
    %v213 = vunpack.c.l.b16 %v112
    %v214 = vunpack.c.l.b16 %v113
    %v215 = vunpack.c.h.b16 %v113
    %v216 = vunpack.c.l.b16 %v114
    %v217 = vunpack.c.l.b16 %v115
    %v218 = vunpack.c.h.b16 %v115
    %v219 = vunpack.c.l.b16 %v116
    %v220 = vpack.c.b16 %v175, %v172
    %v221 = vpack.c.b16 %v176, %v173
    %v222 = vpack.c.b16 %v177, %v174
    %v223 = vpack.c.b16 %v181, %v178
    %v224 = vpack.c.b16 %v182, %v179
    %v225 = vpack.c.b16 %v183, %v180
    %v226 = vpack.c.b16 %v187, %v184
    %v227 = vpack.c.b16 %v188, %v185
    %v228 = vpack.c.b16 %v189, %v186
    %v229 = vpack.c.b16 %v193, %v190
    %v230 = vpack.c.b16 %v194, %v191
    %v231 = vpack.c.b16 %v195, %v192
    %v232 = vpack.c.b16 %v199, %v196
    %v233 = vpack.c.b16 %v200, %v197
    %v234 = vpack.c.b16 %v201, %v198
    %v235 = vpack.c.b16 %v205, %v202
    %v236 = vpack.c.b16 %v206, %v203
    %v237 = vpack.c.b16 %v207, %v204
    %v238 = vpack.c.b16 %v211, %v208
    %v239 = vpack.c.b16 %v212, %v209
    %v240 = vpack.c.b16 %v213, %v210
    %v241 = vpack.c.b16 %v217, %v214
    %v242 = vpack.c.b16 %v218, %v215
    %v243 = vpack.c.b16 %v219, %v216
    %268 = vmatprep.subr.bf16.mxu0 %v242
    %269 = vmatpush1.bf16.msra.mxu0 %v241
    %270 = vmatprep.subr.bf16.mxu0 %v239
    %271 = vmatpush1.bf16.msra.mxu0 %v238
    %272 = vmatprep.subr.bf16.mxu0 %v236
    %273 = vmatpush1.bf16.msra.mxu0 %v235
    %274 = vmatprep.subr.bf16.mxu0 %v233
    %275 = vmatpush1.bf16.msra.mxu0 %v232
    %276 = vmatprep.subr.bf16.mxu0 %v230
    %277 = vmatpush1.bf16.msra.mxu0 %v229
    %278 = vmatprep.subr.bf16.mxu0 %v227
    %279 = vmatpush1.bf16.msra.mxu0 %v226
    %280 = vmatprep.subr.bf16.mxu0 %v224
    %281 = vmatpush1.bf16.msra.mxu0 %v223
    %282 = vmatprep.subr.bf16.mxu0 %v221
    %283 = vmatpush1.bf16.msra.mxu0 %v220
    %284 = vmatprep.subr.bf16.mxu0 0
    %285 = vmatpush2.bf16.msra.mxu0 0
    %286 = vmatprep.subr.bf16.mxu0 0
    %287 = vmatpush2.bf16.msra.mxu0 0
    %288 = vmatprep.subr.bf16.mxu0 0
    %289 = vmatpush2.bf16.msra.mxu0 0
    %290 = vmatprep.subr.bf16.mxu0 0
    %291 = vmatpush2.bf16.msra.mxu0 0
    %292 = vmatprep.subr.bf16.mxu0 0
    %293 = vmatpush2.bf16.msra.mxu0 0
    %294 = vmatprep.subr.bf16.mxu0 0
    %295 = vmatpush2.bf16.msra.mxu0 0
    %296 = vmatprep.subr.bf16.mxu0 0
    %297 = vmatpush2.bf16.msra.mxu0 0
    %298 = vmatprep.subr.bf16.mxu0 0
    %299 = vmatpush2.bf16.msra.mxu0 0
    %300 = vmatprep.mubr.bf16.mxu0 0
    %301 = vmatmul.mubr.bf16.gmra.mxu0 %v138
    %v302 = vpop.f32.mrf.mxu0
    %v303 = vadd.f32 %v122, %v302
    %v304 = vpop.f32.mrf.mxu0
    %v305 = vadd.f32 %v126, %v304
    %v306 = vpop.f32.mrf.mxu0
    %v307 = vadd.f32 %v122, %v306
    %v308 = vpop.f32.mrf.mxu0
    %v309 = vadd.f32 %v126, %v308
    %310 = vdwg.mxu0
    %311 = vmatprep.subr.bf16.mxu0 0
    %312 = vmatpush1.bf16.msra.mxu0 %v243
    %313 = vmatprep.subr.bf16.mxu0 0
    %314 = vmatpush1.bf16.msra.mxu0 %v240
    %315 = vmatprep.subr.bf16.mxu0 0
    %316 = vmatpush1.bf16.msra.mxu0 %v237
    %317 = vmatprep.subr.bf16.mxu0 0
    %318 = vmatpush1.bf16.msra.mxu0 %v234
    %319 = vmatprep.subr.bf16.mxu0 0
    %320 = vmatpush1.bf16.msra.mxu0 %v231
    %321 = vmatprep.subr.bf16.mxu0 0
    %322 = vmatpush1.bf16.msra.mxu0 %v228
    %323 = vmatprep.subr.bf16.mxu0 0
    %324 = vmatpush1.bf16.msra.mxu0 %v225
    %325 = vmatprep.subr.bf16.mxu0 0
    %326 = vmatpush1.bf16.msra.mxu0 %v222
    %327 = vmatprep.subr.bf16.mxu0 0
    %328 = vmatpush2.bf16.msra.mxu0 0
    %329 = vmatprep.subr.bf16.mxu0 0
    %330 = vmatpush2.bf16.msra.mxu0 0
    %331 = vmatprep.subr.bf16.mxu0 0
    %332 = vmatpush2.bf16.msra.mxu0 0
    %333 = vmatprep.subr.bf16.mxu0 0
    %334 = vmatpush2.bf16.msra.mxu0 0
    %335 = vmatprep.subr.bf16.mxu0 0
    %336 = vmatpush2.bf16.msra.mxu0 0
    %337 = vmatprep.subr.bf16.mxu0 0
    %338 = vmatpush2.bf16.msra.mxu0 0
    %339 = vmatprep.subr.bf16.mxu0 0
    %340 = vmatpush2.bf16.msra.mxu0 0
    %341 = vmatprep.subr.bf16.mxu0 0
    %342 = vmatpush2.bf16.msra.mxu0 0
    %343 = vmatprep.mubr.bf16.mxu0 0
    %344 = vmatmul.mubr.bf16.gmra.mxu0 %v138
    %v345 = vpop.f32.mrf.mxu0
    %v346 = vadd.f32 %v130, %v345
    %v347 = vpop.f32.mrf.mxu0
    %v348 = vpop.f32.mrf.mxu0
    %v349 = vadd.f32 %v130, %v348
    %v350 = vpop.f32.mrf.mxu0
    %351 = vdwg.mxu0
    %v352 = vld [vmem:[%s1] sm:$0xff]
    %v353 = vld [vmem:[%s1 + $0x8] sm:$0xff]
    %v354 = vpack.c.bf16 %v303, %v303
    %v355 = vpack.c.bf16 %v305, %v305
    %v356 = vpack.c.bf16 %v346, %v346
    %vm357 = vcmask 261120
    %v359 = vsel %vm357, %v354, 0
    %v362 = vsel %vm357, %v355, 0
    %364 = vmatprep.subr.bf16.mxu0 0
    %365 = vmatpush1.bf16.xpose.msra.mxu0 0
    %366 = vmatprep.subr.bf16.mxu0 0
    %367 = vmatpush1.bf16.xpose.msra.mxu0 0
    %368 = vmatprep.subr.bf16.mxu0 0
    %369 = vmatpush1.bf16.xpose.msra.mxu0 0
    %370 = vmatprep.subr.bf16.mxu0 0
    %371 = vmatpush1.bf16.xpose.msra.mxu0 0
    %372 = vmatprep.subr.bf16.mxu0 0
    %373 = vmatpush1.bf16.xpose.msra.mxu0 0
    %374 = vmatprep.subr.bf16.mxu0 0
    %375 = vmatpush1.bf16.xpose.msra.mxu0 0
    %376 = vmatprep.subr.bf16.mxu0 0
    %377 = vmatpush1.bf16.xpose.msra.mxu0 0
    %378 = vmatprep.subr.bf16.mxu0 0
    %379 = vmatpush1.bf16.xpose.msra.mxu0 %v362
    %380 = vmatprep.subr.bf16.mxu0 0
    %381 = vmatpush2.bf16.xpose.msra.mxu0 0
    %382 = vmatprep.subr.bf16.mxu0 0
    %383 = vmatpush2.bf16.xpose.msra.mxu0 0
    %384 = vmatprep.subr.bf16.mxu0 0
    %385 = vmatpush2.bf16.xpose.msra.mxu0 0
    %386 = vmatprep.subr.bf16.mxu0 0
    %387 = vmatpush2.bf16.xpose.msra.mxu0 0
    %388 = vmatprep.subr.bf16.mxu0 0
    %389 = vmatpush2.bf16.xpose.msra.mxu0 0
    %390 = vmatprep.subr.bf16.mxu0 0
    %391 = vmatpush2.bf16.xpose.msra.mxu0 0
    %392 = vmatprep.subr.bf16.mxu0 0
    %393 = vmatpush2.bf16.xpose.msra.mxu0 0
    %394 = vmatprep.subr.bf16.mxu0 0
    %395 = vmatpush2.bf16.xpose.msra.mxu0 0
    %396 = vmatprep.mubr.bf16.mxu0 0
    %397 = vmatmul.mubr.bf16.gmra.mxu0 %v359
    %v398 = vpop.f32.mrf.mxu0
    %v399 = vadd.f32 0.0, %v398
    %v400 = vpop.f32.mrf.mxu0
    %v401 = vpop.f32.mrf.mxu0
    %v402 = vpop.f32.mrf.mxu0
    %403 = vdwg.mxu0
    %v404 = vmul.f32 %v399, 0.35355338
    %v405 = vlaneseq
    %v406 = vshrl.u32 %v405, 7
    %v407 = vsub.s32 0, %v406
    %v408 = vrot.slane %v352, %v407
    %v409 = vadd.f32 %v404, %v408
    %vm410 = vcmask 64512
    %v411 = vsel %vm410, %v409, -inf
    %412 = vmax.xlane.f32.xlu0 %v411
    %v413 = vpop.xlane.xlu0 %412
    %v414 = vsub.f32 %v409, %v413
    %v415 = vmul.f32 %v414, 1.442695
    %v416 = vpow.pop %v415
    %v417 = vsel %vm410, %v416, 0.0
    %418 = vadd.xlane.f32.xlu0 %v417
    %v419 = vpop.xlane.xlu0 %418
    %v420 = vrcp.pop %v419
    %v421 = vmul.f32 %v416, %v420
    %v422 = vpack.c.bf16 %v421, %v421
    %v424 = vsel %vm410, %v422, 0
    %vm426 = vcmask 1043456
    %v428 = vsel %vm426, %v356, 0
    %430 = vmatprep.subr.bf16.mxu0 0
    %431 = vmatpush1.bf16.msra.mxu0 0
    %432 = vmatprep.subr.bf16.mxu0 0
    %433 = vmatpush1.bf16.msra.mxu0 0
    %434 = vmatprep.subr.bf16.mxu0 0
    %435 = vmatpush1.bf16.msra.mxu0 0
    %436 = vmatprep.subr.bf16.mxu0 0
    %437 = vmatpush1.bf16.msra.mxu0 0
    %438 = vmatprep.subr.bf16.mxu0 0
    %439 = vmatpush1.bf16.msra.mxu0 0
    %440 = vmatprep.subr.bf16.mxu0 0
    %441 = vmatpush1.bf16.msra.mxu0 0
    %442 = vmatprep.subr.bf16.mxu0 0
    %443 = vmatpush1.bf16.msra.mxu0 0
    %444 = vmatprep.subr.bf16.mxu0 0
    %445 = vmatpush1.bf16.msra.mxu0 %v428
    %446 = vmatprep.subr.bf16.mxu0 0
    %447 = vmatpush2.bf16.msra.mxu0 0
    %448 = vmatprep.subr.bf16.mxu0 0
    %449 = vmatpush2.bf16.msra.mxu0 0
    %450 = vmatprep.subr.bf16.mxu0 0
    %451 = vmatpush2.bf16.msra.mxu0 0
    %452 = vmatprep.subr.bf16.mxu0 0
    %453 = vmatpush2.bf16.msra.mxu0 0
    %454 = vmatprep.subr.bf16.mxu0 0
    %455 = vmatpush2.bf16.msra.mxu0 0
    %456 = vmatprep.subr.bf16.mxu0 0
    %457 = vmatpush2.bf16.msra.mxu0 0
    %458 = vmatprep.subr.bf16.mxu0 0
    %459 = vmatpush2.bf16.msra.mxu0 0
    %460 = vmatprep.subr.bf16.mxu0 0
    %461 = vmatpush2.bf16.msra.mxu0 0
    %462 = vmatprep.mubr.bf16.mxu0 0
    %463 = vmatmul.mubr.bf16.gmra.mxu0 %v424
    %v464 = vpop.f32.mrf.mxu0
    %v465 = vadd.f32 0.0, %v464
    %v466 = vpop.f32.mrf.mxu0
    %v467 = vpop.f32.mrf.mxu0
    %v468 = vpop.f32.mrf.mxu0
    %469 = vdwg.mxu0
    %471 = vrot.lane.b32.xlu0 %v354, 96
    %v472 = vpop.permute.xlu0 %471
    %474 = vrot.lane.b32.xlu0 %v355, 96
    %v475 = vpop.permute.xlu0 %474
    %v477 = vsel %vm357, %v472, 0
    %v480 = vsel %vm357, %v475, 0
    %482 = vmatprep.subr.bf16.mxu0 0
    %483 = vmatpush1.bf16.xpose.msra.mxu0 0
    %484 = vmatprep.subr.bf16.mxu0 0
    %485 = vmatpush1.bf16.xpose.msra.mxu0 0
    %486 = vmatprep.subr.bf16.mxu0 0
    %487 = vmatpush1.bf16.xpose.msra.mxu0 0
    %488 = vmatprep.subr.bf16.mxu0 0
    %489 = vmatpush1.bf16.xpose.msra.mxu0 0
    %490 = vmatprep.subr.bf16.mxu0 0
    %491 = vmatpush1.bf16.xpose.msra.mxu0 0
    %492 = vmatprep.subr.bf16.mxu0 0
    %493 = vmatpush1.bf16.xpose.msra.mxu0 0
    %494 = vmatprep.subr.bf16.mxu0 0
    %495 = vmatpush1.bf16.xpose.msra.mxu0 0
    %496 = vmatprep.subr.bf16.mxu0 0
    %497 = vmatpush1.bf16.xpose.msra.mxu0 %v480
    %498 = vmatprep.subr.bf16.mxu0 0
    %499 = vmatpush2.bf16.xpose.msra.mxu0 0
    %500 = vmatprep.subr.bf16.mxu0 0
    %501 = vmatpush2.bf16.xpose.msra.mxu0 0
    %502 = vmatprep.subr.bf16.mxu0 0
    %503 = vmatpush2.bf16.xpose.msra.mxu0 0
    %504 = vmatprep.subr.bf16.mxu0 0
    %505 = vmatpush2.bf16.xpose.msra.mxu0 0
    %506 = vmatprep.subr.bf16.mxu0 0
    %507 = vmatpush2.bf16.xpose.msra.mxu0 0
    %508 = vmatprep.subr.bf16.mxu0 0
    %509 = vmatpush2.bf16.xpose.msra.mxu0 0
    %510 = vmatprep.subr.bf16.mxu0 0
    %511 = vmatpush2.bf16.xpose.msra.mxu0 0
    %512 = vmatprep.subr.bf16.mxu0 0
    %513 = vmatpush2.bf16.xpose.msra.mxu0 0
    %514 = vmatprep.mubr.bf16.mxu0 0
    %515 = vmatmul.mubr.bf16.gmra.mxu0 %v477
    %v516 = vpop.f32.mrf.mxu0
    %v517 = vadd.f32 0.0, %v516
    %v518 = vpop.f32.mrf.mxu0
    %v519 = vpop.f32.mrf.mxu0
    %v520 = vpop.f32.mrf.mxu0
    %521 = vdwg.mxu0
    %v522 = vmul.f32 %v517, 0.35355338
    %v523 = vadd.f32 %v522, %v408
    %v524 = vsel %vm410, %v523, -inf
    %525 = vmax.xlane.f32.xlu0 %v524
    %v526 = vpop.xlane.xlu0 %525
    %v527 = vsub.f32 %v523, %v526
    %v528 = vmul.f32 %v527, 1.442695
    %v529 = vpow.pop %v528
    %v530 = vsel %vm410, %v529, 0.0
    %531 = vadd.xlane.f32.xlu0 %v530
    %v532 = vpop.xlane.xlu0 %531
    %v533 = vrcp.pop %v532
    %v534 = vmul.f32 %v529, %v533
    %v535 = vpack.c.bf16 %v534, %v534
    %537 = vrot.lane.b32.xlu0 %v356, 96
    %v538 = vpop.permute.xlu0 %537
    %v540 = vsel %vm410, %v535, 0
    %v543 = vsel %vm426, %v538, 0
    %545 = vmatprep.subr.bf16.mxu0 0
    %546 = vmatpush1.bf16.msra.mxu0 0
    %547 = vmatprep.subr.bf16.mxu0 0
    %548 = vmatpush1.bf16.msra.mxu0 0
    %549 = vmatprep.subr.bf16.mxu0 0
    %550 = vmatpush1.bf16.msra.mxu0 0
    %551 = vmatprep.subr.bf16.mxu0 0
    %552 = vmatpush1.bf16.msra.mxu0 0
    %553 = vmatprep.subr.bf16.mxu0 0
    %554 = vmatpush1.bf16.msra.mxu0 0
    %555 = vmatprep.subr.bf16.mxu0 0
    %556 = vmatpush1.bf16.msra.mxu0 0
    %557 = vmatprep.subr.bf16.mxu0 0
    %558 = vmatpush1.bf16.msra.mxu0 0
    %559 = vmatprep.subr.bf16.mxu0 0
    %560 = vmatpush1.bf16.msra.mxu0 %v543
    %561 = vmatprep.subr.bf16.mxu0 0
    %562 = vmatpush2.bf16.msra.mxu0 0
    %563 = vmatprep.subr.bf16.mxu0 0
    %564 = vmatpush2.bf16.msra.mxu0 0
    %565 = vmatprep.subr.bf16.mxu0 0
    %566 = vmatpush2.bf16.msra.mxu0 0
    %567 = vmatprep.subr.bf16.mxu0 0
    %568 = vmatpush2.bf16.msra.mxu0 0
    %569 = vmatprep.subr.bf16.mxu0 0
    %570 = vmatpush2.bf16.msra.mxu0 0
    %571 = vmatprep.subr.bf16.mxu0 0
    %572 = vmatpush2.bf16.msra.mxu0 0
    %573 = vmatprep.subr.bf16.mxu0 0
    %574 = vmatpush2.bf16.msra.mxu0 0
    %575 = vmatprep.subr.bf16.mxu0 0
    %576 = vmatpush2.bf16.msra.mxu0 0
    %577 = vmatprep.mubr.bf16.mxu0 0
    %578 = vmatmul.mubr.bf16.gmra.mxu0 %v540
    %v579 = vpop.f32.mrf.mxu0
    %v580 = vadd.f32 0.0, %v579
    %v581 = vpop.f32.mrf.mxu0
    %v582 = vpop.f32.mrf.mxu0
    %v583 = vpop.f32.mrf.mxu0
    %584 = vdwg.mxu0
    %585 = vrot.lane.b32.xlu0 %v354, 64
    %v586 = vpop.permute.xlu0 %585
    %587 = vrot.lane.b32.xlu0 %v355, 64
    %v588 = vpop.permute.xlu0 %587
    %v590 = vsel %vm357, %v586, 0
    %v593 = vsel %vm357, %v588, 0
    %595 = vmatprep.subr.bf16.mxu0 0
    %596 = vmatpush1.bf16.xpose.msra.mxu0 0
    %597 = vmatprep.subr.bf16.mxu0 0
    %598 = vmatpush1.bf16.xpose.msra.mxu0 0
    %599 = vmatprep.subr.bf16.mxu0 0
    %600 = vmatpush1.bf16.xpose.msra.mxu0 0
    %601 = vmatprep.subr.bf16.mxu0 0
    %602 = vmatpush1.bf16.xpose.msra.mxu0 0
    %603 = vmatprep.subr.bf16.mxu0 0
    %604 = vmatpush1.bf16.xpose.msra.mxu0 0
    %605 = vmatprep.subr.bf16.mxu0 0
    %606 = vmatpush1.bf16.xpose.msra.mxu0 0
    %607 = vmatprep.subr.bf16.mxu0 0
    %608 = vmatpush1.bf16.xpose.msra.mxu0 0
    %609 = vmatprep.subr.bf16.mxu0 0
    %610 = vmatpush1.bf16.xpose.msra.mxu0 %v593
    %611 = vmatprep.subr.bf16.mxu0 0
    %612 = vmatpush2.bf16.xpose.msra.mxu0 0
    %613 = vmatprep.subr.bf16.mxu0 0
    %614 = vmatpush2.bf16.xpose.msra.mxu0 0
    %615 = vmatprep.subr.bf16.mxu0 0
    %616 = vmatpush2.bf16.xpose.msra.mxu0 0
    %617 = vmatprep.subr.bf16.mxu0 0
    %618 = vmatpush2.bf16.xpose.msra.mxu0 0
    %619 = vmatprep.subr.bf16.mxu0 0
    %620 = vmatpush2.bf16.xpose.msra.mxu0 0
    %621 = vmatprep.subr.bf16.mxu0 0
    %622 = vmatpush2.bf16.xpose.msra.mxu0 0
    %623 = vmatprep.subr.bf16.mxu0 0
    %624 = vmatpush2.bf16.xpose.msra.mxu0 0
    %625 = vmatprep.subr.bf16.mxu0 0
    %626 = vmatpush2.bf16.xpose.msra.mxu0 0
    %627 = vmatprep.mubr.bf16.mxu0 0
    %628 = vmatmul.mubr.bf16.gmra.mxu0 %v590
    %v629 = vpop.f32.mrf.mxu0
    %v630 = vadd.f32 0.0, %v629
    %v631 = vpop.f32.mrf.mxu0
    %v632 = vpop.f32.mrf.mxu0
    %v633 = vpop.f32.mrf.mxu0
    %634 = vdwg.mxu0
    %v635 = vmul.f32 %v630, 0.35355338
    %v636 = vadd.f32 %v635, %v408
    %v637 = vsel %vm410, %v636, -inf
    %638 = vmax.xlane.f32.xlu0 %v637
    %v639 = vpop.xlane.xlu0 %638
    %v640 = vsub.f32 %v636, %v639
    %v641 = vmul.f32 %v640, 1.442695
    %v642 = vpow.pop %v641
    %v643 = vsel %vm410, %v642, 0.0
    %644 = vadd.xlane.f32.xlu0 %v643
    %v645 = vpop.xlane.xlu0 %644
    %v646 = vrcp.pop %v645
    %v647 = vmul.f32 %v642, %v646
    %v648 = vpack.c.bf16 %v647, %v647
    %649 = vrot.lane.b32.xlu0 %v356, 64
    %v650 = vpop.permute.xlu0 %649
    %v652 = vsel %vm410, %v648, 0
    %v655 = vsel %vm426, %v650, 0
    %657 = vmatprep.subr.bf16.mxu0 0
    %658 = vmatpush1.bf16.msra.mxu0 0
    %659 = vmatprep.subr.bf16.mxu0 0
    %660 = vmatpush1.bf16.msra.mxu0 0
    %661 = vmatprep.subr.bf16.mxu0 0
    %662 = vmatpush1.bf16.msra.mxu0 0
    %663 = vmatprep.subr.bf16.mxu0 0
    %664 = vmatpush1.bf16.msra.mxu0 0
    %665 = vmatprep.subr.bf16.mxu0 0
    %666 = vmatpush1.bf16.msra.mxu0 0
    %667 = vmatprep.subr.bf16.mxu0 0
    %668 = vmatpush1.bf16.msra.mxu0 0
    %669 = vmatprep.subr.bf16.mxu0 0
    %670 = vmatpush1.bf16.msra.mxu0 0
    %671 = vmatprep.subr.bf16.mxu0 0
    %672 = vmatpush1.bf16.msra.mxu0 %v655
    %673 = vmatprep.subr.bf16.mxu0 0
    %674 = vmatpush2.bf16.msra.mxu0 0
    %675 = vmatprep.subr.bf16.mxu0 0
    %676 = vmatpush2.bf16.msra.mxu0 0
    %677 = vmatprep.subr.bf16.mxu0 0
    %678 = vmatpush2.bf16.msra.mxu0 0
    %679 = vmatprep.subr.bf16.mxu0 0
    %680 = vmatpush2.bf16.msra.mxu0 0
    %681 = vmatprep.subr.bf16.mxu0 0
    %682 = vmatpush2.bf16.msra.mxu0 0
    %683 = vmatprep.subr.bf16.mxu0 0
    %684 = vmatpush2.bf16.msra.mxu0 0
    %685 = vmatprep.subr.bf16.mxu0 0
    %686 = vmatpush2.bf16.msra.mxu0 0
    %687 = vmatprep.subr.bf16.mxu0 0
    %688 = vmatpush2.bf16.msra.mxu0 0
    %689 = vmatprep.mubr.bf16.mxu0 0
    %690 = vmatmul.mubr.bf16.gmra.mxu0 %v652
    %v691 = vpop.f32.mrf.mxu0
    %v692 = vadd.f32 0.0, %v691
    %v693 = vpop.f32.mrf.mxu0
    %v694 = vpop.f32.mrf.mxu0
    %v695 = vpop.f32.mrf.mxu0
    %696 = vdwg.mxu0
    %697 = vrot.lane.b32.xlu0 %v354, 32
    %v698 = vpop.permute.xlu0 %697
    %699 = vrot.lane.b32.xlu0 %v355, 32
    %v700 = vpop.permute.xlu0 %699
    %v702 = vsel %vm357, %v698, 0
    %v705 = vsel %vm357, %v700, 0
    %707 = vmatprep.subr.bf16.mxu0 0
    %708 = vmatpush1.bf16.xpose.msra.mxu0 0
    %709 = vmatprep.subr.bf16.mxu0 0
    %710 = vmatpush1.bf16.xpose.msra.mxu0 0
    %711 = vmatprep.subr.bf16.mxu0 0
    %712 = vmatpush1.bf16.xpose.msra.mxu0 0
    %713 = vmatprep.subr.bf16.mxu0 0
    %714 = vmatpush1.bf16.xpose.msra.mxu0 0
    %715 = vmatprep.subr.bf16.mxu0 0
    %716 = vmatpush1.bf16.xpose.msra.mxu0 0
    %717 = vmatprep.subr.bf16.mxu0 0
    %718 = vmatpush1.bf16.xpose.msra.mxu0 0
    %719 = vmatprep.subr.bf16.mxu0 0
    %720 = vmatpush1.bf16.xpose.msra.mxu0 0
    %721 = vmatprep.subr.bf16.mxu0 0
    %722 = vmatpush1.bf16.xpose.msra.mxu0 %v705
    %723 = vmatprep.subr.bf16.mxu0 0
    %724 = vmatpush2.bf16.xpose.msra.mxu0 0
    %725 = vmatprep.subr.bf16.mxu0 0
    %726 = vmatpush2.bf16.xpose.msra.mxu0 0
    %727 = vmatprep.subr.bf16.mxu0 0
    %728 = vmatpush2.bf16.xpose.msra.mxu0 0
    %729 = vmatprep.subr.bf16.mxu0 0
    %730 = vmatpush2.bf16.xpose.msra.mxu0 0
    %731 = vmatprep.subr.bf16.mxu0 0
    %732 = vmatpush2.bf16.xpose.msra.mxu0 0
    %733 = vmatprep.subr.bf16.mxu0 0
    %734 = vmatpush2.bf16.xpose.msra.mxu0 0
    %735 = vmatprep.subr.bf16.mxu0 0
    %736 = vmatpush2.bf16.xpose.msra.mxu0 0
    %737 = vmatprep.subr.bf16.mxu0 0
    %738 = vmatpush2.bf16.xpose.msra.mxu0 0
    %739 = vmatprep.mubr.bf16.mxu0 0
    %740 = vmatmul.mubr.bf16.gmra.mxu0 %v702
    %v741 = vpop.f32.mrf.mxu0
    %v742 = vadd.f32 0.0, %v741
    %v743 = vpop.f32.mrf.mxu0
    %v744 = vpop.f32.mrf.mxu0
    %v745 = vpop.f32.mrf.mxu0
    %746 = vdwg.mxu0
    %v747 = vmul.f32 %v742, 0.35355338
    %v748 = vadd.f32 %v747, %v408
    %v749 = vsel %vm410, %v748, -inf
    %750 = vmax.xlane.f32.xlu0 %v749
    %v751 = vpop.xlane.xlu0 %750
    %v752 = vsub.f32 %v748, %v751
    %v753 = vmul.f32 %v752, 1.442695
    %v754 = vpow.pop %v753
    %v755 = vsel %vm410, %v754, 0.0
    %756 = vadd.xlane.f32.xlu0 %v755
    %v757 = vpop.xlane.xlu0 %756
    %v758 = vrcp.pop %v757
    %v759 = vmul.f32 %v754, %v758
    %v760 = vpack.c.bf16 %v759, %v759
    %761 = vrot.lane.b32.xlu0 %v356, 32
    %v762 = vpop.permute.xlu0 %761
    %v764 = vsel %vm410, %v760, 0
    %v767 = vsel %vm426, %v762, 0
    %769 = vmatprep.subr.bf16.mxu0 0
    %770 = vmatpush1.bf16.msra.mxu0 0
    %771 = vmatprep.subr.bf16.mxu0 0
    %772 = vmatpush1.bf16.msra.mxu0 0
    %773 = vmatprep.subr.bf16.mxu0 0
    %774 = vmatpush1.bf16.msra.mxu0 0
    %775 = vmatprep.subr.bf16.mxu0 0
    %776 = vmatpush1.bf16.msra.mxu0 0
    %777 = vmatprep.subr.bf16.mxu0 0
    %778 = vmatpush1.bf16.msra.mxu0 0
    %779 = vmatprep.subr.bf16.mxu0 0
    %780 = vmatpush1.bf16.msra.mxu0 0
    %781 = vmatprep.subr.bf16.mxu0 0
    %782 = vmatpush1.bf16.msra.mxu0 0
    %783 = vmatprep.subr.bf16.mxu0 0
    %784 = vmatpush1.bf16.msra.mxu0 %v767
    %785 = vmatprep.subr.bf16.mxu0 0
    %786 = vmatpush2.bf16.msra.mxu0 0
    %787 = vmatprep.subr.bf16.mxu0 0
    %788 = vmatpush2.bf16.msra.mxu0 0
    %789 = vmatprep.subr.bf16.mxu0 0
    %790 = vmatpush2.bf16.msra.mxu0 0
    %791 = vmatprep.subr.bf16.mxu0 0
    %792 = vmatpush2.bf16.msra.mxu0 0
    %793 = vmatprep.subr.bf16.mxu0 0
    %794 = vmatpush2.bf16.msra.mxu0 0
    %795 = vmatprep.subr.bf16.mxu0 0
    %796 = vmatpush2.bf16.msra.mxu0 0
    %797 = vmatprep.subr.bf16.mxu0 0
    %798 = vmatpush2.bf16.msra.mxu0 0
    %799 = vmatprep.subr.bf16.mxu0 0
    %800 = vmatpush2.bf16.msra.mxu0 0
    %801 = vmatprep.mubr.bf16.mxu0 0
    %802 = vmatmul.mubr.bf16.gmra.mxu0 %v764
    %v803 = vpop.f32.mrf.mxu0
    %v804 = vadd.f32 0.0, %v803
    %v805 = vpop.f32.mrf.mxu0
    %v806 = vpop.f32.mrf.mxu0
    %v807 = vpop.f32.mrf.mxu0
    %808 = vdwg.mxu0
    %810 = vrot.lane.b32.xlu0 %v580, 32
    %v811 = vpop.permute.xlu0 %810
    %814 = vrot.lane.b32.xlu0 %v692, 64
    %v815 = vpop.permute.xlu0 %814
    %818 = vrot.lane.b32.xlu0 %v804, 96
    %v819 = vpop.permute.xlu0 %818
    %v821 = vsel %vm357, %v465, %v811
    %vm822 = vcmask 523264
    %v823 = vsel %vm822, %v821, %v815
    %vm824 = vcmask 785408
    %v825 = vsel %vm824, %v823, %v819
    %v826 = vpack.c.bf16 %v307, %v307
    %v827 = vpack.c.bf16 %v309, %v309
    %v828 = vpack.c.bf16 %v349, %v349
    %v830 = vsel %vm357, %v826, 0
    %v833 = vsel %vm357, %v827, 0
    %835 = vmatprep.subr.bf16.mxu0 0
    %836 = vmatpush1.bf16.xpose.msra.mxu0 0
    %837 = vmatprep.subr.bf16.mxu0 0
    %838 = vmatpush1.bf16.xpose.msra.mxu0 0
    %839 = vmatprep.subr.bf16.mxu0 0
    %840 = vmatpush1.bf16.xpose.msra.mxu0 0
    %841 = vmatprep.subr.bf16.mxu0 0
    %842 = vmatpush1.bf16.xpose.msra.mxu0 0
    %843 = vmatprep.subr.bf16.mxu0 0
    %844 = vmatpush1.bf16.xpose.msra.mxu0 0
    %845 = vmatprep.subr.bf16.mxu0 0
    %846 = vmatpush1.bf16.xpose.msra.mxu0 0
    %847 = vmatprep.subr.bf16.mxu0 0
    %848 = vmatpush1.bf16.xpose.msra.mxu0 0
    %849 = vmatprep.subr.bf16.mxu0 0
    %850 = vmatpush1.bf16.xpose.msra.mxu0 %v833
    %851 = vmatprep.subr.bf16.mxu0 0
    %852 = vmatpush2.bf16.xpose.msra.mxu0 0
    %853 = vmatprep.subr.bf16.mxu0 0
    %854 = vmatpush2.bf16.xpose.msra.mxu0 0
    %855 = vmatprep.subr.bf16.mxu0 0
    %856 = vmatpush2.bf16.xpose.msra.mxu0 0
    %857 = vmatprep.subr.bf16.mxu0 0
    %858 = vmatpush2.bf16.xpose.msra.mxu0 0
    %859 = vmatprep.subr.bf16.mxu0 0
    %860 = vmatpush2.bf16.xpose.msra.mxu0 0
    %861 = vmatprep.subr.bf16.mxu0 0
    %862 = vmatpush2.bf16.xpose.msra.mxu0 0
    %863 = vmatprep.subr.bf16.mxu0 0
    %864 = vmatpush2.bf16.xpose.msra.mxu0 0
    %865 = vmatprep.subr.bf16.mxu0 0
    %866 = vmatpush2.bf16.xpose.msra.mxu0 0
    %867 = vmatprep.mubr.bf16.mxu0 0
    %868 = vmatmul.mubr.bf16.gmra.mxu0 %v830
    %v869 = vpop.f32.mrf.mxu0
    %v870 = vadd.f32 0.0, %v869
    %v871 = vpop.f32.mrf.mxu0
    %v872 = vpop.f32.mrf.mxu0
    %v873 = vpop.f32.mrf.mxu0
    %874 = vdwg.mxu0
    %v875 = vmul.f32 %v870, 0.35355338
    %v876 = vlaneseq
    %v877 = vshrl.u32 %v876, 7
    %v878 = vsub.s32 0, %v877
    %v879 = vrot.slane %v353, %v878
    %v880 = vadd.f32 %v875, %v879
    %v881 = vsel %vm410, %v880, -inf
    %882 = vmax.xlane.f32.xlu0 %v881
    %v883 = vpop.xlane.xlu0 %882
    %v884 = vsub.f32 %v880, %v883
    %v885 = vmul.f32 %v884, 1.442695
    %v886 = vpow.pop %v885
    %v887 = vsel %vm410, %v886, 0.0
    %888 = vadd.xlane.f32.xlu0 %v887
    %v889 = vpop.xlane.xlu0 %888
    %v890 = vrcp.pop %v889
    %v891 = vmul.f32 %v886, %v890
    %v892 = vpack.c.bf16 %v891, %v891
    %v894 = vsel %vm410, %v892, 0
    %v897 = vsel %vm426, %v828, 0
    %899 = vmatprep.subr.bf16.mxu0 0
    %900 = vmatpush1.bf16.msra.mxu0 0
    %901 = vmatprep.subr.bf16.mxu0 0
    %902 = vmatpush1.bf16.msra.mxu0 0
    %903 = vmatprep.subr.bf16.mxu0 0
    %904 = vmatpush1.bf16.msra.mxu0 0
    %905 = vmatprep.subr.bf16.mxu0 0
    %906 = vmatpush1.bf16.msra.mxu0 0
    %907 = vmatprep.subr.bf16.mxu0 0
    %908 = vmatpush1.bf16.msra.mxu0 0
    %909 = vmatprep.subr.bf16.mxu0 0
    %910 = vmatpush1.bf16.msra.mxu0 0
    %911 = vmatprep.subr.bf16.mxu0 0
    %912 = vmatpush1.bf16.msra.mxu0 0
    %913 = vmatprep.subr.bf16.mxu0 0
    %914 = vmatpush1.bf16.msra.mxu0 %v897
    %915 = vmatprep.subr.bf16.mxu0 0
    %916 = vmatpush2.bf16.msra.mxu0 0
    %917 = vmatprep.subr.bf16.mxu0 0
    %918 = vmatpush2.bf16.msra.mxu0 0
    %919 = vmatprep.subr.bf16.mxu0 0
    %920 = vmatpush2.bf16.msra.mxu0 0
    %921 = vmatprep.subr.bf16.mxu0 0
    %922 = vmatpush2.bf16.msra.mxu0 0
    %923 = vmatprep.subr.bf16.mxu0 0
    %924 = vmatpush2.bf16.msra.mxu0 0
    %925 = vmatprep.subr.bf16.mxu0 0
    %926 = vmatpush2.bf16.msra.mxu0 0
    %927 = vmatprep.subr.bf16.mxu0 0
    %928 = vmatpush2.bf16.msra.mxu0 0
    %929 = vmatprep.subr.bf16.mxu0 0
    %930 = vmatpush2.bf16.msra.mxu0 0
    %931 = vmatprep.mubr.bf16.mxu0 0
    %932 = vmatmul.mubr.bf16.gmra.mxu0 %v894
    %v933 = vpop.f32.mrf.mxu0
    %v934 = vadd.f32 0.0, %v933
    %v935 = vpop.f32.mrf.mxu0
    %v936 = vpop.f32.mrf.mxu0
    %v937 = vpop.f32.mrf.mxu0
    %938 = vdwg.mxu0
    %940 = vrot.lane.b32.xlu0 %v826, 96
    %v941 = vpop.permute.xlu0 %940
    %943 = vrot.lane.b32.xlu0 %v827, 96
    %v944 = vpop.permute.xlu0 %943
    %v946 = vsel %vm357, %v941, 0
    %v949 = vsel %vm357, %v944, 0
    %951 = vmatprep.subr.bf16.mxu0 0
    %952 = vmatpush1.bf16.xpose.msra.mxu0 0
    %953 = vmatprep.subr.bf16.mxu0 0
    %954 = vmatpush1.bf16.xpose.msra.mxu0 0
    %955 = vmatprep.subr.bf16.mxu0 0
    %956 = vmatpush1.bf16.xpose.msra.mxu0 0
    %957 = vmatprep.subr.bf16.mxu0 0
    %958 = vmatpush1.bf16.xpose.msra.mxu0 0
    %959 = vmatprep.subr.bf16.mxu0 0
    %960 = vmatpush1.bf16.xpose.msra.mxu0 0
    %961 = vmatprep.subr.bf16.mxu0 0
    %962 = vmatpush1.bf16.xpose.msra.mxu0 0
    %963 = vmatprep.subr.bf16.mxu0 0
    %964 = vmatpush1.bf16.xpose.msra.mxu0 0
    %965 = vmatprep.subr.bf16.mxu0 0
    %966 = vmatpush1.bf16.xpose.msra.mxu0 %v949
    %967 = vmatprep.subr.bf16.mxu0 0
    %968 = vmatpush2.bf16.xpose.msra.mxu0 0
    %969 = vmatprep.subr.bf16.mxu0 0
    %970 = vmatpush2.bf16.xpose.msra.mxu0 0
    %971 = vmatprep.subr.bf16.mxu0 0
    %972 = vmatpush2.bf16.xpose.msra.mxu0 0
    %973 = vmatprep.subr.bf16.mxu0 0
    %974 = vmatpush2.bf16.xpose.msra.mxu0 0
    %975 = vmatprep.subr.bf16.mxu0 0
    %976 = vmatpush2.bf16.xpose.msra.mxu0 0
    %977 = vmatprep.subr.bf16.mxu0 0
    %978 = vmatpush2.bf16.xpose.msra.mxu0 0
    %979 = vmatprep.subr.bf16.mxu0 0
    %980 = vmatpush2.bf16.xpose.msra.mxu0 0
    %981 = vmatprep.subr.bf16.mxu0 0
    %982 = vmatpush2.bf16.xpose.msra.mxu0 0
    %983 = vmatprep.mubr.bf16.mxu0 0
    %984 = vmatmul.mubr.bf16.gmra.mxu0 %v946
    %v985 = vpop.f32.mrf.mxu0
    %v986 = vadd.f32 0.0, %v985
    %v987 = vpop.f32.mrf.mxu0
    %v988 = vpop.f32.mrf.mxu0
    %v989 = vpop.f32.mrf.mxu0
    %990 = vdwg.mxu0
    %v991 = vmul.f32 %v986, 0.35355338
    %v992 = vadd.f32 %v991, %v879
    %v993 = vsel %vm410, %v992, -inf
    %994 = vmax.xlane.f32.xlu0 %v993
    %v995 = vpop.xlane.xlu0 %994
    %v996 = vsub.f32 %v992, %v995
    %v997 = vmul.f32 %v996, 1.442695
    %v998 = vpow.pop %v997
    %v999 = vsel %vm410, %v998, 0.0
    %1000 = vadd.xlane.f32.xlu0 %v999
    %v1001 = vpop.xlane.xlu0 %1000
    %v1002 = vrcp.pop %v1001
    %v1003 = vmul.f32 %v998, %v1002
    %v1004 = vpack.c.bf16 %v1003, %v1003
    %1006 = vrot.lane.b32.xlu0 %v828, 96
    %v1007 = vpop.permute.xlu0 %1006
    %v1009 = vsel %vm410, %v1004, 0
    %v1012 = vsel %vm426, %v1007, 0
    %1014 = vmatprep.subr.bf16.mxu0 0
    %1015 = vmatpush1.bf16.msra.mxu0 0
    %1016 = vmatprep.subr.bf16.mxu0 0
    %1017 = vmatpush1.bf16.msra.mxu0 0
    %1018 = vmatprep.subr.bf16.mxu0 0
    %1019 = vmatpush1.bf16.msra.mxu0 0
    %1020 = vmatprep.subr.bf16.mxu0 0
    %1021 = vmatpush1.bf16.msra.mxu0 0
    %1022 = vmatprep.subr.bf16.mxu0 0
    %1023 = vmatpush1.bf16.msra.mxu0 0
    %1024 = vmatprep.subr.bf16.mxu0 0
    %1025 = vmatpush1.bf16.msra.mxu0 0
    %1026 = vmatprep.subr.bf16.mxu0 0
    %1027 = vmatpush1.bf16.msra.mxu0 0
    %1028 = vmatprep.subr.bf16.mxu0 0
    %1029 = vmatpush1.bf16.msra.mxu0 %v1012
    %1030 = vmatprep.subr.bf16.mxu0 0
    %1031 = vmatpush2.bf16.msra.mxu0 0
    %1032 = vmatprep.subr.bf16.mxu0 0
    %1033 = vmatpush2.bf16.msra.mxu0 0
    %1034 = vmatprep.subr.bf16.mxu0 0
    %1035 = vmatpush2.bf16.msra.mxu0 0
    %1036 = vmatprep.subr.bf16.mxu0 0
    %1037 = vmatpush2.bf16.msra.mxu0 0
    %1038 = vmatprep.subr.bf16.mxu0 0
    %1039 = vmatpush2.bf16.msra.mxu0 0
    %1040 = vmatprep.subr.bf16.mxu0 0
    %1041 = vmatpush2.bf16.msra.mxu0 0
    %1042 = vmatprep.subr.bf16.mxu0 0
    %1043 = vmatpush2.bf16.msra.mxu0 0
    %1044 = vmatprep.subr.bf16.mxu0 0
    %1045 = vmatpush2.bf16.msra.mxu0 0
    %1046 = vmatprep.mubr.bf16.mxu0 0
    %1047 = vmatmul.mubr.bf16.gmra.mxu0 %v1009
    %v1048 = vpop.f32.mrf.mxu0
    %v1049 = vadd.f32 0.0, %v1048
    %v1050 = vpop.f32.mrf.mxu0
    %v1051 = vpop.f32.mrf.mxu0
    %v1052 = vpop.f32.mrf.mxu0
    %1053 = vdwg.mxu0
    %1054 = vrot.lane.b32.xlu0 %v826, 64
    %v1055 = vpop.permute.xlu0 %1054
    %1056 = vrot.lane.b32.xlu0 %v827, 64
    %v1057 = vpop.permute.xlu0 %1056
    %v1059 = vsel %vm357, %v1055, 0
    %v1062 = vsel %vm357, %v1057, 0
    %1064 = vmatprep.subr.bf16.mxu0 0
    %1065 = vmatpush1.bf16.xpose.msra.mxu0 0
    %1066 = vmatprep.subr.bf16.mxu0 0
    %1067 = vmatpush1.bf16.xpose.msra.mxu0 0
    %1068 = vmatprep.subr.bf16.mxu0 0
    %1069 = vmatpush1.bf16.xpose.msra.mxu0 0
    %1070 = vmatprep.subr.bf16.mxu0 0
    %1071 = vmatpush1.bf16.xpose.msra.mxu0 0
    %1072 = vmatprep.subr.bf16.mxu0 0
    %1073 = vmatpush1.bf16.xpose.msra.mxu0 0
    %1074 = vmatprep.subr.bf16.mxu0 0
    %1075 = vmatpush1.bf16.xpose.msra.mxu0 0
    %1076 = vmatprep.subr.bf16.mxu0 0
    %1077 = vmatpush1.bf16.xpose.msra.mxu0 0
    %1078 = vmatprep.subr.bf16.mxu0 0
    %1079 = vmatpush1.bf16.xpose.msra.mxu0 %v1062
    %1080 = vmatprep.subr.bf16.mxu0 0
    %1081 = vmatpush2.bf16.xpose.msra.mxu0 0
    %1082 = vmatprep.subr.bf16.mxu0 0
    %1083 = vmatpush2.bf16.xpose.msra.mxu0 0
    %1084 = vmatprep.subr.bf16.mxu0 0
    %1085 = vmatpush2.bf16.xpose.msra.mxu0 0
    %1086 = vmatprep.subr.bf16.mxu0 0
    %1087 = vmatpush2.bf16.xpose.msra.mxu0 0
    %1088 = vmatprep.subr.bf16.mxu0 0
    %1089 = vmatpush2.bf16.xpose.msra.mxu0 0
    %1090 = vmatprep.subr.bf16.mxu0 0
    %1091 = vmatpush2.bf16.xpose.msra.mxu0 0
    %1092 = vmatprep.subr.bf16.mxu0 0
    %1093 = vmatpush2.bf16.xpose.msra.mxu0 0
    %1094 = vmatprep.subr.bf16.mxu0 0
    %1095 = vmatpush2.bf16.xpose.msra.mxu0 0
    %1096 = vmatprep.mubr.bf16.mxu0 0
    %1097 = vmatmul.mubr.bf16.gmra.mxu0 %v1059
    %v1098 = vpop.f32.mrf.mxu0
    %v1099 = vadd.f32 0.0, %v1098
    %v1100 = vpop.f32.mrf.mxu0
    %v1101 = vpop.f32.mrf.mxu0
    %v1102 = vpop.f32.mrf.mxu0
    %1103 = vdwg.mxu0
    %v1104 = vmul.f32 %v1099, 0.35355338
    %v1105 = vadd.f32 %v1104, %v879
    %v1106 = vsel %vm410, %v1105, -inf
    %1107 = vmax.xlane.f32.xlu0 %v1106
    %v1108 = vpop.xlane.xlu0 %1107
    %v1109 = vsub.f32 %v1105, %v1108
    %v1110 = vmul.f32 %v1109, 1.442695
    %v1111 = vpow.pop %v1110
    %v1112 = vsel %vm410, %v1111, 0.0
    %1113 = vadd.xlane.f32.xlu0 %v1112
    %v1114 = vpop.xlane.xlu0 %1113
    %v1115 = vrcp.pop %v1114
    %v1116 = vmul.f32 %v1111, %v1115
    %v1117 = vpack.c.bf16 %v1116, %v1116
    %1118 = vrot.lane.b32.xlu0 %v828, 64
    %v1119 = vpop.permute.xlu0 %1118
    %v1121 = vsel %vm410, %v1117, 0
    %v1124 = vsel %vm426, %v1119, 0
    %1126 = vmatprep.subr.bf16.mxu0 0
    %1127 = vmatpush1.bf16.msra.mxu0 0
    %1128 = vmatprep.subr.bf16.mxu0 0
    %1129 = vmatpush1.bf16.msra.mxu0 0
    %1130 = vmatprep.subr.bf16.mxu0 0
    %1131 = vmatpush1.bf16.msra.mxu0 0
    %1132 = vmatprep.subr.bf16.mxu0 0
    %1133 = vmatpush1.bf16.msra.mxu0 0
    %1134 = vmatprep.subr.bf16.mxu0 0
    %1135 = vmatpush1.bf16.msra.mxu0 0
    %1136 = vmatprep.subr.bf16.mxu0 0
    %1137 = vmatpush1.bf16.msra.mxu0 0
    %1138 = vmatprep.subr.bf16.mxu0 0
    %1139 = vmatpush1.bf16.msra.mxu0 0
    %1140 = vmatprep.subr.bf16.mxu0 0
    %1141 = vmatpush1.bf16.msra.mxu0 %v1124
    %1142 = vmatprep.subr.bf16.mxu0 0
    %1143 = vmatpush2.bf16.msra.mxu0 0
    %1144 = vmatprep.subr.bf16.mxu0 0
    %1145 = vmatpush2.bf16.msra.mxu0 0
    %1146 = vmatprep.subr.bf16.mxu0 0
    %1147 = vmatpush2.bf16.msra.mxu0 0
    %1148 = vmatprep.subr.bf16.mxu0 0
    %1149 = vmatpush2.bf16.msra.mxu0 0
    %1150 = vmatprep.subr.bf16.mxu0 0
    %1151 = vmatpush2.bf16.msra.mxu0 0
    %1152 = vmatprep.subr.bf16.mxu0 0
    %1153 = vmatpush2.bf16.msra.mxu0 0
    %1154 = vmatprep.subr.bf16.mxu0 0
    %1155 = vmatpush2.bf16.msra.mxu0 0
    %1156 = vmatprep.subr.bf16.mxu0 0
    %1157 = vmatpush2.bf16.msra.mxu0 0
    %1158 = vmatprep.mubr.bf16.mxu0 0
    %1159 = vmatmul.mubr.bf16.gmra.mxu0 %v1121
    %v1160 = vpop.f32.mrf.mxu0
    %v1161 = vadd.f32 0.0, %v1160
    %v1162 = vpop.f32.mrf.mxu0
    %v1163 = vpop.f32.mrf.mxu0
    %v1164 = vpop.f32.mrf.mxu0
    %1165 = vdwg.mxu0
    %1166 = vrot.lane.b32.xlu0 %v826, 32
    %v1167 = vpop.permute.xlu0 %1166
    %1168 = vrot.lane.b32.xlu0 %v827, 32
    %v1169 = vpop.permute.xlu0 %1168
    %v1171 = vsel %vm357, %v1167, 0
    %v1174 = vsel %vm357, %v1169, 0
    %1176 = vmatprep.subr.bf16.mxu0 0
    %1177 = vmatpush1.bf16.xpose.msra.mxu0 0
    %1178 = vmatprep.subr.bf16.mxu0 0
    %1179 = vmatpush1.bf16.xpose.msra.mxu0 0
    %1180 = vmatprep.subr.bf16.mxu0 0
    %1181 = vmatpush1.bf16.xpose.msra.mxu0 0
    %1182 = vmatprep.subr.bf16.mxu0 0
    %1183 = vmatpush1.bf16.xpose.msra.mxu0 0
    %1184 = vmatprep.subr.bf16.mxu0 0
    %1185 = vmatpush1.bf16.xpose.msra.mxu0 0
    %1186 = vmatprep.subr.bf16.mxu0 0
    %1187 = vmatpush1.bf16.xpose.msra.mxu0 0
    %1188 = vmatprep.subr.bf16.mxu0 0
    %1189 = vmatpush1.bf16.xpose.msra.mxu0 0
    %1190 = vmatprep.subr.bf16.mxu0 0
    %1191 = vmatpush1.bf16.xpose.msra.mxu0 %v1174
    %1192 = vmatprep.subr.bf16.mxu0 0
    %1193 = vmatpush2.bf16.xpose.msra.mxu0 0
    %1194 = vmatprep.subr.bf16.mxu0 0
    %1195 = vmatpush2.bf16.xpose.msra.mxu0 0
    %1196 = vmatprep.subr.bf16.mxu0 0
    %1197 = vmatpush2.bf16.xpose.msra.mxu0 0
    %1198 = vmatprep.subr.bf16.mxu0 0
    %1199 = vmatpush2.bf16.xpose.msra.mxu0 0
    %1200 = vmatprep.subr.bf16.mxu0 0
    %1201 = vmatpush2.bf16.xpose.msra.mxu0 0
    %1202 = vmatprep.subr.bf16.mxu0 0
    %1203 = vmatpush2.bf16.xpose.msra.mxu0 0
    %1204 = vmatprep.subr.bf16.mxu0 0
    %1205 = vmatpush2.bf16.xpose.msra.mxu0 0
    %1206 = vmatprep.subr.bf16.mxu0 0
    %1207 = vmatpush2.bf16.xpose.msra.mxu0 0
    %1208 = vmatprep.mubr.bf16.mxu0 0
    %1209 = vmatmul.mubr.bf16.gmra.mxu0 %v1171
    %v1210 = vpop.f32.mrf.mxu0
    %v1211 = vadd.f32 0.0, %v1210
    %v1212 = vpop.f32.mrf.mxu0
    %v1213 = vpop.f32.mrf.mxu0
    %v1214 = vpop.f32.mrf.mxu0
    %1215 = vdwg.mxu0
    %v1216 = vmul.f32 %v1211, 0.35355338
    %v1217 = vadd.f32 %v1216, %v879
    %v1218 = vsel %vm410, %v1217, -inf
    %1219 = vmax.xlane.f32.xlu0 %v1218
    %v1220 = vpop.xlane.xlu0 %1219
    %v1221 = vsub.f32 %v1217, %v1220
    %v1222 = vmul.f32 %v1221, 1.442695
    %v1223 = vpow.pop %v1222
    %v1224 = vsel %vm410, %v1223, 0.0
    %1225 = vadd.xlane.f32.xlu0 %v1224
    %v1226 = vpop.xlane.xlu0 %1225
    %v1227 = vrcp.pop %v1226
    %v1228 = vmul.f32 %v1223, %v1227
    %v1229 = vpack.c.bf16 %v1228, %v1228
    %1230 = vrot.lane.b32.xlu0 %v828, 32
    %v1231 = vpop.permute.xlu0 %1230
    %v1233 = vsel %vm410, %v1229, 0
    %v1236 = vsel %vm426, %v1231, 0
    %1238 = vmatprep.subr.bf16.mxu0 0
    %1239 = vmatpush1.bf16.msra.mxu0 0
    %1240 = vmatprep.subr.bf16.mxu0 0
    %1241 = vmatpush1.bf16.msra.mxu0 0
    %1242 = vmatprep.subr.bf16.mxu0 0
    %1243 = vmatpush1.bf16.msra.mxu0 0
    %1244 = vmatprep.subr.bf16.mxu0 0
    %1245 = vmatpush1.bf16.msra.mxu0 0
    %1246 = vmatprep.subr.bf16.mxu0 0
    %1247 = vmatpush1.bf16.msra.mxu0 0
    %1248 = vmatprep.subr.bf16.mxu0 0
    %1249 = vmatpush1.bf16.msra.mxu0 0
    %1250 = vmatprep.subr.bf16.mxu0 0
    %1251 = vmatpush1.bf16.msra.mxu0 0
    %1252 = vmatprep.subr.bf16.mxu0 0
    %1253 = vmatpush1.bf16.msra.mxu0 %v1236
    %1254 = vmatprep.subr.bf16.mxu0 0
    %1255 = vmatpush2.bf16.msra.mxu0 0
    %1256 = vmatprep.subr.bf16.mxu0 0
    %1257 = vmatpush2.bf16.msra.mxu0 0
    %1258 = vmatprep.subr.bf16.mxu0 0
    %1259 = vmatpush2.bf16.msra.mxu0 0
    %1260 = vmatprep.subr.bf16.mxu0 0
    %1261 = vmatpush2.bf16.msra.mxu0 0
    %1262 = vmatprep.subr.bf16.mxu0 0
    %1263 = vmatpush2.bf16.msra.mxu0 0
    %1264 = vmatprep.subr.bf16.mxu0 0
    %1265 = vmatpush2.bf16.msra.mxu0 0
    %1266 = vmatprep.subr.bf16.mxu0 0
    %1267 = vmatpush2.bf16.msra.mxu0 0
    %1268 = vmatprep.subr.bf16.mxu0 0
    %1269 = vmatpush2.bf16.msra.mxu0 0
    %1270 = vmatprep.mubr.bf16.mxu0 0
    %1271 = vmatmul.mubr.bf16.gmra.mxu0 %v1233
    %v1272 = vpop.f32.mrf.mxu0
    %v1273 = vadd.f32 0.0, %v1272
    %v1274 = vpop.f32.mrf.mxu0
    %v1275 = vpop.f32.mrf.mxu0
    %v1276 = vpop.f32.mrf.mxu0
    %1277 = vdwg.mxu0
    %1279 = vrot.lane.b32.xlu0 %v1049, 32
    %v1280 = vpop.permute.xlu0 %1279
    %1283 = vrot.lane.b32.xlu0 %v1161, 64
    %v1284 = vpop.permute.xlu0 %1283
    %1287 = vrot.lane.b32.xlu0 %v1273, 96
    %v1288 = vpop.permute.xlu0 %1287
    %v1290 = vsel %vm357, %v934, %v1280
    %v1291 = vsel %vm822, %v1290, %v1284
    %v1292 = vsel %vm824, %v1291, %v1288
    %v1293 = vpack.c.bf16 %v1292, %v825
    %v1294 = vld [vmem:[#allocation4] sm:$0xf]
    %v1295 = vld [vmem:[#allocation4 + $0x4] sm:$0xf]
    %v1296 = vld [vmem:[#allocation4 + $0x8] sm:$0xf]
    %v1297 = vld [vmem:[#allocation4 + $0xc] sm:$0xf]
    %v1298 = vld [vmem:[#allocation4 + $0x10] sm:$0xf]
    %v1299 = vld [vmem:[#allocation4 + $0x14] sm:$0xf]
    %v1300 = vld [vmem:[#allocation4 + $0x18] sm:$0xf]
    %v1301 = vld [vmem:[#allocation4 + $0x1c] sm:$0xf]
    %v1302 = vld [vmem:[#allocation4 + $0x20] sm:$0xf]
    %v1303 = vld [vmem:[#allocation4 + $0x24] sm:$0xf]
    %v1304 = vld [vmem:[#allocation4 + $0x28] sm:$0xf]
    %v1305 = vld [vmem:[#allocation4 + $0x2c] sm:$0xf]
    %v1306 = vld [vmem:[#allocation4 + $0x30] sm:$0xf]
    %v1307 = vld [vmem:[#allocation4 + $0x34] sm:$0xf]
    %v1308 = vld [vmem:[#allocation4 + $0x38] sm:$0xf]
    %v1309 = vld [vmem:[#allocation4 + $0x3c] sm:$0xf]
    %v1310 = vld [vmem:[%s5] sm:$0x1]
    %v1312 = vlaneseq
    %v1313 = vshrl.u32 %v1312, 7
    %v1314 = vsub.s32 0, %v1313
    %v1315 = vrot.slane %v1310, %v1314
    %v1333 = vunpack.c.l.b16 %v1294
    %v1334 = vunpack.c.l.b16 %v1295
    %v1335 = vunpack.c.l.b16 %v1296
    %v1336 = vunpack.c.l.b16 %v1297
    %v1337 = vunpack.c.l.b16 %v1298
    %v1338 = vunpack.c.l.b16 %v1299
    %v1339 = vunpack.c.l.b16 %v1300
    %v1340 = vunpack.c.l.b16 %v1301
    %v1341 = vunpack.c.l.b16 %v1302
    %v1342 = vunpack.c.l.b16 %v1303
    %v1343 = vunpack.c.l.b16 %v1304
    %v1344 = vunpack.c.l.b16 %v1305
    %v1345 = vunpack.c.l.b16 %v1306
    %v1346 = vunpack.c.l.b16 %v1307
    %v1347 = vunpack.c.l.b16 %v1308
    %v1348 = vunpack.c.l.b16 %v1309
    %v1349 = vpack.c.b16 %v1334, %v1333
    %v1350 = vpack.c.b16 %v1336, %v1335
    %v1351 = vpack.c.b16 %v1338, %v1337
    %v1352 = vpack.c.b16 %v1340, %v1339
    %v1353 = vpack.c.b16 %v1342, %v1341
    %v1354 = vpack.c.b16 %v1344, %v1343
    %v1355 = vpack.c.b16 %v1346, %v1345
    %v1356 = vpack.c.b16 %v1348, %v1347
    %1365 = vmatprep.subr.bf16.mxu0 0
    %1366 = vmatpush1.bf16.msra.mxu0 %v1356
    %1367 = vmatprep.subr.bf16.mxu0 0
    %1368 = vmatpush1.bf16.msra.mxu0 %v1355
    %1369 = vmatprep.subr.bf16.mxu0 0
    %1370 = vmatpush1.bf16.msra.mxu0 %v1354
    %1371 = vmatprep.subr.bf16.mxu0 0
    %1372 = vmatpush1.bf16.msra.mxu0 %v1353
    %1373 = vmatprep.subr.bf16.mxu0 0
    %1374 = vmatpush1.bf16.msra.mxu0 %v1352
    %1375 = vmatprep.subr.bf16.mxu0 0
    %1376 = vmatpush1.bf16.msra.mxu0 %v1351
    %1377 = vmatprep.subr.bf16.mxu0 0
    %1378 = vmatpush1.bf16.msra.mxu0 %v1350
    %1379 = vmatprep.subr.bf16.mxu0 0
    %1380 = vmatpush1.bf16.msra.mxu0 %v1349
    %1381 = vmatprep.subr.bf16.mxu0 0
    %1382 = vmatpush2.bf16.msra.mxu0 0
    %1383 = vmatprep.subr.bf16.mxu0 0
    %1384 = vmatpush2.bf16.msra.mxu0 0
    %1385 = vmatprep.subr.bf16.mxu0 0
    %1386 = vmatpush2.bf16.msra.mxu0 0
    %1387 = vmatprep.subr.bf16.mxu0 0
    %1388 = vmatpush2.bf16.msra.mxu0 0
    %1389 = vmatprep.subr.bf16.mxu0 0
    %1390 = vmatpush2.bf16.msra.mxu0 0
    %1391 = vmatprep.subr.bf16.mxu0 0
    %1392 = vmatpush2.bf16.msra.mxu0 0
    %1393 = vmatprep.subr.bf16.mxu0 0
    %1394 = vmatpush2.bf16.msra.mxu0 0
    %1395 = vmatprep.subr.bf16.mxu0 0
    %1396 = vmatpush2.bf16.msra.mxu0 0
    %1397 = vmatprep.mubr.bf16.mxu0 0
    %1398 = vmatmul.mubr.bf16.gmra.mxu0 %v1293
    %v1399 = vpop.f32.mrf.mxu0
    %v1400 = vadd.f32 %v1315, %v1399
    %v1401 = vpop.f32.mrf.mxu0
    %v1402 = vpop.f32.mrf.mxu0
    %v1403 = vadd.f32 %v1315, %v1402
    %v1404 = vpop.f32.mrf.mxu0
    %1405 = vdwg.mxu0
    %v1406 = vadd.f32 %v78, %v1400
    %v1407 = vadd.f32 %v79, %v1403
    %v1408 = vld [vmem:[%s6] sm:$0x1]
    %v1409 = vld [vmem:[%s7] sm:$0x1]
    %1410 = vadd.xlane.f32.xlu0 %v1406
    %v1411 = vpop.xlane.xlu0 %1410
    %1412 = vadd.xlane.f32.xlu0 %v1407
    %v1413 = vpop.xlane.xlu0 %1412
    %v1414 = vmul.f32 %v1411, 0.03125
    %v1415 = vmul.f32 %v1413, 0.03125
    %v1416 = vsub.f32 %v1406, %v1414
    %v1417 = vsub.f32 %v1407, %v1415
    %v1418 = vmul.f32 %v1416, %v84
    %v1419 = vmul.f32 %v1417, %v84
    %v1420 = vmul.f32 %v1418, %v1418
    %v1421 = vmul.f32 %v1419, %v1419
    %1422 = vadd.xlane.f32.xlu0 %v1420
    %v1423 = vpop.xlane.xlu0 %1422
    %1424 = vadd.xlane.f32.xlu0 %v1421
    %v1425 = vpop.xlane.xlu0 %1424
    %v1426 = vmul.f32 %v1423, 0.03125
    %v1427 = vmul.f32 %v1425, 0.03125
    %v1428 = vadd.f32 %v1426, 1e-05
    %v1429 = vadd.f32 %v1427, 1e-05
    %v1430 = vrsqrt.pop %v1428
    %v1431 = vrsqrt.pop %v1429
    %v1432 = vmul.f32 %v1416, %v1430
    %v1433 = vmul.f32 %v1417, %v1431
    %v1435 = vlaneseq
    %v1436 = vshrl.u32 %v1435, 7
    %v1437 = vsub.s32 0, %v1436
    %v1438 = vrot.slane %v1408, %v1437
    %v1440 = vmul.f32 %v1432, %v1438
    %v1441 = vmul.f32 %v1433, %v1438
    %v1443 = vlaneseq
    %v1444 = vshrl.u32 %v1443, 7
    %v1445 = vsub.s32 0, %v1444
    %v1446 = vrot.slane %v1409, %v1445
    %v1448 = vadd.f32 %v1440, %v1446
    %v1449 = vadd.f32 %v1441, %v1446
    %v1450 = vpack.c.bf16 %v1449, %v1448
    %v1451 = vld [vmem:[%s8] sm:$0xf]
    %v1452 = vld [vmem:[%s8 + $0x4] sm:$0xf]
    %v1453 = vld [vmem:[%s8 + $0x8] sm:$0xf]
    %v1454 = vld [vmem:[%s8 + $0xc] sm:$0xf]
    %v1455 = vld [vmem:[%s8 + $0x10] sm:$0xf]
    %v1456 = vld [vmem:[%s8 + $0x14] sm:$0xf]
    %v1457 = vld [vmem:[%s8 + $0x18] sm:$0xf]
    %v1458 = vld [vmem:[%s8 + $0x1c] sm:$0xf]
    %v1459 = vld [vmem:[%s8 + $0x20] sm:$0xf]
    %v1460 = vld [vmem:[%s8 + $0x24] sm:$0xf]
    %v1461 = vld [vmem:[%s8 + $0x28] sm:$0xf]
    %v1462 = vld [vmem:[%s8 + $0x2c] sm:$0xf]
    %v1463 = vld [vmem:[%s8 + $0x30] sm:$0xf]
    %v1464 = vld [vmem:[%s8 + $0x34] sm:$0xf]
    %v1465 = vld [vmem:[%s8 + $0x38] sm:$0xf]
    %v1466 = vld [vmem:[%s8 + $0x3c] sm:$0xf]
    %v1467 = vld [vmem:[%s9] sm:$0x1]
    %v1469 = vlaneseq
    %v1470 = vshrl.u32 %v1469, 7
    %v1471 = vsub.s32 0, %v1470
    %v1472 = vrot.slane %v1467, %v1471
    %v1490 = vunpack.c.l.b16 %v1451
    %v1491 = vunpack.c.l.b16 %v1452
    %v1492 = vunpack.c.l.b16 %v1453
    %v1493 = vunpack.c.l.b16 %v1454
    %v1494 = vunpack.c.l.b16 %v1455
    %v1495 = vunpack.c.l.b16 %v1456
    %v1496 = vunpack.c.l.b16 %v1457
    %v1497 = vunpack.c.l.b16 %v1458
    %v1498 = vunpack.c.l.b16 %v1459
    %v1499 = vunpack.c.l.b16 %v1460
    %v1500 = vunpack.c.l.b16 %v1461
    %v1501 = vunpack.c.l.b16 %v1462
    %v1502 = vunpack.c.l.b16 %v1463
    %v1503 = vunpack.c.l.b16 %v1464
    %v1504 = vunpack.c.l.b16 %v1465
    %v1505 = vunpack.c.l.b16 %v1466
    %v1506 = vpack.c.b16 %v1491, %v1490
    %v1507 = vpack.c.b16 %v1493, %v1492
    %v1508 = vpack.c.b16 %v1495, %v1494
    %v1509 = vpack.c.b16 %v1497, %v1496
    %v1510 = vpack.c.b16 %v1499, %v1498
    %v1511 = vpack.c.b16 %v1501, %v1500
    %v1512 = vpack.c.b16 %v1503, %v1502
    %v1513 = vpack.c.b16 %v1505, %v1504
    %1522 = vmatprep.subr.bf16.mxu0 0
    %1523 = vmatpush1.bf16.msra.mxu0 %v1513
    %1524 = vmatprep.subr.bf16.mxu0 0
    %1525 = vmatpush1.bf16.msra.mxu0 %v1512
    %1526 = vmatprep.subr.bf16.mxu0 0
    %1527 = vmatpush1.bf16.msra.mxu0 %v1511
    %1528 = vmatprep.subr.bf16.mxu0 0
    %1529 = vmatpush1.bf16.msra.mxu0 %v1510
    %1530 = vmatprep.subr.bf16.mxu0 0
    %1531 = vmatpush1.bf16.msra.mxu0 %v1509
    %1532 = vmatprep.subr.bf16.mxu0 0
    %1533 = vmatpush1.bf16.msra.mxu0 %v1508
    %1534 = vmatprep.subr.bf16.mxu0 0
    %1535 = vmatpush1.bf16.msra.mxu0 %v1507
    %1536 = vmatprep.subr.bf16.mxu0 0
    %1537 = vmatpush1.bf16.msra.mxu0 %v1506
    %1538 = vmatprep.subr.bf16.mxu0 0
    %1539 = vmatpush2.bf16.msra.mxu0 0
    %1540 = vmatprep.subr.bf16.mxu0 0
    %1541 = vmatpush2.bf16.msra.mxu0 0
    %1542 = vmatprep.subr.bf16.mxu0 0
    %1543 = vmatpush2.bf16.msra.mxu0 0
    %1544 = vmatprep.subr.bf16.mxu0 0
    %1545 = vmatpush2.bf16.msra.mxu0 0
    %1546 = vmatprep.subr.bf16.mxu0 0
    %1547 = vmatpush2.bf16.msra.mxu0 0
    %1548 = vmatprep.subr.bf16.mxu0 0
    %1549 = vmatpush2.bf16.msra.mxu0 0
    %1550 = vmatprep.subr.bf16.mxu0 0
    %1551 = vmatpush2.bf16.msra.mxu0 0
    %1552 = vmatprep.subr.bf16.mxu0 0
    %1553 = vmatpush2.bf16.msra.mxu0 0
    %1554 = vmatprep.mubr.bf16.mxu0 0
    %1555 = vmatmul.mubr.bf16.gmra.mxu0 %v1450
    %v1556 = vpop.f32.mrf.mxu0
    %v1557 = vadd.f32 %v1472, %v1556
    %v1558 = vpop.f32.mrf.mxu0
    %v1559 = vpop.f32.mrf.mxu0
    %v1560 = vadd.f32 %v1472, %v1559
    %v1561 = vpop.f32.mrf.mxu0
    %1562 = vdwg.mxu0
    %v1563 = vmax.f32 %v1557, 0.0
    %v1564 = vmax.f32 %v1560, 0.0
    %v1565 = vpack.c.bf16 %v1564, %v1563
    %v1566 = vld [vmem:[%s10] sm:$0xf]
    %v1567 = vld [vmem:[%s10 + $0x4] sm:$0xf]
    %v1568 = vld [vmem:[%s10 + $0x8] sm:$0xf]
    %v1569 = vld [vmem:[%s10 + $0xc] sm:$0xf]
    %v1570 = vld [vmem:[%s10 + $0x10] sm:$0xf]
    %v1571 = vld [vmem:[%s10 + $0x14] sm:$0xf]
    %v1572 = vld [vmem:[%s10 + $0x18] sm:$0xf]
    %v1573 = vld [vmem:[%s10 + $0x1c] sm:$0xf]
    %v1574 = vld [vmem:[%s10 + $0x20] sm:$0xf]
    %v1575 = vld [vmem:[%s10 + $0x24] sm:$0xf]
    %v1576 = vld [vmem:[%s10 + $0x28] sm:$0xf]
    %v1577 = vld [vmem:[%s10 + $0x2c] sm:$0xf]
    %v1578 = vld [vmem:[%s10 + $0x30] sm:$0xf]
    %v1579 = vld [vmem:[%s10 + $0x34] sm:$0xf]
    %v1580 = vld [vmem:[%s10 + $0x38] sm:$0xf]
    %v1581 = vld [vmem:[%s10 + $0x3c] sm:$0xf]
    %v1582 = vld [vmem:[%s11] sm:$0x1]
    %v1584 = vlaneseq
    %v1585 = vshrl.u32 %v1584, 7
    %v1586 = vsub.s32 0, %v1585
    %v1587 = vrot.slane %v1582, %v1586
    %v1605 = vunpack.c.l.b16 %v1566
    %v1606 = vunpack.c.l.b16 %v1567
    %v1607 = vunpack.c.l.b16 %v1568
    %v1608 = vunpack.c.l.b16 %v1569
    %v1609 = vunpack.c.l.b16 %v1570
    %v1610 = vunpack.c.l.b16 %v1571
    %v1611 = vunpack.c.l.b16 %v1572
    %v1612 = vunpack.c.l.b16 %v1573
    %v1613 = vunpack.c.l.b16 %v1574
    %v1614 = vunpack.c.l.b16 %v1575
    %v1615 = vunpack.c.l.b16 %v1576
    %v1616 = vunpack.c.l.b16 %v1577
    %v1617 = vunpack.c.l.b16 %v1578
    %v1618 = vunpack.c.l.b16 %v1579
    %v1619 = vunpack.c.l.b16 %v1580
    %v1620 = vunpack.c.l.b16 %v1581
    %v1621 = vpack.c.b16 %v1606, %v1605
    %v1622 = vpack.c.b16 %v1608, %v1607
    %v1623 = vpack.c.b16 %v1610, %v1609
    %v1624 = vpack.c.b16 %v1612, %v1611
    %v1625 = vpack.c.b16 %v1614, %v1613
    %v1626 = vpack.c.b16 %v1616, %v1615
    %v1627 = vpack.c.b16 %v1618, %v1617
    %v1628 = vpack.c.b16 %v1620, %v1619
    %1637 = vmatprep.subr.bf16.mxu0 0
    %1638 = vmatpush1.bf16.msra.mxu0 %v1628
    %1639 = vmatprep.subr.bf16.mxu0 0
    %1640 = vmatpush1.bf16.msra.mxu0 %v1627
    %1641 = vmatprep.subr.bf16.mxu0 0
    %1642 = vmatpush1.bf16.msra.mxu0 %v1626
    %1643 = vmatprep.subr.bf16.mxu0 0
    %1644 = vmatpush1.bf16.msra.mxu0 %v1625
    %1645 = vmatprep.subr.bf16.mxu0 0
    %1646 = vmatpush1.bf16.msra.mxu0 %v1624
    %1647 = vmatprep.subr.bf16.mxu0 0
    %1648 = vmatpush1.bf16.msra.mxu0 %v1623
    %1649 = vmatprep.subr.bf16.mxu0 0
    %1650 = vmatpush1.bf16.msra.mxu0 %v1622
    %1651 = vmatprep.subr.bf16.mxu0 0
    %1652 = vmatpush1.bf16.msra.mxu0 %v1621
    %1653 = vmatprep.subr.bf16.mxu0 0
    %1654 = vmatpush2.bf16.msra.mxu0 0
    %1655 = vmatprep.subr.bf16.mxu0 0
    %1656 = vmatpush2.bf16.msra.mxu0 0
    %1657 = vmatprep.subr.bf16.mxu0 0
    %1658 = vmatpush2.bf16.msra.mxu0 0
    %1659 = vmatprep.subr.bf16.mxu0 0
    %1660 = vmatpush2.bf16.msra.mxu0 0
    %1661 = vmatprep.subr.bf16.mxu0 0
    %1662 = vmatpush2.bf16.msra.mxu0 0
    %1663 = vmatprep.subr.bf16.mxu0 0
    %1664 = vmatpush2.bf16.msra.mxu0 0
    %1665 = vmatprep.subr.bf16.mxu0 0
    %1666 = vmatpush2.bf16.msra.mxu0 0
    %1667 = vmatprep.subr.bf16.mxu0 0
    %1668 = vmatpush2.bf16.msra.mxu0 0
    %1669 = vmatprep.mubr.bf16.mxu0 0
    %1670 = vmatmul.mubr.bf16.gmra.mxu0 %v1565
    %v1671 = vpop.f32.mrf.mxu0
    %v1672 = vadd.f32 %v1587, %v1671
    %v1673 = vpop.f32.mrf.mxu0
    %v1674 = vpop.f32.mrf.mxu0
    %v1675 = vadd.f32 %v1587, %v1674
    %v1676 = vpop.f32.mrf.mxu0
    %1677 = vdwg.mxu0
    %v1678 = vadd.f32 %v1448, %v1672
    %v1679 = vadd.f32 %v1449, %v1675
    %v1680 = vld [vmem:[%s12] sm:$0x1]
    %v1681 = vld [vmem:[%s13] sm:$0x1]
    %1682 = vadd.xlane.f32.xlu0 %v1678
    %v1683 = vpop.xlane.xlu0 %1682
    %1684 = vadd.xlane.f32.xlu0 %v1679
    %v1685 = vpop.xlane.xlu0 %1684
    %v1686 = vmul.f32 %v1683, 0.03125
    %v1687 = vmul.f32 %v1685, 0.03125
    %v1688 = vsub.f32 %v1678, %v1686
    %v1689 = vsub.f32 %v1679, %v1687
    %v1690 = vmul.f32 %v1688, %v84
    %v1691 = vmul.f32 %v1689, %v84
    %v1692 = vmul.f32 %v1690, %v1690
    %v1693 = vmul.f32 %v1691, %v1691
    %1694 = vadd.xlane.f32.xlu0 %v1692
    %v1695 = vpop.xlane.xlu0 %1694
    %1696 = vadd.xlane.f32.xlu0 %v1693
    %v1697 = vpop.xlane.xlu0 %1696
    %v1698 = vmul.f32 %v1695, 0.03125
    %v1699 = vmul.f32 %v1697, 0.03125
    %v1700 = vadd.f32 %v1698, 1e-05
    %v1701 = vadd.f32 %v1699, 1e-05
    %v1702 = vrsqrt.pop %v1700
    %v1703 = vrsqrt.pop %v1701
    %v1704 = vmul.f32 %v1688, %v1702
    %v1705 = vmul.f32 %v1689, %v1703
    %v1707 = vlaneseq
    %v1708 = vshrl.u32 %v1707, 7
    %v1709 = vsub.s32 0, %v1708
    %v1710 = vrot.slane %v1680, %v1709
    %v1712 = vmul.f32 %v1704, %v1710
    %v1713 = vmul.f32 %v1705, %v1710
    %v1715 = vlaneseq
    %v1716 = vshrl.u32 %v1715, 7
    %v1717 = vsub.s32 0, %v1716
    %v1718 = vrot.slane %v1681, %v1717
    %v1720 = vadd.f32 %v1712, %v1718
    %v1721 = vadd.f32 %v1713, %v1718
    %v1722 = vpack.c.bf16 %v1721, %v1720
    %v1724 = vunpack.c.l.b16 %v1722
    %v1725 = vunpack.c.h.b16 %v1722
    %v1726 = vpack.c.b16 %v1724, %v1724
    %v1727 = vpack.c.b16 %v1725, %v1725
    %1730 = vst [vmem:[%s14] sm:$0xf] %v1726
    %1731 = vst [vmem:[%s14 + $0x4] sm:$0xf] %v1727
    // Predicated region
    $region66: #{flat_transformer_mean_log_scale_forward.5} parent=1 // pred_check
      _
    $region67: #{flat_transformer_mean_log_scale_forward.5} parent=1 // pred_check_branch
      %1733 = sbr.rel (0) target = $region69
    $region68: #{flat_transformer_mean_log_scale_forward.5} parent=1 // pred_region
      _
    $region69: #{flat_transformer_mean_log_scale_forward.5} parent=1 // pred_fallthru
      _
    // Predicated region
    $region70: #{flat_transformer_mean_log_scale_forward.5} parent=1 // pred_check
      _
    $region71: #{flat_transformer_mean_log_scale_forward.5} parent=1 // pred_check_branch
      %1735 = sbr.rel (0) target = $region73
    $region72: #{flat_transformer_mean_log_scale_forward.5} parent=1 // pred_region
      _
    $region73: #{flat_transformer_mean_log_scale_forward.5} parent=1 // pred_fallthru
      _
    %1736 = vsyncpa [#allocation3], 1
    %1737 = vsyncpa [#allocation5], 1

// kernel: flat_transformer_mean_log_scale_forward.6
$region0: #{flat_transformer_mean_log_scale_forward.6}
  #allocation0 [shape = 'u32[]', space=smem, size = 0x4, offset = 0x4, fixed_abs, tag = 'smem constant byte address 0x4 - core index']
  #allocation1 [shape = 'u32[144,128]{1,0:T(1,128)}', space=vmem, size = 0x12000, scoped, tag = 'internal scratch']
  %s0 = inlined_call_operand.vmem [shape: bf16[16,128], index: 0, kind: input, shape index: {}]
  %s1 = inlined_call_operand.vmem [shape: f32[2,8,8], index: 1, kind: input, shape index: {}]
  %s2 = inlined_call_operand.vmem [shape: bf16[128,384], index: 2, kind: input, shape index: {}]
  %s3 = inlined_call_operand.vmem [shape: f32[1,384], index: 3, kind: input, shape index: {}]
  %s4 = inlined_call_operand.vmem [shape: bf16[128,128], index: 4, kind: input, shape index: {}]
  %s5 = inlined_call_operand.vmem [shape: f32[1,128], index: 5, kind: input, shape index: {}]
  %s6 = inlined_call_operand.vmem [shape: f32[1,128], index: 6, kind: input, shape index: {}, may-alias: {6,12}]
  %s7 = inlined_call_operand.vmem [shape: f32[1,128], index: 7, kind: input, shape index: {}, may-alias: {7,13}]
  %s8 = inlined_call_operand.vmem [shape: bf16[128,128], index: 8, kind: input, shape index: {}]
  %s9 = inlined_call_operand.vmem [shape: f32[1,128], index: 9, kind: input, shape index: {}]
  %s10 = inlined_call_operand.vmem [shape: bf16[128,128], index: 10, kind: input, shape index: {}]
  %s11 = inlined_call_operand.vmem [shape: f32[1,128], index: 11, kind: input, shape index: {}]
  %s12 = inlined_call_operand.vmem [shape: f32[1,128], index: 12, kind: input, shape index: {}, may-alias: {6,12}]
  %s13 = inlined_call_operand.vmem [shape: f32[1,128], index: 13, kind: input, shape index: {}, may-alias: {7,13}]
  %s14 = inlined_call_operand.vmem [shape: bf16[16,128], index: 14, kind: output, shape index: {}]
  %s15 = sld [smem:[#allocation0]]
  $region66: #{flat_transformer_mean_log_scale_forward.6} parent=0
    _
  %s17 = ssub.s32 1, %s15
  %s18 = scalar_select 0, %s17, %s15
  // Predicated region
  $region2: #{flat_transformer_mean_log_scale_forward.6} parent=0 // pred_check
    _
  $region3: #{flat_transformer_mean_log_scale_forward.6} parent=0 // pred_check_branch
    %20 = sbr.rel (0) target = $region5
  $region4: #{flat_transformer_mean_log_scale_forward.6} parent=0 // pred_region
    _
  $region5: #{flat_transformer_mean_log_scale_forward.6} parent=0 // pred_fallthru
    _
  // Predicated region
  $region6: #{flat_transformer_mean_log_scale_forward.6} parent=0 // pred_check
    _
  $region7: #{flat_transformer_mean_log_scale_forward.6} parent=0 // pred_check_branch
    %22 = sbr.rel (0) target = $region9
  $region8: #{flat_transformer_mean_log_scale_forward.6} parent=0 // pred_region
    _
  $region9: #{flat_transformer_mean_log_scale_forward.6} parent=0 // pred_fallthru
    _
  // Predicated region
  $region10: #{flat_transformer_mean_log_scale_forward.6} parent=0 // pred_check
    _
  $region11: #{flat_transformer_mean_log_scale_forward.6} parent=0 // pred_check_branch
    %24 = sbr.rel (0) target = $region13
  $region12: #{flat_transformer_mean_log_scale_forward.6} parent=0 // pred_region
    _
  $region13: #{flat_transformer_mean_log_scale_forward.6} parent=0 // pred_fallthru
    _
  // Predicated region
  $region14: #{flat_transformer_mean_log_scale_forward.6} parent=0 // pred_check
    _
  $region15: #{flat_transformer_mean_log_scale_forward.6} parent=0 // pred_check_branch
    %26 = sbr.rel (0) target = $region17
  $region16: #{flat_transformer_mean_log_scale_forward.6} parent=0 // pred_region
    _
  $region17: #{flat_transformer_mean_log_scale_forward.6} parent=0 // pred_fallthru
    _
  // Predicated region
  $region18: #{flat_transformer_mean_log_scale_forward.6} parent=0 // pred_check
    _
  $region19: #{flat_transformer_mean_log_scale_forward.6} parent=0 // pred_check_branch
    %28 = sbr.rel (0) target = $region21
  $region20: #{flat_transformer_mean_log_scale_forward.6} parent=0 // pred_region
    _
  $region21: #{flat_transformer_mean_log_scale_forward.6} parent=0 // pred_fallthru
    _
  // Predicated region
  $region22: #{flat_transformer_mean_log_scale_forward.6} parent=0 // pred_check
    _
  $region23: #{flat_transformer_mean_log_scale_forward.6} parent=0 // pred_check_branch
    %30 = sbr.rel (0) target = $region25
  $region24: #{flat_transformer_mean_log_scale_forward.6} parent=0 // pred_region
    _
  $region25: #{flat_transformer_mean_log_scale_forward.6} parent=0 // pred_fallthru
    _
  // Predicated region
  $region26: #{flat_transformer_mean_log_scale_forward.6} parent=0 // pred_check
    _
  $region27: #{flat_transformer_mean_log_scale_forward.6} parent=0 // pred_check_branch
    %32 = sbr.rel (0) target = $region29
  $region28: #{flat_transformer_mean_log_scale_forward.6} parent=0 // pred_region
    _
  $region29: #{flat_transformer_mean_log_scale_forward.6} parent=0 // pred_fallthru
    _
  // Predicated region
  $region30: #{flat_transformer_mean_log_scale_forward.6} parent=0 // pred_check
    _
  $region31: #{flat_transformer_mean_log_scale_forward.6} parent=0 // pred_check_branch
    %34 = sbr.rel (0) target = $region33
  $region32: #{flat_transformer_mean_log_scale_forward.6} parent=0 // pred_region
    _
  $region33: #{flat_transformer_mean_log_scale_forward.6} parent=0 // pred_fallthru
    _
  // Predicated region
  $region34: #{flat_transformer_mean_log_scale_forward.6} parent=0 // pred_check
    _
  $region35: #{flat_transformer_mean_log_scale_forward.6} parent=0 // pred_check_branch
    %36 = sbr.rel (0) target = $region37
  $region36: #{flat_transformer_mean_log_scale_forward.6} parent=0 // pred_region
    _
  $region37: #{flat_transformer_mean_log_scale_forward.6} parent=0 // pred_fallthru
    _
  // Predicated region
  $region38: #{flat_transformer_mean_log_scale_forward.6} parent=0 // pred_check
    _
  $region39: #{flat_transformer_mean_log_scale_forward.6} parent=0 // pred_check_branch
    %38 = sbr.rel (0) target = $region41
  $region40: #{flat_transformer_mean_log_scale_forward.6} parent=0 // pred_region
    _
  $region41: #{flat_transformer_mean_log_scale_forward.6} parent=0 // pred_fallthru
    _
  // Predicated region
  $region42: #{flat_transformer_mean_log_scale_forward.6} parent=0 // pred_check
    _
  $region43: #{flat_transformer_mean_log_scale_forward.6} parent=0 // pred_check_branch
    %40 = sbr.rel (0) target = $region45
  $region44: #{flat_transformer_mean_log_scale_forward.6} parent=0 // pred_region
    _
  $region45: #{flat_transformer_mean_log_scale_forward.6} parent=0 // pred_fallthru
    _
  // Predicated region
  $region46: #{flat_transformer_mean_log_scale_forward.6} parent=0 // pred_check
    _
  $region47: #{flat_transformer_mean_log_scale_forward.6} parent=0 // pred_check_branch
    %42 = sbr.rel (0) target = $region49
  $region48: #{flat_transformer_mean_log_scale_forward.6} parent=0 // pred_region
    _
  $region49: #{flat_transformer_mean_log_scale_forward.6} parent=0 // pred_fallthru
    _
  // Predicated region
  $region50: #{flat_transformer_mean_log_scale_forward.6} parent=0 // pred_check
    _
  $region51: #{flat_transformer_mean_log_scale_forward.6} parent=0 // pred_check_branch
    %44 = sbr.rel (0) target = $region53
  $region52: #{flat_transformer_mean_log_scale_forward.6} parent=0 // pred_region
    _
  $region53: #{flat_transformer_mean_log_scale_forward.6} parent=0 // pred_fallthru
    _
  // Predicated region
  $region54: #{flat_transformer_mean_log_scale_forward.6} parent=0 // pred_check
    _
  $region55: #{flat_transformer_mean_log_scale_forward.6} parent=0 // pred_check_branch
    %46 = sbr.rel (0) target = $region57
  $region56: #{flat_transformer_mean_log_scale_forward.6} parent=0 // pred_region
    _
  $region57: #{flat_transformer_mean_log_scale_forward.6} parent=0 // pred_fallthru
    _
  %v48 = vld [vmem:[%s0] sm:$0xf]
  %v49 = vld [vmem:[%s0 + $0x4] sm:$0xf]
  %v50 = vunpack.c.l.bf16 %v48
  %v51 = vunpack.c.l.bf16 %v49
  %v52 = vlaneseq
  %v53 = vand.u32 %v52, 127
  %vm54 = vcmp.lt.s32.totalorder %v53, 32
  %v55 = vsel %vm54, 1, 0
  %v56 = vcvt.s32.f32 %v55
  %v57 = vld [vmem:[%s2] sm:$0xff]
  %v58 = vld [vmem:[%s2 + $0x8] sm:$0xf]
  %v59 = vld [vmem:[%s2 + $0xc] sm:$0xff]
  %v60 = vld [vmem:[%s2 + $0x14] sm:$0xf]
  %v61 = vld [vmem:[%s2 + $0x18] sm:$0xff]
  %v62 = vld [vmem:[%s2 + $0x20] sm:$0xf]
  %v63 = vld [vmem:[%s2 + $0x24] sm:$0xff]
  %v64 = vld [vmem:[%s2 + $0x2c] sm:$0xf]
  %v65 = vld [vmem:[%s2 + $0x30] sm:$0xff]
  %v66 = vld [vmem:[%s2 + $0x38] sm:$0xf]
  %v67 = vld [vmem:[%s2 + $0x3c] sm:$0xff]
  %v68 = vld [vmem:[%s2 + $0x44] sm:$0xf]
  %v69 = vld [vmem:[%s2 + $0x48] sm:$0xff]
  %v70 = vld [vmem:[%s2 + $0x50] sm:$0xf]
  %v71 = vld [vmem:[%s2 + $0x54] sm:$0xff]
  %v72 = vld [vmem:[%s2 + $0x5c] sm:$0xf]
  %v73 = vld [vmem:[%s2 + $0x60] sm:$0xff]
  %v74 = vld [vmem:[%s2 + $0x68] sm:$0xf]
  %v75 = vld [vmem:[%s2 + $0x6c] sm:$0xff]
  %v76 = vld [vmem:[%s2 + $0x74] sm:$0xf]
  %v77 = vld [vmem:[%s2 + $0x78] sm:$0xff]
  %v78 = vld [vmem:[%s2 + $0x80] sm:$0xf]
  %v79 = vld [vmem:[%s2 + $0x84] sm:$0xff]
  %v80 = vld [vmem:[%s2 + $0x8c] sm:$0xf]
  %v81 = vld [vmem:[%s2 + $0x90] sm:$0xff]
  %v82 = vld [vmem:[%s2 + $0x98] sm:$0xf]
  %v83 = vld [vmem:[%s2 + $0x9c] sm:$0xff]
  %v84 = vld [vmem:[%s2 + $0xa4] sm:$0xf]
  %v85 = vld [vmem:[%s2 + $0xa8] sm:$0xff]
  %v86 = vld [vmem:[%s2 + $0xb0] sm:$0xf]
  %v87 = vld [vmem:[%s2 + $0xb4] sm:$0xff]
  %v88 = vld [vmem:[%s2 + $0xbc] sm:$0xf]
  %v89 = vld [vmem:[%s3] sm:$0x7]
  %v91 = vlaneseq
  %v92 = vshrl.u32 %v91, 7
  %v93 = vsub.s32 0, %v92
  %v94 = vrot.slane %v89, %v93
  %v95 = vlaneseq
  %v96 = vshrl.u32 %v95, 7
  %v97 = vsub.s32 1, %v96
  %v98 = vrot.slane %v89, %v97
  %v99 = vlaneseq
  %v100 = vshrl.u32 %v99, 7
  %v101 = vsub.s32 2, %v100
  %v102 = vrot.slane %v89, %v101
  %v108 = vunpack.c.l.b16 %v48
  %v109 = vunpack.c.l.b16 %v49
  %v110 = vpack.c.b16 %v109, %v108
  %v144 = vunpack.c.l.b16 %v57
  %v145 = vunpack.c.h.b16 %v57
  %v146 = vunpack.c.l.b16 %v58
  %v147 = vunpack.c.l.b16 %v59
  %v148 = vunpack.c.h.b16 %v59
  %v149 = vunpack.c.l.b16 %v60
  %v150 = vunpack.c.l.b16 %v61
  %v151 = vunpack.c.h.b16 %v61
  %v152 = vunpack.c.l.b16 %v62
  %v153 = vunpack.c.l.b16 %v63
  %v154 = vunpack.c.h.b16 %v63
  %v155 = vunpack.c.l.b16 %v64
  %v156 = vunpack.c.l.b16 %v65
  %v157 = vunpack.c.h.b16 %v65
  %v158 = vunpack.c.l.b16 %v66
  %v159 = vunpack.c.l.b16 %v67
  %v160 = vunpack.c.h.b16 %v67
  %v161 = vunpack.c.l.b16 %v68
  %v162 = vunpack.c.l.b16 %v69
  %v163 = vunpack.c.h.b16 %v69
  %v164 = vunpack.c.l.b16 %v70
  %v165 = vunpack.c.l.b16 %v71
  %v166 = vunpack.c.h.b16 %v71
  %v167 = vunpack.c.l.b16 %v72
  %v168 = vunpack.c.l.b16 %v73
  %v169 = vunpack.c.h.b16 %v73
  %v170 = vunpack.c.l.b16 %v74
  %v171 = vunpack.c.l.b16 %v75
  %v172 = vunpack.c.h.b16 %v75
  %v173 = vunpack.c.l.b16 %v76
  %v174 = vunpack.c.l.b16 %v77
  %v175 = vunpack.c.h.b16 %v77
  %v176 = vunpack.c.l.b16 %v78
  %v177 = vunpack.c.l.b16 %v79
  %v178 = vunpack.c.h.b16 %v79
  %v179 = vunpack.c.l.b16 %v80
  %v180 = vunpack.c.l.b16 %v81
  %v181 = vunpack.c.h.b16 %v81
  %v182 = vunpack.c.l.b16 %v82
  %v183 = vunpack.c.l.b16 %v83
  %v184 = vunpack.c.h.b16 %v83
  %v185 = vunpack.c.l.b16 %v84
  %v186 = vunpack.c.l.b16 %v85
  %v187 = vunpack.c.h.b16 %v85
  %v188 = vunpack.c.l.b16 %v86
  %v189 = vunpack.c.l.b16 %v87
  %v190 = vunpack.c.h.b16 %v87
  %v191 = vunpack.c.l.b16 %v88
  %v192 = vpack.c.b16 %v147, %v144
  %v193 = vpack.c.b16 %v148, %v145
  %v194 = vpack.c.b16 %v149, %v146
  %v195 = vpack.c.b16 %v153, %v150
  %v196 = vpack.c.b16 %v154, %v151
  %v197 = vpack.c.b16 %v155, %v152
  %v198 = vpack.c.b16 %v159, %v156
  %v199 = vpack.c.b16 %v160, %v157
  %v200 = vpack.c.b16 %v161, %v158
  %v201 = vpack.c.b16 %v165, %v162
  %v202 = vpack.c.b16 %v166, %v163
  %v203 = vpack.c.b16 %v167, %v164
  %v204 = vpack.c.b16 %v171, %v168
  %v205 = vpack.c.b16 %v172, %v169
  %v206 = vpack.c.b16 %v173, %v170
  %v207 = vpack.c.b16 %v177, %v174
  %v208 = vpack.c.b16 %v178, %v175
  %v209 = vpack.c.b16 %v179, %v176
  %v210 = vpack.c.b16 %v183, %v180
  %v211 = vpack.c.b16 %v184, %v181
  %v212 = vpack.c.b16 %v185, %v182
  %v213 = vpack.c.b16 %v189, %v186
  %v214 = vpack.c.b16 %v190, %v187
  %v215 = vpack.c.b16 %v191, %v188
  %240 = vmatprep.subr.bf16.mxu0 %v214
  %241 = vmatpush1.bf16.msra.mxu0 %v213
  %242 = vmatprep.subr.bf16.mxu0 %v211
  %243 = vmatpush1.bf16.msra.mxu0 %v210
  %244 = vmatprep.subr.bf16.mxu0 %v208
  %245 = vmatpush1.bf16.msra.mxu0 %v207
  %246 = vmatprep.subr.bf16.mxu0 %v205
  %247 = vmatpush1.bf16.msra.mxu0 %v204
  %248 = vmatprep.subr.bf16.mxu0 %v202
  %249 = vmatpush1.bf16.msra.mxu0 %v201
  %250 = vmatprep.subr.bf16.mxu0 %v199
  %251 = vmatpush1.bf16.msra.mxu0 %v198
  %252 = vmatprep.subr.bf16.mxu0 %v196
  %253 = vmatpush1.bf16.msra.mxu0 %v195
  %254 = vmatprep.subr.bf16.mxu0 %v193
  %255 = vmatpush1.bf16.msra.mxu0 %v192
  %256 = vmatprep.subr.bf16.mxu0 0
  %257 = vmatpush2.bf16.msra.mxu0 0
  %258 = vmatprep.subr.bf16.mxu0 0
  %259 = vmatpush2.bf16.msra.mxu0 0
  %260 = vmatprep.subr.bf16.mxu0 0
  %261 = vmatpush2.bf16.msra.mxu0 0
  %262 = vmatprep.subr.bf16.mxu0 0
  %263 = vmatpush2.bf16.msra.mxu0 0
  %264 = vmatprep.subr.bf16.mxu0 0
  %265 = vmatpush2.bf16.msra.mxu0 0
  %266 = vmatprep.subr.bf16.mxu0 0
  %267 = vmatpush2.bf16.msra.mxu0 0
  %268 = vmatprep.subr.bf16.mxu0 0
  %269 = vmatpush2.bf16.msra.mxu0 0
  %270 = vmatprep.subr.bf16.mxu0 0
  %271 = vmatpush2.bf16.msra.mxu0 0
  %272 = vmatprep.mubr.bf16.mxu0 0
  %273 = vmatmul.mubr.bf16.gmra.mxu0 %v110
  %v274 = vpop.f32.mrf.mxu0
  %v275 = vadd.f32 %v94, %v274
  %v276 = vpop.f32.mrf.mxu0
  %v277 = vadd.f32 %v98, %v276
  %v278 = vpop.f32.mrf.mxu0
  %v279 = vadd.f32 %v94, %v278
  %v280 = vpop.f32.mrf.mxu0
  %v281 = vadd.f32 %v98, %v280
  %282 = vdwg.mxu0
  %283 = vmatprep.subr.bf16.mxu0 0
  %284 = vmatpush1.bf16.msra.mxu0 %v215
  %285 = vmatprep.subr.bf16.mxu0 0
  %286 = vmatpush1.bf16.msra.mxu0 %v212
  %287 = vmatprep.subr.bf16.mxu0 0
  %288 = vmatpush1.bf16.msra.mxu0 %v209
  %289 = vmatprep.subr.bf16.mxu0 0
  %290 = vmatpush1.bf16.msra.mxu0 %v206
  %291 = vmatprep.subr.bf16.mxu0 0
  %292 = vmatpush1.bf16.msra.mxu0 %v203
  %293 = vmatprep.subr.bf16.mxu0 0
  %294 = vmatpush1.bf16.msra.mxu0 %v200
  %295 = vmatprep.subr.bf16.mxu0 0
  %296 = vmatpush1.bf16.msra.mxu0 %v197
  %297 = vmatprep.subr.bf16.mxu0 0
  %298 = vmatpush1.bf16.msra.mxu0 %v194
  %299 = vmatprep.subr.bf16.mxu0 0
  %300 = vmatpush2.bf16.msra.mxu0 0
  %301 = vmatprep.subr.bf16.mxu0 0
  %302 = vmatpush2.bf16.msra.mxu0 0
  %303 = vmatprep.subr.bf16.mxu0 0
  %304 = vmatpush2.bf16.msra.mxu0 0
  %305 = vmatprep.subr.bf16.mxu0 0
  %306 = vmatpush2.bf16.msra.mxu0 0
  %307 = vmatprep.subr.bf16.mxu0 0
  %308 = vmatpush2.bf16.msra.mxu0 0
  %309 = vmatprep.subr.bf16.mxu0 0
  %310 = vmatpush2.bf16.msra.mxu0 0
  %311 = vmatprep.subr.bf16.mxu0 0
  %312 = vmatpush2.bf16.msra.mxu0 0
  %313 = vmatprep.subr.bf16.mxu0 0
  %314 = vmatpush2.bf16.msra.mxu0 0
  %315 = vmatprep.mubr.bf16.mxu0 0
  %316 = vmatmul.mubr.bf16.gmra.mxu0 %v110
  %v317 = vpop.f32.mrf.mxu0
  %v318 = vadd.f32 %v102, %v317
  %v319 = vpop.f32.mrf.mxu0
  %v320 = vpop.f32.mrf.mxu0
  %v321 = vadd.f32 %v102, %v320
  %v322 = vpop.f32.mrf.mxu0
  %323 = vdwg.mxu0
  %v324 = vld [vmem:[%s1] sm:$0xff]
  %v325 = vld [vmem:[%s1 + $0x8] sm:$0xff]
  %v326 = vpack.c.bf16 %v275, %v275
  %v327 = vpack.c.bf16 %v277, %v277
  %v328 = vpack.c.bf16 %v318, %v318
  %vm329 = vcmask 261120
  %v331 = vsel %vm329, %v326, 0
  %v334 = vsel %vm329, %v327, 0
  %336 = vmatprep.subr.bf16.mxu0 0
  %337 = vmatpush1.bf16.xpose.msra.mxu0 0
  %338 = vmatprep.subr.bf16.mxu0 0
  %339 = vmatpush1.bf16.xpose.msra.mxu0 0
  %340 = vmatprep.subr.bf16.mxu0 0
  %341 = vmatpush1.bf16.xpose.msra.mxu0 0
  %342 = vmatprep.subr.bf16.mxu0 0
  %343 = vmatpush1.bf16.xpose.msra.mxu0 0
  %344 = vmatprep.subr.bf16.mxu0 0
  %345 = vmatpush1.bf16.xpose.msra.mxu0 0
  %346 = vmatprep.subr.bf16.mxu0 0
  %347 = vmatpush1.bf16.xpose.msra.mxu0 0
  %348 = vmatprep.subr.bf16.mxu0 0
  %349 = vmatpush1.bf16.xpose.msra.mxu0 0
  %350 = vmatprep.subr.bf16.mxu0 0
  %351 = vmatpush1.bf16.xpose.msra.mxu0 %v334
  %352 = vmatprep.subr.bf16.mxu0 0
  %353 = vmatpush2.bf16.xpose.msra.mxu0 0
  %354 = vmatprep.subr.bf16.mxu0 0
  %355 = vmatpush2.bf16.xpose.msra.mxu0 0
  %356 = vmatprep.subr.bf16.mxu0 0
  %357 = vmatpush2.bf16.xpose.msra.mxu0 0
  %358 = vmatprep.subr.bf16.mxu0 0
  %359 = vmatpush2.bf16.xpose.msra.mxu0 0
  %360 = vmatprep.subr.bf16.mxu0 0
  %361 = vmatpush2.bf16.xpose.msra.mxu0 0
  %362 = vmatprep.subr.bf16.mxu0 0
  %363 = vmatpush2.bf16.xpose.msra.mxu0 0
  %364 = vmatprep.subr.bf16.mxu0 0
  %365 = vmatpush2.bf16.xpose.msra.mxu0 0
  %366 = vmatprep.subr.bf16.mxu0 0
  %367 = vmatpush2.bf16.xpose.msra.mxu0 0
  %368 = vmatprep.mubr.bf16.mxu0 0
  %369 = vmatmul.mubr.bf16.gmra.mxu0 %v331
  %v370 = vpop.f32.mrf.mxu0
  %v371 = vadd.f32 0.0, %v370
  %v372 = vpop.f32.mrf.mxu0
  %v373 = vpop.f32.mrf.mxu0
  %v374 = vpop.f32.mrf.mxu0
  %375 = vdwg.mxu0
  %v376 = vmul.f32 %v371, 0.35355338
  %v377 = vlaneseq
  %v378 = vshrl.u32 %v377, 7
  %v379 = vsub.s32 0, %v378
  %v380 = vrot.slane %v324, %v379
  %v381 = vadd.f32 %v376, %v380
  %vm382 = vcmask 64512
  %v383 = vsel %vm382, %v381, -inf
  %384 = vmax.xlane.f32.xlu0 %v383
  %v385 = vpop.xlane.xlu0 %384
  %v386 = vsub.f32 %v381, %v385
  %v387 = vmul.f32 %v386, 1.442695
  %v388 = vpow.pop %v387
  %v389 = vsel %vm382, %v388, 0.0
  %390 = vadd.xlane.f32.xlu0 %v389
  %v391 = vpop.xlane.xlu0 %390
  %v392 = vrcp.pop %v391
  %v393 = vmul.f32 %v388, %v392
  %v394 = vpack.c.bf16 %v393, %v393
  %v396 = vsel %vm382, %v394, 0
  %vm398 = vcmask 1043456
  %v400 = vsel %vm398, %v328, 0
  %402 = vmatprep.subr.bf16.mxu0 0
  %403 = vmatpush1.bf16.msra.mxu0 0
  %404 = vmatprep.subr.bf16.mxu0 0
  %405 = vmatpush1.bf16.msra.mxu0 0
  %406 = vmatprep.subr.bf16.mxu0 0
  %407 = vmatpush1.bf16.msra.mxu0 0
  %408 = vmatprep.subr.bf16.mxu0 0
  %409 = vmatpush1.bf16.msra.mxu0 0
  %410 = vmatprep.subr.bf16.mxu0 0
  %411 = vmatpush1.bf16.msra.mxu0 0
  %412 = vmatprep.subr.bf16.mxu0 0
  %413 = vmatpush1.bf16.msra.mxu0 0
  %414 = vmatprep.subr.bf16.mxu0 0
  %415 = vmatpush1.bf16.msra.mxu0 0
  %416 = vmatprep.subr.bf16.mxu0 0
  %417 = vmatpush1.bf16.msra.mxu0 %v400
  %418 = vmatprep.subr.bf16.mxu0 0
  %419 = vmatpush2.bf16.msra.mxu0 0
  %420 = vmatprep.subr.bf16.mxu0 0
  %421 = vmatpush2.bf16.msra.mxu0 0
  %422 = vmatprep.subr.bf16.mxu0 0
  %423 = vmatpush2.bf16.msra.mxu0 0
  %424 = vmatprep.subr.bf16.mxu0 0
  %425 = vmatpush2.bf16.msra.mxu0 0
  %426 = vmatprep.subr.bf16.mxu0 0
  %427 = vmatpush2.bf16.msra.mxu0 0
  %428 = vmatprep.subr.bf16.mxu0 0
  %429 = vmatpush2.bf16.msra.mxu0 0
  %430 = vmatprep.subr.bf16.mxu0 0
  %431 = vmatpush2.bf16.msra.mxu0 0
  %432 = vmatprep.subr.bf16.mxu0 0
  %433 = vmatpush2.bf16.msra.mxu0 0
  %434 = vmatprep.mubr.bf16.mxu0 0
  %435 = vmatmul.mubr.bf16.gmra.mxu0 %v396
  %v436 = vpop.f32.mrf.mxu0
  %v437 = vadd.f32 0.0, %v436
  %v438 = vpop.f32.mrf.mxu0
  %v439 = vpop.f32.mrf.mxu0
  %v440 = vpop.f32.mrf.mxu0
  %441 = vdwg.mxu0
  %443 = vrot.lane.b32.xlu0 %v326, 96
  %v444 = vpop.permute.xlu0 %443
  %446 = vrot.lane.b32.xlu0 %v327, 96
  %v447 = vpop.permute.xlu0 %446
  %v449 = vsel %vm329, %v444, 0
  %v452 = vsel %vm329, %v447, 0
  %454 = vmatprep.subr.bf16.mxu0 0
  %455 = vmatpush1.bf16.xpose.msra.mxu0 0
  %456 = vmatprep.subr.bf16.mxu0 0
  %457 = vmatpush1.bf16.xpose.msra.mxu0 0
  %458 = vmatprep.subr.bf16.mxu0 0
  %459 = vmatpush1.bf16.xpose.msra.mxu0 0
  %460 = vmatprep.subr.bf16.mxu0 0
  %461 = vmatpush1.bf16.xpose.msra.mxu0 0
  %462 = vmatprep.subr.bf16.mxu0 0
  %463 = vmatpush1.bf16.xpose.msra.mxu0 0
  %464 = vmatprep.subr.bf16.mxu0 0
  %465 = vmatpush1.bf16.xpose.msra.mxu0 0
  %466 = vmatprep.subr.bf16.mxu0 0
  %467 = vmatpush1.bf16.xpose.msra.mxu0 0
  %468 = vmatprep.subr.bf16.mxu0 0
  %469 = vmatpush1.bf16.xpose.msra.mxu0 %v452
  %470 = vmatprep.subr.bf16.mxu0 0
  %471 = vmatpush2.bf16.xpose.msra.mxu0 0
  %472 = vmatprep.subr.bf16.mxu0 0
  %473 = vmatpush2.bf16.xpose.msra.mxu0 0
  %474 = vmatprep.subr.bf16.mxu0 0
  %475 = vmatpush2.bf16.xpose.msra.mxu0 0
  %476 = vmatprep.subr.bf16.mxu0 0
  %477 = vmatpush2.bf16.xpose.msra.mxu0 0
  %478 = vmatprep.subr.bf16.mxu0 0
  %479 = vmatpush2.bf16.xpose.msra.mxu0 0
  %480 = vmatprep.subr.bf16.mxu0 0
  %481 = vmatpush2.bf16.xpose.msra.mxu0 0
  %482 = vmatprep.subr.bf16.mxu0 0
  %483 = vmatpush2.bf16.xpose.msra.mxu0 0
  %484 = vmatprep.subr.bf16.mxu0 0
  %485 = vmatpush2.bf16.xpose.msra.mxu0 0
  %486 = vmatprep.mubr.bf16.mxu0 0
  %487 = vmatmul.mubr.bf16.gmra.mxu0 %v449
  %v488 = vpop.f32.mrf.mxu0
  %v489 = vadd.f32 0.0, %v488
  %v490 = vpop.f32.mrf.mxu0
  %v491 = vpop.f32.mrf.mxu0
  %v492 = vpop.f32.mrf.mxu0
  %493 = vdwg.mxu0
  %v494 = vmul.f32 %v489, 0.35355338
  %v495 = vadd.f32 %v494, %v380
  %v496 = vsel %vm382, %v495, -inf
  %497 = vmax.xlane.f32.xlu0 %v496
  %v498 = vpop.xlane.xlu0 %497
  %v499 = vsub.f32 %v495, %v498
  %v500 = vmul.f32 %v499, 1.442695
  %v501 = vpow.pop %v500
  %v502 = vsel %vm382, %v501, 0.0
  %503 = vadd.xlane.f32.xlu0 %v502
  %v504 = vpop.xlane.xlu0 %503
  %v505 = vrcp.pop %v504
  %v506 = vmul.f32 %v501, %v505
  %v507 = vpack.c.bf16 %v506, %v506
  %509 = vrot.lane.b32.xlu0 %v328, 96
  %v510 = vpop.permute.xlu0 %509
  %v512 = vsel %vm382, %v507, 0
  %v515 = vsel %vm398, %v510, 0
  %517 = vmatprep.subr.bf16.mxu0 0
  %518 = vmatpush1.bf16.msra.mxu0 0
  %519 = vmatprep.subr.bf16.mxu0 0
  %520 = vmatpush1.bf16.msra.mxu0 0
  %521 = vmatprep.subr.bf16.mxu0 0
  %522 = vmatpush1.bf16.msra.mxu0 0
  %523 = vmatprep.subr.bf16.mxu0 0
  %524 = vmatpush1.bf16.msra.mxu0 0
  %525 = vmatprep.subr.bf16.mxu0 0
  %526 = vmatpush1.bf16.msra.mxu0 0
  %527 = vmatprep.subr.bf16.mxu0 0
  %528 = vmatpush1.bf16.msra.mxu0 0
  %529 = vmatprep.subr.bf16.mxu0 0
  %530 = vmatpush1.bf16.msra.mxu0 0
  %531 = vmatprep.subr.bf16.mxu0 0
  %532 = vmatpush1.bf16.msra.mxu0 %v515
  %533 = vmatprep.subr.bf16.mxu0 0
  %534 = vmatpush2.bf16.msra.mxu0 0
  %535 = vmatprep.subr.bf16.mxu0 0
  %536 = vmatpush2.bf16.msra.mxu0 0
  %537 = vmatprep.subr.bf16.mxu0 0
  %538 = vmatpush2.bf16.msra.mxu0 0
  %539 = vmatprep.subr.bf16.mxu0 0
  %540 = vmatpush2.bf16.msra.mxu0 0
  %541 = vmatprep.subr.bf16.mxu0 0
  %542 = vmatpush2.bf16.msra.mxu0 0
  %543 = vmatprep.subr.bf16.mxu0 0
  %544 = vmatpush2.bf16.msra.mxu0 0
  %545 = vmatprep.subr.bf16.mxu0 0
  %546 = vmatpush2.bf16.msra.mxu0 0
  %547 = vmatprep.subr.bf16.mxu0 0
  %548 = vmatpush2.bf16.msra.mxu0 0
  %549 = vmatprep.mubr.bf16.mxu0 0
  %550 = vmatmul.mubr.bf16.gmra.mxu0 %v512
  %v551 = vpop.f32.mrf.mxu0
  %v552 = vadd.f32 0.0, %v551
  %v553 = vpop.f32.mrf.mxu0
  %v554 = vpop.f32.mrf.mxu0
  %v555 = vpop.f32.mrf.mxu0
  %556 = vdwg.mxu0
  %557 = vrot.lane.b32.xlu0 %v326, 64
  %v558 = vpop.permute.xlu0 %557
  %559 = vrot.lane.b32.xlu0 %v327, 64
  %v560 = vpop.permute.xlu0 %559
  %v562 = vsel %vm329, %v558, 0
  %v565 = vsel %vm329, %v560, 0
  %567 = vmatprep.subr.bf16.mxu0 0
  %568 = vmatpush1.bf16.xpose.msra.mxu0 0
  %569 = vmatprep.subr.bf16.mxu0 0
  %570 = vmatpush1.bf16.xpose.msra.mxu0 0
  %571 = vmatprep.subr.bf16.mxu0 0
  %572 = vmatpush1.bf16.xpose.msra.mxu0 0
  %573 = vmatprep.subr.bf16.mxu0 0
  %574 = vmatpush1.bf16.xpose.msra.mxu0 0
  %575 = vmatprep.subr.bf16.mxu0 0
  %576 = vmatpush1.bf16.xpose.msra.mxu0 0
  %577 = vmatprep.subr.bf16.mxu0 0
  %578 = vmatpush1.bf16.xpose.msra.mxu0 0
  %579 = vmatprep.subr.bf16.mxu0 0
  %580 = vmatpush1.bf16.xpose.msra.mxu0 0
  %581 = vmatprep.subr.bf16.mxu0 0
  %582 = vmatpush1.bf16.xpose.msra.mxu0 %v565
  %583 = vmatprep.subr.bf16.mxu0 0
  %584 = vmatpush2.bf16.xpose.msra.mxu0 0
  %585 = vmatprep.subr.bf16.mxu0 0
  %586 = vmatpush2.bf16.xpose.msra.mxu0 0
  %587 = vmatprep.subr.bf16.mxu0 0
  %588 = vmatpush2.bf16.xpose.msra.mxu0 0
  %589 = vmatprep.subr.bf16.mxu0 0
  %590 = vmatpush2.bf16.xpose.msra.mxu0 0
  %591 = vmatprep.subr.bf16.mxu0 0
  %592 = vmatpush2.bf16.xpose.msra.mxu0 0
  %593 = vmatprep.subr.bf16.mxu0 0
  %594 = vmatpush2.bf16.xpose.msra.mxu0 0
  %595 = vmatprep.subr.bf16.mxu0 0
  %596 = vmatpush2.bf16.xpose.msra.mxu0 0
  %597 = vmatprep.subr.bf16.mxu0 0
  %598 = vmatpush2.bf16.xpose.msra.mxu0 0
  %599 = vmatprep.mubr.bf16.mxu0 0
  %600 = vmatmul.mubr.bf16.gmra.mxu0 %v562
  %v601 = vpop.f32.mrf.mxu0
  %v602 = vadd.f32 0.0, %v601
  %v603 = vpop.f32.mrf.mxu0
  %v604 = vpop.f32.mrf.mxu0
  %v605 = vpop.f32.mrf.mxu0
  %606 = vdwg.mxu0
  %v607 = vmul.f32 %v602, 0.35355338
  %v608 = vadd.f32 %v607, %v380
  %v609 = vsel %vm382, %v608, -inf
  %610 = vmax.xlane.f32.xlu0 %v609
  %v611 = vpop.xlane.xlu0 %610
  %v612 = vsub.f32 %v608, %v611
  %v613 = vmul.f32 %v612, 1.442695
  %v614 = vpow.pop %v613
  %v615 = vsel %vm382, %v614, 0.0
  %616 = vadd.xlane.f32.xlu0 %v615
  %v617 = vpop.xlane.xlu0 %616
  %v618 = vrcp.pop %v617
  %v619 = vmul.f32 %v614, %v618
  %v620 = vpack.c.bf16 %v619, %v619
  %621 = vrot.lane.b32.xlu0 %v328, 64
  %v622 = vpop.permute.xlu0 %621
  %v624 = vsel %vm382, %v620, 0
  %v627 = vsel %vm398, %v622, 0
  %629 = vmatprep.subr.bf16.mxu0 0
  %630 = vmatpush1.bf16.msra.mxu0 0
  %631 = vmatprep.subr.bf16.mxu0 0
  %632 = vmatpush1.bf16.msra.mxu0 0
  %633 = vmatprep.subr.bf16.mxu0 0
  %634 = vmatpush1.bf16.msra.mxu0 0
  %635 = vmatprep.subr.bf16.mxu0 0
  %636 = vmatpush1.bf16.msra.mxu0 0
  %637 = vmatprep.subr.bf16.mxu0 0
  %638 = vmatpush1.bf16.msra.mxu0 0
  %639 = vmatprep.subr.bf16.mxu0 0
  %640 = vmatpush1.bf16.msra.mxu0 0
  %641 = vmatprep.subr.bf16.mxu0 0
  %642 = vmatpush1.bf16.msra.mxu0 0
  %643 = vmatprep.subr.bf16.mxu0 0
  %644 = vmatpush1.bf16.msra.mxu0 %v627
  %645 = vmatprep.subr.bf16.mxu0 0
  %646 = vmatpush2.bf16.msra.mxu0 0
  %647 = vmatprep.subr.bf16.mxu0 0
  %648 = vmatpush2.bf16.msra.mxu0 0
  %649 = vmatprep.subr.bf16.mxu0 0
  %650 = vmatpush2.bf16.msra.mxu0 0
  %651 = vmatprep.subr.bf16.mxu0 0
  %652 = vmatpush2.bf16.msra.mxu0 0
  %653 = vmatprep.subr.bf16.mxu0 0
  %654 = vmatpush2.bf16.msra.mxu0 0
  %655 = vmatprep.subr.bf16.mxu0 0
  %656 = vmatpush2.bf16.msra.mxu0 0
  %657 = vmatprep.subr.bf16.mxu0 0
  %658 = vmatpush2.bf16.msra.mxu0 0
  %659 = vmatprep.subr.bf16.mxu0 0
  %660 = vmatpush2.bf16.msra.mxu0 0
  %661 = vmatprep.mubr.bf16.mxu0 0
  %662 = vmatmul.mubr.bf16.gmra.mxu0 %v624
  %v663 = vpop.f32.mrf.mxu0
  %v664 = vadd.f32 0.0, %v663
  %v665 = vpop.f32.mrf.mxu0
  %v666 = vpop.f32.mrf.mxu0
  %v667 = vpop.f32.mrf.mxu0
  %668 = vdwg.mxu0
  %669 = vrot.lane.b32.xlu0 %v326, 32
  %v670 = vpop.permute.xlu0 %669
  %671 = vrot.lane.b32.xlu0 %v327, 32
  %v672 = vpop.permute.xlu0 %671
  %v674 = vsel %vm329, %v670, 0
  %v677 = vsel %vm329, %v672, 0
  %679 = vmatprep.subr.bf16.mxu0 0
  %680 = vmatpush1.bf16.xpose.msra.mxu0 0
  %681 = vmatprep.subr.bf16.mxu0 0
  %682 = vmatpush1.bf16.xpose.msra.mxu0 0
  %683 = vmatprep.subr.bf16.mxu0 0
  %684 = vmatpush1.bf16.xpose.msra.mxu0 0
  %685 = vmatprep.subr.bf16.mxu0 0
  %686 = vmatpush1.bf16.xpose.msra.mxu0 0
  %687 = vmatprep.subr.bf16.mxu0 0
  %688 = vmatpush1.bf16.xpose.msra.mxu0 0
  %689 = vmatprep.subr.bf16.mxu0 0
  %690 = vmatpush1.bf16.xpose.msra.mxu0 0
  %691 = vmatprep.subr.bf16.mxu0 0
  %692 = vmatpush1.bf16.xpose.msra.mxu0 0
  %693 = vmatprep.subr.bf16.mxu0 0
  %694 = vmatpush1.bf16.xpose.msra.mxu0 %v677
  %695 = vmatprep.subr.bf16.mxu0 0
  %696 = vmatpush2.bf16.xpose.msra.mxu0 0
  %697 = vmatprep.subr.bf16.mxu0 0
  %698 = vmatpush2.bf16.xpose.msra.mxu0 0
  %699 = vmatprep.subr.bf16.mxu0 0
  %700 = vmatpush2.bf16.xpose.msra.mxu0 0
  %701 = vmatprep.subr.bf16.mxu0 0
  %702 = vmatpush2.bf16.xpose.msra.mxu0 0
  %703 = vmatprep.subr.bf16.mxu0 0
  %704 = vmatpush2.bf16.xpose.msra.mxu0 0
  %705 = vmatprep.subr.bf16.mxu0 0
  %706 = vmatpush2.bf16.xpose.msra.mxu0 0
  %707 = vmatprep.subr.bf16.mxu0 0
  %708 = vmatpush2.bf16.xpose.msra.mxu0 0
  %709 = vmatprep.subr.bf16.mxu0 0
  %710 = vmatpush2.bf16.xpose.msra.mxu0 0
  %711 = vmatprep.mubr.bf16.mxu0 0
  %712 = vmatmul.mubr.bf16.gmra.mxu0 %v674
  %v713 = vpop.f32.mrf.mxu0
  %v714 = vadd.f32 0.0, %v713
  %v715 = vpop.f32.mrf.mxu0
  %v716 = vpop.f32.mrf.mxu0
  %v717 = vpop.f32.mrf.mxu0
  %718 = vdwg.mxu0
  %v719 = vmul.f32 %v714, 0.35355338
  %v720 = vadd.f32 %v719, %v380
  %v721 = vsel %vm382, %v720, -inf
  %722 = vmax.xlane.f32.xlu0 %v721
  %v723 = vpop.xlane.xlu0 %722
  %v724 = vsub.f32 %v720, %v723
  %v725 = vmul.f32 %v724, 1.442695
  %v726 = vpow.pop %v725
  %v727 = vsel %vm382, %v726, 0.0
  %728 = vadd.xlane.f32.xlu0 %v727
  %v729 = vpop.xlane.xlu0 %728
  %v730 = vrcp.pop %v729
  %v731 = vmul.f32 %v726, %v730
  %v732 = vpack.c.bf16 %v731, %v731
  %733 = vrot.lane.b32.xlu0 %v328, 32
  %v734 = vpop.permute.xlu0 %733
  %v736 = vsel %vm382, %v732, 0
  %v739 = vsel %vm398, %v734, 0
  %741 = vmatprep.subr.bf16.mxu0 0
  %742 = vmatpush1.bf16.msra.mxu0 0
  %743 = vmatprep.subr.bf16.mxu0 0
  %744 = vmatpush1.bf16.msra.mxu0 0
  %745 = vmatprep.subr.bf16.mxu0 0
  %746 = vmatpush1.bf16.msra.mxu0 0
  %747 = vmatprep.subr.bf16.mxu0 0
  %748 = vmatpush1.bf16.msra.mxu0 0
  %749 = vmatprep.subr.bf16.mxu0 0
  %750 = vmatpush1.bf16.msra.mxu0 0
  %751 = vmatprep.subr.bf16.mxu0 0
  %752 = vmatpush1.bf16.msra.mxu0 0
  %753 = vmatprep.subr.bf16.mxu0 0
  %754 = vmatpush1.bf16.msra.mxu0 0
  %755 = vmatprep.subr.bf16.mxu0 0
  %756 = vmatpush1.bf16.msra.mxu0 %v739
  %757 = vmatprep.subr.bf16.mxu0 0
  %758 = vmatpush2.bf16.msra.mxu0 0
  %759 = vmatprep.subr.bf16.mxu0 0
  %760 = vmatpush2.bf16.msra.mxu0 0
  %761 = vmatprep.subr.bf16.mxu0 0
  %762 = vmatpush2.bf16.msra.mxu0 0
  %763 = vmatprep.subr.bf16.mxu0 0
  %764 = vmatpush2.bf16.msra.mxu0 0
  %765 = vmatprep.subr.bf16.mxu0 0
  %766 = vmatpush2.bf16.msra.mxu0 0
  %767 = vmatprep.subr.bf16.mxu0 0
  %768 = vmatpush2.bf16.msra.mxu0 0
  %769 = vmatprep.subr.bf16.mxu0 0
  %770 = vmatpush2.bf16.msra.mxu0 0
  %771 = vmatprep.subr.bf16.mxu0 0
  %772 = vmatpush2.bf16.msra.mxu0 0
  %773 = vmatprep.mubr.bf16.mxu0 0
  %774 = vmatmul.mubr.bf16.gmra.mxu0 %v736
  %v775 = vpop.f32.mrf.mxu0
  %v776 = vadd.f32 0.0, %v775
  %v777 = vpop.f32.mrf.mxu0
  %v778 = vpop.f32.mrf.mxu0
  %v779 = vpop.f32.mrf.mxu0
  %780 = vdwg.mxu0
  %782 = vrot.lane.b32.xlu0 %v552, 32
  %v783 = vpop.permute.xlu0 %782
  %786 = vrot.lane.b32.xlu0 %v664, 64
  %v787 = vpop.permute.xlu0 %786
  %790 = vrot.lane.b32.xlu0 %v776, 96
  %v791 = vpop.permute.xlu0 %790
  %v793 = vsel %vm329, %v437, %v783
  %vm794 = vcmask 523264
  %v795 = vsel %vm794, %v793, %v787
  %vm796 = vcmask 785408
  %v797 = vsel %vm796, %v795, %v791
  %v798 = vpack.c.bf16 %v279, %v279
  %v799 = vpack.c.bf16 %v281, %v281
  %v800 = vpack.c.bf16 %v321, %v321
  %v802 = vsel %vm329, %v798, 0
  %v805 = vsel %vm329, %v799, 0
  %807 = vmatprep.subr.bf16.mxu0 0
  %808 = vmatpush1.bf16.xpose.msra.mxu0 0
  %809 = vmatprep.subr.bf16.mxu0 0
  %810 = vmatpush1.bf16.xpose.msra.mxu0 0
  %811 = vmatprep.subr.bf16.mxu0 0
  %812 = vmatpush1.bf16.xpose.msra.mxu0 0
  %813 = vmatprep.subr.bf16.mxu0 0
  %814 = vmatpush1.bf16.xpose.msra.mxu0 0
  %815 = vmatprep.subr.bf16.mxu0 0
  %816 = vmatpush1.bf16.xpose.msra.mxu0 0
  %817 = vmatprep.subr.bf16.mxu0 0
  %818 = vmatpush1.bf16.xpose.msra.mxu0 0
  %819 = vmatprep.subr.bf16.mxu0 0
  %820 = vmatpush1.bf16.xpose.msra.mxu0 0
  %821 = vmatprep.subr.bf16.mxu0 0
  %822 = vmatpush1.bf16.xpose.msra.mxu0 %v805
  %823 = vmatprep.subr.bf16.mxu0 0
  %824 = vmatpush2.bf16.xpose.msra.mxu0 0
  %825 = vmatprep.subr.bf16.mxu0 0
  %826 = vmatpush2.bf16.xpose.msra.mxu0 0
  %827 = vmatprep.subr.bf16.mxu0 0
  %828 = vmatpush2.bf16.xpose.msra.mxu0 0
  %829 = vmatprep.subr.bf16.mxu0 0
  %830 = vmatpush2.bf16.xpose.msra.mxu0 0
  %831 = vmatprep.subr.bf16.mxu0 0
  %832 = vmatpush2.bf16.xpose.msra.mxu0 0
  %833 = vmatprep.subr.bf16.mxu0 0
  %834 = vmatpush2.bf16.xpose.msra.mxu0 0
  %835 = vmatprep.subr.bf16.mxu0 0
  %836 = vmatpush2.bf16.xpose.msra.mxu0 0
  %837 = vmatprep.subr.bf16.mxu0 0
  %838 = vmatpush2.bf16.xpose.msra.mxu0 0
  %839 = vmatprep.mubr.bf16.mxu0 0
  %840 = vmatmul.mubr.bf16.gmra.mxu0 %v802
  %v841 = vpop.f32.mrf.mxu0
  %v842 = vadd.f32 0.0, %v841
  %v843 = vpop.f32.mrf.mxu0
  %v844 = vpop.f32.mrf.mxu0
  %v845 = vpop.f32.mrf.mxu0
  %846 = vdwg.mxu0
  %v847 = vmul.f32 %v842, 0.35355338
  %v848 = vlaneseq
  %v849 = vshrl.u32 %v848, 7
  %v850 = vsub.s32 0, %v849
  %v851 = vrot.slane %v325, %v850
  %v852 = vadd.f32 %v847, %v851
  %v853 = vsel %vm382, %v852, -inf
  %854 = vmax.xlane.f32.xlu0 %v853
  %v855 = vpop.xlane.xlu0 %854
  %v856 = vsub.f32 %v852, %v855
  %v857 = vmul.f32 %v856, 1.442695
  %v858 = vpow.pop %v857
  %v859 = vsel %vm382, %v858, 0.0
  %860 = vadd.xlane.f32.xlu0 %v859
  %v861 = vpop.xlane.xlu0 %860
  %v862 = vrcp.pop %v861
  %v863 = vmul.f32 %v858, %v862
  %v864 = vpack.c.bf16 %v863, %v863
  %v866 = vsel %vm382, %v864, 0
  %v869 = vsel %vm398, %v800, 0
  %871 = vmatprep.subr.bf16.mxu0 0
  %872 = vmatpush1.bf16.msra.mxu0 0
  %873 = vmatprep.subr.bf16.mxu0 0
  %874 = vmatpush1.bf16.msra.mxu0 0
  %875 = vmatprep.subr.bf16.mxu0 0
  %876 = vmatpush1.bf16.msra.mxu0 0
  %877 = vmatprep.subr.bf16.mxu0 0
  %878 = vmatpush1.bf16.msra.mxu0 0
  %879 = vmatprep.subr.bf16.mxu0 0
  %880 = vmatpush1.bf16.msra.mxu0 0
  %881 = vmatprep.subr.bf16.mxu0 0
  %882 = vmatpush1.bf16.msra.mxu0 0
  %883 = vmatprep.subr.bf16.mxu0 0
  %884 = vmatpush1.bf16.msra.mxu0 0
  %885 = vmatprep.subr.bf16.mxu0 0
  %886 = vmatpush1.bf16.msra.mxu0 %v869
  %887 = vmatprep.subr.bf16.mxu0 0
  %888 = vmatpush2.bf16.msra.mxu0 0
  %889 = vmatprep.subr.bf16.mxu0 0
  %890 = vmatpush2.bf16.msra.mxu0 0
  %891 = vmatprep.subr.bf16.mxu0 0
  %892 = vmatpush2.bf16.msra.mxu0 0
  %893 = vmatprep.subr.bf16.mxu0 0
  %894 = vmatpush2.bf16.msra.mxu0 0
  %895 = vmatprep.subr.bf16.mxu0 0
  %896 = vmatpush2.bf16.msra.mxu0 0
  %897 = vmatprep.subr.bf16.mxu0 0
  %898 = vmatpush2.bf16.msra.mxu0 0
  %899 = vmatprep.subr.bf16.mxu0 0
  %900 = vmatpush2.bf16.msra.mxu0 0
  %901 = vmatprep.subr.bf16.mxu0 0
  %902 = vmatpush2.bf16.msra.mxu0 0
  %903 = vmatprep.mubr.bf16.mxu0 0
  %904 = vmatmul.mubr.bf16.gmra.mxu0 %v866
  %v905 = vpop.f32.mrf.mxu0
  %v906 = vadd.f32 0.0, %v905
  %v907 = vpop.f32.mrf.mxu0
  %v908 = vpop.f32.mrf.mxu0
  %v909 = vpop.f32.mrf.mxu0
  %910 = vdwg.mxu0
  %912 = vrot.lane.b32.xlu0 %v798, 96
  %v913 = vpop.permute.xlu0 %912
  %915 = vrot.lane.b32.xlu0 %v799, 96
  %v916 = vpop.permute.xlu0 %915
  %v918 = vsel %vm329, %v913, 0
  %v921 = vsel %vm329, %v916, 0
  %923 = vmatprep.subr.bf16.mxu0 0
  %924 = vmatpush1.bf16.xpose.msra.mxu0 0
  %925 = vmatprep.subr.bf16.mxu0 0
  %926 = vmatpush1.bf16.xpose.msra.mxu0 0
  %927 = vmatprep.subr.bf16.mxu0 0
  %928 = vmatpush1.bf16.xpose.msra.mxu0 0
  %929 = vmatprep.subr.bf16.mxu0 0
  %930 = vmatpush1.bf16.xpose.msra.mxu0 0
  %931 = vmatprep.subr.bf16.mxu0 0
  %932 = vmatpush1.bf16.xpose.msra.mxu0 0
  %933 = vmatprep.subr.bf16.mxu0 0
  %934 = vmatpush1.bf16.xpose.msra.mxu0 0
  %935 = vmatprep.subr.bf16.mxu0 0
  %936 = vmatpush1.bf16.xpose.msra.mxu0 0
  %937 = vmatprep.subr.bf16.mxu0 0
  %938 = vmatpush1.bf16.xpose.msra.mxu0 %v921
  %939 = vmatprep.subr.bf16.mxu0 0
  %940 = vmatpush2.bf16.xpose.msra.mxu0 0
  %941 = vmatprep.subr.bf16.mxu0 0
  %942 = vmatpush2.bf16.xpose.msra.mxu0 0
  %943 = vmatprep.subr.bf16.mxu0 0
  %944 = vmatpush2.bf16.xpose.msra.mxu0 0
  %945 = vmatprep.subr.bf16.mxu0 0
  %946 = vmatpush2.bf16.xpose.msra.mxu0 0
  %947 = vmatprep.subr.bf16.mxu0 0
  %948 = vmatpush2.bf16.xpose.msra.mxu0 0
  %949 = vmatprep.subr.bf16.mxu0 0
  %950 = vmatpush2.bf16.xpose.msra.mxu0 0
  %951 = vmatprep.subr.bf16.mxu0 0
  %952 = vmatpush2.bf16.xpose.msra.mxu0 0
  %953 = vmatprep.subr.bf16.mxu0 0
  %954 = vmatpush2.bf16.xpose.msra.mxu0 0
  %955 = vmatprep.mubr.bf16.mxu0 0
  %956 = vmatmul.mubr.bf16.gmra.mxu0 %v918
  %v957 = vpop.f32.mrf.mxu0
  %v958 = vadd.f32 0.0, %v957
  %v959 = vpop.f32.mrf.mxu0
  %v960 = vpop.f32.mrf.mxu0
  %v961 = vpop.f32.mrf.mxu0
  %962 = vdwg.mxu0
  %v963 = vmul.f32 %v958, 0.35355338
  %v964 = vadd.f32 %v963, %v851
  %v965 = vsel %vm382, %v964, -inf
  %966 = vmax.xlane.f32.xlu0 %v965
  %v967 = vpop.xlane.xlu0 %966
  %v968 = vsub.f32 %v964, %v967
  %v969 = vmul.f32 %v968, 1.442695
  %v970 = vpow.pop %v969
  %v971 = vsel %vm382, %v970, 0.0
  %972 = vadd.xlane.f32.xlu0 %v971
  %v973 = vpop.xlane.xlu0 %972
  %v974 = vrcp.pop %v973
  %v975 = vmul.f32 %v970, %v974
  %v976 = vpack.c.bf16 %v975, %v975
  %978 = vrot.lane.b32.xlu0 %v800, 96
  %v979 = vpop.permute.xlu0 %978
  %v981 = vsel %vm382, %v976, 0
  %v984 = vsel %vm398, %v979, 0
  %986 = vmatprep.subr.bf16.mxu0 0
  %987 = vmatpush1.bf16.msra.mxu0 0
  %988 = vmatprep.subr.bf16.mxu0 0
  %989 = vmatpush1.bf16.msra.mxu0 0
  %990 = vmatprep.subr.bf16.mxu0 0
  %991 = vmatpush1.bf16.msra.mxu0 0
  %992 = vmatprep.subr.bf16.mxu0 0
  %993 = vmatpush1.bf16.msra.mxu0 0
  %994 = vmatprep.subr.bf16.mxu0 0
  %995 = vmatpush1.bf16.msra.mxu0 0
  %996 = vmatprep.subr.bf16.mxu0 0
  %997 = vmatpush1.bf16.msra.mxu0 0
  %998 = vmatprep.subr.bf16.mxu0 0
  %999 = vmatpush1.bf16.msra.mxu0 0
  %1000 = vmatprep.subr.bf16.mxu0 0
  %1001 = vmatpush1.bf16.msra.mxu0 %v984
  %1002 = vmatprep.subr.bf16.mxu0 0
  %1003 = vmatpush2.bf16.msra.mxu0 0
  %1004 = vmatprep.subr.bf16.mxu0 0
  %1005 = vmatpush2.bf16.msra.mxu0 0
  %1006 = vmatprep.subr.bf16.mxu0 0
  %1007 = vmatpush2.bf16.msra.mxu0 0
  %1008 = vmatprep.subr.bf16.mxu0 0
  %1009 = vmatpush2.bf16.msra.mxu0 0
  %1010 = vmatprep.subr.bf16.mxu0 0
  %1011 = vmatpush2.bf16.msra.mxu0 0
  %1012 = vmatprep.subr.bf16.mxu0 0
  %1013 = vmatpush2.bf16.msra.mxu0 0
  %1014 = vmatprep.subr.bf16.mxu0 0
  %1015 = vmatpush2.bf16.msra.mxu0 0
  %1016 = vmatprep.subr.bf16.mxu0 0
  %1017 = vmatpush2.bf16.msra.mxu0 0
  %1018 = vmatprep.mubr.bf16.mxu0 0
  %1019 = vmatmul.mubr.bf16.gmra.mxu0 %v981
  %v1020 = vpop.f32.mrf.mxu0
  %v1021 = vadd.f32 0.0, %v1020
  %v1022 = vpop.f32.mrf.mxu0
  %v1023 = vpop.f32.mrf.mxu0
  %v1024 = vpop.f32.mrf.mxu0
  %1025 = vdwg.mxu0
  %1026 = vrot.lane.b32.xlu0 %v798, 64
  %v1027 = vpop.permute.xlu0 %1026
  %1028 = vrot.lane.b32.xlu0 %v799, 64
  %v1029 = vpop.permute.xlu0 %1028
  %v1031 = vsel %vm329, %v1027, 0
  %v1034 = vsel %vm329, %v1029, 0
  %1036 = vmatprep.subr.bf16.mxu0 0
  %1037 = vmatpush1.bf16.xpose.msra.mxu0 0
  %1038 = vmatprep.subr.bf16.mxu0 0
  %1039 = vmatpush1.bf16.xpose.msra.mxu0 0
  %1040 = vmatprep.subr.bf16.mxu0 0
  %1041 = vmatpush1.bf16.xpose.msra.mxu0 0
  %1042 = vmatprep.subr.bf16.mxu0 0
  %1043 = vmatpush1.bf16.xpose.msra.mxu0 0
  %1044 = vmatprep.subr.bf16.mxu0 0
  %1045 = vmatpush1.bf16.xpose.msra.mxu0 0
  %1046 = vmatprep.subr.bf16.mxu0 0
  %1047 = vmatpush1.bf16.xpose.msra.mxu0 0
  %1048 = vmatprep.subr.bf16.mxu0 0
  %1049 = vmatpush1.bf16.xpose.msra.mxu0 0
  %1050 = vmatprep.subr.bf16.mxu0 0
  %1051 = vmatpush1.bf16.xpose.msra.mxu0 %v1034
  %1052 = vmatprep.subr.bf16.mxu0 0
  %1053 = vmatpush2.bf16.xpose.msra.mxu0 0
  %1054 = vmatprep.subr.bf16.mxu0 0
  %1055 = vmatpush2.bf16.xpose.msra.mxu0 0
  %1056 = vmatprep.subr.bf16.mxu0 0
  %1057 = vmatpush2.bf16.xpose.msra.mxu0 0
  %1058 = vmatprep.subr.bf16.mxu0 0
  %1059 = vmatpush2.bf16.xpose.msra.mxu0 0
  %1060 = vmatprep.subr.bf16.mxu0 0
  %1061 = vmatpush2.bf16.xpose.msra.mxu0 0
  %1062 = vmatprep.subr.bf16.mxu0 0
  %1063 = vmatpush2.bf16.xpose.msra.mxu0 0
  %1064 = vmatprep.subr.bf16.mxu0 0
  %1065 = vmatpush2.bf16.xpose.msra.mxu0 0
  %1066 = vmatprep.subr.bf16.mxu0 0
  %1067 = vmatpush2.bf16.xpose.msra.mxu0 0
  %1068 = vmatprep.mubr.bf16.mxu0 0
  %1069 = vmatmul.mubr.bf16.gmra.mxu0 %v1031
  %v1070 = vpop.f32.mrf.mxu0
  %v1071 = vadd.f32 0.0, %v1070
  %v1072 = vpop.f32.mrf.mxu0
  %v1073 = vpop.f32.mrf.mxu0
  %v1074 = vpop.f32.mrf.mxu0
  %1075 = vdwg.mxu0
  %v1076 = vmul.f32 %v1071, 0.35355338
  %v1077 = vadd.f32 %v1076, %v851
  %v1078 = vsel %vm382, %v1077, -inf
  %1079 = vmax.xlane.f32.xlu0 %v1078
  %v1080 = vpop.xlane.xlu0 %1079
  %v1081 = vsub.f32 %v1077, %v1080
  %v1082 = vmul.f32 %v1081, 1.442695
  %v1083 = vpow.pop %v1082
  %v1084 = vsel %vm382, %v1083, 0.0
  %1085 = vadd.xlane.f32.xlu0 %v1084
  %v1086 = vpop.xlane.xlu0 %1085
  %v1087 = vrcp.pop %v1086
  %v1088 = vmul.f32 %v1083, %v1087
  %v1089 = vpack.c.bf16 %v1088, %v1088
  %1090 = vrot.lane.b32.xlu0 %v800, 64
  %v1091 = vpop.permute.xlu0 %1090
  %v1093 = vsel %vm382, %v1089, 0
  %v1096 = vsel %vm398, %v1091, 0
  %1098 = vmatprep.subr.bf16.mxu0 0
  %1099 = vmatpush1.bf16.msra.mxu0 0
  %1100 = vmatprep.subr.bf16.mxu0 0
  %1101 = vmatpush1.bf16.msra.mxu0 0
  %1102 = vmatprep.subr.bf16.mxu0 0
  %1103 = vmatpush1.bf16.msra.mxu0 0
  %1104 = vmatprep.subr.bf16.mxu0 0
  %1105 = vmatpush1.bf16.msra.mxu0 0
  %1106 = vmatprep.subr.bf16.mxu0 0
  %1107 = vmatpush1.bf16.msra.mxu0 0
  %1108 = vmatprep.subr.bf16.mxu0 0
  %1109 = vmatpush1.bf16.msra.mxu0 0
  %1110 = vmatprep.subr.bf16.mxu0 0
  %1111 = vmatpush1.bf16.msra.mxu0 0
  %1112 = vmatprep.subr.bf16.mxu0 0
  %1113 = vmatpush1.bf16.msra.mxu0 %v1096
  %1114 = vmatprep.subr.bf16.mxu0 0
  %1115 = vmatpush2.bf16.msra.mxu0 0
  %1116 = vmatprep.subr.bf16.mxu0 0
  %1117 = vmatpush2.bf16.msra.mxu0 0
  %1118 = vmatprep.subr.bf16.mxu0 0
  %1119 = vmatpush2.bf16.msra.mxu0 0
  %1120 = vmatprep.subr.bf16.mxu0 0
  %1121 = vmatpush2.bf16.msra.mxu0 0
  %1122 = vmatprep.subr.bf16.mxu0 0
  %1123 = vmatpush2.bf16.msra.mxu0 0
  %1124 = vmatprep.subr.bf16.mxu0 0
  %1125 = vmatpush2.bf16.msra.mxu0 0
  %1126 = vmatprep.subr.bf16.mxu0 0
  %1127 = vmatpush2.bf16.msra.mxu0 0
  %1128 = vmatprep.subr.bf16.mxu0 0
  %1129 = vmatpush2.bf16.msra.mxu0 0
  %1130 = vmatprep.mubr.bf16.mxu0 0
  %1131 = vmatmul.mubr.bf16.gmra.mxu0 %v1093
  %v1132 = vpop.f32.mrf.mxu0
  %v1133 = vadd.f32 0.0, %v1132
  %v1134 = vpop.f32.mrf.mxu0
  %v1135 = vpop.f32.mrf.mxu0
  %v1136 = vpop.f32.mrf.mxu0
  %1137 = vdwg.mxu0
  %1138 = vrot.lane.b32.xlu0 %v798, 32
  %v1139 = vpop.permute.xlu0 %1138
  %1140 = vrot.lane.b32.xlu0 %v799, 32
  %v1141 = vpop.permute.xlu0 %1140
  %v1143 = vsel %vm329, %v1139, 0
  %v1146 = vsel %vm329, %v1141, 0
  %1148 = vmatprep.subr.bf16.mxu0 0
  %1149 = vmatpush1.bf16.xpose.msra.mxu0 0
  %1150 = vmatprep.subr.bf16.mxu0 0
  %1151 = vmatpush1.bf16.xpose.msra.mxu0 0
  %1152 = vmatprep.subr.bf16.mxu0 0
  %1153 = vmatpush1.bf16.xpose.msra.mxu0 0
  %1154 = vmatprep.subr.bf16.mxu0 0
  %1155 = vmatpush1.bf16.xpose.msra.mxu0 0
  %1156 = vmatprep.subr.bf16.mxu0 0
  %1157 = vmatpush1.bf16.xpose.msra.mxu0 0
  %1158 = vmatprep.subr.bf16.mxu0 0
  %1159 = vmatpush1.bf16.xpose.msra.mxu0 0
  %1160 = vmatprep.subr.bf16.mxu0 0
  %1161 = vmatpush1.bf16.xpose.msra.mxu0 0
  %1162 = vmatprep.subr.bf16.mxu0 0
  %1163 = vmatpush1.bf16.xpose.msra.mxu0 %v1146
  %1164 = vmatprep.subr.bf16.mxu0 0
  %1165 = vmatpush2.bf16.xpose.msra.mxu0 0
  %1166 = vmatprep.subr.bf16.mxu0 0
  %1167 = vmatpush2.bf16.xpose.msra.mxu0 0
  %1168 = vmatprep.subr.bf16.mxu0 0
  %1169 = vmatpush2.bf16.xpose.msra.mxu0 0
  %1170 = vmatprep.subr.bf16.mxu0 0
  %1171 = vmatpush2.bf16.xpose.msra.mxu0 0
  %1172 = vmatprep.subr.bf16.mxu0 0
  %1173 = vmatpush2.bf16.xpose.msra.mxu0 0
  %1174 = vmatprep.subr.bf16.mxu0 0
  %1175 = vmatpush2.bf16.xpose.msra.mxu0 0
  %1176 = vmatprep.subr.bf16.mxu0 0
  %1177 = vmatpush2.bf16.xpose.msra.mxu0 0
  %1178 = vmatprep.subr.bf16.mxu0 0
  %1179 = vmatpush2.bf16.xpose.msra.mxu0 0
  %1180 = vmatprep.mubr.bf16.mxu0 0
  %1181 = vmatmul.mubr.bf16.gmra.mxu0 %v1143
  %v1182 = vpop.f32.mrf.mxu0
  %v1183 = vadd.f32 0.0, %v1182
  %v1184 = vpop.f32.mrf.mxu0
  %v1185 = vpop.f32.mrf.mxu0
  %v1186 = vpop.f32.mrf.mxu0
  %1187 = vdwg.mxu0
  %v1188 = vmul.f32 %v1183, 0.35355338
  %v1189 = vadd.f32 %v1188, %v851
  %v1190 = vsel %vm382, %v1189, -inf
  %1191 = vmax.xlane.f32.xlu0 %v1190
  %v1192 = vpop.xlane.xlu0 %1191
  %v1193 = vsub.f32 %v1189, %v1192
  %v1194 = vmul.f32 %v1193, 1.442695
  %v1195 = vpow.pop %v1194
  %v1196 = vsel %vm382, %v1195, 0.0
  %1197 = vadd.xlane.f32.xlu0 %v1196
  %v1198 = vpop.xlane.xlu0 %1197
  %v1199 = vrcp.pop %v1198
  %v1200 = vmul.f32 %v1195, %v1199
  %v1201 = vpack.c.bf16 %v1200, %v1200
  %1202 = vrot.lane.b32.xlu0 %v800, 32
  %v1203 = vpop.permute.xlu0 %1202
  %v1205 = vsel %vm382, %v1201, 0
  %v1208 = vsel %vm398, %v1203, 0
  %1210 = vmatprep.subr.bf16.mxu0 0
  %1211 = vmatpush1.bf16.msra.mxu0 0
  %1212 = vmatprep.subr.bf16.mxu0 0
  %1213 = vmatpush1.bf16.msra.mxu0 0
  %1214 = vmatprep.subr.bf16.mxu0 0
  %1215 = vmatpush1.bf16.msra.mxu0 0
  %1216 = vmatprep.subr.bf16.mxu0 0
  %1217 = vmatpush1.bf16.msra.mxu0 0
  %1218 = vmatprep.subr.bf16.mxu0 0
  %1219 = vmatpush1.bf16.msra.mxu0 0
  %1220 = vmatprep.subr.bf16.mxu0 0
  %1221 = vmatpush1.bf16.msra.mxu0 0
  %1222 = vmatprep.subr.bf16.mxu0 0
  %1223 = vmatpush1.bf16.msra.mxu0 0
  %1224 = vmatprep.subr.bf16.mxu0 0
  %1225 = vmatpush1.bf16.msra.mxu0 %v1208
  %1226 = vmatprep.subr.bf16.mxu0 0
  %1227 = vmatpush2.bf16.msra.mxu0 0
  %1228 = vmatprep.subr.bf16.mxu0 0
  %1229 = vmatpush2.bf16.msra.mxu0 0
  %1230 = vmatprep.subr.bf16.mxu0 0
  %1231 = vmatpush2.bf16.msra.mxu0 0
  %1232 = vmatprep.subr.bf16.mxu0 0
  %1233 = vmatpush2.bf16.msra.mxu0 0
  %1234 = vmatprep.subr.bf16.mxu0 0
  %1235 = vmatpush2.bf16.msra.mxu0 0
  %1236 = vmatprep.subr.bf16.mxu0 0
  %1237 = vmatpush2.bf16.msra.mxu0 0
  %1238 = vmatprep.subr.bf16.mxu0 0
  %1239 = vmatpush2.bf16.msra.mxu0 0
  %1240 = vmatprep.subr.bf16.mxu0 0
  %1241 = vmatpush2.bf16.msra.mxu0 0
  %1242 = vmatprep.mubr.bf16.mxu0 0
  %1243 = vmatmul.mubr.bf16.gmra.mxu0 %v1205
  %v1244 = vpop.f32.mrf.mxu0
  %v1245 = vadd.f32 0.0, %v1244
  %v1246 = vpop.f32.mrf.mxu0
  %v1247 = vpop.f32.mrf.mxu0
  %v1248 = vpop.f32.mrf.mxu0
  %1249 = vdwg.mxu0
  %1251 = vrot.lane.b32.xlu0 %v1021, 32
  %v1252 = vpop.permute.xlu0 %1251
  %1255 = vrot.lane.b32.xlu0 %v1133, 64
  %v1256 = vpop.permute.xlu0 %1255
  %1259 = vrot.lane.b32.xlu0 %v1245, 96
  %v1260 = vpop.permute.xlu0 %1259
  %v1262 = vsel %vm329, %v906, %v1252
  %v1263 = vsel %vm794, %v1262, %v1256
  %v1264 = vsel %vm796, %v1263, %v1260
  %v1265 = vpack.c.bf16 %v1264, %v797
  %v1266 = vld [vmem:[%s4] sm:$0xf]
  %v1267 = vld [vmem:[%s4 + $0x4] sm:$0xf]
  %v1268 = vld [vmem:[%s4 + $0x8] sm:$0xf]
  %v1269 = vld [vmem:[%s4 + $0xc] sm:$0xf]
  %v1270 = vld [vmem:[%s4 + $0x10] sm:$0xf]
  %v1271 = vld [vmem:[%s4 + $0x14] sm:$0xf]
  %v1272 = vld [vmem:[%s4 + $0x18] sm:$0xf]
  %v1273 = vld [vmem:[%s4 + $0x1c] sm:$0xf]
  %v1274 = vld [vmem:[%s4 + $0x20] sm:$0xf]
  %v1275 = vld [vmem:[%s4 + $0x24] sm:$0xf]
  %v1276 = vld [vmem:[%s4 + $0x28] sm:$0xf]
  %v1277 = vld [vmem:[%s4 + $0x2c] sm:$0xf]
  %v1278 = vld [vmem:[%s4 + $0x30] sm:$0xf]
  %v1279 = vld [vmem:[%s4 + $0x34] sm:$0xf]
  %v1280 = vld [vmem:[%s4 + $0x38] sm:$0xf]
  %v1281 = vld [vmem:[%s4 + $0x3c] sm:$0xf]
  %v1282 = vld [vmem:[%s5] sm:$0x1]
  %v1284 = vlaneseq
  %v1285 = vshrl.u32 %v1284, 7
  %v1286 = vsub.s32 0, %v1285
  %v1287 = vrot.slane %v1282, %v1286
  %v1305 = vunpack.c.l.b16 %v1266
  %v1306 = vunpack.c.l.b16 %v1267
  %v1307 = vunpack.c.l.b16 %v1268
  %v1308 = vunpack.c.l.b16 %v1269
  %v1309 = vunpack.c.l.b16 %v1270
  %v1310 = vunpack.c.l.b16 %v1271
  %v1311 = vunpack.c.l.b16 %v1272
  %v1312 = vunpack.c.l.b16 %v1273
  %v1313 = vunpack.c.l.b16 %v1274
  %v1314 = vunpack.c.l.b16 %v1275
  %v1315 = vunpack.c.l.b16 %v1276
  %v1316 = vunpack.c.l.b16 %v1277
  %v1317 = vunpack.c.l.b16 %v1278
  %v1318 = vunpack.c.l.b16 %v1279
  %v1319 = vunpack.c.l.b16 %v1280
  %v1320 = vunpack.c.l.b16 %v1281
  %v1321 = vpack.c.b16 %v1306, %v1305
  %v1322 = vpack.c.b16 %v1308, %v1307
  %v1323 = vpack.c.b16 %v1310, %v1309
  %v1324 = vpack.c.b16 %v1312, %v1311
  %v1325 = vpack.c.b16 %v1314, %v1313
  %v1326 = vpack.c.b16 %v1316, %v1315
  %v1327 = vpack.c.b16 %v1318, %v1317
  %v1328 = vpack.c.b16 %v1320, %v1319
  %1337 = vmatprep.subr.bf16.mxu0 0
  %1338 = vmatpush1.bf16.msra.mxu0 %v1328
  %1339 = vmatprep.subr.bf16.mxu0 0
  %1340 = vmatpush1.bf16.msra.mxu0 %v1327
  %1341 = vmatprep.subr.bf16.mxu0 0
  %1342 = vmatpush1.bf16.msra.mxu0 %v1326
  %1343 = vmatprep.subr.bf16.mxu0 0
  %1344 = vmatpush1.bf16.msra.mxu0 %v1325
  %1345 = vmatprep.subr.bf16.mxu0 0
  %1346 = vmatpush1.bf16.msra.mxu0 %v1324
  %1347 = vmatprep.subr.bf16.mxu0 0
  %1348 = vmatpush1.bf16.msra.mxu0 %v1323
  %1349 = vmatprep.subr.bf16.mxu0 0
  %1350 = vmatpush1.bf16.msra.mxu0 %v1322
  %1351 = vmatprep.subr.bf16.mxu0 0
  %1352 = vmatpush1.bf16.msra.mxu0 %v1321
  %1353 = vmatprep.subr.bf16.mxu0 0
  %1354 = vmatpush2.bf16.msra.mxu0 0
  %1355 = vmatprep.subr.bf16.mxu0 0
  %1356 = vmatpush2.bf16.msra.mxu0 0
  %1357 = vmatprep.subr.bf16.mxu0 0
  %1358 = vmatpush2.bf16.msra.mxu0 0
  %1359 = vmatprep.subr.bf16.mxu0 0
  %1360 = vmatpush2.bf16.msra.mxu0 0
  %1361 = vmatprep.subr.bf16.mxu0 0
  %1362 = vmatpush2.bf16.msra.mxu0 0
  %1363 = vmatprep.subr.bf16.mxu0 0
  %1364 = vmatpush2.bf16.msra.mxu0 0
  %1365 = vmatprep.subr.bf16.mxu0 0
  %1366 = vmatpush2.bf16.msra.mxu0 0
  %1367 = vmatprep.subr.bf16.mxu0 0
  %1368 = vmatpush2.bf16.msra.mxu0 0
  %1369 = vmatprep.mubr.bf16.mxu0 0
  %1370 = vmatmul.mubr.bf16.gmra.mxu0 %v1265
  %v1371 = vpop.f32.mrf.mxu0
  %v1372 = vadd.f32 %v1287, %v1371
  %v1373 = vpop.f32.mrf.mxu0
  %v1374 = vpop.f32.mrf.mxu0
  %v1375 = vadd.f32 %v1287, %v1374
  %v1376 = vpop.f32.mrf.mxu0
  %1377 = vdwg.mxu0
  %v1378 = vadd.f32 %v50, %v1372
  %v1379 = vadd.f32 %v51, %v1375
  %v1380 = vld [vmem:[%s6] sm:$0x1]
  %v1381 = vld [vmem:[%s7] sm:$0x1]
  %1382 = vadd.xlane.f32.xlu0 %v1378
  %v1383 = vpop.xlane.xlu0 %1382
  %1384 = vadd.xlane.f32.xlu0 %v1379
  %v1385 = vpop.xlane.xlu0 %1384
  %v1386 = vmul.f32 %v1383, 0.03125
  %v1387 = vmul.f32 %v1385, 0.03125
  %v1388 = vsub.f32 %v1378, %v1386
  %v1389 = vsub.f32 %v1379, %v1387
  %v1390 = vmul.f32 %v1388, %v56
  %v1391 = vmul.f32 %v1389, %v56
  %v1392 = vmul.f32 %v1390, %v1390
  %v1393 = vmul.f32 %v1391, %v1391
  %1394 = vadd.xlane.f32.xlu0 %v1392
  %v1395 = vpop.xlane.xlu0 %1394
  %1396 = vadd.xlane.f32.xlu0 %v1393
  %v1397 = vpop.xlane.xlu0 %1396
  %v1398 = vmul.f32 %v1395, 0.03125
  %v1399 = vmul.f32 %v1397, 0.03125
  %v1400 = vadd.f32 %v1398, 1e-05
  %v1401 = vadd.f32 %v1399, 1e-05
  %v1402 = vrsqrt.pop %v1400
  %v1403 = vrsqrt.pop %v1401
  %v1404 = vmul.f32 %v1388, %v1402
  %v1405 = vmul.f32 %v1389, %v1403
  %v1407 = vlaneseq
  %v1408 = vshrl.u32 %v1407, 7
  %v1409 = vsub.s32 0, %v1408
  %v1410 = vrot.slane %v1380, %v1409
  %v1412 = vmul.f32 %v1404, %v1410
  %v1413 = vmul.f32 %v1405, %v1410
  %v1415 = vlaneseq
  %v1416 = vshrl.u32 %v1415, 7
  %v1417 = vsub.s32 0, %v1416
  %v1418 = vrot.slane %v1381, %v1417
  %v1420 = vadd.f32 %v1412, %v1418
  %v1421 = vadd.f32 %v1413, %v1418
  %v1422 = vpack.c.bf16 %v1421, %v1420
  %v1423 = vld [vmem:[%s8] sm:$0xf]
  %v1424 = vld [vmem:[%s8 + $0x4] sm:$0xf]
  %v1425 = vld [vmem:[%s8 + $0x8] sm:$0xf]
  %v1426 = vld [vmem:[%s8 + $0xc] sm:$0xf]
  %v1427 = vld [vmem:[%s8 + $0x10] sm:$0xf]
  %v1428 = vld [vmem:[%s8 + $0x14] sm:$0xf]
  %v1429 = vld [vmem:[%s8 + $0x18] sm:$0xf]
  %v1430 = vld [vmem:[%s8 + $0x1c] sm:$0xf]
  %v1431 = vld [vmem:[%s8 + $0x20] sm:$0xf]
  %v1432 = vld [vmem:[%s8 + $0x24] sm:$0xf]
  %v1433 = vld [vmem:[%s8 + $0x28] sm:$0xf]
  %v1434 = vld [vmem:[%s8 + $0x2c] sm:$0xf]
  %v1435 = vld [vmem:[%s8 + $0x30] sm:$0xf]
  %v1436 = vld [vmem:[%s8 + $0x34] sm:$0xf]
  %v1437 = vld [vmem:[%s8 + $0x38] sm:$0xf]
  %v1438 = vld [vmem:[%s8 + $0x3c] sm:$0xf]
  %v1439 = vld [vmem:[%s9] sm:$0x1]
  %v1441 = vlaneseq
  %v1442 = vshrl.u32 %v1441, 7
  %v1443 = vsub.s32 0, %v1442
  %v1444 = vrot.slane %v1439, %v1443
  %v1462 = vunpack.c.l.b16 %v1423
  %v1463 = vunpack.c.l.b16 %v1424
  %v1464 = vunpack.c.l.b16 %v1425
  %v1465 = vunpack.c.l.b16 %v1426
  %v1466 = vunpack.c.l.b16 %v1427
  %v1467 = vunpack.c.l.b16 %v1428
  %v1468 = vunpack.c.l.b16 %v1429
  %v1469 = vunpack.c.l.b16 %v1430
  %v1470 = vunpack.c.l.b16 %v1431
  %v1471 = vunpack.c.l.b16 %v1432
  %v1472 = vunpack.c.l.b16 %v1433
  %v1473 = vunpack.c.l.b16 %v1434
  %v1474 = vunpack.c.l.b16 %v1435
  %v1475 = vunpack.c.l.b16 %v1436
  %v1476 = vunpack.c.l.b16 %v1437
  %v1477 = vunpack.c.l.b16 %v1438
  %v1478 = vpack.c.b16 %v1463, %v1462
  %v1479 = vpack.c.b16 %v1465, %v1464
  %v1480 = vpack.c.b16 %v1467, %v1466
  %v1481 = vpack.c.b16 %v1469, %v1468
  %v1482 = vpack.c.b16 %v1471, %v1470
  %v1483 = vpack.c.b16 %v1473, %v1472
  %v1484 = vpack.c.b16 %v1475, %v1474
  %v1485 = vpack.c.b16 %v1477, %v1476
  %1494 = vmatprep.subr.bf16.mxu0 0
  %1495 = vmatpush1.bf16.msra.mxu0 %v1485
  %1496 = vmatprep.subr.bf16.mxu0 0
  %1497 = vmatpush1.bf16.msra.mxu0 %v1484
  %1498 = vmatprep.subr.bf16.mxu0 0
  %1499 = vmatpush1.bf16.msra.mxu0 %v1483
  %1500 = vmatprep.subr.bf16.mxu0 0
  %1501 = vmatpush1.bf16.msra.mxu0 %v1482
  %1502 = vmatprep.subr.bf16.mxu0 0
  %1503 = vmatpush1.bf16.msra.mxu0 %v1481
  %1504 = vmatprep.subr.bf16.mxu0 0
  %1505 = vmatpush1.bf16.msra.mxu0 %v1480
  %1506 = vmatprep.subr.bf16.mxu0 0
  %1507 = vmatpush1.bf16.msra.mxu0 %v1479
  %1508 = vmatprep.subr.bf16.mxu0 0
  %1509 = vmatpush1.bf16.msra.mxu0 %v1478
  %1510 = vmatprep.subr.bf16.mxu0 0
  %1511 = vmatpush2.bf16.msra.mxu0 0
  %1512 = vmatprep.subr.bf16.mxu0 0
  %1513 = vmatpush2.bf16.msra.mxu0 0
  %1514 = vmatprep.subr.bf16.mxu0 0
  %1515 = vmatpush2.bf16.msra.mxu0 0
  %1516 = vmatprep.subr.bf16.mxu0 0
  %1517 = vmatpush2.bf16.msra.mxu0 0
  %1518 = vmatprep.subr.bf16.mxu0 0
  %1519 = vmatpush2.bf16.msra.mxu0 0
  %1520 = vmatprep.subr.bf16.mxu0 0
  %1521 = vmatpush2.bf16.msra.mxu0 0
  %1522 = vmatprep.subr.bf16.mxu0 0
  %1523 = vmatpush2.bf16.msra.mxu0 0
  %1524 = vmatprep.subr.bf16.mxu0 0
  %1525 = vmatpush2.bf16.msra.mxu0 0
  %1526 = vmatprep.mubr.bf16.mxu0 0
  %1527 = vmatmul.mubr.bf16.gmra.mxu0 %v1422
  %v1528 = vpop.f32.mrf.mxu0
  %v1529 = vadd.f32 %v1444, %v1528
  %v1530 = vpop.f32.mrf.mxu0
  %v1531 = vpop.f32.mrf.mxu0
  %v1532 = vadd.f32 %v1444, %v1531
  %v1533 = vpop.f32.mrf.mxu0
  %1534 = vdwg.mxu0
  %v1535 = vmax.f32 %v1529, 0.0
  %v1536 = vmax.f32 %v1532, 0.0
  %v1537 = vpack.c.bf16 %v1536, %v1535
  %v1538 = vld [vmem:[%s10] sm:$0xf]
  %v1539 = vld [vmem:[%s10 + $0x4] sm:$0xf]
  %v1540 = vld [vmem:[%s10 + $0x8] sm:$0xf]
  %v1541 = vld [vmem:[%s10 + $0xc] sm:$0xf]
  %v1542 = vld [vmem:[%s10 + $0x10] sm:$0xf]
  %v1543 = vld [vmem:[%s10 + $0x14] sm:$0xf]
  %v1544 = vld [vmem:[%s10 + $0x18] sm:$0xf]
  %v1545 = vld [vmem:[%s10 + $0x1c] sm:$0xf]
  %v1546 = vld [vmem:[%s10 + $0x20] sm:$0xf]
  %v1547 = vld [vmem:[%s10 + $0x24] sm:$0xf]
  %v1548 = vld [vmem:[%s10 + $0x28] sm:$0xf]
  %v1549 = vld [vmem:[%s10 + $0x2c] sm:$0xf]
  %v1550 = vld [vmem:[%s10 + $0x30] sm:$0xf]
  %v1551 = vld [vmem:[%s10 + $0x34] sm:$0xf]
  %v1552 = vld [vmem:[%s10 + $0x38] sm:$0xf]
  %v1553 = vld [vmem:[%s10 + $0x3c] sm:$0xf]
  %v1554 = vld [vmem:[%s11] sm:$0x1]
  %v1556 = vlaneseq
  %v1557 = vshrl.u32 %v1556, 7
  %v1558 = vsub.s32 0, %v1557
  %v1559 = vrot.slane %v1554, %v1558
  %v1577 = vunpack.c.l.b16 %v1538
  %v1578 = vunpack.c.l.b16 %v1539
  %v1579 = vunpack.c.l.b16 %v1540
  %v1580 = vunpack.c.l.b16 %v1541
  %v1581 = vunpack.c.l.b16 %v1542
  %v1582 = vunpack.c.l.b16 %v1543
  %v1583 = vunpack.c.l.b16 %v1544
  %v1584 = vunpack.c.l.b16 %v1545
  %v1585 = vunpack.c.l.b16 %v1546
  %v1586 = vunpack.c.l.b16 %v1547
  %v1587 = vunpack.c.l.b16 %v1548
  %v1588 = vunpack.c.l.b16 %v1549
  %v1589 = vunpack.c.l.b16 %v1550
  %v1590 = vunpack.c.l.b16 %v1551
  %v1591 = vunpack.c.l.b16 %v1552
  %v1592 = vunpack.c.l.b16 %v1553
  %v1593 = vpack.c.b16 %v1578, %v1577
  %v1594 = vpack.c.b16 %v1580, %v1579
  %v1595 = vpack.c.b16 %v1582, %v1581
  %v1596 = vpack.c.b16 %v1584, %v1583
  %v1597 = vpack.c.b16 %v1586, %v1585
  %v1598 = vpack.c.b16 %v1588, %v1587
  %v1599 = vpack.c.b16 %v1590, %v1589
  %v1600 = vpack.c.b16 %v1592, %v1591
  %1609 = vmatprep.subr.bf16.mxu0 0
  %1610 = vmatpush1.bf16.msra.mxu0 %v1600
  %1611 = vmatprep.subr.bf16.mxu0 0
  %1612 = vmatpush1.bf16.msra.mxu0 %v1599
  %1613 = vmatprep.subr.bf16.mxu0 0
  %1614 = vmatpush1.bf16.msra.mxu0 %v1598
  %1615 = vmatprep.subr.bf16.mxu0 0
  %1616 = vmatpush1.bf16.msra.mxu0 %v1597
  %1617 = vmatprep.subr.bf16.mxu0 0
  %1618 = vmatpush1.bf16.msra.mxu0 %v1596
  %1619 = vmatprep.subr.bf16.mxu0 0
  %1620 = vmatpush1.bf16.msra.mxu0 %v1595
  %1621 = vmatprep.subr.bf16.mxu0 0
  %1622 = vmatpush1.bf16.msra.mxu0 %v1594
  %1623 = vmatprep.subr.bf16.mxu0 0
  %1624 = vmatpush1.bf16.msra.mxu0 %v1593
  %1625 = vmatprep.subr.bf16.mxu0 0
  %1626 = vmatpush2.bf16.msra.mxu0 0
  %1627 = vmatprep.subr.bf16.mxu0 0
  %1628 = vmatpush2.bf16.msra.mxu0 0
  %1629 = vmatprep.subr.bf16.mxu0 0
  %1630 = vmatpush2.bf16.msra.mxu0 0
  %1631 = vmatprep.subr.bf16.mxu0 0
  %1632 = vmatpush2.bf16.msra.mxu0 0
  %1633 = vmatprep.subr.bf16.mxu0 0
  %1634 = vmatpush2.bf16.msra.mxu0 0
  %1635 = vmatprep.subr.bf16.mxu0 0
  %1636 = vmatpush2.bf16.msra.mxu0 0
  %1637 = vmatprep.subr.bf16.mxu0 0
  %1638 = vmatpush2.bf16.msra.mxu0 0
  %1639 = vmatprep.subr.bf16.mxu0 0
  %1640 = vmatpush2.bf16.msra.mxu0 0
  %1641 = vmatprep.mubr.bf16.mxu0 0
  %1642 = vmatmul.mubr.bf16.gmra.mxu0 %v1537
  %v1643 = vpop.f32.mrf.mxu0
  %v1644 = vadd.f32 %v1559, %v1643
  %v1645 = vpop.f32.mrf.mxu0
  %v1646 = vpop.f32.mrf.mxu0
  %v1647 = vadd.f32 %v1559, %v1646
  %v1648 = vpop.f32.mrf.mxu0
  %1649 = vdwg.mxu0
  %v1650 = vadd.f32 %v1420, %v1644
  %v1651 = vadd.f32 %v1421, %v1647
  %v1652 = vld [vmem:[%s12] sm:$0x1]
  %v1653 = vld [vmem:[%s13] sm:$0x1]
  %1654 = vadd.xlane.f32.xlu0 %v1650
  %v1655 = vpop.xlane.xlu0 %1654
  %1656 = vadd.xlane.f32.xlu0 %v1651
  %v1657 = vpop.xlane.xlu0 %1656
  %v1658 = vmul.f32 %v1655, 0.03125
  %v1659 = vmul.f32 %v1657, 0.03125
  %v1660 = vsub.f32 %v1650, %v1658
  %v1661 = vsub.f32 %v1651, %v1659
  %v1662 = vmul.f32 %v1660, %v56
  %v1663 = vmul.f32 %v1661, %v56
  %v1664 = vmul.f32 %v1662, %v1662
  %v1665 = vmul.f32 %v1663, %v1663
  %1666 = vadd.xlane.f32.xlu0 %v1664
  %v1667 = vpop.xlane.xlu0 %1666
  %1668 = vadd.xlane.f32.xlu0 %v1665
  %v1669 = vpop.xlane.xlu0 %1668
  %v1670 = vmul.f32 %v1667, 0.03125
  %v1671 = vmul.f32 %v1669, 0.03125
  %v1672 = vadd.f32 %v1670, 1e-05
  %v1673 = vadd.f32 %v1671, 1e-05
  %v1674 = vrsqrt.pop %v1672
  %v1675 = vrsqrt.pop %v1673
  %v1676 = vmul.f32 %v1660, %v1674
  %v1677 = vmul.f32 %v1661, %v1675
  %v1679 = vlaneseq
  %v1680 = vshrl.u32 %v1679, 7
  %v1681 = vsub.s32 0, %v1680
  %v1682 = vrot.slane %v1652, %v1681
  %v1684 = vmul.f32 %v1676, %v1682
  %v1685 = vmul.f32 %v1677, %v1682
  %v1687 = vlaneseq
  %v1688 = vshrl.u32 %v1687, 7
  %v1689 = vsub.s32 0, %v1688
  %v1690 = vrot.slane %v1653, %v1689
  %v1692 = vadd.f32 %v1684, %v1690
  %v1693 = vadd.f32 %v1685, %v1690
  %v1694 = vpack.c.bf16 %v1693, %v1692
  %v1696 = vunpack.c.l.b16 %v1694
  %v1697 = vunpack.c.h.b16 %v1694
  %v1698 = vpack.c.b16 %v1696, %v1696
  %v1699 = vpack.c.b16 %v1697, %v1697
  %1702 = vst [vmem:[%s14] sm:$0xf] %v1698
  %1703 = vst [vmem:[%s14 + $0x4] sm:$0xf] %v1699
  // Predicated region
  $region58: #{flat_transformer_mean_log_scale_forward.6} parent=0 // pred_check
    _
  $region59: #{flat_transformer_mean_log_scale_forward.6} parent=0 // pred_check_branch
    %1705 = sbr.rel (0) target = $region61
  $region60: #{flat_transformer_mean_log_scale_forward.6} parent=0 // pred_region
    _
  $region61: #{flat_transformer_mean_log_scale_forward.6} parent=0 // pred_fallthru
    _
  // Predicated region
  $region62: #{flat_transformer_mean_log_scale_forward.6} parent=0 // pred_check
    _
  $region63: #{flat_transformer_mean_log_scale_forward.6} parent=0 // pred_check_branch
    %1707 = sbr.rel (0) target = $region65
  $region64: #{flat_transformer_mean_log_scale_forward.6} parent=0 // pred_region
    _
  $region65: #{flat_transformer_mean_log_scale_forward.6} parent=0 // pred_fallthru
    _

// kernel: flat_transformer_mean_log_scale_forward.4
$region0: #{flat_transformer_mean_log_scale_forward.4}
  #allocation0 [shape = 'u32[]', space=smem, size = 0x4, offset = 0x4, fixed_abs, tag = 'smem constant byte address 0x4 - core index']
  #allocation1 [shape = 'u32[144,128]{1,0:T(1,128)}', space=vmem, size = 0x12000, scoped, tag = 'internal scratch']
  %s0 = inlined_call_operand.vmem [shape: f32[16,128], index: 0, kind: input, shape index: {}]
  %s1 = inlined_call_operand.hbm [shape: bf16[128,128], index: 1, kind: input, shape index: {}]
  %s2 = inlined_call_operand.vmem [shape: f32[1,128], index: 2, kind: input, shape index: {}]
  %s3 = inlined_call_operand.vmem [shape: bf16[16,128], index: 3, kind: output, shape index: {}]
  %s4 = sld [smem:[#allocation0]]
  $region26: #{flat_transformer_mean_log_scale_forward.4} parent=0
    _
  %s6 = ssub.s32 1, %s4
  %s7 = scalar_select 0, %s6, %s4
  $region1: #{flat_transformer_mean_log_scale_forward.4} parent=0
    #allocation2 [shape = 'u8[32768]{0}', space=vmem, size = 0x8000, scoped, tag = 'input window, operand 1, single buffered']
    #allocation3 [shape = 's32[1]{0}', space=sflag, size = 0x4, scoped, tag = 'scoped memory for flat_transformer_mean_log_scale_forward.4']
    %8 = vsyncpa [#allocation3], 0
    // Predicated region
    $region2: #{flat_transformer_mean_log_scale_forward.4} parent=1 // pred_check
      _
    $region3: #{flat_transformer_mean_log_scale_forward.4} parent=1 // pred_check_branch
      %10 = sbr.rel (0) target = $region5
    $region4: #{flat_transformer_mean_log_scale_forward.4} parent=1 // pred_region
      _
    $region5: #{flat_transformer_mean_log_scale_forward.4} parent=1 // pred_fallthru
      _
    // Predicated region
    $region6: #{flat_transformer_mean_log_scale_forward.4} parent=1 // pred_check
      _
    $region7: #{flat_transformer_mean_log_scale_forward.4} parent=1 // pred_check_branch
      %12 = sbr.rel (0) target = $region9
    $region8: #{flat_transformer_mean_log_scale_forward.4} parent=1 // pred_region
      %s14 = ssub.s32 1024, 1024
      %15 = vsyncadd [#allocation3], %s14
      %s16 = sshll.u32 [#allocation2], 4
      %s17 = int_to_ptr.vmem [resolvable:$true] %s16
      %22 = dma.hbm_to_vmem [thread:$0]  %s1, 1024, %s17, [#allocation3], 64, 64, 4
    $region9: #{flat_transformer_mean_log_scale_forward.4} parent=1 // pred_fallthru
      _
    // Predicated region
    $region10: #{flat_transformer_mean_log_scale_forward.4} parent=1 // pred_check
      _
    $region11: #{flat_transformer_mean_log_scale_forward.4} parent=1 // pred_check_branch
      %24 = sbr.rel (0) target = $region13
    $region12: #{flat_transformer_mean_log_scale_forward.4} parent=1 // pred_region
      _
    $region13: #{flat_transformer_mean_log_scale_forward.4} parent=1 // pred_fallthru
      _
    // Predicated region
    $region14: #{flat_transformer_mean_log_scale_forward.4} parent=1 // pred_check
      _
    $region15: #{flat_transformer_mean_log_scale_forward.4} parent=1 // pred_check_branch
      %26 = sbr.rel (0) target = $region17
    $region16: #{flat_transformer_mean_log_scale_forward.4} parent=1 // pred_region
      %27 = dma.done [#allocation3], 1024
    $region17: #{flat_transformer_mean_log_scale_forward.4} parent=1 // pred_fallthru
      _
    %v29 = vld [vmem:[%s0] sm:$0xff]
    %v30 = vld [vmem:[%s0 + $0x8] sm:$0xff]
    %v31 = vpack.c.bf16 %v30, %v29
    %v32 = vld [vmem:[#allocation2] sm:$0xf]
    %v33 = vld [vmem:[#allocation2 + $0x4] sm:$0xf]
    %v34 = vld [vmem:[#allocation2 + $0x8] sm:$0xf]
    %v35 = vld [vmem:[#allocation2 + $0xc] sm:$0xf]
    %v36 = vld [vmem:[#allocation2 + $0x10] sm:$0xf]
    %v37 = vld [vmem:[#allocation2 + $0x14] sm:$0xf]
    %v38 = vld [vmem:[#allocation2 + $0x18] sm:$0xf]
    %v39 = vld [vmem:[#allocation2 + $0x1c] sm:$0xf]
    %v40 = vld [vmem:[#allocation2 + $0x20] sm:$0xf]
    %v41 = vld [vmem:[#allocation2 + $0x24] sm:$0xf]
    %v42 = vld [vmem:[#allocation2 + $0x28] sm:$0xf]
    %v43 = vld [vmem:[#allocation2 + $0x2c] sm:$0xf]
    %v44 = vld [vmem:[#allocation2 + $0x30] sm:$0xf]
    %v45 = vld [vmem:[#allocation2 + $0x34] sm:$0xf]
    %v46 = vld [vmem:[#allocation2 + $0x38] sm:$0xf]
    %v47 = vld [vmem:[#allocation2 + $0x3c] sm:$0xf]
    %v48 = vld [vmem:[%s2] sm:$0x1]
    %v50 = vlaneseq
    %v51 = vshrl.u32 %v50, 7
    %v52 = vsub.s32 0, %v51
    %v53 = vrot.slane %v48, %v52
    %v71 = vunpack.c.l.b16 %v32
    %v72 = vunpack.c.l.b16 %v33
    %v73 = vunpack.c.l.b16 %v34
    %v74 = vunpack.c.l.b16 %v35
    %v75 = vunpack.c.l.b16 %v36
    %v76 = vunpack.c.l.b16 %v37
    %v77 = vunpack.c.l.b16 %v38
    %v78 = vunpack.c.l.b16 %v39
    %v79 = vunpack.c.l.b16 %v40
    %v80 = vunpack.c.l.b16 %v41
    %v81 = vunpack.c.l.b16 %v42
    %v82 = vunpack.c.l.b16 %v43
    %v83 = vunpack.c.l.b16 %v44
    %v84 = vunpack.c.l.b16 %v45
    %v85 = vunpack.c.l.b16 %v46
    %v86 = vunpack.c.l.b16 %v47
    %v87 = vpack.c.b16 %v72, %v71
    %v88 = vpack.c.b16 %v74, %v73
    %v89 = vpack.c.b16 %v76, %v75
    %v90 = vpack.c.b16 %v78, %v77
    %v91 = vpack.c.b16 %v80, %v79
    %v92 = vpack.c.b16 %v82, %v81
    %v93 = vpack.c.b16 %v84, %v83
    %v94 = vpack.c.b16 %v86, %v85
    %103 = vmatprep.subr.bf16.mxu0 0
    %104 = vmatpush1.bf16.msra.mxu0 %v94
    %105 = vmatprep.subr.bf16.mxu0 0
    %106 = vmatpush1.bf16.msra.mxu0 %v93
    %107 = vmatprep.subr.bf16.mxu0 0
    %108 = vmatpush1.bf16.msra.mxu0 %v92
    %109 = vmatprep.subr.bf16.mxu0 0
    %110 = vmatpush1.bf16.msra.mxu0 %v91
    %111 = vmatprep.subr.bf16.mxu0 0
    %112 = vmatpush1.bf16.msra.mxu0 %v90
    %113 = vmatprep.subr.bf16.mxu0 0
    %114 = vmatpush1.bf16.msra.mxu0 %v89
    %115 = vmatprep.subr.bf16.mxu0 0
    %116 = vmatpush1.bf16.msra.mxu0 %v88
    %117 = vmatprep.subr.bf16.mxu0 0
    %118 = vmatpush1.bf16.msra.mxu0 %v87
    %119 = vmatprep.subr.bf16.mxu0 0
    %120 = vmatpush2.bf16.msra.mxu0 0
    %121 = vmatprep.subr.bf16.mxu0 0
    %122 = vmatpush2.bf16.msra.mxu0 0
    %123 = vmatprep.subr.bf16.mxu0 0
    %124 = vmatpush2.bf16.msra.mxu0 0
    %125 = vmatprep.subr.bf16.mxu0 0
    %126 = vmatpush2.bf16.msra.mxu0 0
    %127 = vmatprep.subr.bf16.mxu0 0
    %128 = vmatpush2.bf16.msra.mxu0 0
    %129 = vmatprep.subr.bf16.mxu0 0
    %130 = vmatpush2.bf16.msra.mxu0 0
    %131 = vmatprep.subr.bf16.mxu0 0
    %132 = vmatpush2.bf16.msra.mxu0 0
    %133 = vmatprep.subr.bf16.mxu0 0
    %134 = vmatpush2.bf16.msra.mxu0 0
    %135 = vmatprep.mubr.bf16.mxu0 0
    %136 = vmatmul.mubr.bf16.gmra.mxu0 %v31
    %v137 = vpop.f32.mrf.mxu0
    %v138 = vadd.f32 %v53, %v137
    %v139 = vpop.f32.mrf.mxu0
    %v140 = vpop.f32.mrf.mxu0
    %v141 = vadd.f32 %v53, %v140
    %v142 = vpop.f32.mrf.mxu0
    %143 = vdwg.mxu0
    %v144 = vpack.c.bf16 %v141, %v138
    %v146 = vunpack.c.l.b16 %v144
    %v147 = vunpack.c.h.b16 %v144
    %v148 = vpack.c.b16 %v146, %v146
    %v149 = vpack.c.b16 %v147, %v147
    %152 = vst [vmem:[%s3] sm:$0xf] %v148
    %153 = vst [vmem:[%s3 + $0x4] sm:$0xf] %v149
    // Predicated region
    $region18: #{flat_transformer_mean_log_scale_forward.4} parent=1 // pred_check
      _
    $region19: #{flat_transformer_mean_log_scale_forward.4} parent=1 // pred_check_branch
      %155 = sbr.rel (0) target = $region21
    $region20: #{flat_transformer_mean_log_scale_forward.4} parent=1 // pred_region
      _
    $region21: #{flat_transformer_mean_log_scale_forward.4} parent=1 // pred_fallthru
      _
    // Predicated region
    $region22: #{flat_transformer_mean_log_scale_forward.4} parent=1 // pred_check
      _
    $region23: #{flat_transformer_mean_log_scale_forward.4} parent=1 // pred_check_branch
      %157 = sbr.rel (0) target = $region25
    $region24: #{flat_transformer_mean_log_scale_forward.4} parent=1 // pred_region
      _
    $region25: #{flat_transformer_mean_log_scale_forward.4} parent=1 // pred_fallthru
      _
    %158 = vsyncpa [#allocation3], 1

// kernel: flat_transformer_mean_log_scale_forward.7
$region0: #{flat_transformer_mean_log_scale_forward.7}
  #allocation0 [shape = 'u32[]', space=smem, size = 0x4, offset = 0x4, fixed_abs, tag = 'smem constant byte address 0x4 - core index']
  #allocation1 [shape = 'u32[144,128]{1,0:T(1,128)}', space=vmem, size = 0x12000, scoped, tag = 'internal scratch']
  %s0 = inlined_call_operand.vmem [shape: bf16[16,128], index: 0, kind: input, shape index: {}]
  %s1 = inlined_call_operand.vmem [shape: bf16[128,128], index: 1, kind: input, shape index: {}]
  %s2 = inlined_call_operand.vmem [shape: f32[1,128], index: 2, kind: input, shape index: {}]
  %s3 = inlined_call_operand.vmem [shape: bf16[128,128], index: 3, kind: input, shape index: {}]
  %s4 = inlined_call_operand.vmem [shape: f32[1,128], index: 4, kind: input, shape index: {}]
  %s5 = inlined_call_operand.vmem [shape: f32[16,128], index: 5, kind: output, shape index: {}]
  %s6 = sld [smem:[#allocation0]]
  $region30: #{flat_transformer_mean_log_scale_forward.7} parent=0
    _
  %s8 = ssub.s32 1, %s6
  %s9 = scalar_select 0, %s8, %s6
  // Predicated region
  $region2: #{flat_transformer_mean_log_scale_forward.7} parent=0 // pred_check
    _
  $region3: #{flat_transformer_mean_log_scale_forward.7} parent=0 // pred_check_branch
    %11 = sbr.rel (0) target = $region5
  $region4: #{flat_transformer_mean_log_scale_forward.7} parent=0 // pred_region
    _
  $region5: #{flat_transformer_mean_log_scale_forward.7} parent=0 // pred_fallthru
    _
  // Predicated region
  $region6: #{flat_transformer_mean_log_scale_forward.7} parent=0 // pred_check
    _
  $region7: #{flat_transformer_mean_log_scale_forward.7} parent=0 // pred_check_branch
    %13 = sbr.rel (0) target = $region9
  $region8: #{flat_transformer_mean_log_scale_forward.7} parent=0 // pred_region
    _
  $region9: #{flat_transformer_mean_log_scale_forward.7} parent=0 // pred_fallthru
    _
  // Predicated region
  $region10: #{flat_transformer_mean_log_scale_forward.7} parent=0 // pred_check
    _
  $region11: #{flat_transformer_mean_log_scale_forward.7} parent=0 // pred_check_branch
    %15 = sbr.rel (0) target = $region13
  $region12: #{flat_transformer_mean_log_scale_forward.7} parent=0 // pred_region
    _
  $region13: #{flat_transformer_mean_log_scale_forward.7} parent=0 // pred_fallthru
    _
  // Predicated region
  $region14: #{flat_transformer_mean_log_scale_forward.7} parent=0 // pred_check
    _
  $region15: #{flat_transformer_mean_log_scale_forward.7} parent=0 // pred_check_branch
    %17 = sbr.rel (0) target = $region17
  $region16: #{flat_transformer_mean_log_scale_forward.7} parent=0 // pred_region
    _
  $region17: #{flat_transformer_mean_log_scale_forward.7} parent=0 // pred_fallthru
    _
  // Predicated region
  $region18: #{flat_transformer_mean_log_scale_forward.7} parent=0 // pred_check
    _
  $region19: #{flat_transformer_mean_log_scale_forward.7} parent=0 // pred_check_branch
    %19 = sbr.rel (0) target = $region21
  $region20: #{flat_transformer_mean_log_scale_forward.7} parent=0 // pred_region
    _
  $region21: #{flat_transformer_mean_log_scale_forward.7} parent=0 // pred_fallthru
    _
  %v21 = vld [vmem:[%s0] sm:$0xf]
  %v22 = vld [vmem:[%s0 + $0x4] sm:$0xf]
  %v23 = vld [vmem:[%s1] sm:$0xf]
  %v24 = vld [vmem:[%s1 + $0x4] sm:$0xf]
  %v25 = vld [vmem:[%s1 + $0x8] sm:$0xf]
  %v26 = vld [vmem:[%s1 + $0xc] sm:$0xf]
  %v27 = vld [vmem:[%s1 + $0x10] sm:$0xf]
  %v28 = vld [vmem:[%s1 + $0x14] sm:$0xf]
  %v29 = vld [vmem:[%s1 + $0x18] sm:$0xf]
  %v30 = vld [vmem:[%s1 + $0x1c] sm:$0xf]
  %v31 = vld [vmem:[%s1 + $0x20] sm:$0xf]
  %v32 = vld [vmem:[%s1 + $0x24] sm:$0xf]
  %v33 = vld [vmem:[%s1 + $0x28] sm:$0xf]
  %v34 = vld [vmem:[%s1 + $0x2c] sm:$0xf]
  %v35 = vld [vmem:[%s1 + $0x30] sm:$0xf]
  %v36 = vld [vmem:[%s1 + $0x34] sm:$0xf]
  %v37 = vld [vmem:[%s1 + $0x38] sm:$0xf]
  %v38 = vld [vmem:[%s1 + $0x3c] sm:$0xf]
  %v39 = vld [vmem:[%s2] sm:$0x1]
  %v41 = vlaneseq
  %v42 = vshrl.u32 %v41, 7
  %v43 = vsub.s32 0, %v42
  %v44 = vrot.slane %v39, %v43
  %v48 = vunpack.c.l.b16 %v21
  %v49 = vunpack.c.l.b16 %v22
  %v50 = vpack.c.b16 %v49, %v48
  %v68 = vunpack.c.l.b16 %v23
  %v69 = vunpack.c.l.b16 %v24
  %v70 = vunpack.c.l.b16 %v25
  %v71 = vunpack.c.l.b16 %v26
  %v72 = vunpack.c.l.b16 %v27
  %v73 = vunpack.c.l.b16 %v28
  %v74 = vunpack.c.l.b16 %v29
  %v75 = vunpack.c.l.b16 %v30
  %v76 = vunpack.c.l.b16 %v31
  %v77 = vunpack.c.l.b16 %v32
  %v78 = vunpack.c.l.b16 %v33
  %v79 = vunpack.c.l.b16 %v34
  %v80 = vunpack.c.l.b16 %v35
  %v81 = vunpack.c.l.b16 %v36
  %v82 = vunpack.c.l.b16 %v37
  %v83 = vunpack.c.l.b16 %v38
  %v84 = vpack.c.b16 %v69, %v68
  %v85 = vpack.c.b16 %v71, %v70
  %v86 = vpack.c.b16 %v73, %v72
  %v87 = vpack.c.b16 %v75, %v74
  %v88 = vpack.c.b16 %v77, %v76
  %v89 = vpack.c.b16 %v79, %v78
  %v90 = vpack.c.b16 %v81, %v80
  %v91 = vpack.c.b16 %v83, %v82
  %100 = vmatprep.subr.bf16.mxu0 0
  %101 = vmatpush1.bf16.msra.mxu0 %v91
  %102 = vmatprep.subr.bf16.mxu0 0
  %103 = vmatpush1.bf16.msra.mxu0 %v90
  %104 = vmatprep.subr.bf16.mxu0 0
  %105 = vmatpush1.bf16.msra.mxu0 %v89
  %106 = vmatprep.subr.bf16.mxu0 0
  %107 = vmatpush1.bf16.msra.mxu0 %v88
  %108 = vmatprep.subr.bf16.mxu0 0
  %109 = vmatpush1.bf16.msra.mxu0 %v87
  %110 = vmatprep.subr.bf16.mxu0 0
  %111 = vmatpush1.bf16.msra.mxu0 %v86
  %112 = vmatprep.subr.bf16.mxu0 0
  %113 = vmatpush1.bf16.msra.mxu0 %v85
  %114 = vmatprep.subr.bf16.mxu0 0
  %115 = vmatpush1.bf16.msra.mxu0 %v84
  %116 = vmatprep.subr.bf16.mxu0 0
  %117 = vmatpush2.bf16.msra.mxu0 0
  %118 = vmatprep.subr.bf16.mxu0 0
  %119 = vmatpush2.bf16.msra.mxu0 0
  %120 = vmatprep.subr.bf16.mxu0 0
  %121 = vmatpush2.bf16.msra.mxu0 0
  %122 = vmatprep.subr.bf16.mxu0 0
  %123 = vmatpush2.bf16.msra.mxu0 0
  %124 = vmatprep.subr.bf16.mxu0 0
  %125 = vmatpush2.bf16.msra.mxu0 0
  %126 = vmatprep.subr.bf16.mxu0 0
  %127 = vmatpush2.bf16.msra.mxu0 0
  %128 = vmatprep.subr.bf16.mxu0 0
  %129 = vmatpush2.bf16.msra.mxu0 0
  %130 = vmatprep.subr.bf16.mxu0 0
  %131 = vmatpush2.bf16.msra.mxu0 0
  %132 = vmatprep.mubr.bf16.mxu0 0
  %133 = vmatmul.mubr.bf16.gmra.mxu0 %v50
  %v134 = vpop.f32.mrf.mxu0
  %v135 = vadd.f32 %v44, %v134
  %v136 = vpop.f32.mrf.mxu0
  %v137 = vpop.f32.mrf.mxu0
  %v138 = vadd.f32 %v44, %v137
  %v139 = vpop.f32.mrf.mxu0
  %140 = vdwg.mxu0
  %v141 = vmax.f32 %v135, 0.0
  %v142 = vmax.f32 %v138, 0.0
  %v143 = vpack.c.bf16 %v142, %v141
  %v144 = vld [vmem:[%s3] sm:$0xf]
  %v145 = vld [vmem:[%s3 + $0x4] sm:$0xf]
  %v146 = vld [vmem:[%s3 + $0x8] sm:$0xf]
  %v147 = vld [vmem:[%s3 + $0xc] sm:$0xf]
  %v148 = vld [vmem:[%s3 + $0x10] sm:$0xf]
  %v149 = vld [vmem:[%s3 + $0x14] sm:$0xf]
  %v150 = vld [vmem:[%s3 + $0x18] sm:$0xf]
  %v151 = vld [vmem:[%s3 + $0x1c] sm:$0xf]
  %v152 = vld [vmem:[%s3 + $0x20] sm:$0xf]
  %v153 = vld [vmem:[%s3 + $0x24] sm:$0xf]
  %v154 = vld [vmem:[%s3 + $0x28] sm:$0xf]
  %v155 = vld [vmem:[%s3 + $0x2c] sm:$0xf]
  %v156 = vld [vmem:[%s3 + $0x30] sm:$0xf]
  %v157 = vld [vmem:[%s3 + $0x34] sm:$0xf]
  %v158 = vld [vmem:[%s3 + $0x38] sm:$0xf]
  %v159 = vld [vmem:[%s3 + $0x3c] sm:$0xf]
  %v160 = vld [vmem:[%s4] sm:$0x1]
  %v162 = vlaneseq
  %v163 = vshrl.u32 %v162, 7
  %v164 = vsub.s32 0, %v163
  %v165 = vrot.slane %v160, %v164
  %v183 = vunpack.c.l.b16 %v144
  %v184 = vunpack.c.l.b16 %v145
  %v185 = vunpack.c.l.b16 %v146
  %v186 = vunpack.c.l.b16 %v147
  %v187 = vunpack.c.l.b16 %v148
  %v188 = vunpack.c.l.b16 %v149
  %v189 = vunpack.c.l.b16 %v150
  %v190 = vunpack.c.l.b16 %v151
  %v191 = vunpack.c.l.b16 %v152
  %v192 = vunpack.c.l.b16 %v153
  %v193 = vunpack.c.l.b16 %v154
  %v194 = vunpack.c.l.b16 %v155
  %v195 = vunpack.c.l.b16 %v156
  %v196 = vunpack.c.l.b16 %v157
  %v197 = vunpack.c.l.b16 %v158
  %v198 = vunpack.c.l.b16 %v159
  %v199 = vpack.c.b16 %v184, %v183
  %v200 = vpack.c.b16 %v186, %v185
  %v201 = vpack.c.b16 %v188, %v187
  %v202 = vpack.c.b16 %v190, %v189
  %v203 = vpack.c.b16 %v192, %v191
  %v204 = vpack.c.b16 %v194, %v193
  %v205 = vpack.c.b16 %v196, %v195
  %v206 = vpack.c.b16 %v198, %v197
  %215 = vmatprep.subr.bf16.mxu0 0
  %216 = vmatpush1.bf16.msra.mxu0 %v206
  %217 = vmatprep.subr.bf16.mxu0 0
  %218 = vmatpush1.bf16.msra.mxu0 %v205
  %219 = vmatprep.subr.bf16.mxu0 0
  %220 = vmatpush1.bf16.msra.mxu0 %v204
  %221 = vmatprep.subr.bf16.mxu0 0
  %222 = vmatpush1.bf16.msra.mxu0 %v203
  %223 = vmatprep.subr.bf16.mxu0 0
  %224 = vmatpush1.bf16.msra.mxu0 %v202
  %225 = vmatprep.subr.bf16.mxu0 0
  %226 = vmatpush1.bf16.msra.mxu0 %v201
  %227 = vmatprep.subr.bf16.mxu0 0
  %228 = vmatpush1.bf16.msra.mxu0 %v200
  %229 = vmatprep.subr.bf16.mxu0 0
  %230 = vmatpush1.bf16.msra.mxu0 %v199
  %231 = vmatprep.subr.bf16.mxu0 0
  %232 = vmatpush2.bf16.msra.mxu0 0
  %233 = vmatprep.subr.bf16.mxu0 0
  %234 = vmatpush2.bf16.msra.mxu0 0
  %235 = vmatprep.subr.bf16.mxu0 0
  %236 = vmatpush2.bf16.msra.mxu0 0
  %237 = vmatprep.subr.bf16.mxu0 0
  %238 = vmatpush2.bf16.msra.mxu0 0
  %239 = vmatprep.subr.bf16.mxu0 0
  %240 = vmatpush2.bf16.msra.mxu0 0
  %241 = vmatprep.subr.bf16.mxu0 0
  %242 = vmatpush2.bf16.msra.mxu0 0
  %243 = vmatprep.subr.bf16.mxu0 0
  %244 = vmatpush2.bf16.msra.mxu0 0
  %245 = vmatprep.subr.bf16.mxu0 0
  %246 = vmatpush2.bf16.msra.mxu0 0
  %247 = vmatprep.mubr.bf16.mxu0 0
  %248 = vmatmul.mubr.bf16.gmra.mxu0 %v143
  %v249 = vpop.f32.mrf.mxu0
  %v250 = vadd.f32 %v165, %v249
  %v251 = vpop.f32.mrf.mxu0
  %v252 = vpop.f32.mrf.mxu0
  %v253 = vadd.f32 %v165, %v252
  %v254 = vpop.f32.mrf.mxu0
  %255 = vdwg.mxu0
  %256 = vst [vmem:[%s5] sm:$0xff] %v250
  %257 = vst [vmem:[%s5 + $0x8] sm:$0xff] %v253
  // Predicated region
  $region22: #{flat_transformer_mean_log_scale_forward.7} parent=0 // pred_check
    _
  $region23: #{flat_transformer_mean_log_scale_forward.7} parent=0 // pred_check_branch
    %259 = sbr.rel (0) target = $region25
  $region24: #{flat_transformer_mean_log_scale_forward.7} parent=0 // pred_region
    _
  $region25: #{flat_transformer_mean_log_scale_forward.7} parent=0 // pred_fallthru
    _
  // Predicated region
  $region26: #{flat_transformer_mean_log_scale_forward.7} parent=0 // pred_check
    _
  $region27: #{flat_transformer_mean_log_scale_forward.7} parent=0 // pred_check_branch
    %261 = sbr.rel (0) target = $region29
  $region28: #{flat_transformer_mean_log_scale_forward.7} parent=0 // pred_region
    _
  $region29: #{flat_transformer_mean_log_scale_forward.7} parent=0 // pred_fallthru
    _

// kernel: flat_transformer_mean_log_scale_forward.5
$region0: #{flat_transformer_mean_log_scale_forward.5}
  #allocation0 [shape = 'u32[]', space=smem, size = 0x4, offset = 0x4, fixed_abs, tag = 'smem constant byte address 0x4 - core index']
  #allocation1 [shape = 'u32[144,128]{1,0:T(1,128)}', space=vmem, size = 0x12000, scoped, tag = 'internal scratch']
  %s0 = inlined_call_operand.vmem [shape: bf16[16,128], index: 0, kind: input, shape index: {}]
  %s1 = inlined_call_operand.vmem [shape: f32[2,8,8], index: 1, kind: input, shape index: {}]
  %s2 = inlined_call_operand.hbm [shape: bf16[128,384], index: 2, kind: input, shape index: {}]
  %s3 = inlined_call_operand.vmem [shape: f32[1,384], index: 3, kind: input, shape index: {}]
  %s4 = inlined_call_operand.hbm [shape: bf16[128,128], index: 4, kind: input, shape index: {}]
  %s5 = inlined_call_operand.vmem [shape: f32[1,128], index: 5, kind: input, shape index: {}]
  %s6 = inlined_call_operand.vmem [shape: f32[1,128], index: 6, kind: input, shape index: {}, may-alias: {6,12}]
  %s7 = inlined_call_operand.vmem [shape: f32[1,128], index: 7, kind: input, shape index: {}, may-alias: {7,13}]
  %s8 = inlined_call_operand.vmem [shape: bf16[128,128], index: 8, kind: input, shape index: {}]
  %s9 = inlined_call_operand.vmem [shape: f32[1,128], index: 9, kind: input, shape index: {}]
  %s10 = inlined_call_operand.vmem [shape: bf16[128,128], index: 10, kind: input, shape index: {}]
  %s11 = inlined_call_operand.vmem [shape: f32[1,128], index: 11, kind: input, shape index: {}]
  %s12 = inlined_call_operand.vmem [shape: f32[1,128], index: 12, kind: input, shape index: {}, may-alias: {6,12}]
  %s13 = inlined_call_operand.vmem [shape: f32[1,128], index: 13, kind: input, shape index: {}, may-alias: {7,13}]
  %s14 = inlined_call_operand.vmem [shape: bf16[16,128], index: 14, kind: output, shape index: {}]
  %s15 = sld [smem:[#allocation0]]
  $region74: #{flat_transformer_mean_log_scale_forward.5} parent=0
    _
  %s17 = ssub.s32 1, %s15
  %s18 = scalar_select 0, %s17, %s15
  $region1: #{flat_transformer_mean_log_scale_forward.5} parent=0
    #allocation2 [shape = 'u8[98304]{0}', space=vmem, size = 0x18000, scoped, tag = 'input window, operand 2, single buffered']
    #allocation3 [shape = 's32[1]{0}', space=sflag, size = 0x4, scoped, tag = 'scoped memory for flat_transformer_mean_log_scale_forward.5']
    #allocation4 [shape = 'u8[32768]{0}', space=vmem, size = 0x8000, scoped, tag = 'input window, operand 4, single buffered']
    #allocation5 [shape = 's32[1]{0}', space=sflag, size = 0x4, scoped, tag = 'scoped memory for flat_transformer_mean_log_scale_forward.5']
    %19 = vsyncpa [#allocation3], 0
    %20 = vsyncpa [#allocation5], 0
    // Predicated region
    $region2: #{flat_transformer_mean_log_scale_forward.5} parent=1 // pred_check
      _
    $region3: #{flat_transformer_mean_log_scale_forward.5} parent=1 // pred_check_branch
      %22 = sbr.rel (0) target = $region5
    $region4: #{flat_transformer_mean_log_scale_forward.5} parent=1 // pred_region
      _
    $region5: #{flat_transformer_mean_log_scale_forward.5} parent=1 // pred_fallthru
      _
    // Predicated region
    $region6: #{flat_transformer_mean_log_scale_forward.5} parent=1 // pred_check
      _
    $region7: #{flat_transformer_mean_log_scale_forward.5} parent=1 // pred_check_branch
      %24 = sbr.rel (0) target = $region9
    $region8: #{flat_transformer_mean_log_scale_forward.5} parent=1 // pred_region
      _
    $region9: #{flat_transformer_mean_log_scale_forward.5} parent=1 // pred_fallthru
      _
    // Predicated region
    $region10: #{flat_transformer_mean_log_scale_forward.5} parent=1 // pred_check
      _
    $region11: #{flat_transformer_mean_log_scale_forward.5} parent=1 // pred_check_branch
      %26 = sbr.rel (0) target = $region13
    $region12: #{flat_transformer_mean_log_scale_forward.5} parent=1 // pred_region
      %s28 = ssub.s32 3072, 3072
      %29 = vsyncadd [#allocation3], %s28
      %s30 = sshll.u32 [#allocation2], 4
      %s31 = int_to_ptr.vmem [resolvable:$true] %s30
      %36 = dma.hbm_to_vmem [thread:$0]  %s2, 3072, %s31, [#allocation3], 192, 192, 12
    $region13: #{flat_transformer_mean_log_scale_forward.5} parent=1 // pred_fallthru
      _
    // Predicated region
    $region14: #{flat_transformer_mean_log_scale_forward.5} parent=1 // pred_check
      _
    $region15: #{flat_transformer_mean_log_scale_forward.5} parent=1 // pred_check_branch
      %38 = sbr.rel (0) target = $region17
    $region16: #{flat_transformer_mean_log_scale_forward.5} parent=1 // pred_region
      _
    $region17: #{flat_transformer_mean_log_scale_forward.5} parent=1 // pred_fallthru
      _
    // Predicated region
    $region18: #{flat_transformer_mean_log_scale_forward.5} parent=1 // pred_check
      _
    $region19: #{flat_transformer_mean_log_scale_forward.5} parent=1 // pred_check_branch
      %40 = sbr.rel (0) target = $region21
    $region20: #{flat_transformer_mean_log_scale_forward.5} parent=1 // pred_region
      %s42 = ssub.s32 1024, 1024
      %43 = vsyncadd [#allocation5], %s42
      %s44 = sshll.u32 [#allocation4], 4
      %s45 = int_to_ptr.vmem [resolvable:$true] %s44
      %50 = dma.hbm_to_vmem [thread:$0]  %s4, 1024, %s45, [#allocation5], 64, 64, 4
    $region21: #{flat_transformer_mean_log_scale_forward.5} parent=1 // pred_fallthru
      _
    // Predicated region
    $region22: #{flat_transformer_mean_log_scale_forward.5} parent=1 // pred_check
      _
    $region23: #{flat_transformer_mean_log_scale_forward.5} parent=1 // pred_check_branch
      %52 = sbr.rel (0) target = $region25
    $region24: #{flat_transformer_mean_log_scale_forward.5} parent=1 // pred_region
      _
    $region25: #{flat_transformer_mean_log_scale_forward.5} parent=1 // pred_fallthru
      _
    // Predicated region
    $region26: #{flat_transformer_mean_log_scale_forward.5} parent=1 // pred_check
      _
    $region27: #{flat_transformer_mean_log_scale_forward.5} parent=1 // pred_check_branch
      %54 = sbr.rel (0) target = $region29
    $region28: #{flat_transformer_mean_log_scale_forward.5} parent=1 // pred_region
      _
    $region29: #{flat_transformer_mean_log_scale_forward.5} parent=1 // pred_fallthru
      _
    // Predicated region
    $region30: #{flat_transformer_mean_log_scale_forward.5} parent=1 // pred_check
      _
    $region31: #{flat_transformer_mean_log_scale_forward.5} parent=1 // pred_check_branch
      %56 = sbr.rel (0) target = $region33
    $region32: #{flat_transformer_mean_log_scale_forward.5} parent=1 // pred_region
      _
    $region33: #{flat_transformer_mean_log_scale_forward.5} parent=1 // pred_fallthru
      _
    // Predicated region
    $region34: #{flat_transformer_mean_log_scale_forward.5} parent=1 // pred_check
      _
    $region35: #{flat_transformer_mean_log_scale_forward.5} parent=1 // pred_check_branch
      %58 = sbr.rel (0) target = $region37
    $region36: #{flat_transformer_mean_log_scale_forward.5} parent=1 // pred_region
      _
    $region37: #{flat_transformer_mean_log_scale_forward.5} parent=1 // pred_fallthru
      _
    // Predicated region
    $region38: #{flat_transformer_mean_log_scale_forward.5} parent=1 // pred_check
      _
    $region39: #{flat_transformer_mean_log_scale_forward.5} parent=1 // pred_check_branch
      %60 = sbr.rel (0) target = $region41
    $region40: #{flat_transformer_mean_log_scale_forward.5} parent=1 // pred_region
      _
    $region41: #{flat_transformer_mean_log_scale_forward.5} parent=1 // pred_fallthru
      _
    // Predicated region
    $region42: #{flat_transformer_mean_log_scale_forward.5} parent=1 // pred_check
      _
    $region43: #{flat_transformer_mean_log_scale_forward.5} parent=1 // pred_check_branch
      %62 = sbr.rel (0) target = $region45
    $region44: #{flat_transformer_mean_log_scale_forward.5} parent=1 // pred_region
      _
    $region45: #{flat_transformer_mean_log_scale_forward.5} parent=1 // pred_fallthru
      _
    // Predicated region
    $region46: #{flat_transformer_mean_log_scale_forward.5} parent=1 // pred_check
      _
    $region47: #{flat_transformer_mean_log_scale_forward.5} parent=1 // pred_check_branch
      %64 = sbr.rel (0) target = $region49
    $region48: #{flat_transformer_mean_log_scale_forward.5} parent=1 // pred_region
      _
    $region49: #{flat_transformer_mean_log_scale_forward.5} parent=1 // pred_fallthru
      _
    // Predicated region
    $region50: #{flat_transformer_mean_log_scale_forward.5} parent=1 // pred_check
      _
    $region51: #{flat_transformer_mean_log_scale_forward.5} parent=1 // pred_check_branch
      %66 = sbr.rel (0) target = $region53
    $region52: #{flat_transformer_mean_log_scale_forward.5} parent=1 // pred_region
      _
    $region53: #{flat_transformer_mean_log_scale_forward.5} parent=1 // pred_fallthru
      _
    // Predicated region
    $region54: #{flat_transformer_mean_log_scale_forward.5} parent=1 // pred_check
      _
    $region55: #{flat_transformer_mean_log_scale_forward.5} parent=1 // pred_check_branch
      %68 = sbr.rel (0) target = $region57
    $region56: #{flat_transformer_mean_log_scale_forward.5} parent=1 // pred_region
      _
    $region57: #{flat_transformer_mean_log_scale_forward.5} parent=1 // pred_fallthru
      _
    // Predicated region
    $region58: #{flat_transformer_mean_log_scale_forward.5} parent=1 // pred_check
      _
    $region59: #{flat_transformer_mean_log_scale_forward.5} parent=1 // pred_check_branch
      %70 = sbr.rel (0) target = $region61
    $region60: #{flat_transformer_mean_log_scale_forward.5} parent=1 // pred_region
      %71 = dma.done [#allocation3], 3072
    $region61: #{flat_transformer_mean_log_scale_forward.5} parent=1 // pred_fallthru
      _
    // Predicated region
    $region62: #{flat_transformer_mean_log_scale_forward.5} parent=1 // pred_check
      _
    $region63: #{flat_transformer_mean_log_scale_forward.5} parent=1 // pred_check_branch
      %73 = sbr.rel (0) target = $region65
    $region64: #{flat_transformer_mean_log_scale_forward.5} parent=1 // pred_region
      %74 = dma.done [#allocation5], 1024
    $region65: #{flat_transformer_mean_log_scale_forward.5} parent=1 // pred_fallthru
      _
    %v76 = vld [vmem:[%s0] sm:$0xf]
    %v77 = vld [vmem:[%s0 + $0x4] sm:$0xf]
    %v78 = vunpack.c.l.bf16 %v76
    %v79 = vunpack.c.l.bf16 %v77
    %v80 = vlaneseq
    %v81 = vand.u32 %v80, 127
    %vm82 = vcmp.lt.s32.totalorder %v81, 32
    %v83 = vsel %vm82, 1, 0
    %v84 = vcvt.s32.f32 %v83
    %v85 = vld [vmem:[#allocation2] sm:$0xff]
    %v86 = vld [vmem:[#allocation2 + $0x8] sm:$0xf]
    %v87 = vld [vmem:[#allocation2 + $0xc] sm:$0xff]
    %v88 = vld [vmem:[#allocation2 + $0x14] sm:$0xf]
    %v89 = vld [vmem:[#allocation2 + $0x18] sm:$0xff]
    %v90 = vld [vmem:[#allocation2 + $0x20] sm:$0xf]
    %v91 = vld [vmem:[#allocation2 + $0x24] sm:$0xff]
    %v92 = vld [vmem:[#allocation2 + $0x2c] sm:$0xf]
    %v93 = vld [vmem:[#allocation2 + $0x30] sm:$0xff]
    %v94 = vld [vmem:[#allocation2 + $0x38] sm:$0xf]
    %v95 = vld [vmem:[#allocation2 + $0x3c] sm:$0xff]
    %v96 = vld [vmem:[#allocation2 + $0x44] sm:$0xf]
    %v97 = vld [vmem:[#allocation2 + $0x48] sm:$0xff]
    %v98 = vld [vmem:[#allocation2 + $0x50] sm:$0xf]
    %v99 = vld [vmem:[#allocation2 + $0x54] sm:$0xff]
    %v100 = vld [vmem:[#allocation2 + $0x5c] sm:$0xf]
    %v101 = vld [vmem:[#allocation2 + $0x60] sm:$0xff]
    %v102 = vld [vmem:[#allocation2 + $0x68] sm:$0xf]
    %v103 = vld [vmem:[#allocation2 + $0x6c] sm:$0xff]
    %v104 = vld [vmem:[#allocation2 + $0x74] sm:$0xf]
    %v105 = vld [vmem:[#allocation2 + $0x78] sm:$0xff]
    %v106 = vld [vmem:[#allocation2 + $0x80] sm:$0xf]
    %v107 = vld [vmem:[#allocation2 + $0x84] sm:$0xff]
    %v108 = vld [vmem:[#allocation2 + $0x8c] sm:$0xf]
    %v109 = vld [vmem:[#allocation2 + $0x90] sm:$0xff]
    %v110 = vld [vmem:[#allocation2 + $0x98] sm:$0xf]
    %v111 = vld [vmem:[#allocation2 + $0x9c] sm:$0xff]
    %v112 = vld [vmem:[#allocation2 + $0xa4] sm:$0xf]
    %v113 = vld [vmem:[#allocation2 + $0xa8] sm:$0xff]
    %v114 = vld [vmem:[#allocation2 + $0xb0] sm:$0xf]
    %v115 = vld [vmem:[#allocation2 + $0xb4] sm:$0xff]
    %v116 = vld [vmem:[#allocation2 + $0xbc] sm:$0xf]
    %v117 = vld [vmem:[%s3] sm:$0x7]
    %v119 = vlaneseq
    %v120 = vshrl.u32 %v119, 7
    %v121 = vsub.s32 0, %v120
    %v122 = vrot.slane %v117, %v121
    %v123 = vlaneseq
    %v124 = vshrl.u32 %v123, 7
    %v125 = vsub.s32 1, %v124
    %v126 = vrot.slane %v117, %v125
    %v127 = vlaneseq
    %v128 = vshrl.u32 %v127, 7
    %v129 = vsub.s32 2, %v128
    %v130 = vrot.slane %v117, %v129
    %v136 = vunpack.c.l.b16 %v76
    %v137 = vunpack.c.l.b16 %v77
    %v138 = vpack.c.b16 %v137, %v136
    %v172 = vunpack.c.l.b16 %v85
    %v173 = vunpack.c.h.b16 %v85
    %v174 = vunpack.c.l.b16 %v86
    %v175 = vunpack.c.l.b16 %v87
    %v176 = vunpack.c.h.b16 %v87
    %v177 = vunpack.c.l.b16 %v88
    %v178 = vunpack.c.l.b16 %v89
    %v179 = vunpack.c.h.b16 %v89
    %v180 = vunpack.c.l.b16 %v90
    %v181 = vunpack.c.l.b16 %v91
    %v182 = vunpack.c.h.b16 %v91
    %v183 = vunpack.c.l.b16 %v92
    %v184 = vunpack.c.l.b16 %v93
    %v185 = vunpack.c.h.b16 %v93
    %v186 = vunpack.c.l.b16 %v94
    %v187 = vunpack.c.l.b16 %v95
    %v188 = vunpack.c.h.b16 %v95
    %v189 = vunpack.c.l.b16 %v96
    %v190 = vunpack.c.l.b16 %v97
    %v191 = vunpack.c.h.b16 %v97
    %v192 = vunpack.c.l.b16 %v98
    %v193 = vunpack.c.l.b16 %v99
    %v194 = vunpack.c.h.b16 %v99
    %v195 = vunpack.c.l.b16 %v100
    %v196 = vunpack.c.l.b16 %v101
    %v197 = vunpack.c.h.b16 %v101
    %v198 = vunpack.c.l.b16 %v102
    %v199 = vunpack.c.l.b16 %v103
    %v200 = vunpack.c.h.b16 %v103
    %v201 = vunpack.c.l.b16 %v104
    %v202 = vunpack.c.l.b16 %v105
    %v203 = vunpack.c.h.b16 %v105
    %v204 = vunpack.c.l.b16 %v106
    %v205 = vunpack.c.l.b16 %v107
    %v206 = vunpack.c.h.b16 %v107
    %v207 = vunpack.c.l.b16 %v108
    %v208 = vunpack.c.l.b16 %v109
    %v209 = vunpack.c.h.b16 %v109
    %v210 = vunpack.c.l.b16 %v110
    %v211 = vunpack.c.l.b16 %v111
    %v212 = vunpack.c.h.b16 %v111
    %v213 = vunpack.c.l.b16 %v112
    %v214 = vunpack.c.l.b16 %v113
    %v215 = vunpack.c.h.b16 %v113
    %v216 = vunpack.c.l.b16 %v114
    %v217 = vunpack.c.l.b16 %v115
    %v218 = vunpack.c.h.b16 %v115
    %v219 = vunpack.c.l.b16 %v116
    %v220 = vpack.c.b16 %v175, %v172
    %v221 = vpack.c.b16 %v176, %v173
    %v222 = vpack.c.b16 %v177, %v174
    %v223 = vpack.c.b16 %v181, %v178
    %v224 = vpack.c.b16 %v182, %v179
    %v225 = vpack.c.b16 %v183, %v180
    %v226 = vpack.c.b16 %v187, %v184
    %v227 = vpack.c.b16 %v188, %v185
    %v228 = vpack.c.b16 %v189, %v186
    %v229 = vpack.c.b16 %v193, %v190
    %v230 = vpack.c.b16 %v194, %v191
    %v231 = vpack.c.b16 %v195, %v192
    %v232 = vpack.c.b16 %v199, %v196
    %v233 = vpack.c.b16 %v200, %v197
    %v234 = vpack.c.b16 %v201, %v198
    %v235 = vpack.c.b16 %v205, %v202
    %v236 = vpack.c.b16 %v206, %v203
    %v237 = vpack.c.b16 %v207, %v204
    %v238 = vpack.c.b16 %v211, %v208
    %v239 = vpack.c.b16 %v212, %v209
    %v240 = vpack.c.b16 %v213, %v210
    %v241 = vpack.c.b16 %v217, %v214
    %v242 = vpack.c.b16 %v218, %v215
    %v243 = vpack.c.b16 %v219, %v216
    %268 = vmatprep.subr.bf16.mxu0 %v242
    %269 = vmatpush1.bf16.msra.mxu0 %v241
    %270 = vmatprep.subr.bf16.mxu0 %v239
    %271 = vmatpush1.bf16.msra.mxu0 %v238
    %272 = vmatprep.subr.bf16.mxu0 %v236
    %273 = vmatpush1.bf16.msra.mxu0 %v235
    %274 = vmatprep.subr.bf16.mxu0 %v233
    %275 = vmatpush1.bf16.msra.mxu0 %v232
    %276 = vmatprep.subr.bf16.mxu0 %v230
    %277 = vmatpush1.bf16.msra.mxu0 %v229
    %278 = vmatprep.subr.bf16.mxu0 %v227
    %279 = vmatpush1.bf16.msra.mxu0 %v226
    %280 = vmatprep.subr.bf16.mxu0 %v224
    %281 = vmatpush1.bf16.msra.mxu0 %v223
    %282 = vmatprep.subr.bf16.mxu0 %v221
    %283 = vmatpush1.bf16.msra.mxu0 %v220
    %284 = vmatprep.subr.bf16.mxu0 0
    %285 = vmatpush2.bf16.msra.mxu0 0
    %286 = vmatprep.subr.bf16.mxu0 0
    %287 = vmatpush2.bf16.msra.mxu0 0
    %288 = vmatprep.subr.bf16.mxu0 0
    %289 = vmatpush2.bf16.msra.mxu0 0
    %290 = vmatprep.subr.bf16.mxu0 0
    %291 = vmatpush2.bf16.msra.mxu0 0
    %292 = vmatprep.subr.bf16.mxu0 0
    %293 = vmatpush2.bf16.msra.mxu0 0
    %294 = vmatprep.subr.bf16.mxu0 0
    %295 = vmatpush2.bf16.msra.mxu0 0
    %296 = vmatprep.subr.bf16.mxu0 0
    %297 = vmatpush2.bf16.msra.mxu0 0
    %298 = vmatprep.subr.bf16.mxu0 0
    %299 = vmatpush2.bf16.msra.mxu0 0
    %300 = vmatprep.mubr.bf16.mxu0 0
    %301 = vmatmul.mubr.bf16.gmra.mxu0 %v138
    %v302 = vpop.f32.mrf.mxu0
    %v303 = vadd.f32 %v122, %v302
    %v304 = vpop.f32.mrf.mxu0
    %v305 = vadd.f32 %v126, %v304
    %v306 = vpop.f32.mrf.mxu0
    %v307 = vadd.f32 %v122, %v306
    %v308 = vpop.f32.mrf.mxu0
    %v309 = vadd.f32 %v126, %v308
    %310 = vdwg.mxu0
    %311 = vmatprep.subr.bf16.mxu0 0
    %312 = vmatpush1.bf16.msra.mxu0 %v243
    %313 = vmatprep.subr.bf16.mxu0 0
    %314 = vmatpush1.bf16.msra.mxu0 %v240
    %315 = vmatprep.subr.bf16.mxu0 0
    %316 = vmatpush1.bf16.msra.mxu0 %v237
    %317 = vmatprep.subr.bf16.mxu0 0
    %318 = vmatpush1.bf16.msra.mxu0 %v234
    %319 = vmatprep.subr.bf16.mxu0 0
    %320 = vmatpush1.bf16.msra.mxu0 %v231
    %321 = vmatprep.subr.bf16.mxu0 0
    %322 = vmatpush1.bf16.msra.mxu0 %v228
    %323 = vmatprep.subr.bf16.mxu0 0
    %324 = vmatpush1.bf16.msra.mxu0 %v225
    %325 = vmatprep.subr.bf16.mxu0 0
    %326 = vmatpush1.bf16.msra.mxu0 %v222
    %327 = vmatprep.subr.bf16.mxu0 0
    %328 = vmatpush2.bf16.msra.mxu0 0
    %329 = vmatprep.subr.bf16.mxu0 0
    %330 = vmatpush2.bf16.msra.mxu0 0
    %331 = vmatprep.subr.bf16.mxu0 0
    %332 = vmatpush2.bf16.msra.mxu0 0
    %333 = vmatprep.subr.bf16.mxu0 0
    %334 = vmatpush2.bf16.msra.mxu0 0
    %335 = vmatprep.subr.bf16.mxu0 0
    %336 = vmatpush2.bf16.msra.mxu0 0
    %337 = vmatprep.subr.bf16.mxu0 0
    %338 = vmatpush2.bf16.msra.mxu0 0
    %339 = vmatprep.subr.bf16.mxu0 0
    %340 = vmatpush2.bf16.msra.mxu0 0
    %341 = vmatprep.subr.bf16.mxu0 0
    %342 = vmatpush2.bf16.msra.mxu0 0
    %343 = vmatprep.mubr.bf16.mxu0 0
    %344 = vmatmul.mubr.bf16.gmra.mxu0 %v138
    %v345 = vpop.f32.mrf.mxu0
    %v346 = vadd.f32 %v130, %v345
    %v347 = vpop.f32.mrf.mxu0
    %v348 = vpop.f32.mrf.mxu0
    %v349 = vadd.f32 %v130, %v348
    %v350 = vpop.f32.mrf.mxu0
    %351 = vdwg.mxu0
    %v352 = vld [vmem:[%s1] sm:$0xff]
    %v353 = vld [vmem:[%s1 + $0x8] sm:$0xff]
    %v354 = vpack.c.bf16 %v303, %v303
    %v355 = vpack.c.bf16 %v305, %v305
    %v356 = vpack.c.bf16 %v346, %v346
    %vm357 = vcmask 261120
    %v359 = vsel %vm357, %v354, 0
    %v362 = vsel %vm357, %v355, 0
    %364 = vmatprep.subr.bf16.mxu0 0
    %365 = vmatpush1.bf16.xpose.msra.mxu0 0
    %366 = vmatprep.subr.bf16.mxu0 0
    %367 = vmatpush1.bf16.xpose.msra.mxu0 0
    %368 = vmatprep.subr.bf16.mxu0 0
    %369 = vmatpush1.bf16.xpose.msra.mxu0 0
    %370 = vmatprep.subr.bf16.mxu0 0
    %371 = vmatpush1.bf16.xpose.msra.mxu0 0
    %372 = vmatprep.subr.bf16.mxu0 0
    %373 = vmatpush1.bf16.xpose.msra.mxu0 0
    %374 = vmatprep.subr.bf16.mxu0 0
    %375 = vmatpush1.bf16.xpose.msra.mxu0 0
    %376 = vmatprep.subr.bf16.mxu0 0
    %377 = vmatpush1.bf16.xpose.msra.mxu0 0
    %378 = vmatprep.subr.bf16.mxu0 0
    %379 = vmatpush1.bf16.xpose.msra.mxu0 %v362
    %380 = vmatprep.subr.bf16.mxu0 0
    %381 = vmatpush2.bf16.xpose.msra.mxu0 0
    %382 = vmatprep.subr.bf16.mxu0 0
    %383 = vmatpush2.bf16.xpose.msra.mxu0 0
    %384 = vmatprep.subr.bf16.mxu0 0
    %385 = vmatpush2.bf16.xpose.msra.mxu0 0
    %386 = vmatprep.subr.bf16.mxu0 0
    %387 = vmatpush2.bf16.xpose.msra.mxu0 0
    %388 = vmatprep.subr.bf16.mxu0 0
    %389 = vmatpush2.bf16.xpose.msra.mxu0 0
    %390 = vmatprep.subr.bf16.mxu0 0
    %391 = vmatpush2.bf16.xpose.msra.mxu0 0
    %392 = vmatprep.subr.bf16.mxu0 0
    %393 = vmatpush2.bf16.xpose.msra.mxu0 0
    %394 = vmatprep.subr.bf16.mxu0 0
    %395 = vmatpush2.bf16.xpose.msra.mxu0 0
    %396 = vmatprep.mubr.bf16.mxu0 0
    %397 = vmatmul.mubr.bf16.gmra.mxu0 %v359
    %v398 = vpop.f32.mrf.mxu0
    %v399 = vadd.f32 0.0, %v398
    %v400 = vpop.f32.mrf.mxu0
    %v401 = vpop.f32.mrf.mxu0
    %v402 = vpop.f32.mrf.mxu0
    %403 = vdwg.mxu0
    %v404 = vmul.f32 %v399, 0.35355338
    %v405 = vlaneseq
    %v406 = vshrl.u32 %v405, 7
    %v407 = vsub.s32 0, %v406
    %v408 = vrot.slane %v352, %v407
    %v409 = vadd.f32 %v404, %v408
    %vm410 = vcmask 64512
    %v411 = vsel %vm410, %v409, -inf
    %412 = vmax.xlane.f32.xlu0 %v411
    %v413 = vpop.xlane.xlu0 %412
    %v414 = vsub.f32 %v409, %v413
    %v415 = vmul.f32 %v414, 1.442695
    %v416 = vpow.pop %v415
    %v417 = vsel %vm410, %v416, 0.0
    %418 = vadd.xlane.f32.xlu0 %v417
    %v419 = vpop.xlane.xlu0 %418
    %v420 = vrcp.pop %v419
    %v421 = vmul.f32 %v416, %v420
    %v422 = vpack.c.bf16 %v421, %v421
    %v424 = vsel %vm410, %v422, 0
    %vm426 = vcmask 1043456
    %v428 = vsel %vm426, %v356, 0
    %430 = vmatprep.subr.bf16.mxu0 0
    %431 = vmatpush1.bf16.msra.mxu0 0
    %432 = vmatprep.subr.bf16.mxu0 0
    %433 = vmatpush1.bf16.msra.mxu0 0
    %434 = vmatprep.subr.bf16.mxu0 0
    %435 = vmatpush1.bf16.msra.mxu0 0
    %436 = vmatprep.subr.bf16.mxu0 0
    %437 = vmatpush1.bf16.msra.mxu0 0
    %438 = vmatprep.subr.bf16.mxu0 0
    %439 = vmatpush1.bf16.msra.mxu0 0
    %440 = vmatprep.subr.bf16.mxu0 0
    %441 = vmatpush1.bf16.msra.mxu0 0
    %442 = vmatprep.subr.bf16.mxu0 0
    %443 = vmatpush1.bf16.msra.mxu0 0
    %444 = vmatprep.subr.bf16.mxu0 0
    %445 = vmatpush1.bf16.msra.mxu0 %v428
    %446 = vmatprep.subr.bf16.mxu0 0
    %447 = vmatpush2.bf16.msra.mxu0 0
    %448 = vmatprep.subr.bf16.mxu0 0
    %449 = vmatpush2.bf16.msra.mxu0 0
    %450 = vmatprep.subr.bf16.mxu0 0
    %451 = vmatpush2.bf16.msra.mxu0 0
    %452 = vmatprep.subr.bf16.mxu0 0
    %453 = vmatpush2.bf16.msra.mxu0 0
    %454 = vmatprep.subr.bf16.mxu0 0
    %455 = vmatpush2.bf16.msra.mxu0 0
    %456 = vmatprep.subr.bf16.mxu0 0
    %457 = vmatpush2.bf16.msra.mxu0 0
    %458 = vmatprep.subr.bf16.mxu0 0
    %459 = vmatpush2.bf16.msra.mxu0 0
    %460 = vmatprep.subr.bf16.mxu0 0
    %461 = vmatpush2.bf16.msra.mxu0 0
    %462 = vmatprep.mubr.bf16.mxu0 0
    %463 = vmatmul.mubr.bf16.gmra.mxu0 %v424
    %v464 = vpop.f32.mrf.mxu0
    %v465 = vadd.f32 0.0, %v464
    %v466 = vpop.f32.mrf.mxu0
    %v467 = vpop.f32.mrf.mxu0
    %v468 = vpop.f32.mrf.mxu0
    %469 = vdwg.mxu0
    %471 = vrot.lane.b32.xlu0 %v354, 96
    %v472 = vpop.permute.xlu0 %471
    %474 = vrot.lane.b32.xlu0 %v355, 96
    %v475 = vpop.permute.xlu0 %474
    %v477 = vsel %vm357, %v472, 0
    %v480 = vsel %vm357, %v475, 0
    %482 = vmatprep.subr.bf16.mxu0 0
    %483 = vmatpush1.bf16.xpose.msra.mxu0 0
    %484 = vmatprep.subr.bf16.mxu0 0
    %485 = vmatpush1.bf16.xpose.msra.mxu0 0
    %486 = vmatprep.subr.bf16.mxu0 0
    %487 = vmatpush1.bf16.xpose.msra.mxu0 0
    %488 = vmatprep.subr.bf16.mxu0 0
    %489 = vmatpush1.bf16.xpose.msra.mxu0 0
    %490 = vmatprep.subr.bf16.mxu0 0
    %491 = vmatpush1.bf16.xpose.msra.mxu0 0
    %492 = vmatprep.subr.bf16.mxu0 0
    %493 = vmatpush1.bf16.xpose.msra.mxu0 0
    %494 = vmatprep.subr.bf16.mxu0 0
    %495 = vmatpush1.bf16.xpose.msra.mxu0 0
    %496 = vmatprep.subr.bf16.mxu0 0
    %497 = vmatpush1.bf16.xpose.msra.mxu0 %v480
    %498 = vmatprep.subr.bf16.mxu0 0
    %499 = vmatpush2.bf16.xpose.msra.mxu0 0
    %500 = vmatprep.subr.bf16.mxu0 0
    %501 = vmatpush2.bf16.xpose.msra.mxu0 0
    %502 = vmatprep.subr.bf16.mxu0 0
    %503 = vmatpush2.bf16.xpose.msra.mxu0 0
    %504 = vmatprep.subr.bf16.mxu0 0
    %505 = vmatpush2.bf16.xpose.msra.mxu0 0
    %506 = vmatprep.subr.bf16.mxu0 0
    %507 = vmatpush2.bf16.xpose.msra.mxu0 0
    %508 = vmatprep.subr.bf16.mxu0 0
    %509 = vmatpush2.bf16.xpose.msra.mxu0 0
    %510 = vmatprep.subr.bf16.mxu0 0
    %511 = vmatpush2.bf16.xpose.msra.mxu0 0
    %512 = vmatprep.subr.bf16.mxu0 0
    %513 = vmatpush2.bf16.xpose.msra.mxu0 0
    %514 = vmatprep.mubr.bf16.mxu0 0
    %515 = vmatmul.mubr.bf16.gmra.mxu0 %v477
    %v516 = vpop.f32.mrf.mxu0
    %v517 = vadd.f32 0.0, %v516
    %v518 = vpop.f32.mrf.mxu0
    %v519 = vpop.f32.mrf.mxu0
    %v520 = vpop.f32.mrf.mxu0
    %521 = vdwg.mxu0
    %v522 = vmul.f32 %v517, 0.35355338
    %v523 = vadd.f32 %v522, %v408
    %v524 = vsel %vm410, %v523, -inf
    %525 = vmax.xlane.f32.xlu0 %v524
    %v526 = vpop.xlane.xlu0 %525
    %v527 = vsub.f32 %v523, %v526
    %v528 = vmul.f32 %v527, 1.442695
    %v529 = vpow.pop %v528
    %v530 = vsel %vm410, %v529, 0.0
    %531 = vadd.xlane.f32.xlu0 %v530
    %v532 = vpop.xlane.xlu0 %531
    %v533 = vrcp.pop %v532
    %v534 = vmul.f32 %v529, %v533
    %v535 = vpack.c.bf16 %v534, %v534
    %537 = vrot.lane.b32.xlu0 %v356, 96
    %v538 = vpop.permute.xlu0 %537
    %v540 = vsel %vm410, %v535, 0
    %v543 = vsel %vm426, %v538, 0
    %545 = vmatprep.subr.bf16.mxu0 0
    %546 = vmatpush1.bf16.msra.mxu0 0
    %547 = vmatprep.subr.bf16.mxu0 0
    %548 = vmatpush1.bf16.msra.mxu0 0
    %549 = vmatprep.subr.bf16.mxu0 0
    %550 = vmatpush1.bf16.msra.mxu0 0
    %551 = vmatprep.subr.bf16.mxu0 0
    %552 = vmatpush1.bf16.msra.mxu0 0
    %553 = vmatprep.subr.bf16.mxu0 0
    %554 = vmatpush1.bf16.msra.mxu0 0
    %555 = vmatprep.subr.bf16.mxu0 0
    %556 = vmatpush1.bf16.msra.mxu0 0
    %557 = vmatprep.subr.bf16.mxu0 0
    %558 = vmatpush1.bf16.msra.mxu0 0
    %559 = vmatprep.subr.bf16.mxu0 0
    %560 = vmatpush1.bf16.msra.mxu0 %v543
    %561 = vmatprep.subr.bf16.mxu0 0
    %562 = vmatpush2.bf16.msra.mxu0 0
    %563 = vmatprep.subr.bf16.mxu0 0
    %564 = vmatpush2.bf16.msra.mxu0 0
    %565 = vmatprep.subr.bf16.mxu0 0
    %566 = vmatpush2.bf16.msra.mxu0 0
    %567 = vmatprep.subr.bf16.mxu0 0
    %568 = vmatpush2.bf16.msra.mxu0 0
    %569 = vmatprep.subr.bf16.mxu0 0
    %570 = vmatpush2.bf16.msra.mxu0 0
    %571 = vmatprep.subr.bf16.mxu0 0
    %572 = vmatpush2.bf16.msra.mxu0 0
    %573 = vmatprep.subr.bf16.mxu0 0
    %574 = vmatpush2.bf16.msra.mxu0 0
    %575 = vmatprep.subr.bf16.mxu0 0
    %576 = vmatpush2.bf16.msra.mxu0 0
    %577 = vmatprep.mubr.bf16.mxu0 0
    %578 = vmatmul.mubr.bf16.gmra.mxu0 %v540
    %v579 = vpop.f32.mrf.mxu0
    %v580 = vadd.f32 0.0, %v579
    %v581 = vpop.f32.mrf.mxu0
    %v582 = vpop.f32.mrf.mxu0
    %v583 = vpop.f32.mrf.mxu0
    %584 = vdwg.mxu0
    %585 = vrot.lane.b32.xlu0 %v354, 64
    %v586 = vpop.permute.xlu0 %585
    %587 = vrot.lane.b32.xlu0 %v355, 64
    %v588 = vpop.permute.xlu0 %587
    %v590 = vsel %vm357, %v586, 0
    %v593 = vsel %vm357, %v588, 0
    %595 = vmatprep.subr.bf16.mxu0 0
    %596 = vmatpush1.bf16.xpose.msra.mxu0 0
    %597 = vmatprep.subr.bf16.mxu0 0
    %598 = vmatpush1.bf16.xpose.msra.mxu0 0
    %599 = vmatprep.subr.bf16.mxu0 0
    %600 = vmatpush1.bf16.xpose.msra.mxu0 0
    %601 = vmatprep.subr.bf16.mxu0 0
    %602 = vmatpush1.bf16.xpose.msra.mxu0 0
    %603 = vmatprep.subr.bf16.mxu0 0
    %604 = vmatpush1.bf16.xpose.msra.mxu0 0
    %605 = vmatprep.subr.bf16.mxu0 0
    %606 = vmatpush1.bf16.xpose.msra.mxu0 0
    %607 = vmatprep.subr.bf16.mxu0 0
    %608 = vmatpush1.bf16.xpose.msra.mxu0 0
    %609 = vmatprep.subr.bf16.mxu0 0
    %610 = vmatpush1.bf16.xpose.msra.mxu0 %v593
    %611 = vmatprep.subr.bf16.mxu0 0
    %612 = vmatpush2.bf16.xpose.msra.mxu0 0
    %613 = vmatprep.subr.bf16.mxu0 0
    %614 = vmatpush2.bf16.xpose.msra.mxu0 0
    %615 = vmatprep.subr.bf16.mxu0 0
    %616 = vmatpush2.bf16.xpose.msra.mxu0 0
    %617 = vmatprep.subr.bf16.mxu0 0
    %618 = vmatpush2.bf16.xpose.msra.mxu0 0
    %619 = vmatprep.subr.bf16.mxu0 0
    %620 = vmatpush2.bf16.xpose.msra.mxu0 0
    %621 = vmatprep.subr.bf16.mxu0 0
    %622 = vmatpush2.bf16.xpose.msra.mxu0 0
    %623 = vmatprep.subr.bf16.mxu0 0
    %624 = vmatpush2.bf16.xpose.msra.mxu0 0
    %625 = vmatprep.subr.bf16.mxu0 0
    %626 = vmatpush2.bf16.xpose.msra.mxu0 0
    %627 = vmatprep.mubr.bf16.mxu0 0
    %628 = vmatmul.mubr.bf16.gmra.mxu0 %v590
    %v629 = vpop.f32.mrf.mxu0
    %v630 = vadd.f32 0.0, %v629
    %v631 = vpop.f32.mrf.mxu0
    %v632 = vpop.f32.mrf.mxu0
    %v633 = vpop.f32.mrf.mxu0
    %634 = vdwg.mxu0
    %v635 = vmul.f32 %v630, 0.35355338
    %v636 = vadd.f32 %v635, %v408
    %v637 = vsel %vm410, %v636, -inf
    %638 = vmax.xlane.f32.xlu0 %v637
    %v639 = vpop.xlane.xlu0 %638
    %v640 = vsub.f32 %v636, %v639
    %v641 = vmul.f32 %v640, 1.442695
    %v642 = vpow.pop %v641
    %v643 = vsel %vm410, %v642, 0.0
    %644 = vadd.xlane.f32.xlu0 %v643
    %v645 = vpop.xlane.xlu0 %644
    %v646 = vrcp.pop %v645
    %v647 = vmul.f32 %v642, %v646
    %v648 = vpack.c.bf16 %v647, %v647
    %649 = vrot.lane.b32.xlu0 %v356, 64
    %v650 = vpop.permute.xlu0 %649
    %v652 = vsel %vm410, %v648, 0
    %v655 = vsel %vm426, %v650, 0
    %657 = vmatprep.subr.bf16.mxu0 0
    %658 = vmatpush1.bf16.msra.mxu0 0
    %659 = vmatprep.subr.bf16.mxu0 0
    %660 = vmatpush1.bf16.msra.mxu0 0
    %661 = vmatprep.subr.bf16.mxu0 0
    %662 = vmatpush1.bf16.msra.mxu0 0
    %663 = vmatprep.subr.bf16.mxu0 0
    %664 = vmatpush1.bf16.msra.mxu0 0
    %665 = vmatprep.subr.bf16.mxu0 0
    %666 = vmatpush1.bf16.msra.mxu0 0
    %667 = vmatprep.subr.bf16.mxu0 0
    %668 = vmatpush1.bf16.msra.mxu0 0
    %669 = vmatprep.subr.bf16.mxu0 0
    %670 = vmatpush1.bf16.msra.mxu0 0
    %671 = vmatprep.subr.bf16.mxu0 0
    %672 = vmatpush1.bf16.msra.mxu0 %v655
    %673 = vmatprep.subr.bf16.mxu0 0
    %674 = vmatpush2.bf16.msra.mxu0 0
    %675 = vmatprep.subr.bf16.mxu0 0
    %676 = vmatpush2.bf16.msra.mxu0 0
    %677 = vmatprep.subr.bf16.mxu0 0
    %678 = vmatpush2.bf16.msra.mxu0 0
    %679 = vmatprep.subr.bf16.mxu0 0
    %680 = vmatpush2.bf16.msra.mxu0 0
    %681 = vmatprep.subr.bf16.mxu0 0
    %682 = vmatpush2.bf16.msra.mxu0 0
    %683 = vmatprep.subr.bf16.mxu0 0
    %684 = vmatpush2.bf16.msra.mxu0 0
    %685 = vmatprep.subr.bf16.mxu0 0
    %686 = vmatpush2.bf16.msra.mxu0 0
    %687 = vmatprep.subr.bf16.mxu0 0
    %688 = vmatpush2.bf16.msra.mxu0 0
    %689 = vmatprep.mubr.bf16.mxu0 0
    %690 = vmatmul.mubr.bf16.gmra.mxu0 %v652
    %v691 = vpop.f32.mrf.mxu0
    %v692 = vadd.f32 0.0, %v691
    %v693 = vpop.f32.mrf.mxu0
    %v694 = vpop.f32.mrf.mxu0
    %v695 = vpop.f32.mrf.mxu0
    %696 = vdwg.mxu0
    %697 = vrot.lane.b32.xlu0 %v354, 32
    %v698 = vpop.permute.xlu0 %697
    %699 = vrot.lane.b32.xlu0 %v355, 32
    %v700 = vpop.permute.xlu0 %699
    %v702 = vsel %vm357, %v698, 0
    %v705 = vsel %vm357, %v700, 0
    %707 = vmatprep.subr.bf16.mxu0 0
    %708 = vmatpush1.bf16.xpose.msra.mxu0 0
    %709 = vmatprep.subr.bf16.mxu0 0
    %710 = vmatpush1.bf16.xpose.msra.mxu0 0
    %711 = vmatprep.subr.bf16.mxu0 0
    %712 = vmatpush1.bf16.xpose.msra.mxu0 0
    %713 = vmatprep.subr.bf16.mxu0 0
    %714 = vmatpush1.bf16.xpose.msra.mxu0 0
    %715 = vmatprep.subr.bf16.mxu0 0
    %716 = vmatpush1.bf16.xpose.msra.mxu0 0
    %717 = vmatprep.subr.bf16.mxu0 0
    %718 = vmatpush1.bf16.xpose.msra.mxu0 0
    %719 = vmatprep.subr.bf16.mxu0 0
    %720 = vmatpush1.bf16.xpose.msra.mxu0 0
    %721 = vmatprep.subr.bf16.mxu0 0
    %722 = vmatpush1.bf16.xpose.msra.mxu0 %v705
    %723 = vmatprep.subr.bf16.mxu0 0
    %724 = vmatpush2.bf16.xpose.msra.mxu0 0
    %725 = vmatprep.subr.bf16.mxu0 0
    %726 = vmatpush2.bf16.xpose.msra.mxu0 0
    %727 = vmatprep.subr.bf16.mxu0 0
    %728 = vmatpush2.bf16.xpose.msra.mxu0 0
    %729 = vmatprep.subr.bf16.mxu0 0
    %730 = vmatpush2.bf16.xpose.msra.mxu0 0
    %731 = vmatprep.subr.bf16.mxu0 0
    %732 = vmatpush2.bf16.xpose.msra.mxu0 0
    %733 = vmatprep.subr.bf16.mxu0 0
    %734 = vmatpush2.bf16.xpose.msra.mxu0 0
    %735 = vmatprep.subr.bf16.mxu0 0
    %736 = vmatpush2.bf16.xpose.msra.mxu0 0
    %737 = vmatprep.subr.bf16.mxu0 0
    %738 = vmatpush2.bf16.xpose.msra.mxu0 0
    %739 = vmatprep.mubr.bf16.mxu0 0
    %740 = vmatmul.mubr.bf16.gmra.mxu0 %v702
    %v741 = vpop.f32.mrf.mxu0
    %v742 = vadd.f32 0.0, %v741
    %v743 = vpop.f32.mrf.mxu0
    %v744 = vpop.f32.mrf.mxu0
    %v745 = vpop.f32.mrf.mxu0
    %746 = vdwg.mxu0
    %v747 = vmul.f32 %v742, 0.35355338
    %v748 = vadd.f32 %v747, %v408
    %v749 = vsel %vm410, %v748, -inf
    %750 = vmax.xlane.f32.xlu0 %v749
    %v751 = vpop.xlane.xlu0 %750
    %v752 = vsub.f32 %v748, %v751
    %v753 = vmul.f32 %v752, 1.442695
    %v754 = vpow.pop %v753
    %v755 = vsel %vm410, %v754, 0.0
    %756 = vadd.xlane.f32.xlu0 %v755
    %v757 = vpop.xlane.xlu0 %756
    %v758 = vrcp.pop %v757
    %v759 = vmul.f32 %v754, %v758
    %v760 = vpack.c.bf16 %v759, %v759
    %761 = vrot.lane.b32.xlu0 %v356, 32
    %v762 = vpop.permute.xlu0 %761
    %v764 = vsel %vm410, %v760, 0
    %v767 = vsel %vm426, %v762, 0
    %769 = vmatprep.subr.bf16.mxu0 0
    %770 = vmatpush1.bf16.msra.mxu0 0
    %771 = vmatprep.subr.bf16.mxu0 0
    %772 = vmatpush1.bf16.msra.mxu0 0
    %773 = vmatprep.subr.bf16.mxu0 0
    %774 = vmatpush1.bf16.msra.mxu0 0
    %775 = vmatprep.subr.bf16.mxu0 0
    %776 = vmatpush1.bf16.msra.mxu0 0
    %777 = vmatprep.subr.bf16.mxu0 0
    %778 = vmatpush1.bf16.msra.mxu0 0
    %779 = vmatprep.subr.bf16.mxu0 0
    %780 = vmatpush1.bf16.msra.mxu0 0
    %781 = vmatprep.subr.bf16.mxu0 0
    %782 = vmatpush1.bf16.msra.mxu0 0
    %783 = vmatprep.subr.bf16.mxu0 0
    %784 = vmatpush1.bf16.msra.mxu0 %v767
    %785 = vmatprep.subr.bf16.mxu0 0
    %786 = vmatpush2.bf16.msra.mxu0 0
    %787 = vmatprep.subr.bf16.mxu0 0
    %788 = vmatpush2.bf16.msra.mxu0 0
    %789 = vmatprep.subr.bf16.mxu0 0
    %790 = vmatpush2.bf16.msra.mxu0 0
    %791 = vmatprep.subr.bf16.mxu0 0
    %792 = vmatpush2.bf16.msra.mxu0 0
    %793 = vmatprep.subr.bf16.mxu0 0
    %794 = vmatpush2.bf16.msra.mxu0 0
    %795 = vmatprep.subr.bf16.mxu0 0
    %796 = vmatpush2.bf16.msra.mxu0 0
    %797 = vmatprep.subr.bf16.mxu0 0
    %798 = vmatpush2.bf16.msra.mxu0 0
    %799 = vmatprep.subr.bf16.mxu0 0
    %800 = vmatpush2.bf16.msra.mxu0 0
    %801 = vmatprep.mubr.bf16.mxu0 0
    %802 = vmatmul.mubr.bf16.gmra.mxu0 %v764
    %v803 = vpop.f32.mrf.mxu0
    %v804 = vadd.f32 0.0, %v803
    %v805 = vpop.f32.mrf.mxu0
    %v806 = vpop.f32.mrf.mxu0
    %v807 = vpop.f32.mrf.mxu0
    %808 = vdwg.mxu0
    %810 = vrot.lane.b32.xlu0 %v580, 32
    %v811 = vpop.permute.xlu0 %810
    %814 = vrot.lane.b32.xlu0 %v692, 64
    %v815 = vpop.permute.xlu0 %814
    %818 = vrot.lane.b32.xlu0 %v804, 96
    %v819 = vpop.permute.xlu0 %818
    %v821 = vsel %vm357, %v465, %v811
    %vm822 = vcmask 523264
    %v823 = vsel %vm822, %v821, %v815
    %vm824 = vcmask 785408
    %v825 = vsel %vm824, %v823, %v819
    %v826 = vpack.c.bf16 %v307, %v307
    %v827 = vpack.c.bf16 %v309, %v309
    %v828 = vpack.c.bf16 %v349, %v349
    %v830 = vsel %vm357, %v826, 0
    %v833 = vsel %vm357, %v827, 0
    %835 = vmatprep.subr.bf16.mxu0 0
    %836 = vmatpush1.bf16.xpose.msra.mxu0 0
    %837 = vmatprep.subr.bf16.mxu0 0
    %838 = vmatpush1.bf16.xpose.msra.mxu0 0
    %839 = vmatprep.subr.bf16.mxu0 0
    %840 = vmatpush1.bf16.xpose.msra.mxu0 0
    %841 = vmatprep.subr.bf16.mxu0 0
    %842 = vmatpush1.bf16.xpose.msra.mxu0 0
    %843 = vmatprep.subr.bf16.mxu0 0
    %844 = vmatpush1.bf16.xpose.msra.mxu0 0
    %845 = vmatprep.subr.bf16.mxu0 0
    %846 = vmatpush1.bf16.xpose.msra.mxu0 0
    %847 = vmatprep.subr.bf16.mxu0 0
    %848 = vmatpush1.bf16.xpose.msra.mxu0 0
    %849 = vmatprep.subr.bf16.mxu0 0
    %850 = vmatpush1.bf16.xpose.msra.mxu0 %v833
    %851 = vmatprep.subr.bf16.mxu0 0
    %852 = vmatpush2.bf16.xpose.msra.mxu0 0
    %853 = vmatprep.subr.bf16.mxu0 0
    %854 = vmatpush2.bf16.xpose.msra.mxu0 0
    %855 = vmatprep.subr.bf16.mxu0 0
    %856 = vmatpush2.bf16.xpose.msra.mxu0 0
    %857 = vmatprep.subr.bf16.mxu0 0
    %858 = vmatpush2.bf16.xpose.msra.mxu0 0
    %859 = vmatprep.subr.bf16.mxu0 0
    %860 = vmatpush2.bf16.xpose.msra.mxu0 0
    %861 = vmatprep.subr.bf16.mxu0 0
    %862 = vmatpush2.bf16.xpose.msra.mxu0 0
    %863 = vmatprep.subr.bf16.mxu0 0
    %864 = vmatpush2.bf16.xpose.msra.mxu0 0
    %865 = vmatprep.subr.bf16.mxu0 0
    %866 = vmatpush2.bf16.xpose.msra.mxu0 0
    %867 = vmatprep.mubr.bf16.mxu0 0
    %868 = vmatmul.mubr.bf16.gmra.mxu0 %v830
    %v869 = vpop.f32.mrf.mxu0
    %v870 = vadd.f32 0.0, %v869
    %v871 = vpop.f32.mrf.mxu0
    %v872 = vpop.f32.mrf.mxu0
    %v873 = vpop.f32.mrf.mxu0
    %874 = vdwg.mxu0
    %v875 = vmul.f32 %v870, 0.35355338
    %v876 = vlaneseq
    %v877 = vshrl.u32 %v876, 7
    %v878 = vsub.s32 0, %v877
    %v879 = vrot.slane %v353, %v878
    %v880 = vadd.f32 %v875, %v879
    %v881 = vsel %vm410, %v880, -inf
    %882 = vmax.xlane.f32.xlu0 %v881
    %v883 = vpop.xlane.xlu0 %882
    %v884 = vsub.f32 %v880, %v883
    %v885 = vmul.f32 %v884, 1.442695
    %v886 = vpow.pop %v885
    %v887 = vsel %vm410, %v886, 0.0
    %888 = vadd.xlane.f32.xlu0 %v887
    %v889 = vpop.xlane.xlu0 %888
    %v890 = vrcp.pop %v889
    %v891 = vmul.f32 %v886, %v890
    %v892 = vpack.c.bf16 %v891, %v891
    %v894 = vsel %vm410, %v892, 0
    %v897 = vsel %vm426, %v828, 0
    %899 = vmatprep.subr.bf16.mxu0 0
    %900 = vmatpush1.bf16.msra.mxu0 0
    %901 = vmatprep.subr.bf16.mxu0 0
    %902 = vmatpush1.bf16.msra.mxu0 0
    %903 = vmatprep.subr.bf16.mxu0 0
    %904 = vmatpush1.bf16.msra.mxu0 0
    %905 = vmatprep.subr.bf16.mxu0 0
    %906 = vmatpush1.bf16.msra.mxu0 0
    %907 = vmatprep.subr.bf16.mxu0 0
    %908 = vmatpush1.bf16.msra.mxu0 0
    %909 = vmatprep.subr.bf16.mxu0 0
    %910 = vmatpush1.bf16.msra.mxu0 0
    %911 = vmatprep.subr.bf16.mxu0 0
    %912 = vmatpush1.bf16.msra.mxu0 0
    %913 = vmatprep.subr.bf16.mxu0 0
    %914 = vmatpush1.bf16.msra.mxu0 %v897
    %915 = vmatprep.subr.bf16.mxu0 0
    %916 = vmatpush2.bf16.msra.mxu0 0
    %917 = vmatprep.subr.bf16.mxu0 0
    %918 = vmatpush2.bf16.msra.mxu0 0
    %919 = vmatprep.subr.bf16.mxu0 0
    %920 = vmatpush2.bf16.msra.mxu0 0
    %921 = vmatprep.subr.bf16.mxu0 0
    %922 = vmatpush2.bf16.msra.mxu0 0
    %923 = vmatprep.subr.bf16.mxu0 0
    %924 = vmatpush2.bf16.msra.mxu0 0
    %925 = vmatprep.subr.bf16.mxu0 0
    %926 = vmatpush2.bf16.msra.mxu0 0
    %927 = vmatprep.subr.bf16.mxu0 0
    %928 = vmatpush2.bf16.msra.mxu0 0
    %929 = vmatprep.subr.bf16.mxu0 0
    %930 = vmatpush2.bf16.msra.mxu0 0
    %931 = vmatprep.mubr.bf16.mxu0 0
    %932 = vmatmul.mubr.bf16.gmra.mxu0 %v894
    %v933 = vpop.f32.mrf.mxu0
    %v934 = vadd.f32 0.0, %v933
    %v935 = vpop.f32.mrf.mxu0
    %v936 = vpop.f32.mrf.mxu0
    %v937 = vpop.f32.mrf.mxu0
    %938 = vdwg.mxu0
    %940 = vrot.lane.b32.xlu0 %v826, 96
    %v941 = vpop.permute.xlu0 %940
    %943 = vrot.lane.b32.xlu0 %v827, 96
    %v944 = vpop.permute.xlu0 %943
    %v946 = vsel %vm357, %v941, 0
    %v949 = vsel %vm357, %v944, 0
    %951 = vmatprep.subr.bf16.mxu0 0
    %952 = vmatpush1.bf16.xpose.msra.mxu0 0
    %953 = vmatprep.subr.bf16.mxu0 0
    %954 = vmatpush1.bf16.xpose.msra.mxu0 0
    %955 = vmatprep.subr.bf16.mxu0 0
    %956 = vmatpush1.bf16.xpose.msra.mxu0 0
    %957 = vmatprep.subr.bf16.mxu0 0
    %958 = vmatpush1.bf16.xpose.msra.mxu0 0
    %959 = vmatprep.subr.bf16.mxu0 0
    %960 = vmatpush1.bf16.xpose.msra.mxu0 0
    %961 = vmatprep.subr.bf16.mxu0 0
    %962 = vmatpush1.bf16.xpose.msra.mxu0 0
    %963 = vmatprep.subr.bf16.mxu0 0
    %964 = vmatpush1.bf16.xpose.msra.mxu0 0
    %965 = vmatprep.subr.bf16.mxu0 0
    %966 = vmatpush1.bf16.xpose.msra.mxu0 %v949
    %967 = vmatprep.subr.bf16.mxu0 0
    %968 = vmatpush2.bf16.xpose.msra.mxu0 0
    %969 = vmatprep.subr.bf16.mxu0 0
    %970 = vmatpush2.bf16.xpose.msra.mxu0 0
    %971 = vmatprep.subr.bf16.mxu0 0
    %972 = vmatpush2.bf16.xpose.msra.mxu0 0
    %973 = vmatprep.subr.bf16.mxu0 0
    %974 = vmatpush2.bf16.xpose.msra.mxu0 0
    %975 = vmatprep.subr.bf16.mxu0 0
    %976 = vmatpush2.bf16.xpose.msra.mxu0 0
    %977 = vmatprep.subr.bf16.mxu0 0
    %978 = vmatpush2.bf16.xpose.msra.mxu0 0
    %979 = vmatprep.subr.bf16.mxu0 0
    %980 = vmatpush2.bf16.xpose.msra.mxu0 0
    %981 = vmatprep.subr.bf16.mxu0 0
    %982 = vmatpush2.bf16.xpose.msra.mxu0 0
    %983 = vmatprep.mubr.bf16.mxu0 0
    %984 = vmatmul.mubr.bf16.gmra.mxu0 %v946
    %v985 = vpop.f32.mrf.mxu0
    %v986 = vadd.f32 0.0, %v985
    %v987 = vpop.f32.mrf.mxu0
    %v988 = vpop.f32.mrf.mxu0
    %v989 = vpop.f32.mrf.mxu0
    %990 = vdwg.mxu0
    %v991 = vmul.f32 %v986, 0.35355338
    %v992 = vadd.f32 %v991, %v879
    %v993 = vsel %vm410, %v992, -inf
    %994 = vmax.xlane.f32.xlu0 %v993
    %v995 = vpop.xlane.xlu0 %994
    %v996 = vsub.f32 %v992, %v995
    %v997 = vmul.f32 %v996, 1.442695
    %v998 = vpow.pop %v997
    %v999 = vsel %vm410, %v998, 0.0
    %1000 = vadd.xlane.f32.xlu0 %v999
    %v1001 = vpop.xlane.xlu0 %1000
    %v1002 = vrcp.pop %v1001
    %v1003 = vmul.f32 %v998, %v1002
    %v1004 = vpack.c.bf16 %v1003, %v1003
    %1006 = vrot.lane.b32.xlu0 %v828, 96
    %v1007 = vpop.permute.xlu0 %1006
    %v1009 = vsel %vm410, %v1004, 0
    %v1012 = vsel %vm426, %v1007, 0
    %1014 = vmatprep.subr.bf16.mxu0 0
    %1015 = vmatpush1.bf16.msra.mxu0 0
    %1016 = vmatprep.subr.bf16.mxu0 0
    %1017 = vmatpush1.bf16.msra.mxu0 0
    %1018 = vmatprep.subr.bf16.mxu0 0
    %1019 = vmatpush1.bf16.msra.mxu0 0
    %1020 = vmatprep.subr.bf16.mxu0 0
    %1021 = vmatpush1.bf16.msra.mxu0 0
    %1022 = vmatprep.subr.bf16.mxu0 0
    %1023 = vmatpush1.bf16.msra.mxu0 0
    %1024 = vmatprep.subr.bf16.mxu0 0
    %1025 = vmatpush1.bf16.msra.mxu0 0
    %1026 = vmatprep.subr.bf16.mxu0 0
    %1027 = vmatpush1.bf16.msra.mxu0 0
    %1028 = vmatprep.subr.bf16.mxu0 0
    %1029 = vmatpush1.bf16.msra.mxu0 %v1012
    %1030 = vmatprep.subr.bf16.mxu0 0
    %1031 = vmatpush2.bf16.msra.mxu0 0
    %1032 = vmatprep.subr.bf16.mxu0 0
    %1033 = vmatpush2.bf16.msra.mxu0 0
    %1034 = vmatprep.subr.bf16.mxu0 0
    %1035 = vmatpush2.bf16.msra.mxu0 0
    %1036 = vmatprep.subr.bf16.mxu0 0
    %1037 = vmatpush2.bf16.msra.mxu0 0
    %1038 = vmatprep.subr.bf16.mxu0 0
    %1039 = vmatpush2.bf16.msra.mxu0 0
    %1040 = vmatprep.subr.bf16.mxu0 0
    %1041 = vmatpush2.bf16.msra.mxu0 0
    %1042 = vmatprep.subr.bf16.mxu0 0
    %1043 = vmatpush2.bf16.msra.mxu0 0
    %1044 = vmatprep.subr.bf16.mxu0 0
    %1045 = vmatpush2.bf16.msra.mxu0 0
    %1046 = vmatprep.mubr.bf16.mxu0 0
    %1047 = vmatmul.mubr.bf16.gmra.mxu0 %v1009
    %v1048 = vpop.f32.mrf.mxu0
    %v1049 = vadd.f32 0.0, %v1048
    %v1050 = vpop.f32.mrf.mxu0
    %v1051 = vpop.f32.mrf.mxu0
    %v1052 = vpop.f32.mrf.mxu0
    %1053 = vdwg.mxu0
    %1054 = vrot.lane.b32.xlu0 %v826, 64
    %v1055 = vpop.permute.xlu0 %1054
    %1056 = vrot.lane.b32.xlu0 %v827, 64
    %v1057 = vpop.permute.xlu0 %1056
    %v1059 = vsel %vm357, %v1055, 0
    %v1062 = vsel %vm357, %v1057, 0
    %1064 = vmatprep.subr.bf16.mxu0 0
    %1065 = vmatpush1.bf16.xpose.msra.mxu0 0
    %1066 = vmatprep.subr.bf16.mxu0 0
    %1067 = vmatpush1.bf16.xpose.msra.mxu0 0
    %1068 = vmatprep.subr.bf16.mxu0 0
    %1069 = vmatpush1.bf16.xpose.msra.mxu0 0
    %1070 = vmatprep.subr.bf16.mxu0 0
    %1071 = vmatpush1.bf16.xpose.msra.mxu0 0
    %1072 = vmatprep.subr.bf16.mxu0 0
    %1073 = vmatpush1.bf16.xpose.msra.mxu0 0
    %1074 = vmatprep.subr.bf16.mxu0 0
    %1075 = vmatpush1.bf16.xpose.msra.mxu0 0
    %1076 = vmatprep.subr.bf16.mxu0 0
    %1077 = vmatpush1.bf16.xpose.msra.mxu0 0
    %1078 = vmatprep.subr.bf16.mxu0 0
    %1079 = vmatpush1.bf16.xpose.msra.mxu0 %v1062
    %1080 = vmatprep.subr.bf16.mxu0 0
    %1081 = vmatpush2.bf16.xpose.msra.mxu0 0
    %1082 = vmatprep.subr.bf16.mxu0 0
    %1083 = vmatpush2.bf16.xpose.msra.mxu0 0
    %1084 = vmatprep.subr.bf16.mxu0 0
    %1085 = vmatpush2.bf16.xpose.msra.mxu0 0
    %1086 = vmatprep.subr.bf16.mxu0 0
    %1087 = vmatpush2.bf16.xpose.msra.mxu0 0
    %1088 = vmatprep.subr.bf16.mxu0 0
    %1089 = vmatpush2.bf16.xpose.msra.mxu0 0
    %1090 = vmatprep.subr.bf16.mxu0 0
    %1091 = vmatpush2.bf16.xpose.msra.mxu0 0
    %1092 = vmatprep.subr.bf16.mxu0 0
    %1093 = vmatpush2.bf16.xpose.msra.mxu0 0
    %1094 = vmatprep.subr.bf16.mxu0 0
    %1095 = vmatpush2.bf16.xpose.msra.mxu0 0
    %1096 = vmatprep.mubr.bf16.mxu0 0
    %1097 = vmatmul.mubr.bf16.gmra.mxu0 %v1059
    %v1098 = vpop.f32.mrf.mxu0
    %v1099 = vadd.f32 0.0, %v1098
    %v1100 = vpop.f32.mrf.mxu0
    %v1101 = vpop.f32.mrf.mxu0
    %v1102 = vpop.f32.mrf.mxu0
    %1103 = vdwg.mxu0
    %v1104 = vmul.f32 %v1099, 0.35355338
    %v1105 = vadd.f32 %v1104, %v879
    %v1106 = vsel %vm410, %v1105, -inf
    %1107 = vmax.xlane.f32.xlu0 %v1106
    %v1108 = vpop.xlane.xlu0 %1107
    %v1109 = vsub.f32 %v1105, %v1108
    %v1110 = vmul.f32 %v1109, 1.442695
    %v1111 = vpow.pop %v1110
    %v1112 = vsel %vm410, %v1111, 0.0
    %1113 = vadd.xlane.f32.xlu0 %v1112
    %v1114 = vpop.xlane.xlu0 %1113
    %v1115 = vrcp.pop %v1114
    %v1116 = vmul.f32 %v1111, %v1115
    %v1117 = vpack.c.bf16 %v1116, %v1116
    %1118 = vrot.lane.b32.xlu0 %v828, 64
    %v1119 = vpop.permute.xlu0 %1118
    %v1121 = vsel %vm410, %v1117, 0
    %v1124 = vsel %vm426, %v1119, 0
    %1126 = vmatprep.subr.bf16.mxu0 0
    %1127 = vmatpush1.bf16.msra.mxu0 0
    %1128 = vmatprep.subr.bf16.mxu0 0
    %1129 = vmatpush1.bf16.msra.mxu0 0
    %1130 = vmatprep.subr.bf16.mxu0 0
    %1131 = vmatpush1.bf16.msra.mxu0 0
    %1132 = vmatprep.subr.bf16.mxu0 0
    %1133 = vmatpush1.bf16.msra.mxu0 0
    %1134 = vmatprep.subr.bf16.mxu0 0
    %1135 = vmatpush1.bf16.msra.mxu0 0
    %1136 = vmatprep.subr.bf16.mxu0 0
    %1137 = vmatpush1.bf16.msra.mxu0 0
    %1138 = vmatprep.subr.bf16.mxu0 0
    %1139 = vmatpush1.bf16.msra.mxu0 0
    %1140 = vmatprep.subr.bf16.mxu0 0
    %1141 = vmatpush1.bf16.msra.mxu0 %v1124
    %1142 = vmatprep.subr.bf16.mxu0 0
    %1143 = vmatpush2.bf16.msra.mxu0 0
    %1144 = vmatprep.subr.bf16.mxu0 0
    %1145 = vmatpush2.bf16.msra.mxu0 0
    %1146 = vmatprep.subr.bf16.mxu0 0
    %1147 = vmatpush2.bf16.msra.mxu0 0
    %1148 = vmatprep.subr.bf16.mxu0 0
    %1149 = vmatpush2.bf16.msra.mxu0 0
    %1150 = vmatprep.subr.bf16.mxu0 0
    %1151 = vmatpush2.bf16.msra.mxu0 0
    %1152 = vmatprep.subr.bf16.mxu0 0
    %1153 = vmatpush2.bf16.msra.mxu0 0
    %1154 = vmatprep.subr.bf16.mxu0 0
    %1155 = vmatpush2.bf16.msra.mxu0 0
    %1156 = vmatprep.subr.bf16.mxu0 0
    %1157 = vmatpush2.bf16.msra.mxu0 0
    %1158 = vmatprep.mubr.bf16.mxu0 0
    %1159 = vmatmul.mubr.bf16.gmra.mxu0 %v1121
    %v1160 = vpop.f32.mrf.mxu0
    %v1161 = vadd.f32 0.0, %v1160
    %v1162 = vpop.f32.mrf.mxu0
    %v1163 = vpop.f32.mrf.mxu0
    %v1164 = vpop.f32.mrf.mxu0
    %1165 = vdwg.mxu0
    %1166 = vrot.lane.b32.xlu0 %v826, 32
    %v1167 = vpop.permute.xlu0 %1166
    %1168 = vrot.lane.b32.xlu0 %v827, 32
    %v1169 = vpop.permute.xlu0 %1168
    %v1171 = vsel %vm357, %v1167, 0
    %v1174 = vsel %vm357, %v1169, 0
    %1176 = vmatprep.subr.bf16.mxu0 0
    %1177 = vmatpush1.bf16.xpose.msra.mxu0 0
    %1178 = vmatprep.subr.bf16.mxu0 0
    %1179 = vmatpush1.bf16.xpose.msra.mxu0 0
    %1180 = vmatprep.subr.bf16.mxu0 0
    %1181 = vmatpush1.bf16.xpose.msra.mxu0 0
    %1182 = vmatprep.subr.bf16.mxu0 0
    %1183 = vmatpush1.bf16.xpose.msra.mxu0 0
    %1184 = vmatprep.subr.bf16.mxu0 0
    %1185 = vmatpush1.bf16.xpose.msra.mxu0 0
    %1186 = vmatprep.subr.bf16.mxu0 0
    %1187 = vmatpush1.bf16.xpose.msra.mxu0 0
    %1188 = vmatprep.subr.bf16.mxu0 0
    %1189 = vmatpush1.bf16.xpose.msra.mxu0 0
    %1190 = vmatprep.subr.bf16.mxu0 0
    %1191 = vmatpush1.bf16.xpose.msra.mxu0 %v1174
    %1192 = vmatprep.subr.bf16.mxu0 0
    %1193 = vmatpush2.bf16.xpose.msra.mxu0 0
    %1194 = vmatprep.subr.bf16.mxu0 0
    %1195 = vmatpush2.bf16.xpose.msra.mxu0 0
    %1196 = vmatprep.subr.bf16.mxu0 0
    %1197 = vmatpush2.bf16.xpose.msra.mxu0 0
    %1198 = vmatprep.subr.bf16.mxu0 0
    %1199 = vmatpush2.bf16.xpose.msra.mxu0 0
    %1200 = vmatprep.subr.bf16.mxu0 0
    %1201 = vmatpush2.bf16.xpose.msra.mxu0 0
    %1202 = vmatprep.subr.bf16.mxu0 0
    %1203 = vmatpush2.bf16.xpose.msra.mxu0 0
    %1204 = vmatprep.subr.bf16.mxu0 0
    %1205 = vmatpush2.bf16.xpose.msra.mxu0 0
    %1206 = vmatprep.subr.bf16.mxu0 0
    %1207 = vmatpush2.bf16.xpose.msra.mxu0 0
    %1208 = vmatprep.mubr.bf16.mxu0 0
    %1209 = vmatmul.mubr.bf16.gmra.mxu0 %v1171
    %v1210 = vpop.f32.mrf.mxu0
    %v1211 = vadd.f32 0.0, %v1210
    %v1212 = vpop.f32.mrf.mxu0
    %v1213 = vpop.f32.mrf.mxu0
    %v1214 = vpop.f32.mrf.mxu0
    %1215 = vdwg.mxu0
    %v1216 = vmul.f32 %v1211, 0.35355338
    %v1217 = vadd.f32 %v1216, %v879
    %v1218 = vsel %vm410, %v1217, -inf
    %1219 = vmax.xlane.f32.xlu0 %v1218
    %v1220 = vpop.xlane.xlu0 %1219
    %v1221 = vsub.f32 %v1217, %v1220
    %v1222 = vmul.f32 %v1221, 1.442695
    %v1223 = vpow.pop %v1222
    %v1224 = vsel %vm410, %v1223, 0.0
    %1225 = vadd.xlane.f32.xlu0 %v1224
    %v1226 = vpop.xlane.xlu0 %1225
    %v1227 = vrcp.pop %v1226
    %v1228 = vmul.f32 %v1223, %v1227
    %v1229 = vpack.c.bf16 %v1228, %v1228
    %1230 = vrot.lane.b32.xlu0 %v828, 32
    %v1231 = vpop.permute.xlu0 %1230
    %v1233 = vsel %vm410, %v1229, 0
    %v1236 = vsel %vm426, %v1231, 0
    %1238 = vmatprep.subr.bf16.mxu0 0
    %1239 = vmatpush1.bf16.msra.mxu0 0
    %1240 = vmatprep.subr.bf16.mxu0 0
    %1241 = vmatpush1.bf16.msra.mxu0 0
    %1242 = vmatprep.subr.bf16.mxu0 0
    %1243 = vmatpush1.bf16.msra.mxu0 0
    %1244 = vmatprep.subr.bf16.mxu0 0
    %1245 = vmatpush1.bf16.msra.mxu0 0
    %1246 = vmatprep.subr.bf16.mxu0 0
    %1247 = vmatpush1.bf16.msra.mxu0 0
    %1248 = vmatprep.subr.bf16.mxu0 0
    %1249 = vmatpush1.bf16.msra.mxu0 0
    %1250 = vmatprep.subr.bf16.mxu0 0
    %1251 = vmatpush1.bf16.msra.mxu0 0
    %1252 = vmatprep.subr.bf16.mxu0 0
    %1253 = vmatpush1.bf16.msra.mxu0 %v1236
    %1254 = vmatprep.subr.bf16.mxu0 0
    %1255 = vmatpush2.bf16.msra.mxu0 0
    %1256 = vmatprep.subr.bf16.mxu0 0
    %1257 = vmatpush2.bf16.msra.mxu0 0
    %1258 = vmatprep.subr.bf16.mxu0 0
    %1259 = vmatpush2.bf16.msra.mxu0 0
    %1260 = vmatprep.subr.bf16.mxu0 0
    %1261 = vmatpush2.bf16.msra.mxu0 0
    %1262 = vmatprep.subr.bf16.mxu0 0
    %1263 = vmatpush2.bf16.msra.mxu0 0
    %1264 = vmatprep.subr.bf16.mxu0 0
    %1265 = vmatpush2.bf16.msra.mxu0 0
    %1266 = vmatprep.subr.bf16.mxu0 0
    %1267 = vmatpush2.bf16.msra.mxu0 0
    %1268 = vmatprep.subr.bf16.mxu0 0
    %1269 = vmatpush2.bf16.msra.mxu0 0
    %1270 = vmatprep.mubr.bf16.mxu0 0
    %1271 = vmatmul.mubr.bf16.gmra.mxu0 %v1233
    %v1272 = vpop.f32.mrf.mxu0
    %v1273 = vadd.f32 0.0, %v1272
    %v1274 = vpop.f32.mrf.mxu0
    %v1275 = vpop.f32.mrf.mxu0
    %v1276 = vpop.f32.mrf.mxu0
    %1277 = vdwg.mxu0
    %1279 = vrot.lane.b32.xlu0 %v1049, 32
    %v1280 = vpop.permute.xlu0 %1279
    %1283 = vrot.lane.b32.xlu0 %v1161, 64
    %v1284 = vpop.permute.xlu0 %1283
    %1287 = vrot.lane.b32.xlu0 %v1273, 96
    %v1288 = vpop.permute.xlu0 %1287
    %v1290 = vsel %vm357, %v934, %v1280
    %v1291 = vsel %vm822, %v1290, %v1284
    %v1292 = vsel %vm824, %v1291, %v1288
    %v1293 = vpack.c.bf16 %v1292, %v825
    %v1294 = vld [vmem:[#allocation4] sm:$0xf]
    %v1295 = vld [vmem:[#allocation4 + $0x4] sm:$0xf]
    %v1296 = vld [vmem:[#allocation4 + $0x8] sm:$0xf]
    %v1297 = vld [vmem:[#allocation4 + $0xc] sm:$0xf]
    %v1298 = vld [vmem:[#allocation4 + $0x10] sm:$0xf]
    %v1299 = vld [vmem:[#allocation4 + $0x14] sm:$0xf]
    %v1300 = vld [vmem:[#allocation4 + $0x18] sm:$0xf]
    %v1301 = vld [vmem:[#allocation4 + $0x1c] sm:$0xf]
    %v1302 = vld [vmem:[#allocation4 + $0x20] sm:$0xf]
    %v1303 = vld [vmem:[#allocation4 + $0x24] sm:$0xf]
    %v1304 = vld [vmem:[#allocation4 + $0x28] sm:$0xf]
    %v1305 = vld [vmem:[#allocation4 + $0x2c] sm:$0xf]
    %v1306 = vld [vmem:[#allocation4 + $0x30] sm:$0xf]
    %v1307 = vld [vmem:[#allocation4 + $0x34] sm:$0xf]
    %v1308 = vld [vmem:[#allocation4 + $0x38] sm:$0xf]
    %v1309 = vld [vmem:[#allocation4 + $0x3c] sm:$0xf]
    %v1310 = vld [vmem:[%s5] sm:$0x1]
    %v1312 = vlaneseq
    %v1313 = vshrl.u32 %v1312, 7
    %v1314 = vsub.s32 0, %v1313
    %v1315 = vrot.slane %v1310, %v1314
    %v1333 = vunpack.c.l.b16 %v1294
    %v1334 = vunpack.c.l.b16 %v1295
    %v1335 = vunpack.c.l.b16 %v1296
    %v1336 = vunpack.c.l.b16 %v1297
    %v1337 = vunpack.c.l.b16 %v1298
    %v1338 = vunpack.c.l.b16 %v1299
    %v1339 = vunpack.c.l.b16 %v1300
    %v1340 = vunpack.c.l.b16 %v1301
    %v1341 = vunpack.c.l.b16 %v1302
    %v1342 = vunpack.c.l.b16 %v1303
    %v1343 = vunpack.c.l.b16 %v1304
    %v1344 = vunpack.c.l.b16 %v1305
    %v1345 = vunpack.c.l.b16 %v1306
    %v1346 = vunpack.c.l.b16 %v1307
    %v1347 = vunpack.c.l.b16 %v1308
    %v1348 = vunpack.c.l.b16 %v1309
    %v1349 = vpack.c.b16 %v1334, %v1333
    %v1350 = vpack.c.b16 %v1336, %v1335
    %v1351 = vpack.c.b16 %v1338, %v1337
    %v1352 = vpack.c.b16 %v1340, %v1339
    %v1353 = vpack.c.b16 %v1342, %v1341
    %v1354 = vpack.c.b16 %v1344, %v1343
    %v1355 = vpack.c.b16 %v1346, %v1345
    %v1356 = vpack.c.b16 %v1348, %v1347
    %1365 = vmatprep.subr.bf16.mxu0 0
    %1366 = vmatpush1.bf16.msra.mxu0 %v1356
    %1367 = vmatprep.subr.bf16.mxu0 0
    %1368 = vmatpush1.bf16.msra.mxu0 %v1355
    %1369 = vmatprep.subr.bf16.mxu0 0
    %1370 = vmatpush1.bf16.msra.mxu0 %v1354
    %1371 = vmatprep.subr.bf16.mxu0 0
    %1372 = vmatpush1.bf16.msra.mxu0 %v1353
    %1373 = vmatprep.subr.bf16.mxu0 0
    %1374 = vmatpush1.bf16.msra.mxu0 %v1352
    %1375 = vmatprep.subr.bf16.mxu0 0
    %1376 = vmatpush1.bf16.msra.mxu0 %v1351
    %1377 = vmatprep.subr.bf16.mxu0 0
    %1378 = vmatpush1.bf16.msra.mxu0 %v1350
    %1379 = vmatprep.subr.bf16.mxu0 0
    %1380 = vmatpush1.bf16.msra.mxu0 %v1349
    %1381 = vmatprep.subr.bf16.mxu0 0
    %1382 = vmatpush2.bf16.msra.mxu0 0
    %1383 = vmatprep.subr.bf16.mxu0 0
    %1384 = vmatpush2.bf16.msra.mxu0 0
    %1385 = vmatprep.subr.bf16.mxu0 0
    %1386 = vmatpush2.bf16.msra.mxu0 0
    %1387 = vmatprep.subr.bf16.mxu0 0
    %1388 = vmatpush2.bf16.msra.mxu0 0
    %1389 = vmatprep.subr.bf16.mxu0 0
    %1390 = vmatpush2.bf16.msra.mxu0 0
    %1391 = vmatprep.subr.bf16.mxu0 0
    %1392 = vmatpush2.bf16.msra.mxu0 0
    %1393 = vmatprep.subr.bf16.mxu0 0
    %1394 = vmatpush2.bf16.msra.mxu0 0
    %1395 = vmatprep.subr.bf16.mxu0 0
    %1396 = vmatpush2.bf16.msra.mxu0 0
    %1397 = vmatprep.mubr.bf16.mxu0 0
    %1398 = vmatmul.mubr.bf16.gmra.mxu0 %v1293
    %v1399 = vpop.f32.mrf.mxu0
    %v1400 = vadd.f32 %v1315, %v1399
    %v1401 = vpop.f32.mrf.mxu0
    %v1402 = vpop.f32.mrf.mxu0
    %v1403 = vadd.f32 %v1315, %v1402
    %v1404 = vpop.f32.mrf.mxu0
    %1405 = vdwg.mxu0
    %v1406 = vadd.f32 %v78, %v1400
    %v1407 = vadd.f32 %v79, %v1403
    %v1408 = vld [vmem:[%s6] sm:$0x1]
    %v1409 = vld [vmem:[%s7] sm:$0x1]
    %1410 = vadd.xlane.f32.xlu0 %v1406
    %v1411 = vpop.xlane.xlu0 %1410
    %1412 = vadd.xlane.f32.xlu0 %v1407
    %v1413 = vpop.xlane.xlu0 %1412
    %v1414 = vmul.f32 %v1411, 0.03125
    %v1415 = vmul.f32 %v1413, 0.03125
    %v1416 = vsub.f32 %v1406, %v1414
    %v1417 = vsub.f32 %v1407, %v1415
    %v1418 = vmul.f32 %v1416, %v84
    %v1419 = vmul.f32 %v1417, %v84
    %v1420 = vmul.f32 %v1418, %v1418
    %v1421 = vmul.f32 %v1419, %v1419
    %1422 = vadd.xlane.f32.xlu0 %v1420
    %v1423 = vpop.xlane.xlu0 %1422
    %1424 = vadd.xlane.f32.xlu0 %v1421
    %v1425 = vpop.xlane.xlu0 %1424
    %v1426 = vmul.f32 %v1423, 0.03125
    %v1427 = vmul.f32 %v1425, 0.03125
    %v1428 = vadd.f32 %v1426, 1e-05
    %v1429 = vadd.f32 %v1427, 1e-05
    %v1430 = vrsqrt.pop %v1428
    %v1431 = vrsqrt.pop %v1429
    %v1432 = vmul.f32 %v1416, %v1430
    %v1433 = vmul.f32 %v1417, %v1431
    %v1435 = vlaneseq
    %v1436 = vshrl.u32 %v1435, 7
    %v1437 = vsub.s32 0, %v1436
    %v1438 = vrot.slane %v1408, %v1437
    %v1440 = vmul.f32 %v1432, %v1438
    %v1441 = vmul.f32 %v1433, %v1438
    %v1443 = vlaneseq
    %v1444 = vshrl.u32 %v1443, 7
    %v1445 = vsub.s32 0, %v1444
    %v1446 = vrot.slane %v1409, %v1445
    %v1448 = vadd.f32 %v1440, %v1446
    %v1449 = vadd.f32 %v1441, %v1446
    %v1450 = vpack.c.bf16 %v1449, %v1448
    %v1451 = vld [vmem:[%s8] sm:$0xf]
    %v1452 = vld [vmem:[%s8 + $0x4] sm:$0xf]
    %v1453 = vld [vmem:[%s8 + $0x8] sm:$0xf]
    %v1454 = vld [vmem:[%s8 + $0xc] sm:$0xf]
    %v1455 = vld [vmem:[%s8 + $0x10] sm:$0xf]
    %v1456 = vld [vmem:[%s8 + $0x14] sm:$0xf]
    %v1457 = vld [vmem:[%s8 + $0x18] sm:$0xf]
    %v1458 = vld [vmem:[%s8 + $0x1c] sm:$0xf]
    %v1459 = vld [vmem:[%s8 + $0x20] sm:$0xf]
    %v1460 = vld [vmem:[%s8 + $0x24] sm:$0xf]
    %v1461 = vld [vmem:[%s8 + $0x28] sm:$0xf]
    %v1462 = vld [vmem:[%s8 + $0x2c] sm:$0xf]
    %v1463 = vld [vmem:[%s8 + $0x30] sm:$0xf]
    %v1464 = vld [vmem:[%s8 + $0x34] sm:$0xf]
    %v1465 = vld [vmem:[%s8 + $0x38] sm:$0xf]
    %v1466 = vld [vmem:[%s8 + $0x3c] sm:$0xf]
    %v1467 = vld [vmem:[%s9] sm:$0x1]
    %v1469 = vlaneseq
    %v1470 = vshrl.u32 %v1469, 7
    %v1471 = vsub.s32 0, %v1470
    %v1472 = vrot.slane %v1467, %v1471
    %v1490 = vunpack.c.l.b16 %v1451
    %v1491 = vunpack.c.l.b16 %v1452
    %v1492 = vunpack.c.l.b16 %v1453
    %v1493 = vunpack.c.l.b16 %v1454
    %v1494 = vunpack.c.l.b16 %v1455
    %v1495 = vunpack.c.l.b16 %v1456
    %v1496 = vunpack.c.l.b16 %v1457
    %v1497 = vunpack.c.l.b16 %v1458
    %v1498 = vunpack.c.l.b16 %v1459
    %v1499 = vunpack.c.l.b16 %v1460
    %v1500 = vunpack.c.l.b16 %v1461
    %v1501 = vunpack.c.l.b16 %v1462
    %v1502 = vunpack.c.l.b16 %v1463
    %v1503 = vunpack.c.l.b16 %v1464
    %v1504 = vunpack.c.l.b16 %v1465
    %v1505 = vunpack.c.l.b16 %v1466
    %v1506 = vpack.c.b16 %v1491, %v1490
    %v1507 = vpack.c.b16 %v1493, %v1492
    %v1508 = vpack.c.b16 %v1495, %v1494
    %v1509 = vpack.c.b16 %v1497, %v1496
    %v1510 = vpack.c.b16 %v1499, %v1498
    %v1511 = vpack.c.b16 %v1501, %v1500
    %v1512 = vpack.c.b16 %v1503, %v1502
    %v1513 = vpack.c.b16 %v1505, %v1504
    %1522 = vmatprep.subr.bf16.mxu0 0
    %1523 = vmatpush1.bf16.msra.mxu0 %v1513
    %1524 = vmatprep.subr.bf16.mxu0 0
    %1525 = vmatpush1.bf16.msra.mxu0 %v1512
    %1526 = vmatprep.subr.bf16.mxu0 0
    %1527 = vmatpush1.bf16.msra.mxu0 %v1511
    %1528 = vmatprep.subr.bf16.mxu0 0
    %1529 = vmatpush1.bf16.msra.mxu0 %v1510
    %1530 = vmatprep.subr.bf16.mxu0 0
    %1531 = vmatpush1.bf16.msra.mxu0 %v1509
    %1532 = vmatprep.subr.bf16.mxu0 0
    %1533 = vmatpush1.bf16.msra.mxu0 %v1508
    %1534 = vmatprep.subr.bf16.mxu0 0
    %1535 = vmatpush1.bf16.msra.mxu0 %v1507
    %1536 = vmatprep.subr.bf16.mxu0 0
    %1537 = vmatpush1.bf16.msra.mxu0 %v1506
    %1538 = vmatprep.subr.bf16.mxu0 0
    %1539 = vmatpush2.bf16.msra.mxu0 0
    %1540 = vmatprep.subr.bf16.mxu0 0
    %1541 = vmatpush2.bf16.msra.mxu0 0
    %1542 = vmatprep.subr.bf16.mxu0 0
    %1543 = vmatpush2.bf16.msra.mxu0 0
    %1544 = vmatprep.subr.bf16.mxu0 0
    %1545 = vmatpush2.bf16.msra.mxu0 0
    %1546 = vmatprep.subr.bf16.mxu0 0
    %1547 = vmatpush2.bf16.msra.mxu0 0
    %1548 = vmatprep.subr.bf16.mxu0 0
    %1549 = vmatpush2.bf16.msra.mxu0 0
    %1550 = vmatprep.subr.bf16.mxu0 0
    %1551 = vmatpush2.bf16.msra.mxu0 0
    %1552 = vmatprep.subr.bf16.mxu0 0
    %1553 = vmatpush2.bf16.msra.mxu0 0
    %1554 = vmatprep.mubr.bf16.mxu0 0
    %1555 = vmatmul.mubr.bf16.gmra.mxu0 %v1450
    %v1556 = vpop.f32.mrf.mxu0
    %v1557 = vadd.f32 %v1472, %v1556
    %v1558 = vpop.f32.mrf.mxu0
    %v1559 = vpop.f32.mrf.mxu0
    %v1560 = vadd.f32 %v1472, %v1559
    %v1561 = vpop.f32.mrf.mxu0
    %1562 = vdwg.mxu0
    %v1563 = vmax.f32 %v1557, 0.0
    %v1564 = vmax.f32 %v1560, 0.0
    %v1565 = vpack.c.bf16 %v1564, %v1563
    %v1566 = vld [vmem:[%s10] sm:$0xf]
    %v1567 = vld [vmem:[%s10 + $0x4] sm:$0xf]
    %v1568 = vld [vmem:[%s10 + $0x8] sm:$0xf]
    %v1569 = vld [vmem:[%s10 + $0xc] sm:$0xf]
    %v1570 = vld [vmem:[%s10 + $0x10] sm:$0xf]
    %v1571 = vld [vmem:[%s10 + $0x14] sm:$0xf]
    %v1572 = vld [vmem:[%s10 + $0x18] sm:$0xf]
    %v1573 = vld [vmem:[%s10 + $0x1c] sm:$0xf]
    %v1574 = vld [vmem:[%s10 + $0x20] sm:$0xf]
    %v1575 = vld [vmem:[%s10 + $0x24] sm:$0xf]
    %v1576 = vld [vmem:[%s10 + $0x28] sm:$0xf]
    %v1577 = vld [vmem:[%s10 + $0x2c] sm:$0xf]
    %v1578 = vld [vmem:[%s10 + $0x30] sm:$0xf]
    %v1579 = vld [vmem:[%s10 + $0x34] sm:$0xf]
    %v1580 = vld [vmem:[%s10 + $0x38] sm:$0xf]
    %v1581 = vld [vmem:[%s10 + $0x3c] sm:$0xf]
    %v1582 = vld [vmem:[%s11] sm:$0x1]
    %v1584 = vlaneseq
    %v1585 = vshrl.u32 %v1584, 7
    %v1586 = vsub.s32 0, %v1585
    %v1587 = vrot.slane %v1582, %v1586
    %v1605 = vunpack.c.l.b16 %v1566
    %v1606 = vunpack.c.l.b16 %v1567
    %v1607 = vunpack.c.l.b16 %v1568
    %v1608 = vunpack.c.l.b16 %v1569
    %v1609 = vunpack.c.l.b16 %v1570
    %v1610 = vunpack.c.l.b16 %v1571
    %v1611 = vunpack.c.l.b16 %v1572
    %v1612 = vunpack.c.l.b16 %v1573
    %v1613 = vunpack.c.l.b16 %v1574
    %v1614 = vunpack.c.l.b16 %v1575
    %v1615 = vunpack.c.l.b16 %v1576
    %v1616 = vunpack.c.l.b16 %v1577
    %v1617 = vunpack.c.l.b16 %v1578
    %v1618 = vunpack.c.l.b16 %v1579
    %v1619 = vunpack.c.l.b16 %v1580
    %v1620 = vunpack.c.l.b16 %v1581
    %v1621 = vpack.c.b16 %v1606, %v1605
    %v1622 = vpack.c.b16 %v1608, %v1607
    %v1623 = vpack.c.b16 %v1610, %v1609
    %v1624 = vpack.c.b16 %v1612, %v1611
    %v1625 = vpack.c.b16 %v1614, %v1613
    %v1626 = vpack.c.b16 %v1616, %v1615
    %v1627 = vpack.c.b16 %v1618, %v1617
    %v1628 = vpack.c.b16 %v1620, %v1619
    %1637 = vmatprep.subr.bf16.mxu0 0
    %1638 = vmatpush1.bf16.msra.mxu0 %v1628
    %1639 = vmatprep.subr.bf16.mxu0 0
    %1640 = vmatpush1.bf16.msra.mxu0 %v1627
    %1641 = vmatprep.subr.bf16.mxu0 0
    %1642 = vmatpush1.bf16.msra.mxu0 %v1626
    %1643 = vmatprep.subr.bf16.mxu0 0
    %1644 = vmatpush1.bf16.msra.mxu0 %v1625
    %1645 = vmatprep.subr.bf16.mxu0 0
    %1646 = vmatpush1.bf16.msra.mxu0 %v1624
    %1647 = vmatprep.subr.bf16.mxu0 0
    %1648 = vmatpush1.bf16.msra.mxu0 %v1623
    %1649 = vmatprep.subr.bf16.mxu0 0
    %1650 = vmatpush1.bf16.msra.mxu0 %v1622
    %1651 = vmatprep.subr.bf16.mxu0 0
    %1652 = vmatpush1.bf16.msra.mxu0 %v1621
    %1653 = vmatprep.subr.bf16.mxu0 0
    %1654 = vmatpush2.bf16.msra.mxu0 0
    %1655 = vmatprep.subr.bf16.mxu0 0
    %1656 = vmatpush2.bf16.msra.mxu0 0
    %1657 = vmatprep.subr.bf16.mxu0 0
    %1658 = vmatpush2.bf16.msra.mxu0 0
    %1659 = vmatprep.subr.bf16.mxu0 0
    %1660 = vmatpush2.bf16.msra.mxu0 0
    %1661 = vmatprep.subr.bf16.mxu0 0
    %1662 = vmatpush2.bf16.msra.mxu0 0
    %1663 = vmatprep.subr.bf16.mxu0 0
    %1664 = vmatpush2.bf16.msra.mxu0 0
    %1665 = vmatprep.subr.bf16.mxu0 0
    %1666 = vmatpush2.bf16.msra.mxu0 0
    %1667 = vmatprep.subr.bf16.mxu0 0
    %1668 = vmatpush2.bf16.msra.mxu0 0
    %1669 = vmatprep.mubr.bf16.mxu0 0
    %1670 = vmatmul.mubr.bf16.gmra.mxu0 %v1565
    %v1671 = vpop.f32.mrf.mxu0
    %v1672 = vadd.f32 %v1587, %v1671
    %v1673 = vpop.f32.mrf.mxu0
    %v1674 = vpop.f32.mrf.mxu0
    %v1675 = vadd.f32 %v1587, %v1674
    %v1676 = vpop.f32.mrf.mxu0
    %1677 = vdwg.mxu0
    %v1678 = vadd.f32 %v1448, %v1672
    %v1679 = vadd.f32 %v1449, %v1675
    %v1680 = vld [vmem:[%s12] sm:$0x1]
    %v1681 = vld [vmem:[%s13] sm:$0x1]
    %1682 = vadd.xlane.f32.xlu0 %v1678
    %v1683 = vpop.xlane.xlu0 %1682
    %1684 = vadd.xlane.f32.xlu0 %v1679
    %v1685 = vpop.xlane.xlu0 %1684
    %v1686 = vmul.f32 %v1683, 0.03125
    %v1687 = vmul.f32 %v1685, 0.03125
    %v1688 = vsub.f32 %v1678, %v1686
    %v1689 = vsub.f32 %v1679, %v1687
    %v1690 = vmul.f32 %v1688, %v84
    %v1691 = vmul.f32 %v1689, %v84
    %v1692 = vmul.f32 %v1690, %v1690
    %v1693 = vmul.f32 %v1691, %v1691
    %1694 = vadd.xlane.f32.xlu0 %v1692
    %v1695 = vpop.xlane.xlu0 %1694
    %1696 = vadd.xlane.f32.xlu0 %v1693
    %v1697 = vpop.xlane.xlu0 %1696
    %v1698 = vmul.f32 %v1695, 0.03125
    %v1699 = vmul.f32 %v1697, 0.03125
    %v1700 = vadd.f32 %v1698, 1e-05
    %v1701 = vadd.f32 %v1699, 1e-05
    %v1702 = vrsqrt.pop %v1700
    %v1703 = vrsqrt.pop %v1701
    %v1704 = vmul.f32 %v1688, %v1702
    %v1705 = vmul.f32 %v1689, %v1703
    %v1707 = vlaneseq
    %v1708 = vshrl.u32 %v1707, 7
    %v1709 = vsub.s32 0, %v1708
    %v1710 = vrot.slane %v1680, %v1709
    %v1712 = vmul.f32 %v1704, %v1710
    %v1713 = vmul.f32 %v1705, %v1710
    %v1715 = vlaneseq
    %v1716 = vshrl.u32 %v1715, 7
    %v1717 = vsub.s32 0, %v1716
    %v1718 = vrot.slane %v1681, %v1717
    %v1720 = vadd.f32 %v1712, %v1718
    %v1721 = vadd.f32 %v1713, %v1718
    %v1722 = vpack.c.bf16 %v1721, %v1720
    %v1724 = vunpack.c.l.b16 %v1722
    %v1725 = vunpack.c.h.b16 %v1722
    %v1726 = vpack.c.b16 %v1724, %v1724
    %v1727 = vpack.c.b16 %v1725, %v1725
    %1730 = vst [vmem:[%s14] sm:$0xf] %v1726
    %1731 = vst [vmem:[%s14 + $0x4] sm:$0xf] %v1727
    // Predicated region
    $region66: #{flat_transformer_mean_log_scale_forward.5} parent=1 // pred_check
      _
    $region67: #{flat_transformer_mean_log_scale_forward.5} parent=1 // pred_check_branch
      %1733 = sbr.rel (0) target = $region69
    $region68: #{flat_transformer_mean_log_scale_forward.5} parent=1 // pred_region
      _
    $region69: #{flat_transformer_mean_log_scale_forward.5} parent=1 // pred_fallthru
      _
    // Predicated region
    $region70: #{flat_transformer_mean_log_scale_forward.5} parent=1 // pred_check
      _
    $region71: #{flat_transformer_mean_log_scale_forward.5} parent=1 // pred_check_branch
      %1735 = sbr.rel (0) target = $region73
    $region72: #{flat_transformer_mean_log_scale_forward.5} parent=1 // pred_region
      _
    $region73: #{flat_transformer_mean_log_scale_forward.5} parent=1 // pred_fallthru
      _
    %1736 = vsyncpa [#allocation3], 1
    %1737 = vsyncpa [#allocation5], 1

// kernel: flat_transformer_mean_log_scale_forward.6
$region0: #{flat_transformer_mean_log_scale_forward.6}
  #allocation0 [shape = 'u32[]', space=smem, size = 0x4, offset = 0x4, fixed_abs, tag = 'smem constant byte address 0x4 - core index']
  #allocation1 [shape = 'u32[144,128]{1,0:T(1,128)}', space=vmem, size = 0x12000, scoped, tag = 'internal scratch']
  %s0 = inlined_call_operand.vmem [shape: bf16[16,128], index: 0, kind: input, shape index: {}]
  %s1 = inlined_call_operand.vmem [shape: f32[2,8,8], index: 1, kind: input, shape index: {}]
  %s2 = inlined_call_operand.vmem [shape: bf16[128,384], index: 2, kind: input, shape index: {}]
  %s3 = inlined_call_operand.vmem [shape: f32[1,384], index: 3, kind: input, shape index: {}]
  %s4 = inlined_call_operand.vmem [shape: bf16[128,128], index: 4, kind: input, shape index: {}]
  %s5 = inlined_call_operand.vmem [shape: f32[1,128], index: 5, kind: input, shape index: {}]
  %s6 = inlined_call_operand.vmem [shape: f32[1,128], index: 6, kind: input, shape index: {}, may-alias: {6,12}]
  %s7 = inlined_call_operand.vmem [shape: f32[1,128], index: 7, kind: input, shape index: {}, may-alias: {7,13}]
  %s8 = inlined_call_operand.vmem [shape: bf16[128,128], index: 8, kind: input, shape index: {}]
  %s9 = inlined_call_operand.vmem [shape: f32[1,128], index: 9, kind: input, shape index: {}]
  %s10 = inlined_call_operand.vmem [shape: bf16[128,128], index: 10, kind: input, shape index: {}]
  %s11 = inlined_call_operand.vmem [shape: f32[1,128], index: 11, kind: input, shape index: {}]
  %s12 = inlined_call_operand.vmem [shape: f32[1,128], index: 12, kind: input, shape index: {}, may-alias: {6,12}]
  %s13 = inlined_call_operand.vmem [shape: f32[1,128], index: 13, kind: input, shape index: {}, may-alias: {7,13}]
  %s14 = inlined_call_operand.vmem [shape: bf16[16,128], index: 14, kind: output, shape index: {}]
  %s15 = sld [smem:[#allocation0]]
  $region66: #{flat_transformer_mean_log_scale_forward.6} parent=0
    _
  %s17 = ssub.s32 1, %s15
  %s18 = scalar_select 0, %s17, %s15
  // Predicated region
  $region2: #{flat_transformer_mean_log_scale_forward.6} parent=0 // pred_check
    _
  $region3: #{flat_transformer_mean_log_scale_forward.6} parent=0 // pred_check_branch
    %20 = sbr.rel (0) target = $region5
  $region4: #{flat_transformer_mean_log_scale_forward.6} parent=0 // pred_region
    _
  $region5: #{flat_transformer_mean_log_scale_forward.6} parent=0 // pred_fallthru
    _
  // Predicated region
  $region6: #{flat_transformer_mean_log_scale_forward.6} parent=0 // pred_check
    _
  $region7: #{flat_transformer_mean_log_scale_forward.6} parent=0 // pred_check_branch
    %22 = sbr.rel (0) target = $region9
  $region8: #{flat_transformer_mean_log_scale_forward.6} parent=0 // pred_region
    _
  $region9: #{flat_transformer_mean_log_scale_forward.6} parent=0 // pred_fallthru
    _
  // Predicated region
  $region10: #{flat_transformer_mean_log_scale_forward.6} parent=0 // pred_check
    _
  $region11: #{flat_transformer_mean_log_scale_forward.6} parent=0 // pred_check_branch
    %24 = sbr.rel (0) target = $region13
  $region12: #{flat_transformer_mean_log_scale_forward.6} parent=0 // pred_region
    _
  $region13: #{flat_transformer_mean_log_scale_forward.6} parent=0 // pred_fallthru
    _
  // Predicated region
  $region14: #{flat_transformer_mean_log_scale_forward.6} parent=0 // pred_check
    _
  $region15: #{flat_transformer_mean_log_scale_forward.6} parent=0 // pred_check_branch
    %26 = sbr.rel (0) target = $region17
  $region16: #{flat_transformer_mean_log_scale_forward.6} parent=0 // pred_region
    _
  $region17: #{flat_transformer_mean_log_scale_forward.6} parent=0 // pred_fallthru
    _
  // Predicated region
  $region18: #{flat_transformer_mean_log_scale_forward.6} parent=0 // pred_check
    _
  $region19: #{flat_transformer_mean_log_scale_forward.6} parent=0 // pred_check_branch
    %28 = sbr.rel (0) target = $region21
  $region20: #{flat_transformer_mean_log_scale_forward.6} parent=0 // pred_region
    _
  $region21: #{flat_transformer_mean_log_scale_forward.6} parent=0 // pred_fallthru
    _
  // Predicated region
  $region22: #{flat_transformer_mean_log_scale_forward.6} parent=0 // pred_check
    _
  $region23: #{flat_transformer_mean_log_scale_forward.6} parent=0 // pred_check_branch
    %30 = sbr.rel (0) target = $region25
  $region24: #{flat_transformer_mean_log_scale_forward.6} parent=0 // pred_region
    _
  $region25: #{flat_transformer_mean_log_scale_forward.6} parent=0 // pred_fallthru
    _
  // Predicated region
  $region26: #{flat_transformer_mean_log_scale_forward.6} parent=0 // pred_check
    _
  $region27: #{flat_transformer_mean_log_scale_forward.6} parent=0 // pred_check_branch
    %32 = sbr.rel (0) target = $region29
  $region28: #{flat_transformer_mean_log_scale_forward.6} parent=0 // pred_region
    _
  $region29: #{flat_transformer_mean_log_scale_forward.6} parent=0 // pred_fallthru
    _
  // Predicated region
  $region30: #{flat_transformer_mean_log_scale_forward.6} parent=0 // pred_check
    _
  $region31: #{flat_transformer_mean_log_scale_forward.6} parent=0 // pred_check_branch
    %34 = sbr.rel (0) target = $region33
  $region32: #{flat_transformer_mean_log_scale_forward.6} parent=0 // pred_region
    _
  $region33: #{flat_transformer_mean_log_scale_forward.6} parent=0 // pred_fallthru
    _
  // Predicated region
  $region34: #{flat_transformer_mean_log_scale_forward.6} parent=0 // pred_check
    _
  $region35: #{flat_transformer_mean_log_scale_forward.6} parent=0 // pred_check_branch
    %36 = sbr.rel (0) target = $region37
  $region36: #{flat_transformer_mean_log_scale_forward.6} parent=0 // pred_region
    _
  $region37: #{flat_transformer_mean_log_scale_forward.6} parent=0 // pred_fallthru
    _
  // Predicated region
  $region38: #{flat_transformer_mean_log_scale_forward.6} parent=0 // pred_check
    _
  $region39: #{flat_transformer_mean_log_scale_forward.6} parent=0 // pred_check_branch
    %38 = sbr.rel (0) target = $region41
  $region40: #{flat_transformer_mean_log_scale_forward.6} parent=0 // pred_region
    _
  $region41: #{flat_transformer_mean_log_scale_forward.6} parent=0 // pred_fallthru
    _
  // Predicated region
  $region42: #{flat_transformer_mean_log_scale_forward.6} parent=0 // pred_check
    _
  $region43: #{flat_transformer_mean_log_scale_forward.6} parent=0 // pred_check_branch
    %40 = sbr.rel (0) target = $region45
  $region44: #{flat_transformer_mean_log_scale_forward.6} parent=0 // pred_region
    _
  $region45: #{flat_transformer_mean_log_scale_forward.6} parent=0 // pred_fallthru
    _
  // Predicated region
  $region46: #{flat_transformer_mean_log_scale_forward.6} parent=0 // pred_check
    _
  $region47: #{flat_transformer_mean_log_scale_forward.6} parent=0 // pred_check_branch
    %42 = sbr.rel (0) target = $region49
  $region48: #{flat_transformer_mean_log_scale_forward.6} parent=0 // pred_region
    _
  $region49: #{flat_transformer_mean_log_scale_forward.6} parent=0 // pred_fallthru
    _
  // Predicated region
  $region50: #{flat_transformer_mean_log_scale_forward.6} parent=0 // pred_check
    _
  $region51: #{flat_transformer_mean_log_scale_forward.6} parent=0 // pred_check_branch
    %44 = sbr.rel (0) target = $region53
  $region52: #{flat_transformer_mean_log_scale_forward.6} parent=0 // pred_region
    _
  $region53: #{flat_transformer_mean_log_scale_forward.6} parent=0 // pred_fallthru
    _
  // Predicated region
  $region54: #{flat_transformer_mean_log_scale_forward.6} parent=0 // pred_check
    _
  $region55: #{flat_transformer_mean_log_scale_forward.6} parent=0 // pred_check_branch
    %46 = sbr.rel (0) target = $region57
  $region56: #{flat_transformer_mean_log_scale_forward.6} parent=0 // pred_region
    _
  $region57: #{flat_transformer_mean_log_scale_forward.6} parent=0 // pred_fallthru
    _
  %v48 = vld [vmem:[%s0] sm:$0xf]
  %v49 = vld [vmem:[%s0 + $0x4] sm:$0xf]
  %v50 = vunpack.c.l.bf16 %v48
  %v51 = vunpack.c.l.bf16 %v49
  %v52 = vlaneseq
  %v53 = vand.u32 %v52, 127
  %vm54 = vcmp.lt.s32.totalorder %v53, 32
  %v55 = vsel %vm54, 1, 0
  %v56 = vcvt.s32.f32 %v55
  %v57 = vld [vmem:[%s2] sm:$0xff]
  %v58 = vld [vmem:[%s2 + $0x8] sm:$0xf]
  %v59 = vld [vmem:[%s2 + $0xc] sm:$0xff]
  %v60 = vld [vmem:[%s2 + $0x14] sm:$0xf]
  %v61 = vld [vmem:[%s2 + $0x18] sm:$0xff]
  %v62 = vld [vmem:[%s2 + $0x20] sm:$0xf]
  %v63 = vld [vmem:[%s2 + $0x24] sm:$0xff]
  %v64 = vld [vmem:[%s2 + $0x2c] sm:$0xf]
  %v65 = vld [vmem:[%s2 + $0x30] sm:$0xff]
  %v66 = vld [vmem:[%s2 + $0x38] sm:$0xf]
  %v67 = vld [vmem:[%s2 + $0x3c] sm:$0xff]
  %v68 = vld [vmem:[%s2 + $0x44] sm:$0xf]
  %v69 = vld [vmem:[%s2 + $0x48] sm:$0xff]
  %v70 = vld [vmem:[%s2 + $0x50] sm:$0xf]
  %v71 = vld [vmem:[%s2 + $0x54] sm:$0xff]
  %v72 = vld [vmem:[%s2 + $0x5c] sm:$0xf]
  %v73 = vld [vmem:[%s2 + $0x60] sm:$0xff]
  %v74 = vld [vmem:[%s2 + $0x68] sm:$0xf]
  %v75 = vld [vmem:[%s2 + $0x6c] sm:$0xff]
  %v76 = vld [vmem:[%s2 + $0x74] sm:$0xf]
  %v77 = vld [vmem:[%s2 + $0x78] sm:$0xff]
  %v78 = vld [vmem:[%s2 + $0x80] sm:$0xf]
  %v79 = vld [vmem:[%s2 + $0x84] sm:$0xff]
  %v80 = vld [vmem:[%s2 + $0x8c] sm:$0xf]
  %v81 = vld [vmem:[%s2 + $0x90] sm:$0xff]
  %v82 = vld [vmem:[%s2 + $0x98] sm:$0xf]
  %v83 = vld [vmem:[%s2 + $0x9c] sm:$0xff]
  %v84 = vld [vmem:[%s2 + $0xa4] sm:$0xf]
  %v85 = vld [vmem:[%s2 + $0xa8] sm:$0xff]
  %v86 = vld [vmem:[%s2 + $0xb0] sm:$0xf]
  %v87 = vld [vmem:[%s2 + $0xb4] sm:$0xff]
  %v88 = vld [vmem:[%s2 + $0xbc] sm:$0xf]
  %v89 = vld [vmem:[%s3] sm:$0x7]
  %v91 = vlaneseq
  %v92 = vshrl.u32 %v91, 7
  %v93 = vsub.s32 0, %v92
  %v94 = vrot.slane %v89, %v93
  %v95 = vlaneseq
  %v96 = vshrl.u32 %v95, 7
  %v97 = vsub.s32 1, %v96
  %v98 = vrot.slane %v89, %v97
  %v99 = vlaneseq
  %v100 = vshrl.u32 %v99, 7
  %v101 = vsub.s32 2, %v100
  %v102 = vrot.slane %v89, %v101
  %v108 = vunpack.c.l.b16 %v48
  %v109 = vunpack.c.l.b16 %v49
  %v110 = vpack.c.b16 %v109, %v108
  %v144 = vunpack.c.l.b16 %v57
  %v145 = vunpack.c.h.b16 %v57
  %v146 = vunpack.c.l.b16 %v58
  %v147 = vunpack.c.l.b16 %v59
  %v148 = vunpack.c.h.b16 %v59
  %v149 = vunpack.c.l.b16 %v60
  %v150 = vunpack.c.l.b16 %v61
  %v151 = vunpack.c.h.b16 %v61
  %v152 = vunpack.c.l.b16 %v62
  %v153 = vunpack.c.l.b16 %v63
  %v154 = vunpack.c.h.b16 %v63
  %v155 = vunpack.c.l.b16 %v64
  %v156 = vunpack.c.l.b16 %v65
  %v157 = vunpack.c.h.b16 %v65
  %v158 = vunpack.c.l.b16 %v66
  %v159 = vunpack.c.l.b16 %v67
  %v160 = vunpack.c.h.b16 %v67
  %v161 = vunpack.c.l.b16 %v68
  %v162 = vunpack.c.l.b16 %v69
  %v163 = vunpack.c.h.b16 %v69
  %v164 = vunpack.c.l.b16 %v70
  %v165 = vunpack.c.l.b16 %v71
  %v166 = vunpack.c.h.b16 %v71
  %v167 = vunpack.c.l.b16 %v72
  %v168 = vunpack.c.l.b16 %v73
  %v169 = vunpack.c.h.b16 %v73
  %v170 = vunpack.c.l.b16 %v74
  %v171 = vunpack.c.l.b16 %v75
  %v172 = vunpack.c.h.b16 %v75
  %v173 = vunpack.c.l.b16 %v76
  %v174 = vunpack.c.l.b16 %v77
  %v175 = vunpack.c.h.b16 %v77
  %v176 = vunpack.c.l.b16 %v78
  %v177 = vunpack.c.l.b16 %v79
  %v178 = vunpack.c.h.b16 %v79
  %v179 = vunpack.c.l.b16 %v80
  %v180 = vunpack.c.l.b16 %v81
  %v181 = vunpack.c.h.b16 %v81
  %v182 = vunpack.c.l.b16 %v82
  %v183 = vunpack.c.l.b16 %v83
  %v184 = vunpack.c.h.b16 %v83
  %v185 = vunpack.c.l.b16 %v84
  %v186 = vunpack.c.l.b16 %v85
  %v187 = vunpack.c.h.b16 %v85
  %v188 = vunpack.c.l.b16 %v86
  %v189 = vunpack.c.l.b16 %v87
  %v190 = vunpack.c.h.b16 %v87
  %v191 = vunpack.c.l.b16 %v88
  %v192 = vpack.c.b16 %v147, %v144
  %v193 = vpack.c.b16 %v148, %v145
  %v194 = vpack.c.b16 %v149, %v146
  %v195 = vpack.c.b16 %v153, %v150
  %v196 = vpack.c.b16 %v154, %v151
  %v197 = vpack.c.b16 %v155, %v152
  %v198 = vpack.c.b16 %v159, %v156
  %v199 = vpack.c.b16 %v160, %v157
  %v200 = vpack.c.b16 %v161, %v158
  %v201 = vpack.c.b16 %v165, %v162
  %v202 = vpack.c.b16 %v166, %v163
  %v203 = vpack.c.b16 %v167, %v164
  %v204 = vpack.c.b16 %v171, %v168
  %v205 = vpack.c.b16 %v172, %v169
  %v206 = vpack.c.b16 %v173, %v170
  %v207 = vpack.c.b16 %v177, %v174
  %v208 = vpack.c.b16 %v178, %v175
  %v209 = vpack.c.b16 %v179, %v176
  %v210 = vpack.c.b16 %v183, %v180
  %v211 = vpack.c.b16 %v184, %v181
  %v212 = vpack.c.b16 %v185, %v182
  %v213 = vpack.c.b16 %v189, %v186
  %v214 = vpack.c.b16 %v190, %v187
  %v215 = vpack.c.b16 %v191, %v188
  %240 = vmatprep.subr.bf16.mxu0 %v214
  %241 = vmatpush1.bf16.msra.mxu0 %v213
  %242 = vmatprep.subr.bf16.mxu0 %v211
  %243 = vmatpush1.bf16.msra.mxu0 %v210
  %244 = vmatprep.subr.bf16.mxu0 %v208
  %245 = vmatpush1.bf16.msra.mxu0 %v207
  %246 = vmatprep.subr.bf16.mxu0 %v205
  %247 = vmatpush1.bf16.msra.mxu0 %v204
  %248 = vmatprep.subr.bf16.mxu0 %v202
  %249 = vmatpush1.bf16.msra.mxu0 %v201
  %250 = vmatprep.subr.bf16.mxu0 %v199
  %251 = vmatpush1.bf16.msra.mxu0 %v198
  %252 = vmatprep.subr.bf16.mxu0 %v196
  %253 = vmatpush1.bf16.msra.mxu0 %v195
  %254 = vmatprep.subr.bf16.mxu0 %v193
  %255 = vmatpush1.bf16.msra.mxu0 %v192
  %256 = vmatprep.subr.bf16.mxu0 0
  %257 = vmatpush2.bf16.msra.mxu0 0
  %258 = vmatprep.subr.bf16.mxu0 0
  %259 = vmatpush2.bf16.msra.mxu0 0
  %260 = vmatprep.subr.bf16.mxu0 0
  %261 = vmatpush2.bf16.msra.mxu0 0
  %262 = vmatprep.subr.bf16.mxu0 0
  %263 = vmatpush2.bf16.msra.mxu0 0
  %264 = vmatprep.subr.bf16.mxu0 0
  %265 = vmatpush2.bf16.msra.mxu0 0
  %266 = vmatprep.subr.bf16.mxu0 0
  %267 = vmatpush2.bf16.msra.mxu0 0
  %268 = vmatprep.subr.bf16.mxu0 0
  %269 = vmatpush2.bf16.msra.mxu0 0
  %270 = vmatprep.subr.bf16.mxu0 0
  %271 = vmatpush2.bf16.msra.mxu0 0
  %272 = vmatprep.mubr.bf16.mxu0 0
  %273 = vmatmul.mubr.bf16.gmra.mxu0 %v110
  %v274 = vpop.f32.mrf.mxu0
  %v275 = vadd.f32 %v94, %v274
  %v276 = vpop.f32.mrf.mxu0
  %v277 = vadd.f32 %v98, %v276
  %v278 = vpop.f32.mrf.mxu0
  %v279 = vadd.f32 %v94, %v278
  %v280 = vpop.f32.mrf.mxu0
  %v281 = vadd.f32 %v98, %v280
  %282 = vdwg.mxu0
  %283 = vmatprep.subr.bf16.mxu0 0
  %284 = vmatpush1.bf16.msra.mxu0 %v215
  %285 = vmatprep.subr.bf16.mxu0 0
  %286 = vmatpush1.bf16.msra.mxu0 %v212
  %287 = vmatprep.subr.bf16.mxu0 0
  %288 = vmatpush1.bf16.msra.mxu0 %v209
  %289 = vmatprep.subr.bf16.mxu0 0
  %290 = vmatpush1.bf16.msra.mxu0 %v206
  %291 = vmatprep.subr.bf16.mxu0 0
  %292 = vmatpush1.bf16.msra.mxu0 %v203
  %293 = vmatprep.subr.bf16.mxu0 0
  %294 = vmatpush1.bf16.msra.mxu0 %v200
  %295 = vmatprep.subr.bf16.mxu0 0
  %296 = vmatpush1.bf16.msra.mxu0 %v197
  %297 = vmatprep.subr.bf16.mxu0 0
  %298 = vmatpush1.bf16.msra.mxu0 %v194
  %299 = vmatprep.subr.bf16.mxu0 0
  %300 = vmatpush2.bf16.msra.mxu0 0
  %301 = vmatprep.subr.bf16.mxu0 0
  %302 = vmatpush2.bf16.msra.mxu0 0
  %303 = vmatprep.subr.bf16.mxu0 0
  %304 = vmatpush2.bf16.msra.mxu0 0
  %305 = vmatprep.subr.bf16.mxu0 0
  %306 = vmatpush2.bf16.msra.mxu0 0
  %307 = vmatprep.subr.bf16.mxu0 0
  %308 = vmatpush2.bf16.msra.mxu0 0
  %309 = vmatprep.subr.bf16.mxu0 0
  %310 = vmatpush2.bf16.msra.mxu0 0
  %311 = vmatprep.subr.bf16.mxu0 0
  %312 = vmatpush2.bf16.msra.mxu0 0
  %313 = vmatprep.subr.bf16.mxu0 0
  %314 = vmatpush2.bf16.msra.mxu0 0
  %315 = vmatprep.mubr.bf16.mxu0 0
  %316 = vmatmul.mubr.bf16.gmra.mxu0 %v110
  %v317 = vpop.f32.mrf.mxu0
  %v318 = vadd.f32 %v102, %v317
  %v319 = vpop.f32.mrf.mxu0
  %v320 = vpop.f32.mrf.mxu0
  %v321 = vadd.f32 %v102, %v320
  %v322 = vpop.f32.mrf.mxu0
  %323 = vdwg.mxu0
  %v324 = vld [vmem:[%s1] sm:$0xff]
  %v325 = vld [vmem:[%s1 + $0x8] sm:$0xff]
  %v326 = vpack.c.bf16 %v275, %v275
  %v327 = vpack.c.bf16 %v277, %v277
  %v328 = vpack.c.bf16 %v318, %v318
  %vm329 = vcmask 261120
  %v331 = vsel %vm329, %v326, 0
  %v334 = vsel %vm329, %v327, 0
  %336 = vmatprep.subr.bf16.mxu0 0
  %337 = vmatpush1.bf16.xpose.msra.mxu0 0
  %338 = vmatprep.subr.bf16.mxu0 0
  %339 = vmatpush1.bf16.xpose.msra.mxu0 0
  %340 = vmatprep.subr.bf16.mxu0 0
  %341 = vmatpush1.bf16.xpose.msra.mxu0 0
  %342 = vmatprep.subr.bf16.mxu0 0
  %343 = vmatpush1.bf16.xpose.msra.mxu0 0
  %344 = vmatprep.subr.bf16.mxu0 0
  %345 = vmatpush1.bf16.xpose.msra.mxu0 0
  %346 = vmatprep.subr.bf16.mxu0 0
  %347 = vmatpush1.bf16.xpose.msra.mxu0 0
  %348 = vmatprep.subr.bf16.mxu0 0
  %349 = vmatpush1.bf16.xpose.msra.mxu0 0
  %350 = vmatprep.subr.bf16.mxu0 0
  %351 = vmatpush1.bf16.xpose.msra.mxu0 %v334
  %352 = vmatprep.subr.bf16.mxu0 0
  %353 = vmatpush2.bf16.xpose.msra.mxu0 0
  %354 = vmatprep.subr.bf16.mxu0 0
  %355 = vmatpush2.bf16.xpose.msra.mxu0 0
  %356 = vmatprep.subr.bf16.mxu0 0
  %357 = vmatpush2.bf16.xpose.msra.mxu0 0
  %358 = vmatprep.subr.bf16.mxu0 0
  %359 = vmatpush2.bf16.xpose.msra.mxu0 0
  %360 = vmatprep.subr.bf16.mxu0 0
  %361 = vmatpush2.bf16.xpose.msra.mxu0 0
  %362 = vmatprep.subr.bf16.mxu0 0
  %363 = vmatpush2.bf16.xpose.msra.mxu0 0
  %364 = vmatprep.subr.bf16.mxu0 0
  %365 = vmatpush2.bf16.xpose.msra.mxu0 0
  %366 = vmatprep.subr.bf16.mxu0 0
  %367 = vmatpush2.bf16.xpose.msra.mxu0 0
  %368 = vmatprep.mubr.bf16.mxu0 0
  %369 = vmatmul.mubr.bf16.gmra.mxu0 %v331
  %v370 = vpop.f32.mrf.mxu0
  %v371 = vadd.f32 0.0, %v370
  %v372 = vpop.f32.mrf.mxu0
  %v373 = vpop.f32.mrf.mxu0
  %v374 = vpop.f32.mrf.mxu0
  %375 = vdwg.mxu0
  %v376 = vmul.f32 %v371, 0.35355338
  %v377 = vlaneseq
  %v378 = vshrl.u32 %v377, 7
  %v379 = vsub.s32 0, %v378
  %v380 = vrot.slane %v324, %v379
  %v381 = vadd.f32 %v376, %v380
  %vm382 = vcmask 64512
  %v383 = vsel %vm382, %v381, -inf
  %384 = vmax.xlane.f32.xlu0 %v383
  %v385 = vpop.xlane.xlu0 %384
  %v386 = vsub.f32 %v381, %v385
  %v387 = vmul.f32 %v386, 1.442695
  %v388 = vpow.pop %v387
  %v389 = vsel %vm382, %v388, 0.0
  %390 = vadd.xlane.f32.xlu0 %v389
  %v391 = vpop.xlane.xlu0 %390
  %v392 = vrcp.pop %v391
  %v393 = vmul.f32 %v388, %v392
  %v394 = vpack.c.bf16 %v393, %v393
  %v396 = vsel %vm382, %v394, 0
  %vm398 = vcmask 1043456
  %v400 = vsel %vm398, %v328, 0
  %402 = vmatprep.subr.bf16.mxu0 0
  %403 = vmatpush1.bf16.msra.mxu0 0
  %404 = vmatprep.subr.bf16.mxu0 0
  %405 = vmatpush1.bf16.msra.mxu0 0
  %406 = vmatprep.subr.bf16.mxu0 0
  %407 = vmatpush1.bf16.msra.mxu0 0
  %408 = vmatprep.subr.bf16.mxu0 0
  %409 = vmatpush1.bf16.msra.mxu0 0
  %410 = vmatprep.subr.bf16.mxu0 0
  %411 = vmatpush1.bf16.msra.mxu0 0
  %412 = vmatprep.subr.bf16.mxu0 0
  %413 = vmatpush1.bf16.msra.mxu0 0
  %414 = vmatprep.subr.bf16.mxu0 0
  %415 = vmatpush1.bf16.msra.mxu0 0
  %416 = vmatprep.subr.bf16.mxu0 0
  %417 = vmatpush1.bf16.msra.mxu0 %v400
  %418 = vmatprep.subr.bf16.mxu0 0
  %419 = vmatpush2.bf16.msra.mxu0 0
  %420 = vmatprep.subr.bf16.mxu0 0
  %421 = vmatpush2.bf16.msra.mxu0 0
  %422 = vmatprep.subr.bf16.mxu0 0
  %423 = vmatpush2.bf16.msra.mxu0 0
  %424 = vmatprep.subr.bf16.mxu0 0
  %425 = vmatpush2.bf16.msra.mxu0 0
  %426 = vmatprep.subr.bf16.mxu0 0
  %427 = vmatpush2.bf16.msra.mxu0 0
  %428 = vmatprep.subr.bf16.mxu0 0
  %429 = vmatpush2.bf16.msra.mxu0 0
  %430 = vmatprep.subr.bf16.mxu0 0
  %431 = vmatpush2.bf16.msra.mxu0 0
  %432 = vmatprep.subr.bf16.mxu0 0
  %433 = vmatpush2.bf16.msra.mxu0 0
  %434 = vmatprep.mubr.bf16.mxu0 0
  %435 = vmatmul.mubr.bf16.gmra.mxu0 %v396
  %v436 = vpop.f32.mrf.mxu0
  %v437 = vadd.f32 0.0, %v436
  %v438 = vpop.f32.mrf.mxu0
  %v439 = vpop.f32.mrf.mxu0
  %v440 = vpop.f32.mrf.mxu0
  %441 = vdwg.mxu0
  %443 = vrot.lane.b32.xlu0 %v326, 96
  %v444 = vpop.permute.xlu0 %443
  %446 = vrot.lane.b32.xlu0 %v327, 96
  %v447 = vpop.permute.xlu0 %446
  %v449 = vsel %vm329, %v444, 0
  %v452 = vsel %vm329, %v447, 0
  %454 = vmatprep.subr.bf16.mxu0 0
  %455 = vmatpush1.bf16.xpose.msra.mxu0 0
  %456 = vmatprep.subr.bf16.mxu0 0
  %457 = vmatpush1.bf16.xpose.msra.mxu0 0
  %458 = vmatprep.subr.bf16.mxu0 0
  %459 = vmatpush1.bf16.xpose.msra.mxu0 0
  %460 = vmatprep.subr.bf16.mxu0 0
  %461 = vmatpush1.bf16.xpose.msra.mxu0 0
  %462 = vmatprep.subr.bf16.mxu0 0
  %463 = vmatpush1.bf16.xpose.msra.mxu0 0
  %464 = vmatprep.subr.bf16.mxu0 0
  %465 = vmatpush1.bf16.xpose.msra.mxu0 0
  %466 = vmatprep.subr.bf16.mxu0 0
  %467 = vmatpush1.bf16.xpose.msra.mxu0 0
  %468 = vmatprep.subr.bf16.mxu0 0
  %469 = vmatpush1.bf16.xpose.msra.mxu0 %v452
  %470 = vmatprep.subr.bf16.mxu0 0
  %471 = vmatpush2.bf16.xpose.msra.mxu0 0
  %472 = vmatprep.subr.bf16.mxu0 0
  %473 = vmatpush2.bf16.xpose.msra.mxu0 0
  %474 = vmatprep.subr.bf16.mxu0 0
  %475 = vmatpush2.bf16.xpose.msra.mxu0 0
  %476 = vmatprep.subr.bf16.mxu0 0
  %477 = vmatpush2.bf16.xpose.msra.mxu0 0
  %478 = vmatprep.subr.bf16.mxu0 0
  %479 = vmatpush2.bf16.xpose.msra.mxu0 0
  %480 = vmatprep.subr.bf16.mxu0 0
  %481 = vmatpush2.bf16.xpose.msra.mxu0 0
  %482 = vmatprep.subr.bf16.mxu0 0
  %483 = vmatpush2.bf16.xpose.msra.mxu0 0
  %484 = vmatprep.subr.bf16.mxu0 0
  %485 = vmatpush2.bf16.xpose.msra.mxu0 0
  %486 = vmatprep.mubr.bf16.mxu0 0
  %487 = vmatmul.mubr.bf16.gmra.mxu0 %v449
  %v488 = vpop.f32.mrf.mxu0
  %v489 = vadd.f32 0.0, %v488
  %v490 = vpop.f32.mrf.mxu0
  %v491 = vpop.f32.mrf.mxu0
  %v492 = vpop.f32.mrf.mxu0
  %493 = vdwg.mxu0
  %v494 = vmul.f32 %v489, 0.35355338
  %v495 = vadd.f32 %v494, %v380
  %v496 = vsel %vm382, %v495, -inf
  %497 = vmax.xlane.f32.xlu0 %v496
  %v498 = vpop.xlane.xlu0 %497
  %v499 = vsub.f32 %v495, %v498
  %v500 = vmul.f32 %v499, 1.442695
  %v501 = vpow.pop %v500
  %v502 = vsel %vm382, %v501, 0.0
  %503 = vadd.xlane.f32.xlu0 %v502
  %v504 = vpop.xlane.xlu0 %503
  %v505 = vrcp.pop %v504
  %v506 = vmul.f32 %v501, %v505
  %v507 = vpack.c.bf16 %v506, %v506
  %509 = vrot.lane.b32.xlu0 %v328, 96
  %v510 = vpop.permute.xlu0 %509
  %v512 = vsel %vm382, %v507, 0
  %v515 = vsel %vm398, %v510, 0
  %517 = vmatprep.subr.bf16.mxu0 0
  %518 = vmatpush1.bf16.msra.mxu0 0
  %519 = vmatprep.subr.bf16.mxu0 0
  %520 = vmatpush1.bf16.msra.mxu0 0
  %521 = vmatprep.subr.bf16.mxu0 0
  %522 = vmatpush1.bf16.msra.mxu0 0
  %523 = vmatprep.subr.bf16.mxu0 0
  %524 = vmatpush1.bf16.msra.mxu0 0
  %525 = vmatprep.subr.bf16.mxu0 0
  %526 = vmatpush1.bf16.msra.mxu0 0
  %527 = vmatprep.subr.bf16.mxu0 0
  %528 = vmatpush1.bf16.msra.mxu0 0
  %529 = vmatprep.subr.bf16.mxu0 0
  %530 = vmatpush1.bf16.msra.mxu0 0
  %531 = vmatprep.subr.bf16.mxu0 0
  %532 = vmatpush1.bf16.msra.mxu0 %v515
  %533 = vmatprep.subr.bf16.mxu0 0
  %534 = vmatpush2.bf16.msra.mxu0 0
  %535 = vmatprep.subr.bf16.mxu0 0
  %536 = vmatpush2.bf16.msra.mxu0 0
  %537 = vmatprep.subr.bf16.mxu0 0
  %538 = vmatpush2.bf16.msra.mxu0 0
  %539 = vmatprep.subr.bf16.mxu0 0
  %540 = vmatpush2.bf16.msra.mxu0 0
  %541 = vmatprep.subr.bf16.mxu0 0
  %542 = vmatpush2.bf16.msra.mxu0 0
  %543 = vmatprep.subr.bf16.mxu0 0
  %544 = vmatpush2.bf16.msra.mxu0 0
  %545 = vmatprep.subr.bf16.mxu0 0
  %546 = vmatpush2.bf16.msra.mxu0 0
  %547 = vmatprep.subr.bf16.mxu0 0
  %548 = vmatpush2.bf16.msra.mxu0 0
  %549 = vmatprep.mubr.bf16.mxu0 0
  %550 = vmatmul.mubr.bf16.gmra.mxu0 %v512
  %v551 = vpop.f32.mrf.mxu0
  %v552 = vadd.f32 0.0, %v551
  %v553 = vpop.f32.mrf.mxu0
  %v554 = vpop.f32.mrf.mxu0
  %v555 = vpop.f32.mrf.mxu0
  %556 = vdwg.mxu0
  %557 = vrot.lane.b32.xlu0 %v326, 64
  %v558 = vpop.permute.xlu0 %557
  %559 = vrot.lane.b32.xlu0 %v327, 64
  %v560 = vpop.permute.xlu0 %559
  %v562 = vsel %vm329, %v558, 0
  %v565 = vsel %vm329, %v560, 0
  %567 = vmatprep.subr.bf16.mxu0 0
  %568 = vmatpush1.bf16.xpose.msra.mxu0 0
  %569 = vmatprep.subr.bf16.mxu0 0
  %570 = vmatpush1.bf16.xpose.msra.mxu0 0
  %571 = vmatprep.subr.bf16.mxu0 0
  %572 = vmatpush1.bf16.xpose.msra.mxu0 0
  %573 = vmatprep.subr.bf16.mxu0 0
  %574 = vmatpush1.bf16.xpose.msra.mxu0 0
  %575 = vmatprep.subr.bf16.mxu0 0
  %576 = vmatpush1.bf16.xpose.msra.mxu0 0
  %577 = vmatprep.subr.bf16.mxu0 0
  %578 = vmatpush1.bf16.xpose.msra.mxu0 0
  %579 = vmatprep.subr.bf16.mxu0 0
  %580 = vmatpush1.bf16.xpose.msra.mxu0 0
  %581 = vmatprep.subr.bf16.mxu0 0
  %582 = vmatpush1.bf16.xpose.msra.mxu0 %v565
  %583 = vmatprep.subr.bf16.mxu0 0
  %584 = vmatpush2.bf16.xpose.msra.mxu0 0
  %585 = vmatprep.subr.bf16.mxu0 0
  %586 = vmatpush2.bf16.xpose.msra.mxu0 0
  %587 = vmatprep.subr.bf16.mxu0 0
  %588 = vmatpush2.bf16.xpose.msra.mxu0 0
  %589 = vmatprep.subr.bf16.mxu0 0
  %590 = vmatpush2.bf16.xpose.msra.mxu0 0
  %591 = vmatprep.subr.bf16.mxu0 0
  %592 = vmatpush2.bf16.xpose.msra.mxu0 0
  %593 = vmatprep.subr.bf16.mxu0 0
  %594 = vmatpush2.bf16.xpose.msra.mxu0 0
  %595 = vmatprep.subr.bf16.mxu0 0
  %596 = vmatpush2.bf16.xpose.msra.mxu0 0
  %597 = vmatprep.subr.bf16.mxu0 0
  %598 = vmatpush2.bf16.xpose.msra.mxu0 0
  %599 = vmatprep.mubr.bf16.mxu0 0
  %600 = vmatmul.mubr.bf16.gmra.mxu0 %v562
  %v601 = vpop.f32.mrf.mxu0
  %v602 = vadd.f32 0.0, %v601
  %v603 = vpop.f32.mrf.mxu0
  %v604 = vpop.f32.mrf.mxu0
  %v605 = vpop.f32.mrf.mxu0
  %606 = vdwg.mxu0
  %v607 = vmul.f32 %v602, 0.35355338
  %v608 = vadd.f32 %v607, %v380
  %v609 = vsel %vm382, %v608, -inf
  %610 = vmax.xlane.f32.xlu0 %v609
  %v611 = vpop.xlane.xlu0 %610
  %v612 = vsub.f32 %v608, %v611
  %v613 = vmul.f32 %v612, 1.442695
  %v614 = vpow.pop %v613
  %v615 = vsel %vm382, %v614, 0.0
  %616 = vadd.xlane.f32.xlu0 %v615
  %v617 = vpop.xlane.xlu0 %616
  %v618 = vrcp.pop %v617
  %v619 = vmul.f32 %v614, %v618
  %v620 = vpack.c.bf16 %v619, %v619
  %621 = vrot.lane.b32.xlu0 %v328, 64
  %v622 = vpop.permute.xlu0 %621
  %v624 = vsel %vm382, %v620, 0
  %v627 = vsel %vm398, %v622, 0
  %629 = vmatprep.subr.bf16.mxu0 0
  %630 = vmatpush1.bf16.msra.mxu0 0
  %631 = vmatprep.subr.bf16.mxu0 0
  %632 = vmatpush1.bf16.msra.mxu0 0
  %633 = vmatprep.subr.bf16.mxu0 0
  %634 = vmatpush1.bf16.msra.mxu0 0
  %635 = vmatprep.subr.bf16.mxu0 0
  %636 = vmatpush1.bf16.msra.mxu0 0
  %637 = vmatprep.subr.bf16.mxu0 0
  %638 = vmatpush1.bf16.msra.mxu0 0
  %639 = vmatprep.subr.bf16.mxu0 0
  %640 = vmatpush1.bf16.msra.mxu0 0
  %641 = vmatprep.subr.bf16.mxu0 0
  %642 = vmatpush1.bf16.msra.mxu0 0
  %643 = vmatprep.subr.bf16.mxu0 0
  %644 = vmatpush1.bf16.msra.mxu0 %v627
  %645 = vmatprep.subr.bf16.mxu0 0
  %646 = vmatpush2.bf16.msra.mxu0 0
  %647 = vmatprep.subr.bf16.mxu0 0
  %648 = vmatpush2.bf16.msra.mxu0 0
  %649 = vmatprep.subr.bf16.mxu0 0
  %650 = vmatpush2.bf16.msra.mxu0 0
  %651 = vmatprep.subr.bf16.mxu0 0
  %652 = vmatpush2.bf16.msra.mxu0 0
  %653 = vmatprep.subr.bf16.mxu0 0
  %654 = vmatpush2.bf16.msra.mxu0 0
  %655 = vmatprep.subr.bf16.mxu0 0
  %656 = vmatpush2.bf16.msra.mxu0 0
  %657 = vmatprep.subr.bf16.mxu0 0
  %658 = vmatpush2.bf16.msra.mxu0 0
  %659 = vmatprep.subr.bf16.mxu0 0
  %660 = vmatpush2.bf16.msra.mxu0 0
  %661 = vmatprep.mubr.bf16.mxu0 0
  %662 = vmatmul.mubr.bf16.gmra.mxu0 %v624
  %v663 = vpop.f32.mrf.mxu0
  %v664 = vadd.f32 0.0, %v663
  %v665 = vpop.f32.mrf.mxu0
  %v666 = vpop.f32.mrf.mxu0
  %v667 = vpop.f32.mrf.mxu0
  %668 = vdwg.mxu0
  %669 = vrot.lane.b32.xlu0 %v326, 32
  %v670 = vpop.permute.xlu0 %669
  %671 = vrot.lane.b32.xlu0 %v327, 32
  %v672 = vpop.permute.xlu0 %671
  %v674 = vsel %vm329, %v670, 0
  %v677 = vsel %vm329, %v672, 0
  %679 = vmatprep.subr.bf16.mxu0 0
  %680 = vmatpush1.bf16.xpose.msra.mxu0 0
  %681 = vmatprep.subr.bf16.mxu0 0
  %682 = vmatpush1.bf16.xpose.msra.mxu0 0
  %683 = vmatprep.subr.bf16.mxu0 0
  %684 = vmatpush1.bf16.xpose.msra.mxu0 0
  %685 = vmatprep.subr.bf16.mxu0 0
  %686 = vmatpush1.bf16.xpose.msra.mxu0 0
  %687 = vmatprep.subr.bf16.mxu0 0
  %688 = vmatpush1.bf16.xpose.msra.mxu0 0
  %689 = vmatprep.subr.bf16.mxu0 0
  %690 = vmatpush1.bf16.xpose.msra.mxu0 0
  %691 = vmatprep.subr.bf16.mxu0 0
  %692 = vmatpush1.bf16.xpose.msra.mxu0 0
  %693 = vmatprep.subr.bf16.mxu0 0
  %694 = vmatpush1.bf16.xpose.msra.mxu0 %v677
  %695 = vmatprep.subr.bf16.mxu0 0
  %696 = vmatpush2.bf16.xpose.msra.mxu0 0
  %697 = vmatprep.subr.bf16.mxu0 0
  %698 = vmatpush2.bf16.xpose.msra.mxu0 0
  %699 = vmatprep.subr.bf16.mxu0 0
  %700 = vmatpush2.bf16.xpose.msra.mxu0 0
  %701 = vmatprep.subr.bf16.mxu0 0
  %702 = vmatpush2.bf16.xpose.msra.mxu0 0
  %703 = vmatprep.subr.bf16.mxu0 0
  %704 = vmatpush2.bf16.xpose.msra.mxu0 0
  %705 = vmatprep.subr.bf16.mxu0 0
  %706 = vmatpush2.bf16.xpose.msra.mxu0 0
  %707 = vmatprep.subr.bf16.mxu0 0
  %708 = vmatpush2.bf16.xpose.msra.mxu0 0
  %709 = vmatprep.subr.bf16.mxu0 0
  %710 = vmatpush2.bf16.xpose.msra.mxu0 0
  %711 = vmatprep.mubr.bf16.mxu0 0
  %712 = vmatmul.mubr.bf16.gmra.mxu0 %v674
  %v713 = vpop.f32.mrf.mxu0
  %v714 = vadd.f32 0.0, %v713
  %v715 = vpop.f32.mrf.mxu0
  %v716 = vpop.f32.mrf.mxu0
  %v717 = vpop.f32.mrf.mxu0
  %718 = vdwg.mxu0
  %v719 = vmul.f32 %v714, 0.35355338
  %v720 = vadd.f32 %v719, %v380
  %v721 = vsel %vm382, %v720, -inf
  %722 = vmax.xlane.f32.xlu0 %v721
  %v723 = vpop.xlane.xlu0 %722
  %v724 = vsub.f32 %v720, %v723
  %v725 = vmul.f32 %v724, 1.442695
  %v726 = vpow.pop %v725
  %v727 = vsel %vm382, %v726, 0.0
  %728 = vadd.xlane.f32.xlu0 %v727
  %v729 = vpop.xlane.xlu0 %728
  %v730 = vrcp.pop %v729
  %v731 = vmul.f32 %v726, %v730
  %v732 = vpack.c.bf16 %v731, %v731
  %733 = vrot.lane.b32.xlu0 %v328, 32
  %v734 = vpop.permute.xlu0 %733
  %v736 = vsel %vm382, %v732, 0
  %v739 = vsel %vm398, %v734, 0
  %741 = vmatprep.subr.bf16.mxu0 0
  %742 = vmatpush1.bf16.msra.mxu0 0
  %743 = vmatprep.subr.bf16.mxu0 0
  %744 = vmatpush1.bf16.msra.mxu0 0
  %745 = vmatprep.subr.bf16.mxu0 0
  %746 = vmatpush1.bf16.msra.mxu0 0
  %747 = vmatprep.subr.bf16.mxu0 0
  %748 = vmatpush1.bf16.msra.mxu0 0
  %749 = vmatprep.subr.bf16.mxu0 0
  %750 = vmatpush1.bf16.msra.mxu0 0
  %751 = vmatprep.subr.bf16.mxu0 0
  %752 = vmatpush1.bf16.msra.mxu0 0
  %753 = vmatprep.subr.bf16.mxu0 0
  %754 = vmatpush1.bf16.msra.mxu0 0
  %755 = vmatprep.subr.bf16.mxu0 0
  %756 = vmatpush1.bf16.msra.mxu0 %v739
  %757 = vmatprep.subr.bf16.mxu0 0
  %758 = vmatpush2.bf16.msra.mxu0 0
  %759 = vmatprep.subr.bf16.mxu0 0
  %760 = vmatpush2.bf16.msra.mxu0 0
  %761 = vmatprep.subr.bf16.mxu0 0
  %762 = vmatpush2.bf16.msra.mxu0 0
  %763 = vmatprep.subr.bf16.mxu0 0
  %764 = vmatpush2.bf16.msra.mxu0 0
  %765 = vmatprep.subr.bf16.mxu0 0
  %766 = vmatpush2.bf16.msra.mxu0 0
  %767 = vmatprep.subr.bf16.mxu0 0
  %768 = vmatpush2.bf16.msra.mxu0 0
  %769 = vmatprep.subr.bf16.mxu0 0
  %770 = vmatpush2.bf16.msra.mxu0 0
  %771 = vmatprep.subr.bf16.mxu0 0
  %772 = vmatpush2.bf16.msra.mxu0 0
  %773 = vmatprep.mubr.bf16.mxu0 0
  %774 = vmatmul.mubr.bf16.gmra.mxu0 %v736
  %v775 = vpop.f32.mrf.mxu0
  %v776 = vadd.f32 0.0, %v775
  %v777 = vpop.f32.mrf.mxu0
  %v778 = vpop.f32.mrf.mxu0
  %v779 = vpop.f32.mrf.mxu0
  %780 = vdwg.mxu0
  %782 = vrot.lane.b32.xlu0 %v552, 32
  %v783 = vpop.permute.xlu0 %782
  %786 = vrot.lane.b32.xlu0 %v664, 64
  %v787 = vpop.permute.xlu0 %786
  %790 = vrot.lane.b32.xlu0 %v776, 96
  %v791 = vpop.permute.xlu0 %790
  %v793 = vsel %vm329, %v437, %v783
  %vm794 = vcmask 523264
  %v795 = vsel %vm794, %v793, %v787
  %vm796 = vcmask 785408
  %v797 = vsel %vm796, %v795, %v791
  %v798 = vpack.c.bf16 %v279, %v279
  %v799 = vpack.c.bf16 %v281, %v281
  %v800 = vpack.c.bf16 %v321, %v321
  %v802 = vsel %vm329, %v798, 0
  %v805 = vsel %vm329, %v799, 0
  %807 = vmatprep.subr.bf16.mxu0 0
  %808 = vmatpush1.bf16.xpose.msra.mxu0 0
  %809 = vmatprep.subr.bf16.mxu0 0
  %810 = vmatpush1.bf16.xpose.msra.mxu0 0
  %811 = vmatprep.subr.bf16.mxu0 0
  %812 = vmatpush1.bf16.xpose.msra.mxu0 0
  %813 = vmatprep.subr.bf16.mxu0 0
  %814 = vmatpush1.bf16.xpose.msra.mxu0 0
  %815 = vmatprep.subr.bf16.mxu0 0
  %816 = vmatpush1.bf16.xpose.msra.mxu0 0
  %817 = vmatprep.subr.bf16.mxu0 0
  %818 = vmatpush1.bf16.xpose.msra.mxu0 0
  %819 = vmatprep.subr.bf16.mxu0 0
  %820 = vmatpush1.bf16.xpose.msra.mxu0 0
  %821 = vmatprep.subr.bf16.mxu0 0
  %822 = vmatpush1.bf16.xpose.msra.mxu0 %v805
  %823 = vmatprep.subr.bf16.mxu0 0
  %824 = vmatpush2.bf16.xpose.msra.mxu0 0
  %825 = vmatprep.subr.bf16.mxu0 0
  %826 = vmatpush2.bf16.xpose.msra.mxu0 0
  %827 = vmatprep.subr.bf16.mxu0 0
  %828 = vmatpush2.bf16.xpose.msra.mxu0 0
  %829 = vmatprep.subr.bf16.mxu0 0
  %830 = vmatpush2.bf16.xpose.msra.mxu0 0
  %831 = vmatprep.subr.bf16.mxu0 0
  %832 = vmatpush2.bf16.xpose.msra.mxu0 0
  %833 = vmatprep.subr.bf16.mxu0 0
  %834 = vmatpush2.bf16.xpose.msra.mxu0 0
  %835 = vmatprep.subr.bf16.mxu0 0
  %836 = vmatpush2.bf16.xpose.msra.mxu0 0
  %837 = vmatprep.subr.bf16.mxu0 0
  %838 = vmatpush2.bf16.xpose.msra.mxu0 0
  %839 = vmatprep.mubr.bf16.mxu0 0
  %840 = vmatmul.mubr.bf16.gmra.mxu0 %v802
  %v841 = vpop.f32.mrf.mxu0
  %v842 = vadd.f32 0.0, %v841
  %v843 = vpop.f32.mrf.mxu0
  %v844 = vpop.f32.mrf.mxu0
  %v845 = vpop.f32.mrf.mxu0
  %846 = vdwg.mxu0
  %v847 = vmul.f32 %v842, 0.35355338
  %v848 = vlaneseq
  %v849 = vshrl.u32 %v848, 7
  %v850 = vsub.s32 0, %v849
  %v851 = vrot.slane %v325, %v850
  %v852 = vadd.f32 %v847, %v851
  %v853 = vsel %vm382, %v852, -inf
  %854 = vmax.xlane.f32.xlu0 %v853
  %v855 = vpop.xlane.xlu0 %854
  %v856 = vsub.f32 %v852, %v855
  %v857 = vmul.f32 %v856, 1.442695
  %v858 = vpow.pop %v857
  %v859 = vsel %vm382, %v858, 0.0
  %860 = vadd.xlane.f32.xlu0 %v859
  %v861 = vpop.xlane.xlu0 %860
  %v862 = vrcp.pop %v861
  %v863 = vmul.f32 %v858, %v862
  %v864 = vpack.c.bf16 %v863, %v863
  %v866 = vsel %vm382, %v864, 0
  %v869 = vsel %vm398, %v800, 0
  %871 = vmatprep.subr.bf16.mxu0 0
  %872 = vmatpush1.bf16.msra.mxu0 0
  %873 = vmatprep.subr.bf16.mxu0 0
  %874 = vmatpush1.bf16.msra.mxu0 0
  %875 = vmatprep.subr.bf16.mxu0 0
  %876 = vmatpush1.bf16.msra.mxu0 0
  %877 = vmatprep.subr.bf16.mxu0 0
  %878 = vmatpush1.bf16.msra.mxu0 0
  %879 = vmatprep.subr.bf16.mxu0 0
  %880 = vmatpush1.bf16.msra.mxu0 0
  %881 = vmatprep.subr.bf16.mxu0 0
  %882 = vmatpush1.bf16.msra.mxu0 0
  %883 = vmatprep.subr.bf16.mxu0 0
  %884 = vmatpush1.bf16.msra.mxu0 0
  %885 = vmatprep.subr.bf16.mxu0 0
  %886 = vmatpush1.bf16.msra.mxu0 %v869
  %887 = vmatprep.subr.bf16.mxu0 0
  %888 = vmatpush2.bf16.msra.mxu0 0
  %889 = vmatprep.subr.bf16.mxu0 0
  %890 = vmatpush2.bf16.msra.mxu0 0
  %891 = vmatprep.subr.bf16.mxu0 0
  %892 = vmatpush2.bf16.msra.mxu0 0
  %893 = vmatprep.subr.bf16.mxu0 0
  %894 = vmatpush2.bf16.msra.mxu0 0
  %895 = vmatprep.subr.bf16.mxu0 0
  %896 = vmatpush2.bf16.msra.mxu0 0
  %897 = vmatprep.subr.bf16.mxu0 0
  %898 = vmatpush2.bf16.msra.mxu0 0
  %899 = vmatprep.subr.bf16.mxu0 0
  %900 = vmatpush2.bf16.msra.mxu0 0
  %901 = vmatprep.subr.bf16.mxu0 0
  %902 = vmatpush2.bf16.msra.mxu0 0
  %903 = vmatprep.mubr.bf16.mxu0 0
  %904 = vmatmul.mubr.bf16.gmra.mxu0 %v866
  %v905 = vpop.f32.mrf.mxu0
  %v906 = vadd.f32 0.0, %v905
  %v907 = vpop.f32.mrf.mxu0
  %v908 = vpop.f32.mrf.mxu0
  %v909 = vpop.f32.mrf.mxu0
  %910 = vdwg.mxu0
  %912 = vrot.lane.b32.xlu0 %v798, 96
  %v913 = vpop.permute.xlu0 %912
  %915 = vrot.lane.b32.xlu0 %v799, 96
  %v916 = vpop.permute.xlu0 %915
  %v918 = vsel %vm329, %v913, 0
  %v921 = vsel %vm329, %v916, 0
  %923 = vmatprep.subr.bf16.mxu0 0
  %924 = vmatpush1.bf16.xpose.msra.mxu0 0
  %925 = vmatprep.subr.bf16.mxu0 0
  %926 = vmatpush1.bf16.xpose.msra.mxu0 0
  %927 = vmatprep.subr.bf16.mxu0 0
  %928 = vmatpush1.bf16.xpose.msra.mxu0 0
  %929 = vmatprep.subr.bf16.mxu0 0
  %930 = vmatpush1.bf16.xpose.msra.mxu0 0
  %931 = vmatprep.subr.bf16.mxu0 0
  %932 = vmatpush1.bf16.xpose.msra.mxu0 0
  %933 = vmatprep.subr.bf16.mxu0 0
  %934 = vmatpush1.bf16.xpose.msra.mxu0 0
  %935 = vmatprep.subr.bf16.mxu0 0
  %936 = vmatpush1.bf16.xpose.msra.mxu0 0
  %937 = vmatprep.subr.bf16.mxu0 0
  %938 = vmatpush1.bf16.xpose.msra.mxu0 %v921
  %939 = vmatprep.subr.bf16.mxu0 0
  %940 = vmatpush2.bf16.xpose.msra.mxu0 0
  %941 = vmatprep.subr.bf16.mxu0 0
  %942 = vmatpush2.bf16.xpose.msra.mxu0 0
  %943 = vmatprep.subr.bf16.mxu0 0
  %944 = vmatpush2.bf16.xpose.msra.mxu0 0
  %945 = vmatprep.subr.bf16.mxu0 0
  %946 = vmatpush2.bf16.xpose.msra.mxu0 0
  %947 = vmatprep.subr.bf16.mxu0 0
  %948 = vmatpush2.bf16.xpose.msra.mxu0 0
  %949 = vmatprep.subr.bf16.mxu0 0
  %950 = vmatpush2.bf16.xpose.msra.mxu0 0
  %951 = vmatprep.subr.bf16.mxu0 0
  %952 = vmatpush2.bf16.xpose.msra.mxu0 0
  %953 = vmatprep.subr.bf16.mxu0 0
  %954 = vmatpush2.bf16.xpose.msra.mxu0 0
  %955 = vmatprep.mubr.bf16.mxu0 0
  %956 = vmatmul.mubr.bf16.gmra.mxu0 %v918
  %v957 = vpop.f32.mrf.mxu0
  %v958 = vadd.f32 0.0, %v957
  %v959 = vpop.f32.mrf.mxu0
  %v960 = vpop.f32.mrf.mxu0
  %v961 = vpop.f32.mrf.mxu0
  %962 = vdwg.mxu0
  %v963 = vmul.f32 %v958, 0.35355338
  %v964 = vadd.f32 %v963, %v851
  %v965 = vsel %vm382, %v964, -inf
  %966 = vmax.xlane.f32.xlu0 %v965
  %v967 = vpop.xlane.xlu0 %966
  %v968 = vsub.f32 %v964, %v967
  %v969 = vmul.f32 %v968, 1.442695
  %v970 = vpow.pop %v969
  %v971 = vsel %vm382, %v970, 0.0
  %972 = vadd.xlane.f32.xlu0 %v971
  %v973 = vpop.xlane.xlu0 %972
  %v974 = vrcp.pop %v973
  %v975 = vmul.f32 %v970, %v974
  %v976 = vpack.c.bf16 %v975, %v975
  %978 = vrot.lane.b32.xlu0 %v800, 96
  %v979 = vpop.permute.xlu0 %978
  %v981 = vsel %vm382, %v976, 0
  %v984 = vsel %vm398, %v979, 0
  %986 = vmatprep.subr.bf16.mxu0 0
  %987 = vmatpush1.bf16.msra.mxu0 0
  %988 = vmatprep.subr.bf16.mxu0 0
  %989 = vmatpush1.bf16.msra.mxu0 0
  %990 = vmatprep.subr.bf16.mxu0 0
  %991 = vmatpush1.bf16.msra.mxu0 0
  %992 = vmatprep.subr.bf16.mxu0 0
  %993 = vmatpush1.bf16.msra.mxu0 0
  %994 = vmatprep.subr.bf16.mxu0 0
  %995 = vmatpush1.bf16.msra.mxu0 0
  %996 = vmatprep.subr.bf16.mxu0 0
  %997 = vmatpush1.bf16.msra.mxu0 0
  %998 = vmatprep.subr.bf16.mxu0 0
  %999 = vmatpush1.bf16.msra.mxu0 0
  %1000 = vmatprep.subr.bf16.mxu0 0
  %1001 = vmatpush1.bf16.msra.mxu0 %v984
  %1002 = vmatprep.subr.bf16.mxu0 0
  %1003 = vmatpush2.bf16.msra.mxu0 0
  %1004 = vmatprep.subr.bf16.mxu0 0
  %1005 = vmatpush2.bf16.msra.mxu0 0
  %1006 = vmatprep.subr.bf16.mxu0 0
  %1007 = vmatpush2.bf16.msra.mxu0 0
  %1008 = vmatprep.subr.bf16.mxu0 0
  %1009 = vmatpush2.bf16.msra.mxu0 0
  %1010 = vmatprep.subr.bf16.mxu0 0
  %1011 = vmatpush2.bf16.msra.mxu0 0
  %1012 = vmatprep.subr.bf16.mxu0 0
  %1013 = vmatpush2.bf16.msra.mxu0 0
  %1014 = vmatprep.subr.bf16.mxu0 0
  %1015 = vmatpush2.bf16.msra.mxu0 0
  %1016 = vmatprep.subr.bf16.mxu0 0
  %1017 = vmatpush2.bf16.msra.mxu0 0
  %1018 = vmatprep.mubr.bf16.mxu0 0
  %1019 = vmatmul.mubr.bf16.gmra.mxu0 %v981
  %v1020 = vpop.f32.mrf.mxu0
  %v1021 = vadd.f32 0.0, %v1020
  %v1022 = vpop.f32.mrf.mxu0
  %v1023 = vpop.f32.mrf.mxu0
  %v1024 = vpop.f32.mrf.mxu0
  %1025 = vdwg.mxu0
  %1026 = vrot.lane.b32.xlu0 %v798, 64
  %v1027 = vpop.permute.xlu0 %1026
  %1028 = vrot.lane.b32.xlu0 %v799, 64
  %v1029 = vpop.permute.xlu0 %1028
  %v1031 = vsel %vm329, %v1027, 0
  %v1034 = vsel %vm329, %v1029, 0
  %1036 = vmatprep.subr.bf16.mxu0 0
  %1037 = vmatpush1.bf16.xpose.msra.mxu0 0
  %1038 = vmatprep.subr.bf16.mxu0 0
  %1039 = vmatpush1.bf16.xpose.msra.mxu0 0
  %1040 = vmatprep.subr.bf16.mxu0 0
  %1041 = vmatpush1.bf16.xpose.msra.mxu0 0
  %1042 = vmatprep.subr.bf16.mxu0 0
  %1043 = vmatpush1.bf16.xpose.msra.mxu0 0
  %1044 = vmatprep.subr.bf16.mxu0 0
  %1045 = vmatpush1.bf16.xpose.msra.mxu0 0
  %1046 = vmatprep.subr.bf16.mxu0 0
  %1047 = vmatpush1.bf16.xpose.msra.mxu0 0
  %1048 = vmatprep.subr.bf16.mxu0 0
  %1049 = vmatpush1.bf16.xpose.msra.mxu0 0
  %1050 = vmatprep.subr.bf16.mxu0 0
  %1051 = vmatpush1.bf16.xpose.msra.mxu0 %v1034
  %1052 = vmatprep.subr.bf16.mxu0 0
  %1053 = vmatpush2.bf16.xpose.msra.mxu0 0
  %1054 = vmatprep.subr.bf16.mxu0 0
  %1055 = vmatpush2.bf16.xpose.msra.mxu0 0
  %1056 = vmatprep.subr.bf16.mxu0 0
  %1057 = vmatpush2.bf16.xpose.msra.mxu0 0
  %1058 = vmatprep.subr.bf16.mxu0 0
  %1059 = vmatpush2.bf16.xpose.msra.mxu0 0
  %1060 = vmatprep.subr.bf16.mxu0 0
  %1061 = vmatpush2.bf16.xpose.msra.mxu0 0
  %1062 = vmatprep.subr.bf16.mxu0 0
  %1063 = vmatpush2.bf16.xpose.msra.mxu0 0
  %1064 = vmatprep.subr.bf16.mxu0 0
  %1065 = vmatpush2.bf16.xpose.msra.mxu0 0
  %1066 = vmatprep.subr.bf16.mxu0 0
  %1067 = vmatpush2.bf16.xpose.msra.mxu0 0
  %1068 = vmatprep.mubr.bf16.mxu0 0
  %1069 = vmatmul.mubr.bf16.gmra.mxu0 %v1031
  %v1070 = vpop.f32.mrf.mxu0
  %v1071 = vadd.f32 0.0, %v1070
  %v1072 = vpop.f32.mrf.mxu0
  %v1073 = vpop.f32.mrf.mxu0
  %v1074 = vpop.f32.mrf.mxu0
  %1075 = vdwg.mxu0
  %v1076 = vmul.f32 %v1071, 0.35355338
  %v1077 = vadd.f32 %v1076, %v851
  %v1078 = vsel %vm382, %v1077, -inf
  %1079 = vmax.xlane.f32.xlu0 %v1078
  %v1080 = vpop.xlane.xlu0 %1079
  %v1081 = vsub.f32 %v1077, %v1080
  %v1082 = vmul.f32 %v1081, 1.442695
  %v1083 = vpow.pop %v1082
  %v1084 = vsel %vm382, %v1083, 0.0
  %1085 = vadd.xlane.f32.xlu0 %v1084
  %v1086 = vpop.xlane.xlu0 %1085
  %v1087 = vrcp.pop %v1086
  %v1088 = vmul.f32 %v1083, %v1087
  %v1089 = vpack.c.bf16 %v1088, %v1088
  %1090 = vrot.lane.b32.xlu0 %v800, 64
  %v1091 = vpop.permute.xlu0 %1090
  %v1093 = vsel %vm382, %v1089, 0
  %v1096 = vsel %vm398, %v1091, 0
  %1098 = vmatprep.subr.bf16.mxu0 0
  %1099 = vmatpush1.bf16.msra.mxu0 0
  %1100 = vmatprep.subr.bf16.mxu0 0
  %1101 = vmatpush1.bf16.msra.mxu0 0
  %1102 = vmatprep.subr.bf16.mxu0 0
  %1103 = vmatpush1.bf16.msra.mxu0 0
  %1104 = vmatprep.subr.bf16.mxu0 0
  %1105 = vmatpush1.bf16.msra.mxu0 0
  %1106 = vmatprep.subr.bf16.mxu0 0
  %1107 = vmatpush1.bf16.msra.mxu0 0
  %1108 = vmatprep.subr.bf16.mxu0 0
  %1109 = vmatpush1.bf16.msra.mxu0 0
  %1110 = vmatprep.subr.bf16.mxu0 0
  %1111 = vmatpush1.bf16.msra.mxu0 0
  %1112 = vmatprep.subr.bf16.mxu0 0
  %1113 = vmatpush1.bf16.msra.mxu0 %v1096
  %1114 = vmatprep.subr.bf16.mxu0 0
  %1115 = vmatpush2.bf16.msra.mxu0 0
  %1116 = vmatprep.subr.bf16.mxu0 0
  %1117 = vmatpush2.bf16.msra.mxu0 0
  %1118 = vmatprep.subr.bf16.mxu0 0
  %1119 = vmatpush2.bf16.msra.mxu0 0
  %1120 = vmatprep.subr.bf16.mxu0 0
  %1121 = vmatpush2.bf16.msra.mxu0 0
  %1122 = vmatprep.subr.bf16.mxu0 0
  %1123 = vmatpush2.bf16.msra.mxu0 0
  %1124 = vmatprep.subr.bf16.mxu0 0
  %1125 = vmatpush2.bf16.msra.mxu0 0
  %1126 = vmatprep.subr.bf16.mxu0 0
  %1127 = vmatpush2.bf16.msra.mxu0 0
  %1128 = vmatprep.subr.bf16.mxu0 0
  %1129 = vmatpush2.bf16.msra.mxu0 0
  %1130 = vmatprep.mubr.bf16.mxu0 0
  %1131 = vmatmul.mubr.bf16.gmra.mxu0 %v1093
  %v1132 = vpop.f32.mrf.mxu0
  %v1133 = vadd.f32 0.0, %v1132
  %v1134 = vpop.f32.mrf.mxu0
  %v1135 = vpop.f32.mrf.mxu0
  %v1136 = vpop.f32.mrf.mxu0
  %1137 = vdwg.mxu0
  %1138 = vrot.lane.b32.xlu0 %v798, 32
  %v1139 = vpop.permute.xlu0 %1138
  %1140 = vrot.lane.b32.xlu0 %v799, 32
  %v1141 = vpop.permute.xlu0 %1140
  %v1143 = vsel %vm329, %v1139, 0
  %v1146 = vsel %vm329, %v1141, 0
  %1148 = vmatprep.subr.bf16.mxu0 0
  %1149 = vmatpush1.bf16.xpose.msra.mxu0 0
  %1150 = vmatprep.subr.bf16.mxu0 0
  %1151 = vmatpush1.bf16.xpose.msra.mxu0 0
  %1152 = vmatprep.subr.bf16.mxu0 0
  %1153 = vmatpush1.bf16.xpose.msra.mxu0 0
  %1154 = vmatprep.subr.bf16.mxu0 0
  %1155 = vmatpush1.bf16.xpose.msra.mxu0 0
  %1156 = vmatprep.subr.bf16.mxu0 0
  %1157 = vmatpush1.bf16.xpose.msra.mxu0 0
  %1158 = vmatprep.subr.bf16.mxu0 0
  %1159 = vmatpush1.bf16.xpose.msra.mxu0 0
  %1160 = vmatprep.subr.bf16.mxu0 0
  %1161 = vmatpush1.bf16.xpose.msra.mxu0 0
  %1162 = vmatprep.subr.bf16.mxu0 0
  %1163 = vmatpush1.bf16.xpose.msra.mxu0 %v1146
  %1164 = vmatprep.subr.bf16.mxu0 0
  %1165 = vmatpush2.bf16.xpose.msra.mxu0 0
  %1166 = vmatprep.subr.bf16.mxu0 0
  %1167 = vmatpush2.bf16.xpose.msra.mxu0 0
  %1168 = vmatprep.subr.bf16.mxu0 0
  %1169 = vmatpush2.bf16.xpose.msra.mxu0 0
  %1170 = vmatprep.subr.bf16.mxu0 0
  %1171 = vmatpush2.bf16.xpose.msra.mxu0 0
  %1172 = vmatprep.subr.bf16.mxu0 0
  %1173 = vmatpush2.bf16.xpose.msra.mxu0 0
  %1174 = vmatprep.subr.bf16.mxu0 0
  %1175 = vmatpush2.bf16.xpose.msra.mxu0 0
  %1176 = vmatprep.subr.bf16.mxu0 0
  %1177 = vmatpush2.bf16.xpose.msra.mxu0 0
  %1178 = vmatprep.subr.bf16.mxu0 0
  %1179 = vmatpush2.bf16.xpose.msra.mxu0 0
  %1180 = vmatprep.mubr.bf16.mxu0 0
  %1181 = vmatmul.mubr.bf16.gmra.mxu0 %v1143
  %v1182 = vpop.f32.mrf.mxu0
  %v1183 = vadd.f32 0.0, %v1182
  %v1184 = vpop.f32.mrf.mxu0
  %v1185 = vpop.f32.mrf.mxu0
  %v1186 = vpop.f32.mrf.mxu0
  %1187 = vdwg.mxu0
  %v1188 = vmul.f32 %v1183, 0.35355338
  %v1189 = vadd.f32 %v1188, %v851
  %v1190 = vsel %vm382, %v1189, -inf
  %1191 = vmax.xlane.f32.xlu0 %v1190
  %v1192 = vpop.xlane.xlu0 %1191
  %v1193 = vsub.f32 %v1189, %v1192
  %v1194 = vmul.f32 %v1193, 1.442695
  %v1195 = vpow.pop %v1194
  %v1196 = vsel %vm382, %v1195, 0.0
  %1197 = vadd.xlane.f32.xlu0 %v1196
  %v1198 = vpop.xlane.xlu0 %1197
  %v1199 = vrcp.pop %v1198
  %v1200 = vmul.f32 %v1195, %v1199
  %v1201 = vpack.c.bf16 %v1200, %v1200
  %1202 = vrot.lane.b32.xlu0 %v800, 32
  %v1203 = vpop.permute.xlu0 %1202
  %v1205 = vsel %vm382, %v1201, 0
  %v1208 = vsel %vm398, %v1203, 0
  %1210 = vmatprep.subr.bf16.mxu0 0
  %1211 = vmatpush1.bf16.msra.mxu0 0
  %1212 = vmatprep.subr.bf16.mxu0 0
  %1213 = vmatpush1.bf16.msra.mxu0 0
  %1214 = vmatprep.subr.bf16.mxu0 0
  %1215 = vmatpush1.bf16.msra.mxu0 0
  %1216 = vmatprep.subr.bf16.mxu0 0
  %1217 = vmatpush1.bf16.msra.mxu0 0
  %1218 = vmatprep.subr.bf16.mxu0 0
  %1219 = vmatpush1.bf16.msra.mxu0 0
  %1220 = vmatprep.subr.bf16.mxu0 0
  %1221 = vmatpush1.bf16.msra.mxu0 0
  %1222 = vmatprep.subr.bf16.mxu0 0
  %1223 = vmatpush1.bf16.msra.mxu0 0
  %1224 = vmatprep.subr.bf16.mxu0 0
  %1225 = vmatpush1.bf16.msra.mxu0 %v1208
  %1226 = vmatprep.subr.bf16.mxu0 0
  %1227 = vmatpush2.bf16.msra.mxu0 0
  %1228 = vmatprep.subr.bf16.mxu0 0
  %1229 = vmatpush2.bf16.msra.mxu0 0
  %1230 = vmatprep.subr.bf16.mxu0 0
  %1231 = vmatpush2.bf16.msra.mxu0 0
  %1232 = vmatprep.subr.bf16.mxu0 0
  %1233 = vmatpush2.bf16.msra.mxu0 0
  %1234 = vmatprep.subr.bf16.mxu0 0
  %1235 = vmatpush2.bf16.msra.mxu0 0
  %1236 = vmatprep.subr.bf16.mxu0 0
  %1237 = vmatpush2.bf16.msra.mxu0 0
  %1238 = vmatprep.subr.bf16.mxu0 0
  %1239 = vmatpush2.bf16.msra.mxu0 0
  %1240 = vmatprep.subr.bf16.mxu0 0
  %1241 = vmatpush2.bf16.msra.mxu0 0
  %1242 = vmatprep.mubr.bf16.mxu0 0
  %1243 = vmatmul.mubr.bf16.gmra.mxu0 %v1205
  %v1244 = vpop.f32.mrf.mxu0
  %v1245 = vadd.f32 0.0, %v1244
  %v1246 = vpop.f32.mrf.mxu0
  %v1247 = vpop.f32.mrf.mxu0
  %v1248 = vpop.f32.mrf.mxu0
  %1249 = vdwg.mxu0
  %1251 = vrot.lane.b32.xlu0 %v1021, 32
  %v1252 = vpop.permute.xlu0 %1251
  %1255 = vrot.lane.b32.xlu0 %v1133, 64
  %v1256 = vpop.permute.xlu0 %1255
  %1259 = vrot.lane.b32.xlu0 %v1245, 96
  %v1260 = vpop.permute.xlu0 %1259
  %v1262 = vsel %vm329, %v906, %v1252
  %v1263 = vsel %vm794, %v1262, %v1256
  %v1264 = vsel %vm796, %v1263, %v1260
  %v1265 = vpack.c.bf16 %v1264, %v797
  %v1266 = vld [vmem:[%s4] sm:$0xf]
  %v1267 = vld [vmem:[%s4 + $0x4] sm:$0xf]
  %v1268 = vld [vmem:[%s4 + $0x8] sm:$0xf]
  %v1269 = vld [vmem:[%s4 + $0xc] sm:$0xf]
  %v1270 = vld [vmem:[%s4 + $0x10] sm:$0xf]
  %v1271 = vld [vmem:[%s4 + $0x14] sm:$0xf]
  %v1272 = vld [vmem:[%s4 + $0x18] sm:$0xf]
  %v1273 = vld [vmem:[%s4 + $0x1c] sm:$0xf]
  %v1274 = vld [vmem:[%s4 + $0x20] sm:$0xf]
  %v1275 = vld [vmem:[%s4 + $0x24] sm:$0xf]
  %v1276 = vld [vmem:[%s4 + $0x28] sm:$0xf]
  %v1277 = vld [vmem:[%s4 + $0x2c] sm:$0xf]
  %v1278 = vld [vmem:[%s4 + $0x30] sm:$0xf]
  %v1279 = vld [vmem:[%s4 + $0x34] sm:$0xf]
  %v1280 = vld [vmem:[%s4 + $0x38] sm:$0xf]
  %v1281 = vld [vmem:[%s4 + $0x3c] sm:$0xf]
  %v1282 = vld [vmem:[%s5] sm:$0x1]
  %v1284 = vlaneseq
  %v1285 = vshrl.u32 %v1284, 7
  %v1286 = vsub.s32 0, %v1285
  %v1287 = vrot.slane %v1282, %v1286
  %v1305 = vunpack.c.l.b16 %v1266
  %v1306 = vunpack.c.l.b16 %v1267
  %v1307 = vunpack.c.l.b16 %v1268
  %v1308 = vunpack.c.l.b16 %v1269
  %v1309 = vunpack.c.l.b16 %v1270
  %v1310 = vunpack.c.l.b16 %v1271
  %v1311 = vunpack.c.l.b16 %v1272
  %v1312 = vunpack.c.l.b16 %v1273
  %v1313 = vunpack.c.l.b16 %v1274
  %v1314 = vunpack.c.l.b16 %v1275
  %v1315 = vunpack.c.l.b16 %v1276
  %v1316 = vunpack.c.l.b16 %v1277
  %v1317 = vunpack.c.l.b16 %v1278
  %v1318 = vunpack.c.l.b16 %v1279
  %v1319 = vunpack.c.l.b16 %v1280
  %v1320 = vunpack.c.l.b16 %v1281
  %v1321 = vpack.c.b16 %v1306, %v1305
  %v1322 = vpack.c.b16 %v1308, %v1307
  %v1323 = vpack.c.b16 %v1310, %v1309
  %v1324 = vpack.c.b16 %v1312, %v1311
  %v1325 = vpack.c.b16 %v1314, %v1313
  %v1326 = vpack.c.b16 %v1316, %v1315
  %v1327 = vpack.c.b16 %v1318, %v1317
  %v1328 = vpack.c.b16 %v1320, %v1319
  %1337 = vmatprep.subr.bf16.mxu0 0
  %1338 = vmatpush1.bf16.msra.mxu0 %v1328
  %1339 = vmatprep.subr.bf16.mxu0 0
  %1340 = vmatpush1.bf16.msra.mxu0 %v1327
  %1341 = vmatprep.subr.bf16.mxu0 0
  %1342 = vmatpush1.bf16.msra.mxu0 %v1326
  %1343 = vmatprep.subr.bf16.mxu0 0
  %1344 = vmatpush1.bf16.msra.mxu0 %v1325
  %1345 = vmatprep.subr.bf16.mxu0 0
  %1346 = vmatpush1.bf16.msra.mxu0 %v1324
  %1347 = vmatprep.subr.bf16.mxu0 0
  %1348 = vmatpush1.bf16.msra.mxu0 %v1323
  %1349 = vmatprep.subr.bf16.mxu0 0
  %1350 = vmatpush1.bf16.msra.mxu0 %v1322
  %1351 = vmatprep.subr.bf16.mxu0 0
  %1352 = vmatpush1.bf16.msra.mxu0 %v1321
  %1353 = vmatprep.subr.bf16.mxu0 0
  %1354 = vmatpush2.bf16.msra.mxu0 0
  %1355 = vmatprep.subr.bf16.mxu0 0
  %1356 = vmatpush2.bf16.msra.mxu0 0
  %1357 = vmatprep.subr.bf16.mxu0 0
  %1358 = vmatpush2.bf16.msra.mxu0 0
  %1359 = vmatprep.subr.bf16.mxu0 0
  %1360 = vmatpush2.bf16.msra.mxu0 0
  %1361 = vmatprep.subr.bf16.mxu0 0
  %1362 = vmatpush2.bf16.msra.mxu0 0
  %1363 = vmatprep.subr.bf16.mxu0 0
  %1364 = vmatpush2.bf16.msra.mxu0 0
  %1365 = vmatprep.subr.bf16.mxu0 0
  %1366 = vmatpush2.bf16.msra.mxu0 0
  %1367 = vmatprep.subr.bf16.mxu0 0
  %1368 = vmatpush2.bf16.msra.mxu0 0
  %1369 = vmatprep.mubr.bf16.mxu0 0
  %1370 = vmatmul.mubr.bf16.gmra.mxu0 %v1265
  %v1371 = vpop.f32.mrf.mxu0
  %v1372 = vadd.f32 %v1287, %v1371
  %v1373 = vpop.f32.mrf.mxu0
  %v1374 = vpop.f32.mrf.mxu0
  %v1375 = vadd.f32 %v1287, %v1374
  %v1376 = vpop.f32.mrf.mxu0
  %1377 = vdwg.mxu0
  %v1378 = vadd.f32 %v50, %v1372
  %v1379 = vadd.f32 %v51, %v1375
  %v1380 = vld [vmem:[%s6] sm:$0x1]
  %v1381 = vld [vmem:[%s7] sm:$0x1]
  %1382 = vadd.xlane.f32.xlu0 %v1378
  %v1383 = vpop.xlane.xlu0 %1382
  %1384 = vadd.xlane.f32.xlu0 %v1379
  %v1385 = vpop.xlane.xlu0 %1384
  %v1386 = vmul.f32 %v1383, 0.03125
  %v1387 = vmul.f32 %v1385, 0.03125
  %v1388 = vsub.f32 %v1378, %v1386
  %v1389 = vsub.f32 %v1379, %v1387
  %v1390 = vmul.f32 %v1388, %v56
  %v1391 = vmul.f32 %v1389, %v56
  %v1392 = vmul.f32 %v1390, %v1390
  %v1393 = vmul.f32 %v1391, %v1391
  %1394 = vadd.xlane.f32.xlu0 %v1392
  %v1395 = vpop.xlane.xlu0 %1394
  %1396 = vadd.xlane.f32.xlu0 %v1393
  %v1397 = vpop.xlane.xlu0 %1396
  %v1398 = vmul.f32 %v1395, 0.03125
  %v1399 = vmul.f32 %v1397, 0.03125
  %v1400 = vadd.f32 %v1398, 1e-05
  %v1401 = vadd.f32 %v1399, 1e-05
  %v1402 = vrsqrt.pop %v1400
  %v1403 = vrsqrt.pop %v1401
  %v1404 = vmul.f32 %v1388, %v1402
  %v1405 = vmul.f32 %v1389, %v1403
  %v1407 = vlaneseq
  %v1408 = vshrl.u32 %v1407, 7
  %v1409 = vsub.s32 0, %v1408
  %v1410 = vrot.slane %v1380, %v1409
  %v1412 = vmul.f32 %v1404, %v1410
  %v1413 = vmul.f32 %v1405, %v1410
  %v1415 = vlaneseq
  %v1416 = vshrl.u32 %v1415, 7
  %v1417 = vsub.s32 0, %v1416
  %v1418 = vrot.slane %v1381, %v1417
  %v1420 = vadd.f32 %v1412, %v1418
  %v1421 = vadd.f32 %v1413, %v1418
  %v1422 = vpack.c.bf16 %v1421, %v1420
  %v1423 = vld [vmem:[%s8] sm:$0xf]
  %v1424 = vld [vmem:[%s8 + $0x4] sm:$0xf]
  %v1425 = vld [vmem:[%s8 + $0x8] sm:$0xf]
  %v1426 = vld [vmem:[%s8 + $0xc] sm:$0xf]
  %v1427 = vld [vmem:[%s8 + $0x10] sm:$0xf]
  %v1428 = vld [vmem:[%s8 + $0x14] sm:$0xf]
  %v1429 = vld [vmem:[%s8 + $0x18] sm:$0xf]
  %v1430 = vld [vmem:[%s8 + $0x1c] sm:$0xf]
  %v1431 = vld [vmem:[%s8 + $0x20] sm:$0xf]
  %v1432 = vld [vmem:[%s8 + $0x24] sm:$0xf]
  %v1433 = vld [vmem:[%s8 + $0x28] sm:$0xf]
  %v1434 = vld [vmem:[%s8 + $0x2c] sm:$0xf]
  %v1435 = vld [vmem:[%s8 + $0x30] sm:$0xf]
  %v1436 = vld [vmem:[%s8 + $0x34] sm:$0xf]
  %v1437 = vld [vmem:[%s8 + $0x38] sm:$0xf]
  %v1438 = vld [vmem:[%s8 + $0x3c] sm:$0xf]
  %v1439 = vld [vmem:[%s9] sm:$0x1]
  %v1441 = vlaneseq
  %v1442 = vshrl.u32 %v1441, 7
  %v1443 = vsub.s32 0, %v1442
  %v1444 = vrot.slane %v1439, %v1443
  %v1462 = vunpack.c.l.b16 %v1423
  %v1463 = vunpack.c.l.b16 %v1424
  %v1464 = vunpack.c.l.b16 %v1425
  %v1465 = vunpack.c.l.b16 %v1426
  %v1466 = vunpack.c.l.b16 %v1427
  %v1467 = vunpack.c.l.b16 %v1428
  %v1468 = vunpack.c.l.b16 %v1429
  %v1469 = vunpack.c.l.b16 %v1430
  %v1470 = vunpack.c.l.b16 %v1431
  %v1471 = vunpack.c.l.b16 %v1432
  %v1472 = vunpack.c.l.b16 %v1433
  %v1473 = vunpack.c.l.b16 %v1434
  %v1474 = vunpack.c.l.b16 %v1435
  %v1475 = vunpack.c.l.b16 %v1436
  %v1476 = vunpack.c.l.b16 %v1437
  %v1477 = vunpack.c.l.b16 %v1438
  %v1478 = vpack.c.b16 %v1463, %v1462
  %v1479 = vpack.c.b16 %v1465, %v1464
  %v1480 = vpack.c.b16 %v1467, %v1466
  %v1481 = vpack.c.b16 %v1469, %v1468
  %v1482 = vpack.c.b16 %v1471, %v1470
  %v1483 = vpack.c.b16 %v1473, %v1472
  %v1484 = vpack.c.b16 %v1475, %v1474
  %v1485 = vpack.c.b16 %v1477, %v1476
  %1494 = vmatprep.subr.bf16.mxu0 0
  %1495 = vmatpush1.bf16.msra.mxu0 %v1485
  %1496 = vmatprep.subr.bf16.mxu0 0
  %1497 = vmatpush1.bf16.msra.mxu0 %v1484
  %1498 = vmatprep.subr.bf16.mxu0 0
  %1499 = vmatpush1.bf16.msra.mxu0 %v1483
  %1500 = vmatprep.subr.bf16.mxu0 0
  %1501 = vmatpush1.bf16.msra.mxu0 %v1482
  %1502 = vmatprep.subr.bf16.mxu0 0
  %1503 = vmatpush1.bf16.msra.mxu0 %v1481
  %1504 = vmatprep.subr.bf16.mxu0 0
  %1505 = vmatpush1.bf16.msra.mxu0 %v1480
  %1506 = vmatprep.subr.bf16.mxu0 0
  %1507 = vmatpush1.bf16.msra.mxu0 %v1479
  %1508 = vmatprep.subr.bf16.mxu0 0
  %1509 = vmatpush1.bf16.msra.mxu0 %v1478
  %1510 = vmatprep.subr.bf16.mxu0 0
  %1511 = vmatpush2.bf16.msra.mxu0 0
  %1512 = vmatprep.subr.bf16.mxu0 0
  %1513 = vmatpush2.bf16.msra.mxu0 0
  %1514 = vmatprep.subr.bf16.mxu0 0
  %1515 = vmatpush2.bf16.msra.mxu0 0
  %1516 = vmatprep.subr.bf16.mxu0 0
  %1517 = vmatpush2.bf16.msra.mxu0 0
  %1518 = vmatprep.subr.bf16.mxu0 0
  %1519 = vmatpush2.bf16.msra.mxu0 0
  %1520 = vmatprep.subr.bf16.mxu0 0
  %1521 = vmatpush2.bf16.msra.mxu0 0
  %1522 = vmatprep.subr.bf16.mxu0 0
  %1523 = vmatpush2.bf16.msra.mxu0 0
  %1524 = vmatprep.subr.bf16.mxu0 0
  %1525 = vmatpush2.bf16.msra.mxu0 0
  %1526 = vmatprep.mubr.bf16.mxu0 0
  %1527 = vmatmul.mubr.bf16.gmra.mxu0 %v1422
  %v1528 = vpop.f32.mrf.mxu0
  %v1529 = vadd.f32 %v1444, %v1528
  %v1530 = vpop.f32.mrf.mxu0
  %v1531 = vpop.f32.mrf.mxu0
  %v1532 = vadd.f32 %v1444, %v1531
  %v1533 = vpop.f32.mrf.mxu0
  %1534 = vdwg.mxu0
  %v1535 = vmax.f32 %v1529, 0.0
  %v1536 = vmax.f32 %v1532, 0.0
  %v1537 = vpack.c.bf16 %v1536, %v1535
  %v1538 = vld [vmem:[%s10] sm:$0xf]
  %v1539 = vld [vmem:[%s10 + $0x4] sm:$0xf]
  %v1540 = vld [vmem:[%s10 + $0x8] sm:$0xf]
  %v1541 = vld [vmem:[%s10 + $0xc] sm:$0xf]
  %v1542 = vld [vmem:[%s10 + $0x10] sm:$0xf]
  %v1543 = vld [vmem:[%s10 + $0x14] sm:$0xf]
  %v1544 = vld [vmem:[%s10 + $0x18] sm:$0xf]
  %v1545 = vld [vmem:[%s10 + $0x1c] sm:$0xf]
  %v1546 = vld [vmem:[%s10 + $0x20] sm:$0xf]
  %v1547 = vld [vmem:[%s10 + $0x24] sm:$0xf]
  %v1548 = vld [vmem:[%s10 + $0x28] sm:$0xf]
  %v1549 = vld [vmem:[%s10 + $0x2c] sm:$0xf]
  %v1550 = vld [vmem:[%s10 + $0x30] sm:$0xf]
  %v1551 = vld [vmem:[%s10 + $0x34] sm:$0xf]
  %v1552 = vld [vmem:[%s10 + $0x38] sm:$0xf]
  %v1553 = vld [vmem:[%s10 + $0x3c] sm:$0xf]
  %v1554 = vld [vmem:[%s11] sm:$0x1]
  %v1556 = vlaneseq
  %v1557 = vshrl.u32 %v1556, 7
  %v1558 = vsub.s32 0, %v1557
  %v1559 = vrot.slane %v1554, %v1558
  %v1577 = vunpack.c.l.b16 %v1538
  %v1578 = vunpack.c.l.b16 %v1539
  %v1579 = vunpack.c.l.b16 %v1540
  %v1580 = vunpack.c.l.b16 %v1541
  %v1581 = vunpack.c.l.b16 %v1542
  %v1582 = vunpack.c.l.b16 %v1543
  %v1583 = vunpack.c.l.b16 %v1544
  %v1584 = vunpack.c.l.b16 %v1545
  %v1585 = vunpack.c.l.b16 %v1546
  %v1586 = vunpack.c.l.b16 %v1547
  %v1587 = vunpack.c.l.b16 %v1548
  %v1588 = vunpack.c.l.b16 %v1549
  %v1589 = vunpack.c.l.b16 %v1550
  %v1590 = vunpack.c.l.b16 %v1551
  %v1591 = vunpack.c.l.b16 %v1552
  %v1592 = vunpack.c.l.b16 %v1553
  %v1593 = vpack.c.b16 %v1578, %v1577
  %v1594 = vpack.c.b16 %v1580, %v1579
  %v1595 = vpack.c.b16 %v1582, %v1581
  %v1596 = vpack.c.b16 %v1584, %v1583
  %v1597 = vpack.c.b16 %v1586, %v1585
  %v1598 = vpack.c.b16 %v1588, %v1587
  %v1599 = vpack.c.b16 %v1590, %v1589
  %v1600 = vpack.c.b16 %v1592, %v1591
  %1609 = vmatprep.subr.bf16.mxu0 0
  %1610 = vmatpush1.bf16.msra.mxu0 %v1600
  %1611 = vmatprep.subr.bf16.mxu0 0
  %1612 = vmatpush1.bf16.msra.mxu0 %v1599
  %1613 = vmatprep.subr.bf16.mxu0 0
  %1614 = vmatpush1.bf16.msra.mxu0 %v1598
  %1615 = vmatprep.subr.bf16.mxu0 0
  %1616 = vmatpush1.bf16.msra.mxu0 %v1597
  %1617 = vmatprep.subr.bf16.mxu0 0
  %1618 = vmatpush1.bf16.msra.mxu0 %v1596
  %1619 = vmatprep.subr.bf16.mxu0 0
  %1620 = vmatpush1.bf16.msra.mxu0 %v1595
  %1621 = vmatprep.subr.bf16.mxu0 0
  %1622 = vmatpush1.bf16.msra.mxu0 %v1594
  %1623 = vmatprep.subr.bf16.mxu0 0
  %1624 = vmatpush1.bf16.msra.mxu0 %v1593
  %1625 = vmatprep.subr.bf16.mxu0 0
  %1626 = vmatpush2.bf16.msra.mxu0 0
  %1627 = vmatprep.subr.bf16.mxu0 0
  %1628 = vmatpush2.bf16.msra.mxu0 0
  %1629 = vmatprep.subr.bf16.mxu0 0
  %1630 = vmatpush2.bf16.msra.mxu0 0
  %1631 = vmatprep.subr.bf16.mxu0 0
  %1632 = vmatpush2.bf16.msra.mxu0 0
  %1633 = vmatprep.subr.bf16.mxu0 0
  %1634 = vmatpush2.bf16.msra.mxu0 0
  %1635 = vmatprep.subr.bf16.mxu0 0
  %1636 = vmatpush2.bf16.msra.mxu0 0
  %1637 = vmatprep.subr.bf16.mxu0 0
  %1638 = vmatpush2.bf16.msra.mxu0 0
  %1639 = vmatprep.subr.bf16.mxu0 0
  %1640 = vmatpush2.bf16.msra.mxu0 0
  %1641 = vmatprep.mubr.bf16.mxu0 0
  %1642 = vmatmul.mubr.bf16.gmra.mxu0 %v1537
  %v1643 = vpop.f32.mrf.mxu0
  %v1644 = vadd.f32 %v1559, %v1643
  %v1645 = vpop.f32.mrf.mxu0
  %v1646 = vpop.f32.mrf.mxu0
  %v1647 = vadd.f32 %v1559, %v1646
  %v1648 = vpop.f32.mrf.mxu0
  %1649 = vdwg.mxu0
  %v1650 = vadd.f32 %v1420, %v1644
  %v1651 = vadd.f32 %v1421, %v1647
  %v1652 = vld [vmem:[%s12] sm:$0x1]
  %v1653 = vld [vmem:[%s13] sm:$0x1]
  %1654 = vadd.xlane.f32.xlu0 %v1650
  %v1655 = vpop.xlane.xlu0 %1654
  %1656 = vadd.xlane.f32.xlu0 %v1651
  %v1657 = vpop.xlane.xlu0 %1656
  %v1658 = vmul.f32 %v1655, 0.03125
  %v1659 = vmul.f32 %v1657, 0.03125
  %v1660 = vsub.f32 %v1650, %v1658
  %v1661 = vsub.f32 %v1651, %v1659
  %v1662 = vmul.f32 %v1660, %v56
  %v1663 = vmul.f32 %v1661, %v56
  %v1664 = vmul.f32 %v1662, %v1662
  %v1665 = vmul.f32 %v1663, %v1663
  %1666 = vadd.xlane.f32.xlu0 %v1664
  %v1667 = vpop.xlane.xlu0 %1666
  %1668 = vadd.xlane.f32.xlu0 %v1665
  %v1669 = vpop.xlane.xlu0 %1668
  %v1670 = vmul.f32 %v1667, 0.03125
  %v1671 = vmul.f32 %v1669, 0.03125
  %v1672 = vadd.f32 %v1670, 1e-05
  %v1673 = vadd.f32 %v1671, 1e-05
  %v1674 = vrsqrt.pop %v1672
  %v1675 = vrsqrt.pop %v1673
  %v1676 = vmul.f32 %v1660, %v1674
  %v1677 = vmul.f32 %v1661, %v1675
  %v1679 = vlaneseq
  %v1680 = vshrl.u32 %v1679, 7
  %v1681 = vsub.s32 0, %v1680
  %v1682 = vrot.slane %v1652, %v1681
  %v1684 = vmul.f32 %v1676, %v1682
  %v1685 = vmul.f32 %v1677, %v1682
  %v1687 = vlaneseq
  %v1688 = vshrl.u32 %v1687, 7
  %v1689 = vsub.s32 0, %v1688
  %v1690 = vrot.slane %v1653, %v1689
  %v1692 = vadd.f32 %v1684, %v1690
  %v1693 = vadd.f32 %v1685, %v1690
  %v1694 = vpack.c.bf16 %v1693, %v1692
  %v1696 = vunpack.c.l.b16 %v1694
  %v1697 = vunpack.c.h.b16 %v1694
  %v1698 = vpack.c.b16 %v1696, %v1696
  %v1699 = vpack.c.b16 %v1697, %v1697
  %1702 = vst [vmem:[%s14] sm:$0xf] %v1698
  %1703 = vst [vmem:[%s14 + $0x4] sm:$0xf] %v1699
  // Predicated region
  $region58: #{flat_transformer_mean_log_scale_forward.6} parent=0 // pred_check
    _
  $region59: #{flat_transformer_mean_log_scale_forward.6} parent=0 // pred_check_branch
    %1705 = sbr.rel (0) target = $region61
  $region60: #{flat_transformer_mean_log_scale_forward.6} parent=0 // pred_region
    _
  $region61: #{flat_transformer_mean_log_scale_forward.6} parent=0 // pred_fallthru
    _
  // Predicated region
  $region62: #{flat_transformer_mean_log_scale_forward.6} parent=0 // pred_check
    _
  $region63: #{flat_transformer_mean_log_scale_forward.6} parent=0 // pred_check_branch
    %1707 = sbr.rel (0) target = $region65
  $region64: #{flat_transformer_mean_log_scale_forward.6} parent=0 // pred_region
    _
  $region65: #{flat_transformer_mean_log_scale_forward.6} parent=0 // pred_fallthru
    _

</llo_original>
